<compile_context>
chip_gen: v5e
topology: v5e:2x2
jax: 0.10.0
libtpu: 0.0.40
codegen_flags: <defaults>
</compile_context>

<pallas_src>
import jax
import jax.numpy as jnp
import numpy as np
from jax import lax
from jax.experimental import pallas as pl
from jax.experimental.pallas import tpu as pltpu


# ------------------------------ Pallas kernel ------------------------------ #
def _upconv_kernel(x_ref, w_ref, b_ref, o_ref, acc_ref):
    # x_ref : (1, H+2, W+2, TK)        bf16   (spatially padded input, K-tile)
    # w_ref : (4, 4, TK, Cpad)         bf16   [sub-pixel 2a+b, tap 2di+dj]
    # b_ref : (1, Cpad)                f32
    # o_ref : (1, H, 2, W, 2*Cpad)     out dtype (pixel-shuffled layout)
    # acc_ref: (4, H, W, Cpad)         f32 scratch, persists across the K grid axis
    k = pl.program_id(1)
    _, hp2, wp2, tk = x_ref.shape
    h, w = hp2 - 2, wp2 - 2
    cpad = w_ref.shape[-1]

    @pl.when(k == 0)
    def _init():
        acc_ref[...] = jnp.zeros_like(acc_ref)

    # 4 sub-pixel outputs, each a sum over 4 shifted taps (MXU matmuls).
    for a in range(2):
        for b in range(2):
            sp = 2 * a + b
            part = jnp.zeros((h * w, cpad), jnp.float32)
            for di in range(2):
                for dj in range(2):
                    tap = x_ref[0, a + di:a + di + h, b + dj:b + dj + w, :]
                    part += jnp.dot(tap.reshape(h * w, tk),
                                    w_ref[sp, 2 * di + dj],
                                    preferred_element_type=jnp.float32)
            acc_ref[sp] += part.reshape(h, w, cpad)

    @pl.when(k == pl.num_programs(1) - 1)
    def _finalize():
        bias = b_ref[...]                              # (1, Cpad) f32
        for a in range(2):
            for b in range(2):
                val = (acc_ref[2 * a + b] + bias).astype(o_ref.dtype)
                # lane offsets are 128-aligned -> unmasked, lane-dense stores
                o_ref[0, :, a, :, b * cpad:(b + 1) * cpad] = val


def _round_up(x, m):
    return (x + m - 1) // m * m


def conv_transpose2d_up2(x_nhwc, weight, bias, *, out_dtype, tk_cap=512):
    """ConvTranspose2d(kernel=4, stride=2, padding=1), PyTorch semantics, NHWC.

    x_nhwc : (B, H, W, Cx)   Cx may exceed weight's Cin (extra channels must be 0,
                             e.g. lane-padding from a previous layer).
    weight : (Cin, Cout, 4, 4)   (PyTorch ConvTranspose2d layout)
    bias   : (Cout,)
    returns (B, 2H, 2W, Cpad) with Cpad = round_up(Cout, 128); channels >= Cout are 0.
    """
    B, H, W, Cx = x_nhwc.shape
    Cin, Cout = weight.shape[0], weight.shape[1]
    assert Cx >= Cin
    Cpad = _round_up(Cout, 128)

    # Reorganize weight -> (4, 4, Cin, Cout): [2a+b, 2di+dj] = W[:, :, (3-a)-2di, (3-b)-2dj]
    w_taps = []
    for a in (0, 1):
        for b in (0, 1):
            for di in (0, 1):
                for dj in (0, 1):
                    w_taps.append(weight[:, :, (3 - a) - 2 * di, (3 - b) - 2 * dj])
    w_mat = jnp.stack(w_taps, 0).reshape(4, 4, Cin, Cout)
    # zero-pad: Cin up to the (possibly lane-padded) input channels, Cout up to Cpad
    w_mat = jnp.pad(w_mat, ((0, 0), (0, 0), (0, Cx - Cin), (0, Cpad - Cout)))
    w_mat = w_mat.astype(jnp.bfloat16)
    b_pad = jnp.pad(bias.astype(jnp.float32), (0, Cpad - Cout)).reshape(1, Cpad)

    # spatial halo pad (+1 each side); bf16 for the MXU / halved HBM traffic
    x_pad = jnp.pad(x_nhwc, ((0, 0), (1, 1), (1, 1), (0, 0))).astype(jnp.bfloat16)

    # K tiling (channel axis) keeps per-step VMEM bounded for large Cin (v7x: 64 MiB).
    if Cx <= tk_cap or Cx % 128 != 0:
        tk = Cx
    else:
        tk = max(t for t in (512, 384, 256, 128) if t <= tk_cap and Cx % t == 0)
    kb = Cx // tk

    out_elems = B * H * 2 * W * 2 * Cpad
    cost = pl.CostEstimate(
        flops=2 * B * 4 * H * W * (4 * Cx) * Cpad,
        transcendentals=0,
        bytes_accessed=int(x_pad.size * 2 + w_mat.size * 2 + b_pad.size * 4
                           + out_elems * jnp.dtype(out_dtype).itemsize),
    )

    out = pl.pallas_call(
        _upconv_kernel,
        out_shape=jax.ShapeDtypeStruct((B, H, 2, W, 2 * Cpad), out_dtype),
        grid_spec=pltpu.PrefetchScalarGridSpec(
            num_scalar_prefetch=0,
            grid=(B, kb),
            in_specs=[
                pl.BlockSpec((1, H + 2, W + 2, tk), lambda b, k: (b, 0, 0, k)),
                pl.BlockSpec((4, 4, tk, Cpad), lambda b, k: (0, 0, k, 0)),
                pl.BlockSpec((1, Cpad), lambda b, k: (0, 0)),
            ],
            out_specs=pl.BlockSpec((1, H, 2, W, 2 * Cpad),
                                   lambda b, k: (b, 0, 0, 0, 0)),
            scratch_shapes=[pltpu.VMEM((4, H, W, Cpad), jnp.float32)],
        ),
        compiler_params=pltpu.CompilerParams(
            dimension_semantics=("parallel", "arbitrary"),
            vmem_limit_bytes=40 * 1024 * 1024,
        ),
        cost_estimate=cost,
    )(x_pad, w_mat, b_pad)

    # Free reshape: memory order of (B, H, 2, W, 2, Cpad) == (B, 2H, 2W, Cpad).
    return out.reshape(B, 2 * H, 2 * W, Cpad)


# ------------------------------ PredictionHead ------------------------------ #
def init_prediction_head(key, num_classes=6, in_channels=32, mid_channels=64):
    k1, k2, k3, k4 = jax.random.split(key, 4)
    # PyTorch ConvTranspose2d weight layout: (in_channels, out_channels, kH, kW)
    s1 = 1.0 / np.sqrt(in_channels * 16)
    s2 = 1.0 / np.sqrt(mid_channels * 16)
    return {
        "w1": jax.random.uniform(k1, (in_channels, mid_channels, 4, 4),
                                 jnp.float32, -s1, s1),
        "b1": jax.random.uniform(k2, (mid_channels,), jnp.float32, -s1, s1),
        "w2": jax.random.uniform(k3, (mid_channels, num_classes, 4, 4),
                                 jnp.float32, -s2, s2),
        "b2": jax.random.uniform(k4, (num_classes,), jnp.float32, -s2, s2),
    }


@jax.jit
def prediction_head(x_nchw, params):
    num_classes = params["b2"].shape[0]
    x = jnp.transpose(x_nchw, (0, 2, 3, 1))                               # NHWC
    x = conv_transpose2d_up2(x, params["w1"], params["b1"],
                             out_dtype=jnp.bfloat16)                      # bf16 intermediate
    x = conv_transpose2d_up2(x, params["w2"], params["b2"],
                             out_dtype=jnp.float32)
    x = x[..., :num_classes]                                              # drop lane padding
    return jnp.transpose(x, (0, 3, 1, 2))                                 # NCHW


# ----------------------------- reference (XLA) ------------------------------ #
def _bf16_round(x):
    return x.astype(jnp.bfloat16).astype(jnp.float32)


def _ref_conv_transpose(x_nchw, weight, bias, stride=2, padding=1):
    K = weight.shape[2]
    ker = jnp.transpose(jnp.flip(weight, (2, 3)), (1, 0, 2, 3))  # OIHW
    q = K - 1 - padding
    y = lax.conv_general_dilated(
        x_nchw, ker, window_strides=(1, 1), padding=[(q, q), (q, q)],
        lhs_dilation=(stride, stride),
        dimension_numbers=("NCHW", "OIHW", "NCHW"),
        preferred_element_type=jnp.float32)
    return y + bias[None, :, None, None]


def _ref_prediction_head(x_nchw, params):
    # mirror the kernel's bf16 input/weight quantization (f32 accumulate)
    y = _ref_conv_transpose(_bf16_round(x_nchw), _bf16_round(params["w1"]),
                            params["b1"])
    y = _ref_conv_transpose(_bf16_round(y), _bf16_round(params["w2"]),
                            params["b2"])
    return y


# ---------------------------------- main ------------------------------------ #
if __name__ == "__main__":
    key = jax.random.PRNGKey(0)
    k_x, k_p = jax.random.split(key)

    B, C_in, H, W = 2, 32, 8, 8          # small stand-in for (B, 2048, H, W)
    num_classes, mid = 6, 64             # small stand-in for (6, 512)

    x = jax.random.normal(k_x, (B, C_in, H, W), jnp.float32)
    params = init_prediction_head(k_p, num_classes=num_classes,
                                  in_channels=C_in, mid_channels=mid)

    out = jax.block_until_ready(prediction_head(x, params))
    assert out.shape == (B, num_classes, 4 * H, 4 * W), out.shape

    ref = jax.block_until_ready(_ref_prediction_head(x, params))
    np.testing.assert_allclose(np.asarray(out), np.asarray(ref),
                               rtol=1e-2, atol=1e-2)

    print("KERNEL_OK")
</pallas_src>

<mosaic_0001>
module attributes {stable_mosaic.version = 11 : i64} {
  func.func @_upconv_kernel(%arg0: i32, %arg1: i32, %arg2: memref<1x10x10x32xbf16, #tpu.memory_space<vmem>>, %arg3: memref<4x4x32x128xbf16, #tpu.memory_space<vmem>>, %arg4: memref<1x128xf32, #tpu.memory_space<vmem>>, %arg5: memref<1x8x2x8x256xbf16, #tpu.memory_space<vmem>>, %arg6: memref<4x8x8x128xf32, #tpu.memory_space<vmem>>) attributes {dimension_semantics = [#tpu.dimension_semantics<parallel>, #tpu.dimension_semantics<arbitrary>], iteration_bounds = array<i64: 2, 1>, scalar_prefetch = 0 : i64, scratch_operands = 1 : i64, tpu.core_type = #tpu.core_type<tc>, window_params = [{transform_indices = @transform_0, window_bounds = array<i64: 1, 10, 10, 32>}, {transform_indices = @transform_1, window_bounds = array<i64: 4, 4, 32, 128>}, {pipeline_mode = #tpu.pipeline_mode<synchronous>, transform_indices = @transform_2, window_bounds = array<i64: 1, 128>}, {transform_indices = @transform_3, window_bounds = array<i64: 1, 8, 2, 8, 256>}]} {
    %c0_i32 = arith.constant 0 : i32
    %0 = arith.cmpi eq, %arg1, %c0_i32 : i32
    %1 = arith.extui %0 : i1 to i32
    %c0_i32_0 = arith.constant 0 : i32
    %2 = arith.cmpi ne, %1, %c0_i32_0 : i32
    scf.if %2 {
      %cst_178 = arith.constant 0.000000e+00 : f32
      %150 = vector.broadcast %cst_178 : f32 to vector<4x8x8x128xf32>
      %c0_179 = arith.constant 0 : index
      %c0_180 = arith.constant 0 : index
      %c0_181 = arith.constant 0 : index
      %c0_182 = arith.constant 0 : index
      %151 = vector.load %arg6[%c0_179, %c0_180, %c0_181, %c0_182] : memref<4x8x8x128xf32, #tpu.memory_space<vmem>>, vector<4x8x8x128xf32>
      tpu.vector_store %arg6[%c0_179, %c0_180, %c0_181, %c0_182], %150 {strides = array<i32>} : memref<4x8x8x128xf32, #tpu.memory_space<vmem>>, vector<4x8x8x128xf32>,
    } else {
    }
    %cst = arith.constant 0.000000e+00 : f32
    %3 = vector.broadcast %cst : f32 to vector<64x128xf32>
    %c0 = arith.constant 0 : index
    %c0_1 = arith.constant 0 : index
    %c0_2 = arith.constant 0 : index
    %c0_3 = arith.constant 0 : index
    %4 = vector.load %arg2[%c0, %c0_1, %c0_2, %c0_3] : memref<1x10x10x32xbf16, #tpu.memory_space<vmem>>, vector<1x8x8x32xbf16>
    %5 = vector.shape_cast %4 : vector<1x8x8x32xbf16> to vector<8x8x32xbf16>
    %6 = vector.shape_cast %5 : vector<8x8x32xbf16> to vector<64x32xbf16>
    %c0_4 = arith.constant 0 : index
    %c0_5 = arith.constant 0 : index
    %c0_6 = arith.constant 0 : index
    %c0_7 = arith.constant 0 : index
    %7 = vector.load %arg3[%c0_4, %c0_5, %c0_6, %c0_7] : memref<4x4x32x128xbf16, #tpu.memory_space<vmem>>, vector<1x1x32x128xbf16>
    %8 = vector.shape_cast %7 : vector<1x1x32x128xbf16> to vector<32x128xbf16>
    %cst_8 = arith.constant dense<0.000000e+00> : vector<64x128xf32>
    %9 = tpu.matmul %6, %8, %cst_8 {dimension_numbers = #tpu.dot_dimension_numbers<[1], [0], [0], [1], [0, 0, 1, 1], [], []>} : vector<64x32xbf16>, vector<32x128xbf16>, vector<64x128xf32> -> vector<64x128xf32>
    %10 = arith.addf %3, %9 : vector<64x128xf32>
    %c0_9 = arith.constant 0 : index
    %c0_10 = arith.constant 0 : index
    %c1 = arith.constant 1 : index
    %c0_11 = arith.constant 0 : index
    %11 = vector.load %arg2[%c0_9, %c0_10, %c1, %c0_11] : memref<1x10x10x32xbf16, #tpu.memory_space<vmem>>, vector<1x8x8x32xbf16>
    %12 = vector.shape_cast %11 : vector<1x8x8x32xbf16> to vector<8x8x32xbf16>
    %13 = vector.shape_cast %12 : vector<8x8x32xbf16> to vector<64x32xbf16>
    %c0_12 = arith.constant 0 : index
    %c1_13 = arith.constant 1 : index
    %c0_14 = arith.constant 0 : index
    %c0_15 = arith.constant 0 : index
    %14 = vector.load %arg3[%c0_12, %c1_13, %c0_14, %c0_15] : memref<4x4x32x128xbf16, #tpu.memory_space<vmem>>, vector<1x1x32x128xbf16>
    %15 = vector.shape_cast %14 : vector<1x1x32x128xbf16> to vector<32x128xbf16>
    %cst_16 = arith.constant dense<0.000000e+00> : vector<64x128xf32>
    %16 = tpu.matmul %13, %15, %cst_16 {dimension_numbers = #tpu.dot_dimension_numbers<[1], [0], [0], [1], [0, 0, 1, 1], [], []>} : vector<64x32xbf16>, vector<32x128xbf16>, vector<64x128xf32> -> vector<64x128xf32>
    %17 = arith.addf %10, %16 : vector<64x128xf32>
    %c0_17 = arith.constant 0 : index
    %c1_18 = arith.constant 1 : index
    %c0_19 = arith.constant 0 : index
    %c0_20 = arith.constant 0 : index
    %18 = vector.load %arg2[%c0_17, %c1_18, %c0_19, %c0_20] : memref<1x10x10x32xbf16, #tpu.memory_space<vmem>>, vector<1x8x8x32xbf16>
    %19 = vector.shape_cast %18 : vector<1x8x8x32xbf16> to vector<8x8x32xbf16>
    %20 = vector.shape_cast %19 : vector<8x8x32xbf16> to vector<64x32xbf16>
    %c0_21 = arith.constant 0 : index
    %c2 = arith.constant 2 : index
    %c0_22 = arith.constant 0 : index
    %c0_23 = arith.constant 0 : index
    %21 = vector.load %arg3[%c0_21, %c2, %c0_22, %c0_23] : memref<4x4x32x128xbf16, #tpu.memory_space<vmem>>, vector<1x1x32x128xbf16>
    %22 = vector.shape_cast %21 : vector<1x1x32x128xbf16> to vector<32x128xbf16>
    %cst_24 = arith.constant dense<0.000000e+00> : vector<64x128xf32>
    %23 = tpu.matmul %20, %22, %cst_24 {dimension_numbers = #tpu.dot_dimension_numbers<[1], [0], [0], [1], [0, 0, 1, 1], [], []>} : vector<64x32xbf16>, vector<32x128xbf16>, vector<64x128xf32> -> vector<64x128xf32>
    %24 = arith.addf %17, %23 : vector<64x128xf32>
    %c0_25 = arith.constant 0 : index
    %c1_26 = arith.constant 1 : index
    %c1_27 = arith.constant 1 : index
    %c0_28 = arith.constant 0 : index
    %25 = vector.load %arg2[%c0_25, %c1_26, %c1_27, %c0_28] : memref<1x10x10x32xbf16, #tpu.memory_space<vmem>>, vector<1x8x8x32xbf16>
    %26 = vector.shape_cast %25 : vector<1x8x8x32xbf16> to vector<8x8x32xbf16>
    %27 = vector.shape_cast %26 : vector<8x8x32xbf16> to vector<64x32xbf16>
    %c0_29 = arith.constant 0 : index
    %c3 = arith.constant 3 : index
    %c0_30 = arith.constant 0 : index
    %c0_31 = arith.constant 0 : index
    %28 = vector.load %arg3[%c0_29, %c3, %c0_30, %c0_31] : memref<4x4x32x128xbf16, #tpu.memory_space<vmem>>, vector<1x1x32x128xbf16>
    %29 = vector.shape_cast %28 : vector<1x1x32x128xbf16> to vector<32x128xbf16>
    %cst_32 = arith.constant dense<0.000000e+00> : vector<64x128xf32>
    %30 = tpu.matmul %27, %29, %cst_32 {dimension_numbers = #tpu.dot_dimension_numbers<[1], [0], [0], [1], [0, 0, 1, 1], [], []>} : vector<64x32xbf16>, vector<32x128xbf16>, vector<64x128xf32> -> vector<64x128xf32>
    %31 = arith.addf %24, %30 : vector<64x128xf32>
    %c0_33 = arith.constant 0 : index
    %c0_34 = arith.constant 0 : index
    %c0_35 = arith.constant 0 : index
    %c0_36 = arith.constant 0 : index
    %32 = vector.load %arg6[%c0_33, %c0_34, %c0_35, %c0_36] : memref<4x8x8x128xf32, #tpu.memory_space<vmem>>, vector<1x8x8x128xf32>
    %33 = vector.shape_cast %32 : vector<1x8x8x128xf32> to vector<8x8x128xf32>
    %34 = vector.shape_cast %31 : vector<64x128xf32> to vector<8x8x128xf32>
    %35 = arith.addf %33, %34 : vector<8x8x128xf32>
    %c0_37 = arith.constant 0 : index
    %c0_38 = arith.constant 0 : index
    %c0_39 = arith.constant 0 : index
    %c0_40 = arith.constant 0 : index
    %36 = vector.load %arg6[%c0_37, %c0_38, %c0_39, %c0_40] : memref<4x8x8x128xf32, #tpu.memory_space<vmem>>, vector<1x8x8x128xf32>
    %37 = vector.shape_cast %36 : vector<1x8x8x128xf32> to vector<8x8x128xf32>
    %38 = vector.shape_cast %35 : vector<8x8x128xf32> to vector<1x8x8x128xf32>
    tpu.vector_store %arg6[%c0_37, %c0_38, %c0_39, %c0_40], %38 {strides = array<i32>} : memref<4x8x8x128xf32, #tpu.memory_space<vmem>>, vector<1x8x8x128xf32>,
    %cst_41 = arith.constant 0.000000e+00 : f32
    %39 = vector.broadcast %cst_41 : f32 to vector<64x128xf32>
    %c0_42 = arith.constant 0 : index
    %c0_43 = arith.constant 0 : index
    %c1_44 = arith.constant 1 : index
    %c0_45 = arith.constant 0 : index
    %40 = vector.load %arg2[%c0_42, %c0_43, %c1_44, %c0_45] : memref<1x10x10x32xbf16, #tpu.memory_space<vmem>>, vector<1x8x8x32xbf16>
    %41 = vector.shape_cast %40 : vector<1x8x8x32xbf16> to vector<8x8x32xbf16>
    %42 = vector.shape_cast %41 : vector<8x8x32xbf16> to vector<64x32xbf16>
    %c1_46 = arith.constant 1 : index
    %c0_47 = arith.constant 0 : index
    %c0_48 = arith.constant 0 : index
    %c0_49 = arith.constant 0 : index
    %43 = vector.load %arg3[%c1_46, %c0_47, %c0_48, %c0_49] : memref<4x4x32x128xbf16, #tpu.memory_space<vmem>>, vector<1x1x32x128xbf16>
    %44 = vector.shape_cast %43 : vector<1x1x32x128xbf16> to vector<32x128xbf16>
    %cst_50 = arith.constant dense<0.000000e+00> : vector<64x128xf32>
    %45 = tpu.matmul %42, %44, %cst_50 {dimension_numbers = #tpu.dot_dimension_numbers<[1], [0], [0], [1], [0, 0, 1, 1], [], []>} : vector<64x32xbf16>, vector<32x128xbf16>, vector<64x128xf32> -> vector<64x128xf32>
    %46 = arith.addf %39, %45 : vector<64x128xf32>
    %c0_51 = arith.constant 0 : index
    %c0_52 = arith.constant 0 : index
    %c2_53 = arith.constant 2 : index
    %c0_54 = arith.constant 0 : index
    %47 = vector.load %arg2[%c0_51, %c0_52, %c2_53, %c0_54] : memref<1x10x10x32xbf16, #tpu.memory_space<vmem>>, vector<1x8x8x32xbf16>
    %48 = vector.shape_cast %47 : vector<1x8x8x32xbf16> to vector<8x8x32xbf16>
    %49 = vector.shape_cast %48 : vector<8x8x32xbf16> to vector<64x32xbf16>
    %c1_55 = arith.constant 1 : index
    %c1_56 = arith.constant 1 : index
    %c0_57 = arith.constant 0 : index
    %c0_58 = arith.constant 0 : index
    %50 = vector.load %arg3[%c1_55, %c1_56, %c0_57, %c0_58] : memref<4x4x32x128xbf16, #tpu.memory_space<vmem>>, vector<1x1x32x128xbf16>
    %51 = vector.shape_cast %50 : vector<1x1x32x128xbf16> to vector<32x128xbf16>
    %cst_59 = arith.constant dense<0.000000e+00> : vector<64x128xf32>
    %52 = tpu.matmul %49, %51, %cst_59 {dimension_numbers = #tpu.dot_dimension_numbers<[1], [0], [0], [1], [0, 0, 1, 1], [], []>} : vector<64x32xbf16>, vector<32x128xbf16>, vector<64x128xf32> -> vector<64x128xf32>
    %53 = arith.addf %46, %52 : vector<64x128xf32>
    %c0_60 = arith.constant 0 : index
    %c1_61 = arith.constant 1 : index
    %c1_62 = arith.constant 1 : index
    %c0_63 = arith.constant 0 : index
    %54 = vector.load %arg2[%c0_60, %c1_61, %c1_62, %c0_63] : memref<1x10x10x32xbf16, #tpu.memory_space<vmem>>, vector<1x8x8x32xbf16>
    %55 = vector.shape_cast %54 : vector<1x8x8x32xbf16> to vector<8x8x32xbf16>
    %56 = vector.shape_cast %55 : vector<8x8x32xbf16> to vector<64x32xbf16>
    %c1_64 = arith.constant 1 : index
    %c2_65 = arith.constant 2 : index
    %c0_66 = arith.constant 0 : index
    %c0_67 = arith.constant 0 : index
    %57 = vector.load %arg3[%c1_64, %c2_65, %c0_66, %c0_67] : memref<4x4x32x128xbf16, #tpu.memory_space<vmem>>, vector<1x1x32x128xbf16>
    %58 = vector.shape_cast %57 : vector<1x1x32x128xbf16> to vector<32x128xbf16>
    %cst_68 = arith.constant dense<0.000000e+00> : vector<64x128xf32>
    %59 = tpu.matmul %56, %58, %cst_68 {dimension_numbers = #tpu.dot_dimension_numbers<[1], [0], [0], [1], [0, 0, 1, 1], [], []>} : vector<64x32xbf16>, vector<32x128xbf16>, vector<64x128xf32> -> vector<64x128xf32>
    %60 = arith.addf %53, %59 : vector<64x128xf32>
    %c0_69 = arith.constant 0 : index
    %c1_70 = arith.constant 1 : index
    %c2_71 = arith.constant 2 : index
    %c0_72 = arith.constant 0 : index
    %61 = vector.load %arg2[%c0_69, %c1_70, %c2_71, %c0_72] : memref<1x10x10x32xbf16, #tpu.memory_space<vmem>>, vector<1x8x8x32xbf16>
    %62 = vector.shape_cast %61 : vector<1x8x8x32xbf16> to vector<8x8x32xbf16>
    %63 = vector.shape_cast %62 : vector<8x8x32xbf16> to vector<64x32xbf16>
    %c1_73 = arith.constant 1 : index
    %c3_74 = arith.constant 3 : index
    %c0_75 = arith.constant 0 : index
    %c0_76 = arith.constant 0 : index
    %64 = vector.load %arg3[%c1_73, %c3_74, %c0_75, %c0_76] : memref<4x4x32x128xbf16, #tpu.memory_space<vmem>>, vector<1x1x32x128xbf16>
    %65 = vector.shape_cast %64 : vector<1x1x32x128xbf16> to vector<32x128xbf16>
    %cst_77 = arith.constant dense<0.000000e+00> : vector<64x128xf32>
    %66 = tpu.matmul %63, %65, %cst_77 {dimension_numbers = #tpu.dot_dimension_numbers<[1], [0], [0], [1], [0, 0, 1, 1], [], []>} : vector<64x32xbf16>, vector<32x128xbf16>, vector<64x128xf32> -> vector<64x128xf32>
    %67 = arith.addf %60, %66 : vector<64x128xf32>
    %c1_78 = arith.constant 1 : index
    %c0_79 = arith.constant 0 : index
    %c0_80 = arith.constant 0 : index
    %c0_81 = arith.constant 0 : index
    %68 = vector.load %arg6[%c1_78, %c0_79, %c0_80, %c0_81] : memref<4x8x8x128xf32, #tpu.memory_space<vmem>>, vector<1x8x8x128xf32>
    %69 = vector.shape_cast %68 : vector<1x8x8x128xf32> to vector<8x8x128xf32>
    %70 = vector.shape_cast %67 : vector<64x128xf32> to vector<8x8x128xf32>
    %71 = arith.addf %69, %70 : vector<8x8x128xf32>
    %c1_82 = arith.constant 1 : index
    %c0_83 = arith.constant 0 : index
    %c0_84 = arith.constant 0 : index
    %c0_85 = arith.constant 0 : index
    %72 = vector.load %arg6[%c1_82, %c0_83, %c0_84, %c0_85] : memref<4x8x8x128xf32, #tpu.memory_space<vmem>>, vector<1x8x8x128xf32>
    %73 = vector.shape_cast %72 : vector<1x8x8x128xf32> to vector<8x8x128xf32>
    %74 = vector.shape_cast %71 : vector<8x8x128xf32> to vector<1x8x8x128xf32>
    tpu.vector_store %arg6[%c1_82, %c0_83, %c0_84, %c0_85], %74 {strides = array<i32>} : memref<4x8x8x128xf32, #tpu.memory_space<vmem>>, vector<1x8x8x128xf32>,
    %cst_86 = arith.constant 0.000000e+00 : f32
    %75 = vector.broadcast %cst_86 : f32 to vector<64x128xf32>
    %c0_87 = arith.constant 0 : index
    %c1_88 = arith.constant 1 : index
    %c0_89 = arith.constant 0 : index
    %c0_90 = arith.constant 0 : index
    %76 = vector.load %arg2[%c0_87, %c1_88, %c0_89, %c0_90] : memref<1x10x10x32xbf16, #tpu.memory_space<vmem>>, vector<1x8x8x32xbf16>
    %77 = vector.shape_cast %76 : vector<1x8x8x32xbf16> to vector<8x8x32xbf16>
    %78 = vector.shape_cast %77 : vector<8x8x32xbf16> to vector<64x32xbf16>
    %c2_91 = arith.constant 2 : index
    %c0_92 = arith.constant 0 : index
    %c0_93 = arith.constant 0 : index
    %c0_94 = arith.constant 0 : index
    %79 = vector.load %arg3[%c2_91, %c0_92, %c0_93, %c0_94] : memref<4x4x32x128xbf16, #tpu.memory_space<vmem>>, vector<1x1x32x128xbf16>
    %80 = vector.shape_cast %79 : vector<1x1x32x128xbf16> to vector<32x128xbf16>
    %cst_95 = arith.constant dense<0.000000e+00> : vector<64x128xf32>
    %81 = tpu.matmul %78, %80, %cst_95 {dimension_numbers = #tpu.dot_dimension_numbers<[1], [0], [0], [1], [0, 0, 1, 1], [], []>} : vector<64x32xbf16>, vector<32x128xbf16>, vector<64x128xf32> -> vector<64x128xf32>
    %82 = arith.addf %75, %81 : vector<64x128xf32>
    %c0_96 = arith.constant 0 : index
    %c1_97 = arith.constant 1 : index
    %c1_98 = arith.constant 1 : index
    %c0_99 = arith.constant 0 : index
    %83 = vector.load %arg2[%c0_96, %c1_97, %c1_98, %c0_99] : memref<1x10x10x32xbf16, #tpu.memory_space<vmem>>, vector<1x8x8x32xbf16>
    %84 = vector.shape_cast %83 : vector<1x8x8x32xbf16> to vector<8x8x32xbf16>
    %85 = vector.shape_cast %84 : vector<8x8x32xbf16> to vector<64x32xbf16>
    %c2_100 = arith.constant 2 : index
    %c1_101 = arith.constant 1 : index
    %c0_102 = arith.constant 0 : index
    %c0_103 = arith.constant 0 : index
    %86 = vector.load %arg3[%c2_100, %c1_101, %c0_102, %c0_103] : memref<4x4x32x128xbf16, #tpu.memory_space<vmem>>, vector<1x1x32x128xbf16>
    %87 = vector.shape_cast %86 : vector<1x1x32x128xbf16> to vector<32x128xbf16>
    %cst_104 = arith.constant dense<0.000000e+00> : vector<64x128xf32>
    %88 = tpu.matmul %85, %87, %cst_104 {dimension_numbers = #tpu.dot_dimension_numbers<[1], [0], [0], [1], [0, 0, 1, 1], [], []>} : vector<64x32xbf16>, vector<32x128xbf16>, vector<64x128xf32> -> vector<64x128xf32>
    %89 = arith.addf %82, %88 : vector<64x128xf32>
    %c0_105 = arith.constant 0 : index
    %c2_106 = arith.constant 2 : index
    %c0_107 = arith.constant 0 : index
    %c0_108 = arith.constant 0 : index
    %90 = vector.load %arg2[%c0_105, %c2_106, %c0_107, %c0_108] : memref<1x10x10x32xbf16, #tpu.memory_space<vmem>>, vector<1x8x8x32xbf16>
    %91 = vector.shape_cast %90 : vector<1x8x8x32xbf16> to vector<8x8x32xbf16>
    %92 = vector.shape_cast %91 : vector<8x8x32xbf16> to vector<64x32xbf16>
    %c2_109 = arith.constant 2 : index
    %c2_110 = arith.constant 2 : index
    %c0_111 = arith.constant 0 : index
    %c0_112 = arith.constant 0 : index
    %93 = vector.load %arg3[%c2_109, %c2_110, %c0_111, %c0_112] : memref<4x4x32x128xbf16, #tpu.memory_space<vmem>>, vector<1x1x32x128xbf16>
    %94 = vector.shape_cast %93 : vector<1x1x32x128xbf16> to vector<32x128xbf16>
    %cst_113 = arith.constant dense<0.000000e+00> : vector<64x128xf32>
    %95 = tpu.matmul %92, %94, %cst_113 {dimension_numbers = #tpu.dot_dimension_numbers<[1], [0], [0], [1], [0, 0, 1, 1], [], []>} : vector<64x32xbf16>, vector<32x128xbf16>, vector<64x128xf32> -> vector<64x128xf32>
    %96 = arith.addf %89, %95 : vector<64x128xf32>
    %c0_114 = arith.constant 0 : index
    %c2_115 = arith.constant 2 : index
    %c1_116 = arith.constant 1 : index
    %c0_117 = arith.constant 0 : index
    %97 = vector.load %arg2[%c0_114, %c2_115, %c1_116, %c0_117] : memref<1x10x10x32xbf16, #tpu.memory_space<vmem>>, vector<1x8x8x32xbf16>
    %98 = vector.shape_cast %97 : vector<1x8x8x32xbf16> to vector<8x8x32xbf16>
    %99 = vector.shape_cast %98 : vector<8x8x32xbf16> to vector<64x32xbf16>
    %c2_118 = arith.constant 2 : index
    %c3_119 = arith.constant 3 : index
    %c0_120 = arith.constant 0 : index
    %c0_121 = arith.constant 0 : index
    %100 = vector.load %arg3[%c2_118, %c3_119, %c0_120, %c0_121] : memref<4x4x32x128xbf16, #tpu.memory_space<vmem>>, vector<1x1x32x128xbf16>
    %101 = vector.shape_cast %100 : vector<1x1x32x128xbf16> to vector<32x128xbf16>
    %cst_122 = arith.constant dense<0.000000e+00> : vector<64x128xf32>
    %102 = tpu.matmul %99, %101, %cst_122 {dimension_numbers = #tpu.dot_dimension_numbers<[1], [0], [0], [1], [0, 0, 1, 1], [], []>} : vector<64x32xbf16>, vector<32x128xbf16>, vector<64x128xf32> -> vector<64x128xf32>
    %103 = arith.addf %96, %102 : vector<64x128xf32>
    %c2_123 = arith.constant 2 : index
    %c0_124 = arith.constant 0 : index
    %c0_125 = arith.constant 0 : index
    %c0_126 = arith.constant 0 : index
    %104 = vector.load %arg6[%c2_123, %c0_124, %c0_125, %c0_126] : memref<4x8x8x128xf32, #tpu.memory_space<vmem>>, vector<1x8x8x128xf32>
    %105 = vector.shape_cast %104 : vector<1x8x8x128xf32> to vector<8x8x128xf32>
    %106 = vector.shape_cast %103 : vector<64x128xf32> to vector<8x8x128xf32>
    %107 = arith.addf %105, %106 : vector<8x8x128xf32>
    %c2_127 = arith.constant 2 : index
    %c0_128 = arith.constant 0 : index
    %c0_129 = arith.constant 0 : index
    %c0_130 = arith.constant 0 : index
    %108 = vector.load %arg6[%c2_127, %c0_128, %c0_129, %c0_130] : memref<4x8x8x128xf32, #tpu.memory_space<vmem>>, vector<1x8x8x128xf32>
    %109 = vector.shape_cast %108 : vector<1x8x8x128xf32> to vector<8x8x128xf32>
    %110 = vector.shape_cast %107 : vector<8x8x128xf32> to vector<1x8x8x128xf32>
    tpu.vector_store %arg6[%c2_127, %c0_128, %c0_129, %c0_130], %110 {strides = array<i32>} : memref<4x8x8x128xf32, #tpu.memory_space<vmem>>, vector<1x8x8x128xf32>,
    %cst_131 = arith.constant 0.000000e+00 : f32
    %111 = vector.broadcast %cst_131 : f32 to vector<64x128xf32>
    %c0_132 = arith.constant 0 : index
    %c1_133 = arith.constant 1 : index
    %c1_134 = arith.constant 1 : index
    %c0_135 = arith.constant 0 : index
    %112 = vector.load %arg2[%c0_132, %c1_133, %c1_134, %c0_135] : memref<1x10x10x32xbf16, #tpu.memory_space<vmem>>, vector<1x8x8x32xbf16>
    %113 = vector.shape_cast %112 : vector<1x8x8x32xbf16> to vector<8x8x32xbf16>
    %114 = vector.shape_cast %113 : vector<8x8x32xbf16> to vector<64x32xbf16>
    %c3_136 = arith.constant 3 : index
    %c0_137 = arith.constant 0 : index
    %c0_138 = arith.constant 0 : index
    %c0_139 = arith.constant 0 : index
    %115 = vector.load %arg3[%c3_136, %c0_137, %c0_138, %c0_139] : memref<4x4x32x128xbf16, #tpu.memory_space<vmem>>, vector<1x1x32x128xbf16>
    %116 = vector.shape_cast %115 : vector<1x1x32x128xbf16> to vector<32x128xbf16>
    %cst_140 = arith.constant dense<0.000000e+00> : vector<64x128xf32>
    %117 = tpu.matmul %114, %116, %cst_140 {dimension_numbers = #tpu.dot_dimension_numbers<[1], [0], [0], [1], [0, 0, 1, 1], [], []>} : vector<64x32xbf16>, vector<32x128xbf16>, vector<64x128xf32> -> vector<64x128xf32>
    %118 = arith.addf %111, %117 : vector<64x128xf32>
    %c0_141 = arith.constant 0 : index
    %c1_142 = arith.constant 1 : index
    %c2_143 = arith.constant 2 : index
    %c0_144 = arith.constant 0 : index
    %119 = vector.load %arg2[%c0_141, %c1_142, %c2_143, %c0_144] : memref<1x10x10x32xbf16, #tpu.memory_space<vmem>>, vector<1x8x8x32xbf16>
    %120 = vector.shape_cast %119 : vector<1x8x8x32xbf16> to vector<8x8x32xbf16>
    %121 = vector.shape_cast %120 : vector<8x8x32xbf16> to vector<64x32xbf16>
    %c3_145 = arith.constant 3 : index
    %c1_146 = arith.constant 1 : index
    %c0_147 = arith.constant 0 : index
    %c0_148 = arith.constant 0 : index
    %122 = vector.load %arg3[%c3_145, %c1_146, %c0_147, %c0_148] : memref<4x4x32x128xbf16, #tpu.memory_space<vmem>>, vector<1x1x32x128xbf16>
    %123 = vector.shape_cast %122 : vector<1x1x32x128xbf16> to vector<32x128xbf16>
    %cst_149 = arith.constant dense<0.000000e+00> : vector<64x128xf32>
    %124 = tpu.matmul %121, %123, %cst_149 {dimension_numbers = #tpu.dot_dimension_numbers<[1], [0], [0], [1], [0, 0, 1, 1], [], []>} : vector<64x32xbf16>, vector<32x128xbf16>, vector<64x128xf32> -> vector<64x128xf32>
    %125 = arith.addf %118, %124 : vector<64x128xf32>
    %c0_150 = arith.constant 0 : index
    %c2_151 = arith.constant 2 : index
    %c1_152 = arith.constant 1 : index
    %c0_153 = arith.constant 0 : index
    %126 = vector.load %arg2[%c0_150, %c2_151, %c1_152, %c0_153] : memref<1x10x10x32xbf16, #tpu.memory_space<vmem>>, vector<1x8x8x32xbf16>
    %127 = vector.shape_cast %126 : vector<1x8x8x32xbf16> to vector<8x8x32xbf16>
    %128 = vector.shape_cast %127 : vector<8x8x32xbf16> to vector<64x32xbf16>
    %c3_154 = arith.constant 3 : index
    %c2_155 = arith.constant 2 : index
    %c0_156 = arith.constant 0 : index
    %c0_157 = arith.constant 0 : index
    %129 = vector.load %arg3[%c3_154, %c2_155, %c0_156, %c0_157] : memref<4x4x32x128xbf16, #tpu.memory_space<vmem>>, vector<1x1x32x128xbf16>
    %130 = vector.shape_cast %129 : vector<1x1x32x128xbf16> to vector<32x128xbf16>
    %cst_158 = arith.constant dense<0.000000e+00> : vector<64x128xf32>
    %131 = tpu.matmul %128, %130, %cst_158 {dimension_numbers = #tpu.dot_dimension_numbers<[1], [0], [0], [1], [0, 0, 1, 1], [], []>} : vector<64x32xbf16>, vector<32x128xbf16>, vector<64x128xf32> -> vector<64x128xf32>
    %132 = arith.addf %125, %131 : vector<64x128xf32>
    %c0_159 = arith.constant 0 : index
    %c2_160 = arith.constant 2 : index
    %c2_161 = arith.constant 2 : index
    %c0_162 = arith.constant 0 : index
    %133 = vector.load %arg2[%c0_159, %c2_160, %c2_161, %c0_162] : memref<1x10x10x32xbf16, #tpu.memory_space<vmem>>, vector<1x8x8x32xbf16>
    %134 = vector.shape_cast %133 : vector<1x8x8x32xbf16> to vector<8x8x32xbf16>
    %135 = vector.shape_cast %134 : vector<8x8x32xbf16> to vector<64x32xbf16>
    %c3_163 = arith.constant 3 : index
    %c3_164 = arith.constant 3 : index
    %c0_165 = arith.constant 0 : index
    %c0_166 = arith.constant 0 : index
    %136 = vector.load %arg3[%c3_163, %c3_164, %c0_165, %c0_166] : memref<4x4x32x128xbf16, #tpu.memory_space<vmem>>, vector<1x1x32x128xbf16>
    %137 = vector.shape_cast %136 : vector<1x1x32x128xbf16> to vector<32x128xbf16>
    %cst_167 = arith.constant dense<0.000000e+00> : vector<64x128xf32>
    %138 = tpu.matmul %135, %137, %cst_167 {dimension_numbers = #tpu.dot_dimension_numbers<[1], [0], [0], [1], [0, 0, 1, 1], [], []>} : vector<64x32xbf16>, vector<32x128xbf16>, vector<64x128xf32> -> vector<64x128xf32>
    %139 = arith.addf %132, %138 : vector<64x128xf32>
    %c3_168 = arith.constant 3 : index
    %c0_169 = arith.constant 0 : index
    %c0_170 = arith.constant 0 : index
    %c0_171 = arith.constant 0 : index
    %140 = vector.load %arg6[%c3_168, %c0_169, %c0_170, %c0_171] : memref<4x8x8x128xf32, #tpu.memory_space<vmem>>, vector<1x8x8x128xf32>
    %141 = vector.shape_cast %140 : vector<1x8x8x128xf32> to vector<8x8x128xf32>
    %142 = vector.shape_cast %139 : vector<64x128xf32> to vector<8x8x128xf32>
    %143 = arith.addf %141, %142 : vector<8x8x128xf32>
    %c3_172 = arith.constant 3 : index
    %c0_173 = arith.constant 0 : index
    %c0_174 = arith.constant 0 : index
    %c0_175 = arith.constant 0 : index
    %144 = vector.load %arg6[%c3_172, %c0_173, %c0_174, %c0_175] : memref<4x8x8x128xf32, #tpu.memory_space<vmem>>, vector<1x8x8x128xf32>
    %145 = vector.shape_cast %144 : vector<1x8x8x128xf32> to vector<8x8x128xf32>
    %146 = vector.shape_cast %143 : vector<8x8x128xf32> to vector<1x8x8x128xf32>
    tpu.vector_store %arg6[%c3_172, %c0_173, %c0_174, %c0_175], %146 {strides = array<i32>} : memref<4x8x8x128xf32, #tpu.memory_space<vmem>>, vector<1x8x8x128xf32>,
    %c0_i32_176 = arith.constant 0 : i32
    %147 = arith.cmpi eq, %arg1, %c0_i32_176 : i32
    %148 = arith.extui %147 : i1 to i32
    %c0_i32_177 = arith.constant 0 : i32
    %149 = arith.cmpi ne, %148, %c0_i32_177 : i32
    scf.if %149 {
      %c0_178 = arith.constant 0 : index
      %c0_179 = arith.constant 0 : index
      %150 = vector.load %arg4[%c0_178, %c0_179] : memref<1x128xf32, #tpu.memory_space<vmem>>, vector<1x128xf32>
      %c0_180 = arith.constant 0 : index
      %c0_181 = arith.constant 0 : index
      %c0_182 = arith.constant 0 : index
      %c0_183 = arith.constant 0 : index
      %151 = vector.load %arg6[%c0_180, %c0_181, %c0_182, %c0_183] : memref<4x8x8x128xf32, #tpu.memory_space<vmem>>, vector<1x8x8x128xf32>
      %152 = vector.shape_cast %151 : vector<1x8x8x128xf32> to vector<8x8x128xf32>
      %153 = vector.shape_cast %150 : vector<1x128xf32> to vector<1x1x128xf32>
      %154 = vector.broadcast %153 : vector<1x1x128xf32> to vector<8x8x128xf32>
      %155 = arith.addf %152, %154 : vector<8x8x128xf32>
      %156 = arith.truncf %155 : vector<8x8x128xf32> to vector<8x8x128xbf16>
      %c0_184 = arith.constant 0 : index
      %c0_185 = arith.constant 0 : index
      %c0_186 = arith.constant 0 : index
      %c0_187 = arith.constant 0 : index
      %c0_188 = arith.constant 0 : index
      %157 = vector.load %arg5[%c0_184, %c0_185, %c0_186, %c0_187, %c0_188] : memref<1x8x2x8x256xbf16, #tpu.memory_space<vmem>>, vector<1x8x1x8x128xbf16>
      %158 = vector.shape_cast %157 : vector<1x8x1x8x128xbf16> to vector<8x8x128xbf16>
      %159 = vector.shape_cast %156 : vector<8x8x128xbf16> to vector<1x8x1x8x128xbf16>
      tpu.vector_store %arg5[%c0_184, %c0_185, %c0_186, %c0_187, %c0_188], %159 {strides = array<i32>} : memref<1x8x2x8x256xbf16, #tpu.memory_space<vmem>>, vector<1x8x1x8x128xbf16>,
      %c1_189 = arith.constant 1 : index
      %c0_190 = arith.constant 0 : index
      %c0_191 = arith.constant 0 : index
      %c0_192 = arith.constant 0 : index
      %160 = vector.load %arg6[%c1_189, %c0_190, %c0_191, %c0_192] : memref<4x8x8x128xf32, #tpu.memory_space<vmem>>, vector<1x8x8x128xf32>
      %161 = vector.shape_cast %160 : vector<1x8x8x128xf32> to vector<8x8x128xf32>
      %162 = vector.shape_cast %150 : vector<1x128xf32> to vector<1x1x128xf32>
      %163 = vector.broadcast %162 : vector<1x1x128xf32> to vector<8x8x128xf32>
      %164 = arith.addf %161, %163 : vector<8x8x128xf32>
      %165 = arith.truncf %164 : vector<8x8x128xf32> to vector<8x8x128xbf16>
      %c0_193 = arith.constant 0 : index
      %c0_194 = arith.constant 0 : index
      %c0_195 = arith.constant 0 : index
      %c0_196 = arith.constant 0 : index
      %c128 = arith.constant 128 : index
      %166 = vector.load %arg5[%c0_193, %c0_194, %c0_195, %c0_196, %c128] : memref<1x8x2x8x256xbf16, #tpu.memory_space<vmem>>, vector<1x8x1x8x128xbf16>
      %167 = vector.shape_cast %166 : vector<1x8x1x8x128xbf16> to vector<8x8x128xbf16>
      %168 = vector.shape_cast %165 : vector<8x8x128xbf16> to vector<1x8x1x8x128xbf16>
      tpu.vector_store %arg5[%c0_193, %c0_194, %c0_195, %c0_196, %c128], %168 {strides = array<i32>} : memref<1x8x2x8x256xbf16, #tpu.memory_space<vmem>>, vector<1x8x1x8x128xbf16>,
      %c2_197 = arith.constant 2 : index
      %c0_198 = arith.constant 0 : index
      %c0_199 = arith.constant 0 : index
      %c0_200 = arith.constant 0 : index
      %169 = vector.load %arg6[%c2_197, %c0_198, %c0_199, %c0_200] : memref<4x8x8x128xf32, #tpu.memory_space<vmem>>, vector<1x8x8x128xf32>
      %170 = vector.shape_cast %169 : vector<1x8x8x128xf32> to vector<8x8x128xf32>
      %171 = vector.shape_cast %150 : vector<1x128xf32> to vector<1x1x128xf32>
      %172 = vector.broadcast %171 : vector<1x1x128xf32> to vector<8x8x128xf32>
      %173 = arith.addf %170, %172 : vector<8x8x128xf32>
      %174 = arith.truncf %173 : vector<8x8x128xf32> to vector<8x8x128xbf16>
      %c0_201 = arith.constant 0 : index
      %c0_202 = arith.constant 0 : index
      %c1_203 = arith.constant 1 : index
      %c0_204 = arith.constant 0 : index
      %c0_205 = arith.constant 0 : index
      %175 = vector.load %arg5[%c0_201, %c0_202, %c1_203, %c0_204, %c0_205] : memref<1x8x2x8x256xbf16, #tpu.memory_space<vmem>>, vector<1x8x1x8x128xbf16>
      %176 = vector.shape_cast %175 : vector<1x8x1x8x128xbf16> to vector<8x8x128xbf16>
      %177 = vector.shape_cast %174 : vector<8x8x128xbf16> to vector<1x8x1x8x128xbf16>
      tpu.vector_store %arg5[%c0_201, %c0_202, %c1_203, %c0_204, %c0_205], %177 {strides = array<i32>} : memref<1x8x2x8x256xbf16, #tpu.memory_space<vmem>>, vector<1x8x1x8x128xbf16>,
      %c3_206 = arith.constant 3 : index
      %c0_207 = arith.constant 0 : index
      %c0_208 = arith.constant 0 : index
      %c0_209 = arith.constant 0 : index
      %178 = vector.load %arg6[%c3_206, %c0_207, %c0_208, %c0_209] : memref<4x8x8x128xf32, #tpu.memory_space<vmem>>, vector<1x8x8x128xf32>
      %179 = vector.shape_cast %178 : vector<1x8x8x128xf32> to vector<8x8x128xf32>
      %180 = vector.shape_cast %150 : vector<1x128xf32> to vector<1x1x128xf32>
      %181 = vector.broadcast %180 : vector<1x1x128xf32> to vector<8x8x128xf32>
      %182 = arith.addf %179, %181 : vector<8x8x128xf32>
      %183 = arith.truncf %182 : vector<8x8x128xf32> to vector<8x8x128xbf16>
      %c0_210 = arith.constant 0 : index
      %c0_211 = arith.constant 0 : index
      %c1_212 = arith.constant 1 : index
      %c0_213 = arith.constant 0 : index
      %c128_214 = arith.constant 128 : index
      %184 = vector.load %arg5[%c0_210, %c0_211, %c1_212, %c0_213, %c128_214] : memref<1x8x2x8x256xbf16, #tpu.memory_space<vmem>>, vector<1x8x1x8x128xbf16>
      %185 = vector.shape_cast %184 : vector<1x8x1x8x128xbf16> to vector<8x8x128xbf16>
      %186 = vector.shape_cast %183 : vector<8x8x128xbf16> to vector<1x8x1x8x128xbf16>
      tpu.vector_store %arg5[%c0_210, %c0_211, %c1_212, %c0_213, %c128_214], %186 {strides = array<i32>} : memref<1x8x2x8x256xbf16, #tpu.memory_space<vmem>>, vector<1x8x1x8x128xbf16>,
    } else {
    }
    return
  }
  func.func @transform_0(%arg0: i32, %arg1: i32) -> (i32, i32, i32, i32) {
    %c0_i32 = arith.constant 0 : i32
    %c0_i32_0 = arith.constant 0 : i32
    %c0_i32_1 = arith.constant 0 : i32
    return %arg0, %c0_i32, %c0_i32_0, %arg1 : i32, i32, i32, i32
  }
  func.func @transform_1(%arg0: i32, %arg1: i32) -> (i32, i32, i32, i32) {
    %c0_i32 = arith.constant 0 : i32
    %c0_i32_0 = arith.constant 0 : i32
    %c0_i32_1 = arith.constant 0 : i32
    %c0_i32_2 = arith.constant 0 : i32
    return %c0_i32, %c0_i32_0, %arg1, %c0_i32_1 : i32, i32, i32, i32
  }
  func.func @transform_2(%arg0: i32, %arg1: i32) -> (i32, i32) {
    %c0_i32 = arith.constant 0 : i32
    %c0_i32_0 = arith.constant 0 : i32
    %c0_i32_1 = arith.constant 0 : i32
    return %c0_i32, %c0_i32_0 : i32, i32
  }
  func.func @transform_3(%arg0: i32, %arg1: i32) -> (i32, i32, i32, i32, i32) {
    %c0_i32 = arith.constant 0 : i32
    %c0_i32_0 = arith.constant 0 : i32
    %c0_i32_1 = arith.constant 0 : i32
    %c0_i32_2 = arith.constant 0 : i32
    %c0_i32_3 = arith.constant 0 : i32
    return %arg0, %c0_i32, %c0_i32_0, %c0_i32_1, %c0_i32_2 : i32, i32, i32, i32, i32
  }
}

module attributes {stable_mosaic.version = 11 : i64} {
  func.func @_upconv_kernel(%arg0: i32, %arg1: i32, %arg2: memref<1x18x18x128xbf16, #tpu.memory_space<vmem>>, %arg3: memref<4x4x128x128xbf16, #tpu.memory_space<vmem>>, %arg4: memref<1x128xf32, #tpu.memory_space<vmem>>, %arg5: memref<1x16x2x16x256xf32, #tpu.memory_space<vmem>>, %arg6: memref<4x16x16x128xf32, #tpu.memory_space<vmem>>) attributes {dimension_semantics = [#tpu.dimension_semantics<parallel>, #tpu.dimension_semantics<arbitrary>], iteration_bounds = array<i64: 2, 1>, scalar_prefetch = 0 : i64, scratch_operands = 1 : i64, tpu.core_type = #tpu.core_type<tc>, window_params = [{transform_indices = @transform_0, window_bounds = array<i64: 1, 18, 18, 128>}, {transform_indices = @transform_1, window_bounds = array<i64: 4, 4, 128, 128>}, {pipeline_mode = #tpu.pipeline_mode<synchronous>, transform_indices = @transform_2, window_bounds = array<i64: 1, 128>}, {transform_indices = @transform_3, window_bounds = array<i64: 1, 16, 2, 16, 256>}]} {
    %c0_i32 = arith.constant 0 : i32
    %0 = arith.cmpi eq, %arg1, %c0_i32 : i32
    %1 = arith.extui %0 : i1 to i32
    %c0_i32_0 = arith.constant 0 : i32
    %2 = arith.cmpi ne, %1, %c0_i32_0 : i32
    scf.if %2 {
      %cst_178 = arith.constant 0.000000e+00 : f32
      %150 = vector.broadcast %cst_178 : f32 to vector<4x16x16x128xf32>
      %c0_179 = arith.constant 0 : index
      %c0_180 = arith.constant 0 : index
      %c0_181 = arith.constant 0 : index
      %c0_182 = arith.constant 0 : index
      %151 = vector.load %arg6[%c0_179, %c0_180, %c0_181, %c0_182] : memref<4x16x16x128xf32, #tpu.memory_space<vmem>>, vector<4x16x16x128xf32>
      tpu.vector_store %arg6[%c0_179, %c0_180, %c0_181, %c0_182], %150 {strides = array<i32>} : memref<4x16x16x128xf32, #tpu.memory_space<vmem>>, vector<4x16x16x128xf32>,
    } else {
    }
    %cst = arith.constant 0.000000e+00 : f32
    %3 = vector.broadcast %cst : f32 to vector<256x128xf32>
    %c0 = arith.constant 0 : index
    %c0_1 = arith.constant 0 : index
    %c0_2 = arith.constant 0 : index
    %c0_3 = arith.constant 0 : index
    %4 = vector.load %arg2[%c0, %c0_1, %c0_2, %c0_3] : memref<1x18x18x128xbf16, #tpu.memory_space<vmem>>, vector<1x16x16x128xbf16>
    %5 = vector.shape_cast %4 : vector<1x16x16x128xbf16> to vector<16x16x128xbf16>
    %6 = vector.shape_cast %5 : vector<16x16x128xbf16> to vector<256x128xbf16>
    %c0_4 = arith.constant 0 : index
    %c0_5 = arith.constant 0 : index
    %c0_6 = arith.constant 0 : index
    %c0_7 = arith.constant 0 : index
    %7 = vector.load %arg3[%c0_4, %c0_5, %c0_6, %c0_7] : memref<4x4x128x128xbf16, #tpu.memory_space<vmem>>, vector<1x1x128x128xbf16>
    %8 = vector.shape_cast %7 : vector<1x1x128x128xbf16> to vector<128x128xbf16>
    %cst_8 = arith.constant dense<0.000000e+00> : vector<256x128xf32>
    %9 = tpu.matmul %6, %8, %cst_8 {dimension_numbers = #tpu.dot_dimension_numbers<[1], [0], [0], [1], [0, 0, 1, 1], [], []>} : vector<256x128xbf16>, vector<128x128xbf16>, vector<256x128xf32> -> vector<256x128xf32>
    %10 = arith.addf %3, %9 : vector<256x128xf32>
    %c0_9 = arith.constant 0 : index
    %c0_10 = arith.constant 0 : index
    %c1 = arith.constant 1 : index
    %c0_11 = arith.constant 0 : index
    %11 = vector.load %arg2[%c0_9, %c0_10, %c1, %c0_11] : memref<1x18x18x128xbf16, #tpu.memory_space<vmem>>, vector<1x16x16x128xbf16>
    %12 = vector.shape_cast %11 : vector<1x16x16x128xbf16> to vector<16x16x128xbf16>
    %13 = vector.shape_cast %12 : vector<16x16x128xbf16> to vector<256x128xbf16>
    %c0_12 = arith.constant 0 : index
    %c1_13 = arith.constant 1 : index
    %c0_14 = arith.constant 0 : index
    %c0_15 = arith.constant 0 : index
    %14 = vector.load %arg3[%c0_12, %c1_13, %c0_14, %c0_15] : memref<4x4x128x128xbf16, #tpu.memory_space<vmem>>, vector<1x1x128x128xbf16>
    %15 = vector.shape_cast %14 : vector<1x1x128x128xbf16> to vector<128x128xbf16>
    %cst_16 = arith.constant dense<0.000000e+00> : vector<256x128xf32>
    %16 = tpu.matmul %13, %15, %cst_16 {dimension_numbers = #tpu.dot_dimension_numbers<[1], [0], [0], [1], [0, 0, 1, 1], [], []>} : vector<256x128xbf16>, vector<128x128xbf16>, vector<256x128xf32> -> vector<256x128xf32>
    %17 = arith.addf %10, %16 : vector<256x128xf32>
    %c0_17 = arith.constant 0 : index
    %c1_18 = arith.constant 1 : index
    %c0_19 = arith.constant 0 : index
    %c0_20 = arith.constant 0 : index
    %18 = vector.load %arg2[%c0_17, %c1_18, %c0_19, %c0_20] : memref<1x18x18x128xbf16, #tpu.memory_space<vmem>>, vector<1x16x16x128xbf16>
    %19 = vector.shape_cast %18 : vector<1x16x16x128xbf16> to vector<16x16x128xbf16>
    %20 = vector.shape_cast %19 : vector<16x16x128xbf16> to vector<256x128xbf16>
    %c0_21 = arith.constant 0 : index
    %c2 = arith.constant 2 : index
    %c0_22 = arith.constant 0 : index
    %c0_23 = arith.constant 0 : index
    %21 = vector.load %arg3[%c0_21, %c2, %c0_22, %c0_23] : memref<4x4x128x128xbf16, #tpu.memory_space<vmem>>, vector<1x1x128x128xbf16>
    %22 = vector.shape_cast %21 : vector<1x1x128x128xbf16> to vector<128x128xbf16>
    %cst_24 = arith.constant dense<0.000000e+00> : vector<256x128xf32>
    %23 = tpu.matmul %20, %22, %cst_24 {dimension_numbers = #tpu.dot_dimension_numbers<[1], [0], [0], [1], [0, 0, 1, 1], [], []>} : vector<256x128xbf16>, vector<128x128xbf16>, vector<256x128xf32> -> vector<256x128xf32>
    %24 = arith.addf %17, %23 : vector<256x128xf32>
    %c0_25 = arith.constant 0 : index
    %c1_26 = arith.constant 1 : index
    %c1_27 = arith.constant 1 : index
    %c0_28 = arith.constant 0 : index
    %25 = vector.load %arg2[%c0_25, %c1_26, %c1_27, %c0_28] : memref<1x18x18x128xbf16, #tpu.memory_space<vmem>>, vector<1x16x16x128xbf16>
    %26 = vector.shape_cast %25 : vector<1x16x16x128xbf16> to vector<16x16x128xbf16>
    %27 = vector.shape_cast %26 : vector<16x16x128xbf16> to vector<256x128xbf16>
    %c0_29 = arith.constant 0 : index
    %c3 = arith.constant 3 : index
    %c0_30 = arith.constant 0 : index
    %c0_31 = arith.constant 0 : index
    %28 = vector.load %arg3[%c0_29, %c3, %c0_30, %c0_31] : memref<4x4x128x128xbf16, #tpu.memory_space<vmem>>, vector<1x1x128x128xbf16>
    %29 = vector.shape_cast %28 : vector<1x1x128x128xbf16> to vector<128x128xbf16>
    %cst_32 = arith.constant dense<0.000000e+00> : vector<256x128xf32>
    %30 = tpu.matmul %27, %29, %cst_32 {dimension_numbers = #tpu.dot_dimension_numbers<[1], [0], [0], [1], [0, 0, 1, 1], [], []>} : vector<256x128xbf16>, vector<128x128xbf16>, vector<256x128xf32> -> vector<256x128xf32>
    %31 = arith.addf %24, %30 : vector<256x128xf32>
    %c0_33 = arith.constant 0 : index
    %c0_34 = arith.constant 0 : index
    %c0_35 = arith.constant 0 : index
    %c0_36 = arith.constant 0 : index
    %32 = vector.load %arg6[%c0_33, %c0_34, %c0_35, %c0_36] : memref<4x16x16x128xf32, #tpu.memory_space<vmem>>, vector<1x16x16x128xf32>
    %33 = vector.shape_cast %32 : vector<1x16x16x128xf32> to vector<16x16x128xf32>
    %34 = vector.shape_cast %31 : vector<256x128xf32> to vector<16x16x128xf32>
    %35 = arith.addf %33, %34 : vector<16x16x128xf32>
    %c0_37 = arith.constant 0 : index
    %c0_38 = arith.constant 0 : index
    %c0_39 = arith.constant 0 : index
    %c0_40 = arith.constant 0 : index
    %36 = vector.load %arg6[%c0_37, %c0_38, %c0_39, %c0_40] : memref<4x16x16x128xf32, #tpu.memory_space<vmem>>, vector<1x16x16x128xf32>
    %37 = vector.shape_cast %36 : vector<1x16x16x128xf32> to vector<16x16x128xf32>
    %38 = vector.shape_cast %35 : vector<16x16x128xf32> to vector<1x16x16x128xf32>
    tpu.vector_store %arg6[%c0_37, %c0_38, %c0_39, %c0_40], %38 {strides = array<i32>} : memref<4x16x16x128xf32, #tpu.memory_space<vmem>>, vector<1x16x16x128xf32>,
    %cst_41 = arith.constant 0.000000e+00 : f32
    %39 = vector.broadcast %cst_41 : f32 to vector<256x128xf32>
    %c0_42 = arith.constant 0 : index
    %c0_43 = arith.constant 0 : index
    %c1_44 = arith.constant 1 : index
    %c0_45 = arith.constant 0 : index
    %40 = vector.load %arg2[%c0_42, %c0_43, %c1_44, %c0_45] : memref<1x18x18x128xbf16, #tpu.memory_space<vmem>>, vector<1x16x16x128xbf16>
    %41 = vector.shape_cast %40 : vector<1x16x16x128xbf16> to vector<16x16x128xbf16>
    %42 = vector.shape_cast %41 : vector<16x16x128xbf16> to vector<256x128xbf16>
    %c1_46 = arith.constant 1 : index
    %c0_47 = arith.constant 0 : index
    %c0_48 = arith.constant 0 : index
    %c0_49 = arith.constant 0 : index
    %43 = vector.load %arg3[%c1_46, %c0_47, %c0_48, %c0_49] : memref<4x4x128x128xbf16, #tpu.memory_space<vmem>>, vector<1x1x128x128xbf16>
    %44 = vector.shape_cast %43 : vector<1x1x128x128xbf16> to vector<128x128xbf16>
    %cst_50 = arith.constant dense<0.000000e+00> : vector<256x128xf32>
    %45 = tpu.matmul %42, %44, %cst_50 {dimension_numbers = #tpu.dot_dimension_numbers<[1], [0], [0], [1], [0, 0, 1, 1], [], []>} : vector<256x128xbf16>, vector<128x128xbf16>, vector<256x128xf32> -> vector<256x128xf32>
    %46 = arith.addf %39, %45 : vector<256x128xf32>
    %c0_51 = arith.constant 0 : index
    %c0_52 = arith.constant 0 : index
    %c2_53 = arith.constant 2 : index
    %c0_54 = arith.constant 0 : index
    %47 = vector.load %arg2[%c0_51, %c0_52, %c2_53, %c0_54] : memref<1x18x18x128xbf16, #tpu.memory_space<vmem>>, vector<1x16x16x128xbf16>
    %48 = vector.shape_cast %47 : vector<1x16x16x128xbf16> to vector<16x16x128xbf16>
    %49 = vector.shape_cast %48 : vector<16x16x128xbf16> to vector<256x128xbf16>
    %c1_55 = arith.constant 1 : index
    %c1_56 = arith.constant 1 : index
    %c0_57 = arith.constant 0 : index
    %c0_58 = arith.constant 0 : index
    %50 = vector.load %arg3[%c1_55, %c1_56, %c0_57, %c0_58] : memref<4x4x128x128xbf16, #tpu.memory_space<vmem>>, vector<1x1x128x128xbf16>
    %51 = vector.shape_cast %50 : vector<1x1x128x128xbf16> to vector<128x128xbf16>
    %cst_59 = arith.constant dense<0.000000e+00> : vector<256x128xf32>
    %52 = tpu.matmul %49, %51, %cst_59 {dimension_numbers = #tpu.dot_dimension_numbers<[1], [0], [0], [1], [0, 0, 1, 1], [], []>} : vector<256x128xbf16>, vector<128x128xbf16>, vector<256x128xf32> -> vector<256x128xf32>
    %53 = arith.addf %46, %52 : vector<256x128xf32>
    %c0_60 = arith.constant 0 : index
    %c1_61 = arith.constant 1 : index
    %c1_62 = arith.constant 1 : index
    %c0_63 = arith.constant 0 : index
    %54 = vector.load %arg2[%c0_60, %c1_61, %c1_62, %c0_63] : memref<1x18x18x128xbf16, #tpu.memory_space<vmem>>, vector<1x16x16x128xbf16>
    %55 = vector.shape_cast %54 : vector<1x16x16x128xbf16> to vector<16x16x128xbf16>
    %56 = vector.shape_cast %55 : vector<16x16x128xbf16> to vector<256x128xbf16>
    %c1_64 = arith.constant 1 : index
    %c2_65 = arith.constant 2 : index
    %c0_66 = arith.constant 0 : index
    %c0_67 = arith.constant 0 : index
    %57 = vector.load %arg3[%c1_64, %c2_65, %c0_66, %c0_67] : memref<4x4x128x128xbf16, #tpu.memory_space<vmem>>, vector<1x1x128x128xbf16>
    %58 = vector.shape_cast %57 : vector<1x1x128x128xbf16> to vector<128x128xbf16>
    %cst_68 = arith.constant dense<0.000000e+00> : vector<256x128xf32>
    %59 = tpu.matmul %56, %58, %cst_68 {dimension_numbers = #tpu.dot_dimension_numbers<[1], [0], [0], [1], [0, 0, 1, 1], [], []>} : vector<256x128xbf16>, vector<128x128xbf16>, vector<256x128xf32> -> vector<256x128xf32>
    %60 = arith.addf %53, %59 : vector<256x128xf32>
    %c0_69 = arith.constant 0 : index
    %c1_70 = arith.constant 1 : index
    %c2_71 = arith.constant 2 : index
    %c0_72 = arith.constant 0 : index
    %61 = vector.load %arg2[%c0_69, %c1_70, %c2_71, %c0_72] : memref<1x18x18x128xbf16, #tpu.memory_space<vmem>>, vector<1x16x16x128xbf16>
    %62 = vector.shape_cast %61 : vector<1x16x16x128xbf16> to vector<16x16x128xbf16>
    %63 = vector.shape_cast %62 : vector<16x16x128xbf16> to vector<256x128xbf16>
    %c1_73 = arith.constant 1 : index
    %c3_74 = arith.constant 3 : index
    %c0_75 = arith.constant 0 : index
    %c0_76 = arith.constant 0 : index
    %64 = vector.load %arg3[%c1_73, %c3_74, %c0_75, %c0_76] : memref<4x4x128x128xbf16, #tpu.memory_space<vmem>>, vector<1x1x128x128xbf16>
    %65 = vector.shape_cast %64 : vector<1x1x128x128xbf16> to vector<128x128xbf16>
    %cst_77 = arith.constant dense<0.000000e+00> : vector<256x128xf32>
    %66 = tpu.matmul %63, %65, %cst_77 {dimension_numbers = #tpu.dot_dimension_numbers<[1], [0], [0], [1], [0, 0, 1, 1], [], []>} : vector<256x128xbf16>, vector<128x128xbf16>, vector<256x128xf32> -> vector<256x128xf32>
    %67 = arith.addf %60, %66 : vector<256x128xf32>
    %c1_78 = arith.constant 1 : index
    %c0_79 = arith.constant 0 : index
    %c0_80 = arith.constant 0 : index
    %c0_81 = arith.constant 0 : index
    %68 = vector.load %arg6[%c1_78, %c0_79, %c0_80, %c0_81] : memref<4x16x16x128xf32, #tpu.memory_space<vmem>>, vector<1x16x16x128xf32>
    %69 = vector.shape_cast %68 : vector<1x16x16x128xf32> to vector<16x16x128xf32>
    %70 = vector.shape_cast %67 : vector<256x128xf32> to vector<16x16x128xf32>
    %71 = arith.addf %69, %70 : vector<16x16x128xf32>
    %c1_82 = arith.constant 1 : index
    %c0_83 = arith.constant 0 : index
    %c0_84 = arith.constant 0 : index
    %c0_85 = arith.constant 0 : index
    %72 = vector.load %arg6[%c1_82, %c0_83, %c0_84, %c0_85] : memref<4x16x16x128xf32, #tpu.memory_space<vmem>>, vector<1x16x16x128xf32>
    %73 = vector.shape_cast %72 : vector<1x16x16x128xf32> to vector<16x16x128xf32>
    %74 = vector.shape_cast %71 : vector<16x16x128xf32> to vector<1x16x16x128xf32>
    tpu.vector_store %arg6[%c1_82, %c0_83, %c0_84, %c0_85], %74 {strides = array<i32>} : memref<4x16x16x128xf32, #tpu.memory_space<vmem>>, vector<1x16x16x128xf32>,
    %cst_86 = arith.constant 0.000000e+00 : f32
    %75 = vector.broadcast %cst_86 : f32 to vector<256x128xf32>
    %c0_87 = arith.constant 0 : index
    %c1_88 = arith.constant 1 : index
    %c0_89 = arith.constant 0 : index
    %c0_90 = arith.constant 0 : index
    %76 = vector.load %arg2[%c0_87, %c1_88, %c0_89, %c0_90] : memref<1x18x18x128xbf16, #tpu.memory_space<vmem>>, vector<1x16x16x128xbf16>
    %77 = vector.shape_cast %76 : vector<1x16x16x128xbf16> to vector<16x16x128xbf16>
    %78 = vector.shape_cast %77 : vector<16x16x128xbf16> to vector<256x128xbf16>
    %c2_91 = arith.constant 2 : index
    %c0_92 = arith.constant 0 : index
    %c0_93 = arith.constant 0 : index
    %c0_94 = arith.constant 0 : index
    %79 = vector.load %arg3[%c2_91, %c0_92, %c0_93, %c0_94] : memref<4x4x128x128xbf16, #tpu.memory_space<vmem>>, vector<1x1x128x128xbf16>
    %80 = vector.shape_cast %79 : vector<1x1x128x128xbf16> to vector<128x128xbf16>
    %cst_95 = arith.constant dense<0.000000e+00> : vector<256x128xf32>
    %81 = tpu.matmul %78, %80, %cst_95 {dimension_numbers = #tpu.dot_dimension_numbers<[1], [0], [0], [1], [0, 0, 1, 1], [], []>} : vector<256x128xbf16>, vector<128x128xbf16>, vector<256x128xf32> -> vector<256x128xf32>
    %82 = arith.addf %75, %81 : vector<256x128xf32>
    %c0_96 = arith.constant 0 : index
    %c1_97 = arith.constant 1 : index
    %c1_98 = arith.constant 1 : index
    %c0_99 = arith.constant 0 : index
    %83 = vector.load %arg2[%c0_96, %c1_97, %c1_98, %c0_99] : memref<1x18x18x128xbf16, #tpu.memory_space<vmem>>, vector<1x16x16x128xbf16>
    %84 = vector.shape_cast %83 : vector<1x16x16x128xbf16> to vector<16x16x128xbf16>
    %85 = vector.shape_cast %84 : vector<16x16x128xbf16> to vector<256x128xbf16>
    %c2_100 = arith.constant 2 : index
    %c1_101 = arith.constant 1 : index
    %c0_102 = arith.constant 0 : index
    %c0_103 = arith.constant 0 : index
    %86 = vector.load %arg3[%c2_100, %c1_101, %c0_102, %c0_103] : memref<4x4x128x128xbf16, #tpu.memory_space<vmem>>, vector<1x1x128x128xbf16>
    %87 = vector.shape_cast %86 : vector<1x1x128x128xbf16> to vector<128x128xbf16>
    %cst_104 = arith.constant dense<0.000000e+00> : vector<256x128xf32>
    %88 = tpu.matmul %85, %87, %cst_104 {dimension_numbers = #tpu.dot_dimension_numbers<[1], [0], [0], [1], [0, 0, 1, 1], [], []>} : vector<256x128xbf16>, vector<128x128xbf16>, vector<256x128xf32> -> vector<256x128xf32>
    %89 = arith.addf %82, %88 : vector<256x128xf32>
    %c0_105 = arith.constant 0 : index
    %c2_106 = arith.constant 2 : index
    %c0_107 = arith.constant 0 : index
    %c0_108 = arith.constant 0 : index
    %90 = vector.load %arg2[%c0_105, %c2_106, %c0_107, %c0_108] : memref<1x18x18x128xbf16, #tpu.memory_space<vmem>>, vector<1x16x16x128xbf16>
    %91 = vector.shape_cast %90 : vector<1x16x16x128xbf16> to vector<16x16x128xbf16>
    %92 = vector.shape_cast %91 : vector<16x16x128xbf16> to vector<256x128xbf16>
    %c2_109 = arith.constant 2 : index
    %c2_110 = arith.constant 2 : index
    %c0_111 = arith.constant 0 : index
    %c0_112 = arith.constant 0 : index
    %93 = vector.load %arg3[%c2_109, %c2_110, %c0_111, %c0_112] : memref<4x4x128x128xbf16, #tpu.memory_space<vmem>>, vector<1x1x128x128xbf16>
    %94 = vector.shape_cast %93 : vector<1x1x128x128xbf16> to vector<128x128xbf16>
    %cst_113 = arith.constant dense<0.000000e+00> : vector<256x128xf32>
    %95 = tpu.matmul %92, %94, %cst_113 {dimension_numbers = #tpu.dot_dimension_numbers<[1], [0], [0], [1], [0, 0, 1, 1], [], []>} : vector<256x128xbf16>, vector<128x128xbf16>, vector<256x128xf32> -> vector<256x128xf32>
    %96 = arith.addf %89, %95 : vector<256x128xf32>
    %c0_114 = arith.constant 0 : index
    %c2_115 = arith.constant 2 : index
    %c1_116 = arith.constant 1 : index
    %c0_117 = arith.constant 0 : index
    %97 = vector.load %arg2[%c0_114, %c2_115, %c1_116, %c0_117] : memref<1x18x18x128xbf16, #tpu.memory_space<vmem>>, vector<1x16x16x128xbf16>
    %98 = vector.shape_cast %97 : vector<1x16x16x128xbf16> to vector<16x16x128xbf16>
    %99 = vector.shape_cast %98 : vector<16x16x128xbf16> to vector<256x128xbf16>
    %c2_118 = arith.constant 2 : index
    %c3_119 = arith.constant 3 : index
    %c0_120 = arith.constant 0 : index
    %c0_121 = arith.constant 0 : index
    %100 = vector.load %arg3[%c2_118, %c3_119, %c0_120, %c0_121] : memref<4x4x128x128xbf16, #tpu.memory_space<vmem>>, vector<1x1x128x128xbf16>
    %101 = vector.shape_cast %100 : vector<1x1x128x128xbf16> to vector<128x128xbf16>
    %cst_122 = arith.constant dense<0.000000e+00> : vector<256x128xf32>
    %102 = tpu.matmul %99, %101, %cst_122 {dimension_numbers = #tpu.dot_dimension_numbers<[1], [0], [0], [1], [0, 0, 1, 1], [], []>} : vector<256x128xbf16>, vector<128x128xbf16>, vector<256x128xf32> -> vector<256x128xf32>
    %103 = arith.addf %96, %102 : vector<256x128xf32>
    %c2_123 = arith.constant 2 : index
    %c0_124 = arith.constant 0 : index
    %c0_125 = arith.constant 0 : index
    %c0_126 = arith.constant 0 : index
    %104 = vector.load %arg6[%c2_123, %c0_124, %c0_125, %c0_126] : memref<4x16x16x128xf32, #tpu.memory_space<vmem>>, vector<1x16x16x128xf32>
    %105 = vector.shape_cast %104 : vector<1x16x16x128xf32> to vector<16x16x128xf32>
    %106 = vector.shape_cast %103 : vector<256x128xf32> to vector<16x16x128xf32>
    %107 = arith.addf %105, %106 : vector<16x16x128xf32>
    %c2_127 = arith.constant 2 : index
    %c0_128 = arith.constant 0 : index
    %c0_129 = arith.constant 0 : index
    %c0_130 = arith.constant 0 : index
    %108 = vector.load %arg6[%c2_127, %c0_128, %c0_129, %c0_130] : memref<4x16x16x128xf32, #tpu.memory_space<vmem>>, vector<1x16x16x128xf32>
    %109 = vector.shape_cast %108 : vector<1x16x16x128xf32> to vector<16x16x128xf32>
    %110 = vector.shape_cast %107 : vector<16x16x128xf32> to vector<1x16x16x128xf32>
    tpu.vector_store %arg6[%c2_127, %c0_128, %c0_129, %c0_130], %110 {strides = array<i32>} : memref<4x16x16x128xf32, #tpu.memory_space<vmem>>, vector<1x16x16x128xf32>,
    %cst_131 = arith.constant 0.000000e+00 : f32
    %111 = vector.broadcast %cst_131 : f32 to vector<256x128xf32>
    %c0_132 = arith.constant 0 : index
    %c1_133 = arith.constant 1 : index
    %c1_134 = arith.constant 1 : index
    %c0_135 = arith.constant 0 : index
    %112 = vector.load %arg2[%c0_132, %c1_133, %c1_134, %c0_135] : memref<1x18x18x128xbf16, #tpu.memory_space<vmem>>, vector<1x16x16x128xbf16>
    %113 = vector.shape_cast %112 : vector<1x16x16x128xbf16> to vector<16x16x128xbf16>
    %114 = vector.shape_cast %113 : vector<16x16x128xbf16> to vector<256x128xbf16>
    %c3_136 = arith.constant 3 : index
    %c0_137 = arith.constant 0 : index
    %c0_138 = arith.constant 0 : index
    %c0_139 = arith.constant 0 : index
    %115 = vector.load %arg3[%c3_136, %c0_137, %c0_138, %c0_139] : memref<4x4x128x128xbf16, #tpu.memory_space<vmem>>, vector<1x1x128x128xbf16>
    %116 = vector.shape_cast %115 : vector<1x1x128x128xbf16> to vector<128x128xbf16>
    %cst_140 = arith.constant dense<0.000000e+00> : vector<256x128xf32>
    %117 = tpu.matmul %114, %116, %cst_140 {dimension_numbers = #tpu.dot_dimension_numbers<[1], [0], [0], [1], [0, 0, 1, 1], [], []>} : vector<256x128xbf16>, vector<128x128xbf16>, vector<256x128xf32> -> vector<256x128xf32>
    %118 = arith.addf %111, %117 : vector<256x128xf32>
    %c0_141 = arith.constant 0 : index
    %c1_142 = arith.constant 1 : index
    %c2_143 = arith.constant 2 : index
    %c0_144 = arith.constant 0 : index
    %119 = vector.load %arg2[%c0_141, %c1_142, %c2_143, %c0_144] : memref<1x18x18x128xbf16, #tpu.memory_space<vmem>>, vector<1x16x16x128xbf16>
    %120 = vector.shape_cast %119 : vector<1x16x16x128xbf16> to vector<16x16x128xbf16>
    %121 = vector.shape_cast %120 : vector<16x16x128xbf16> to vector<256x128xbf16>
    %c3_145 = arith.constant 3 : index
    %c1_146 = arith.constant 1 : index
    %c0_147 = arith.constant 0 : index
    %c0_148 = arith.constant 0 : index
    %122 = vector.load %arg3[%c3_145, %c1_146, %c0_147, %c0_148] : memref<4x4x128x128xbf16, #tpu.memory_space<vmem>>, vector<1x1x128x128xbf16>
    %123 = vector.shape_cast %122 : vector<1x1x128x128xbf16> to vector<128x128xbf16>
    %cst_149 = arith.constant dense<0.000000e+00> : vector<256x128xf32>
    %124 = tpu.matmul %121, %123, %cst_149 {dimension_numbers = #tpu.dot_dimension_numbers<[1], [0], [0], [1], [0, 0, 1, 1], [], []>} : vector<256x128xbf16>, vector<128x128xbf16>, vector<256x128xf32> -> vector<256x128xf32>
    %125 = arith.addf %118, %124 : vector<256x128xf32>
    %c0_150 = arith.constant 0 : index
    %c2_151 = arith.constant 2 : index
    %c1_152 = arith.constant 1 : index
    %c0_153 = arith.constant 0 : index
    %126 = vector.load %arg2[%c0_150, %c2_151, %c1_152, %c0_153] : memref<1x18x18x128xbf16, #tpu.memory_space<vmem>>, vector<1x16x16x128xbf16>
    %127 = vector.shape_cast %126 : vector<1x16x16x128xbf16> to vector<16x16x128xbf16>
    %128 = vector.shape_cast %127 : vector<16x16x128xbf16> to vector<256x128xbf16>
    %c3_154 = arith.constant 3 : index
    %c2_155 = arith.constant 2 : index
    %c0_156 = arith.constant 0 : index
    %c0_157 = arith.constant 0 : index
    %129 = vector.load %arg3[%c3_154, %c2_155, %c0_156, %c0_157] : memref<4x4x128x128xbf16, #tpu.memory_space<vmem>>, vector<1x1x128x128xbf16>
    %130 = vector.shape_cast %129 : vector<1x1x128x128xbf16> to vector<128x128xbf16>
    %cst_158 = arith.constant dense<0.000000e+00> : vector<256x128xf32>
    %131 = tpu.matmul %128, %130, %cst_158 {dimension_numbers = #tpu.dot_dimension_numbers<[1], [0], [0], [1], [0, 0, 1, 1], [], []>} : vector<256x128xbf16>, vector<128x128xbf16>, vector<256x128xf32> -> vector<256x128xf32>
    %132 = arith.addf %125, %131 : vector<256x128xf32>
    %c0_159 = arith.constant 0 : index
    %c2_160 = arith.constant 2 : index
    %c2_161 = arith.constant 2 : index
    %c0_162 = arith.constant 0 : index
    %133 = vector.load %arg2[%c0_159, %c2_160, %c2_161, %c0_162] : memref<1x18x18x128xbf16, #tpu.memory_space<vmem>>, vector<1x16x16x128xbf16>
    %134 = vector.shape_cast %133 : vector<1x16x16x128xbf16> to vector<16x16x128xbf16>
    %135 = vector.shape_cast %134 : vector<16x16x128xbf16> to vector<256x128xbf16>
    %c3_163 = arith.constant 3 : index
    %c3_164 = arith.constant 3 : index
    %c0_165 = arith.constant 0 : index
    %c0_166 = arith.constant 0 : index
    %136 = vector.load %arg3[%c3_163, %c3_164, %c0_165, %c0_166] : memref<4x4x128x128xbf16, #tpu.memory_space<vmem>>, vector<1x1x128x128xbf16>
    %137 = vector.shape_cast %136 : vector<1x1x128x128xbf16> to vector<128x128xbf16>
    %cst_167 = arith.constant dense<0.000000e+00> : vector<256x128xf32>
    %138 = tpu.matmul %135, %137, %cst_167 {dimension_numbers = #tpu.dot_dimension_numbers<[1], [0], [0], [1], [0, 0, 1, 1], [], []>} : vector<256x128xbf16>, vector<128x128xbf16>, vector<256x128xf32> -> vector<256x128xf32>
    %139 = arith.addf %132, %138 : vector<256x128xf32>
    %c3_168 = arith.constant 3 : index
    %c0_169 = arith.constant 0 : index
    %c0_170 = arith.constant 0 : index
    %c0_171 = arith.constant 0 : index
    %140 = vector.load %arg6[%c3_168, %c0_169, %c0_170, %c0_171] : memref<4x16x16x128xf32, #tpu.memory_space<vmem>>, vector<1x16x16x128xf32>
    %141 = vector.shape_cast %140 : vector<1x16x16x128xf32> to vector<16x16x128xf32>
    %142 = vector.shape_cast %139 : vector<256x128xf32> to vector<16x16x128xf32>
    %143 = arith.addf %141, %142 : vector<16x16x128xf32>
    %c3_172 = arith.constant 3 : index
    %c0_173 = arith.constant 0 : index
    %c0_174 = arith.constant 0 : index
    %c0_175 = arith.constant 0 : index
    %144 = vector.load %arg6[%c3_172, %c0_173, %c0_174, %c0_175] : memref<4x16x16x128xf32, #tpu.memory_space<vmem>>, vector<1x16x16x128xf32>
    %145 = vector.shape_cast %144 : vector<1x16x16x128xf32> to vector<16x16x128xf32>
    %146 = vector.shape_cast %143 : vector<16x16x128xf32> to vector<1x16x16x128xf32>
    tpu.vector_store %arg6[%c3_172, %c0_173, %c0_174, %c0_175], %146 {strides = array<i32>} : memref<4x16x16x128xf32, #tpu.memory_space<vmem>>, vector<1x16x16x128xf32>,
    %c0_i32_176 = arith.constant 0 : i32
    %147 = arith.cmpi eq, %arg1, %c0_i32_176 : i32
    %148 = arith.extui %147 : i1 to i32
    %c0_i32_177 = arith.constant 0 : i32
    %149 = arith.cmpi ne, %148, %c0_i32_177 : i32
    scf.if %149 {
      %c0_178 = arith.constant 0 : index
      %c0_179 = arith.constant 0 : index
      %150 = vector.load %arg4[%c0_178, %c0_179] : memref<1x128xf32, #tpu.memory_space<vmem>>, vector<1x128xf32>
      %c0_180 = arith.constant 0 : index
      %c0_181 = arith.constant 0 : index
      %c0_182 = arith.constant 0 : index
      %c0_183 = arith.constant 0 : index
      %151 = vector.load %arg6[%c0_180, %c0_181, %c0_182, %c0_183] : memref<4x16x16x128xf32, #tpu.memory_space<vmem>>, vector<1x16x16x128xf32>
      %152 = vector.shape_cast %151 : vector<1x16x16x128xf32> to vector<16x16x128xf32>
      %153 = vector.shape_cast %150 : vector<1x128xf32> to vector<1x1x128xf32>
      %154 = vector.broadcast %153 : vector<1x1x128xf32> to vector<16x16x128xf32>
      %155 = arith.addf %152, %154 : vector<16x16x128xf32>
      %c0_184 = arith.constant 0 : index
      %c0_185 = arith.constant 0 : index
      %c0_186 = arith.constant 0 : index
      %c0_187 = arith.constant 0 : index
      %c0_188 = arith.constant 0 : index
      %156 = vector.load %arg5[%c0_184, %c0_185, %c0_186, %c0_187, %c0_188] : memref<1x16x2x16x256xf32, #tpu.memory_space<vmem>>, vector<1x16x1x16x128xf32>
      %157 = vector.shape_cast %156 : vector<1x16x1x16x128xf32> to vector<16x16x128xf32>
      %158 = vector.shape_cast %155 : vector<16x16x128xf32> to vector<1x16x1x16x128xf32>
      tpu.vector_store %arg5[%c0_184, %c0_185, %c0_186, %c0_187, %c0_188], %158 {strides = array<i32>} : memref<1x16x2x16x256xf32, #tpu.memory_space<vmem>>, vector<1x16x1x16x128xf32>,
      %c1_189 = arith.constant 1 : index
      %c0_190 = arith.constant 0 : index
      %c0_191 = arith.constant 0 : index
      %c0_192 = arith.constant 0 : index
      %159 = vector.load %arg6[%c1_189, %c0_190, %c0_191, %c0_192] : memref<4x16x16x128xf32, #tpu.memory_space<vmem>>, vector<1x16x16x128xf32>
      %160 = vector.shape_cast %159 : vector<1x16x16x128xf32> to vector<16x16x128xf32>
      %161 = vector.shape_cast %150 : vector<1x128xf32> to vector<1x1x128xf32>
      %162 = vector.broadcast %161 : vector<1x1x128xf32> to vector<16x16x128xf32>
      %163 = arith.addf %160, %162 : vector<16x16x128xf32>
      %c0_193 = arith.constant 0 : index
      %c0_194 = arith.constant 0 : index
      %c0_195 = arith.constant 0 : index
      %c0_196 = arith.constant 0 : index
      %c128 = arith.constant 128 : index
      %164 = vector.load %arg5[%c0_193, %c0_194, %c0_195, %c0_196, %c128] : memref<1x16x2x16x256xf32, #tpu.memory_space<vmem>>, vector<1x16x1x16x128xf32>
      %165 = vector.shape_cast %164 : vector<1x16x1x16x128xf32> to vector<16x16x128xf32>
      %166 = vector.shape_cast %163 : vector<16x16x128xf32> to vector<1x16x1x16x128xf32>
      tpu.vector_store %arg5[%c0_193, %c0_194, %c0_195, %c0_196, %c128], %166 {strides = array<i32>} : memref<1x16x2x16x256xf32, #tpu.memory_space<vmem>>, vector<1x16x1x16x128xf32>,
      %c2_197 = arith.constant 2 : index
      %c0_198 = arith.constant 0 : index
      %c0_199 = arith.constant 0 : index
      %c0_200 = arith.constant 0 : index
      %167 = vector.load %arg6[%c2_197, %c0_198, %c0_199, %c0_200] : memref<4x16x16x128xf32, #tpu.memory_space<vmem>>, vector<1x16x16x128xf32>
      %168 = vector.shape_cast %167 : vector<1x16x16x128xf32> to vector<16x16x128xf32>
      %169 = vector.shape_cast %150 : vector<1x128xf32> to vector<1x1x128xf32>
      %170 = vector.broadcast %169 : vector<1x1x128xf32> to vector<16x16x128xf32>
      %171 = arith.addf %168, %170 : vector<16x16x128xf32>
      %c0_201 = arith.constant 0 : index
      %c0_202 = arith.constant 0 : index
      %c1_203 = arith.constant 1 : index
      %c0_204 = arith.constant 0 : index
      %c0_205 = arith.constant 0 : index
      %172 = vector.load %arg5[%c0_201, %c0_202, %c1_203, %c0_204, %c0_205] : memref<1x16x2x16x256xf32, #tpu.memory_space<vmem>>, vector<1x16x1x16x128xf32>
      %173 = vector.shape_cast %172 : vector<1x16x1x16x128xf32> to vector<16x16x128xf32>
      %174 = vector.shape_cast %171 : vector<16x16x128xf32> to vector<1x16x1x16x128xf32>
      tpu.vector_store %arg5[%c0_201, %c0_202, %c1_203, %c0_204, %c0_205], %174 {strides = array<i32>} : memref<1x16x2x16x256xf32, #tpu.memory_space<vmem>>, vector<1x16x1x16x128xf32>,
      %c3_206 = arith.constant 3 : index
      %c0_207 = arith.constant 0 : index
      %c0_208 = arith.constant 0 : index
      %c0_209 = arith.constant 0 : index
      %175 = vector.load %arg6[%c3_206, %c0_207, %c0_208, %c0_209] : memref<4x16x16x128xf32, #tpu.memory_space<vmem>>, vector<1x16x16x128xf32>
      %176 = vector.shape_cast %175 : vector<1x16x16x128xf32> to vector<16x16x128xf32>
      %177 = vector.shape_cast %150 : vector<1x128xf32> to vector<1x1x128xf32>
      %178 = vector.broadcast %177 : vector<1x1x128xf32> to vector<16x16x128xf32>
      %179 = arith.addf %176, %178 : vector<16x16x128xf32>
      %c0_210 = arith.constant 0 : index
      %c0_211 = arith.constant 0 : index
      %c1_212 = arith.constant 1 : index
      %c0_213 = arith.constant 0 : index
      %c128_214 = arith.constant 128 : index
      %180 = vector.load %arg5[%c0_210, %c0_211, %c1_212, %c0_213, %c128_214] : memref<1x16x2x16x256xf32, #tpu.memory_space<vmem>>, vector<1x16x1x16x128xf32>
      %181 = vector.shape_cast %180 : vector<1x16x1x16x128xf32> to vector<16x16x128xf32>
      %182 = vector.shape_cast %179 : vector<16x16x128xf32> to vector<1x16x1x16x128xf32>
      tpu.vector_store %arg5[%c0_210, %c0_211, %c1_212, %c0_213, %c128_214], %182 {strides = array<i32>} : memref<1x16x2x16x256xf32, #tpu.memory_space<vmem>>, vector<1x16x1x16x128xf32>,
    } else {
    }
    return
  }
  func.func @transform_0(%arg0: i32, %arg1: i32) -> (i32, i32, i32, i32) {
    %c0_i32 = arith.constant 0 : i32
    %c0_i32_0 = arith.constant 0 : i32
    %c0_i32_1 = arith.constant 0 : i32
    return %arg0, %c0_i32, %c0_i32_0, %arg1 : i32, i32, i32, i32
  }
  func.func @transform_1(%arg0: i32, %arg1: i32) -> (i32, i32, i32, i32) {
    %c0_i32 = arith.constant 0 : i32
    %c0_i32_0 = arith.constant 0 : i32
    %c0_i32_1 = arith.constant 0 : i32
    %c0_i32_2 = arith.constant 0 : i32
    return %c0_i32, %c0_i32_0, %arg1, %c0_i32_1 : i32, i32, i32, i32
  }
  func.func @transform_2(%arg0: i32, %arg1: i32) -> (i32, i32) {
    %c0_i32 = arith.constant 0 : i32
    %c0_i32_0 = arith.constant 0 : i32
    %c0_i32_1 = arith.constant 0 : i32
    return %c0_i32, %c0_i32_0 : i32, i32
  }
  func.func @transform_3(%arg0: i32, %arg1: i32) -> (i32, i32, i32, i32, i32) {
    %c0_i32 = arith.constant 0 : i32
    %c0_i32_0 = arith.constant 0 : i32
    %c0_i32_1 = arith.constant 0 : i32
    %c0_i32_2 = arith.constant 0 : i32
    %c0_i32_3 = arith.constant 0 : i32
    return %arg0, %c0_i32, %c0_i32_0, %c0_i32_1, %c0_i32_2 : i32, i32, i32, i32, i32
  }
}

</mosaic_0001>

<llo_original>
// kernel: prediction_head.2
$region0: #{prediction_head.2}
  #allocation0 [shape = 'u32[]', space=smem, size = 0x4, offset = 0x4, fixed_abs, tag = 'smem constant byte address 0x4 - core index']
  #allocation1 [shape = 'u32[72,128]{1,0:T(1,128)}', space=vmem, size = 0x9000, scoped, tag = 'internal scratch']
  #allocation2 [shape = 'f32[4,8,8,128]{3,2,1,0:T(8,128)}', space=vmem, size = 0x20000, scoped, tag = 'scratch operand']
  %s0 = inlined_call_operand.vmem [shape: bf16[2,10,10,32], index: 0, kind: input, shape index: {}]
  %s1 = inlined_call_operand.vmem [shape: bf16[4,4,32,128], index: 1, kind: input, shape index: {}]
  %s2 = inlined_call_operand.vmem [shape: f32[1,128], index: 2, kind: input, shape index: {}]
  %s3 = inlined_call_operand.vmem [shape: bf16[2,8,2,8,256], index: 3, kind: output, shape index: {}]
  %s4 = sld [smem:[#allocation0]]
  $region53: #{prediction_head.2} parent=0
    _
  %s6 = ssub.s32 1, %s4
  %s7 = scalar_select 0, %s6, %s4
  loop: start=0, step=1, limit=4
  $region2: #{prediction_head.2} parent=0 // loop_pre_header
    _
  $region3: #{prediction_head.2} parent=0 // loop_header
    %s9 = sphi 0, %s13
    %p10 = scmp.ge.s32.totalorder %s9, 4
    %s16 = sphi 0, %s28
    %s17 = sphi 0, %s24
    %s18 = sphi 0, %s16
    %s19 = sphi 0, %s17
    %s20 = sphi 0, %s18
    %s21 = sphi 0, %s19
    %s33 = sphi 0, %s35
    %s36 = sphi 0, %s33
    %s37 = sphi 0, %s36
    %s53 = sphi 0, %s37
    %s59 = sphi 0, %s61
    %s62 = sphi 0, %s59
    %s63 = sphi 0, %s62
    %s79 = sphi 0, %s63
    %s83 = sphi 0, %s83
    %s85 = sphi 0, %s83
    %s86 = sphi 0, %s85
    %s100 = sphi 0, %s86
    %s106 = sphi 0, %s108
    %s109 = sphi 0, %s106
    %s110 = sphi 0, %s109
    %s126 = sphi 0, %s110
  $region4: #{prediction_head.2} parent=0 // loop_header_branch
    %12 = sbr.rel (%p10) target = $region8
  $region5: #{prediction_head.2} parent=0 // loop_body
    %s14 = ssub.s32 %s9, 1
    %s15 = ssub.s32 %s9, 2
    %s22 = sadd.s32 1, %s17
    %p23 = scmp.ge.s32.totalorder %s22, 1
    %s24 = scalar_select %p23, 0, %s22
    %s25 = sadd.s32 1, %s16
    %s26 = scalar_select %p23, %s25, %s16
    %p27 = scmp.ge.s32.totalorder %s26, 2
    %s28 = scalar_select %p27, 0, %s26
    %s29 = ssub.s32 %s16, %s28
    %s30 = ssub.s32 %s17, %s24
    %s31 = sor.u32 %s29, %s30
    %p32 = scmp.eq.s32.totalorder %s31, 0
    %s34 = sadd.s32 %s33, 1
    %s35 = scalar_select %p32, %s33, %s34
    %p38 = pneg %p32
    %p39 = scmp.eq.s32.totalorder %s9, 1
    %p40 = por %p38, %p39
    %p41 = scmp.ne.s32.totalorder %s33, %s36
    %p42 = scmp.eq.s32.totalorder %s9, 0
    %p43 = por %p41, %p42
    %p44 = scmp.ne.s32.totalorder %s33, %s36
    %p45 = scmp.eq.s32.totalorder %s14, 1
    %p46 = por %p44, %p45
    %p47 = scmp.ne.s32.totalorder %s36, %s37
    %p48 = scmp.eq.s32.totalorder %s14, 0
    %p49 = por %p47, %p48
    %p50 = scmp.ne.s32.totalorder %s36, %s37
    %p51 = scmp.eq.s32.totalorder %s15, 1
    %p52 = por %p50, %p51
    %p54 = scmp.ne.s32.totalorder %s37, %s53
    %p55 = scmp.eq.s32.totalorder %s15, 0
    %p56 = por %p54, %p55
    %s57 = ssub.s32 %s17, %s24
    %p58 = scmp.eq.s32.totalorder %s57, 0
    %s60 = sadd.s32 %s59, 1
    %s61 = scalar_select %p58, %s59, %s60
    %p64 = pneg %p58
    %p65 = scmp.eq.s32.totalorder %s9, 1
    %p66 = por %p64, %p65
    %p67 = scmp.ne.s32.totalorder %s59, %s62
    %p68 = scmp.eq.s32.totalorder %s9, 0
    %p69 = por %p67, %p68
    %p70 = scmp.ne.s32.totalorder %s59, %s62
    %p71 = scmp.eq.s32.totalorder %s14, 1
    %p72 = por %p70, %p71
    %p73 = scmp.ne.s32.totalorder %s62, %s63
    %p74 = scmp.eq.s32.totalorder %s14, 0
    %p75 = por %p73, %p74
    %p76 = scmp.ne.s32.totalorder %s62, %s63
    %p77 = scmp.eq.s32.totalorder %s15, 1
    %p78 = por %p76, %p77
    %p80 = scmp.ne.s32.totalorder %s63, %s79
    %p81 = scmp.eq.s32.totalorder %s15, 0
    %p82 = por %p80, %p81
    %s84 = sadd.s32 %s83, 1
    %p87 = scmp.eq.s32.totalorder %s9, 1
    %p88 = scmp.ne.s32.totalorder %s83, %s85
    %p89 = scmp.eq.s32.totalorder %s9, 0
    %p90 = por %p88, %p89
    %p91 = scmp.ne.s32.totalorder %s83, %s85
    %p92 = scmp.eq.s32.totalorder %s14, 1
    %p93 = por %p91, %p92
    %p94 = scmp.ne.s32.totalorder %s85, %s86
    %p95 = scmp.eq.s32.totalorder %s14, 0
    %p96 = por %p94, %p95
    %p97 = scmp.ne.s32.totalorder %s85, %s86
    %p98 = scmp.eq.s32.totalorder %s15, 1
    %p99 = por %p97, %p98
    %p101 = scmp.ne.s32.totalorder %s86, %s100
    %p102 = scmp.eq.s32.totalorder %s15, 0
    %p103 = por %p101, %p102
    %s104 = ssub.s32 %s16, %s28
    %p105 = scmp.eq.s32.totalorder %s104, 0
    %s107 = sadd.s32 %s106, 1
    %s108 = scalar_select %p105, %s106, %s107
    %p111 = pneg %p105
    %p112 = scmp.eq.s32.totalorder %s9, 1
    %p113 = por %p111, %p112
    %p114 = scmp.ne.s32.totalorder %s106, %s109
    %p115 = scmp.eq.s32.totalorder %s9, 0
    %p116 = por %p114, %p115
    %p117 = scmp.ne.s32.totalorder %s106, %s109
    %p118 = scmp.eq.s32.totalorder %s14, 1
    %p119 = por %p117, %p118
    %p120 = scmp.ne.s32.totalorder %s109, %s110
    %p121 = scmp.eq.s32.totalorder %s14, 0
    %p122 = por %p120, %p121
    %p123 = scmp.ne.s32.totalorder %s109, %s110
    %p124 = scmp.eq.s32.totalorder %s15, 1
    %p125 = por %p123, %p124
    %p127 = scmp.ne.s32.totalorder %s110, %s126
    %p128 = scmp.eq.s32.totalorder %s15, 0
    %p129 = por %p127, %p128
    %p130 = scmp.le.s32.totalorder 1, %s9
    %p131 = scmp.lt.s32.totalorder %s9, 3
    %p132 = pnand %p130, %p131
    %p133 = pneg %p132
    // Predicated region
    $region9: #{prediction_head.2} parent=5 // pred_check
      _
    $region10: #{prediction_head.2} parent=5 // pred_check_branch
      %135 = sbr.rel (%p132) target = $region12
    $region11: #{prediction_head.2} parent=5 // pred_region
      %s136 = ssub.s32 %s9, 1
      // Predicated region
      $region13: #{prediction_head.2} parent=11 // pred_check
        %p137 = pneg %p75
      $region14: #{prediction_head.2} parent=11 // pred_check_branch
        %139 = sbr.rel (%p137) target = $region16
      $region15: #{prediction_head.2} parent=11 // pred_region
        %s140 = smul.u32 4, %s19
        %p141 = scmp.lt.s32.totalorder %s140, 3
        %s142 = scalar_select %p141, %s140, 3
        %s143 = smul.addr %s142, 4
        %s144 = scalar_lea.vmem %s1, %s143
        %s145 = smul.u32 4, %s19
      $region16: #{prediction_head.2} parent=11 // pred_fallthru
        _
      // Predicated region
      $region17: #{prediction_head.2} parent=11 // pred_check
        %p146 = pneg %p96
      $region18: #{prediction_head.2} parent=11 // pred_check_branch
        %148 = sbr.rel (%p146) target = $region20
      $region19: #{prediction_head.2} parent=11 // pred_region
        _
      $region20: #{prediction_head.2} parent=11 // pred_fallthru
        _
    $region12: #{prediction_head.2} parent=5 // pred_fallthru
      _
    %p149 = scmp.lt.s32.totalorder %s9, 2
    // Predicated region
    $region21: #{prediction_head.2} parent=5 // pred_check
      %p150 = pneg %p149
    $region22: #{prediction_head.2} parent=5 // pred_check_branch
      %152 = sbr.rel (%p150) target = $region24
    $region23: #{prediction_head.2} parent=5 // pred_region
      // Predicated region
      $region25: #{prediction_head.2} parent=23 // pred_check
        %p153 = pneg %p43
      $region26: #{prediction_head.2} parent=23 // pred_check_branch
        %155 = sbr.rel (%p153) target = $region28
      $region27: #{prediction_head.2} parent=23 // pred_region
        %p156 = scmp.lt.s32.totalorder %s16, 1
        %s157 = scalar_select %p156, %s16, 1
        %p158 = scmp.lt.s32.totalorder %s17, 0
        %s159 = scalar_select %p158, %s17, 0
        %s160 = smul.addr %s157, 20
        %s161 = sadd.s32 %s159, %s160
        %s162 = smul.addr %s161, 4
        %s163 = scalar_lea.vmem %s0, %s162
      $region28: #{prediction_head.2} parent=23 // pred_fallthru
        _
    $region24: #{prediction_head.2} parent=5 // pred_fallthru
      _
    %p164 = scmp.le.s32.totalorder 1, %s9
    %p165 = scmp.lt.s32.totalorder %s9, 3
    %p166 = pnand %p164, %p165
    %p167 = pneg %p166
    // Predicated region
    $region29: #{prediction_head.2} parent=5 // pred_check
      _
    $region30: #{prediction_head.2} parent=5 // pred_check_branch
      %169 = sbr.rel (%p166) target = $region32
    $region31: #{prediction_head.2} parent=5 // pred_region
      %s170 = ssub.s32 %s9, 1
      %p171 = scmp.lt.s32.totalorder %s18, 1
      %s172 = scalar_select %p171, %s18, 1
      %p173 = scmp.lt.s32.totalorder %s19, 0
      %s174 = scalar_select %p173, %s19, 0
      %s175 = smul.addr %s172, 20
      %s176 = sadd.s32 %s174, %s175
      %s177 = smul.addr %s176, 4
      %s178 = scalar_lea.vmem %s0, %s177
      %p179 = pneg %p49
      %p180 = pneg %p46
      %s181 = smul.u32 4, %s19
      %p182 = scmp.lt.s32.totalorder %s181, 3
      %s183 = scalar_select %p182, %s181, 3
      %s184 = smul.addr %s183, 4
      %s185 = scalar_lea.vmem %s1, %s184
      %p186 = pneg %p75
      %p187 = pneg %p72
      %p188 = pneg %p96
      %p189 = pneg %p93
      %p190 = pneg %p122
      %p191 = pneg %p119
      %p192 = scmp.lt.s32.totalorder %s18, 1
      %s193 = scalar_select %p192, %s18, 1
      %s194 = smul.addr %s193, 32
      %s195 = smul.addr %s194, 4
      %s196 = scalar_lea.vmem %s3, %s195
      %p197 = scmp.lt.s32.totalorder %s18, 1
      %s198 = scalar_select %p197, %s18, 1
      %p199 = scmp.lt.s32.totalorder %s19, 0
      %s200 = scalar_select %p199, %s19, 0
      %s201 = smul.addr %s198, 20
      %s202 = sadd.s32 %s200, %s201
      %s203 = smul.addr %s202, 4
      %s204 = scalar_lea.vmem %s0, %s203
      %s205 = smul.u32 4, %s19
      %p206 = scmp.lt.s32.totalorder %s205, 3
      %s207 = scalar_select %p206, %s205, 3
      %s208 = smul.addr %s207, 4
      %s209 = scalar_lea.vmem %s1, %s208
      %s210 = smul.u32 4, %s19
      %p211 = scmp.lt.s32.totalorder %s18, 1
      %s212 = scalar_select %p211, %s18, 1
      %s213 = smul.addr %s212, 32
      %s214 = smul.addr %s213, 4
      %s215 = scalar_lea.vmem %s3, %s214
      %p217 = scmp.eq.s32.totalorder %s19, 0
      // Predicated region
      $region33: #{prediction_head.2} parent=31 // pred_check
        %p218 = pneg %p217
      $region34: #{prediction_head.2} parent=31 // pred_check_branch
        %220 = sbr.rel (%p218) target = $region36
      $region35: #{prediction_head.2} parent=31 // pred_region
        %221 = vst [vmem:[#allocation2] sm:$0xff] 0.0
        %222 = vst [vmem:[#allocation2 + $0x8] sm:$0xff] 0.0
        %223 = vst [vmem:[#allocation2 + $0x10] sm:$0xff] 0.0
        %224 = vst [vmem:[#allocation2 + $0x18] sm:$0xff] 0.0
        %225 = vst [vmem:[#allocation2 + $0x20] sm:$0xff] 0.0
        %226 = vst [vmem:[#allocation2 + $0x28] sm:$0xff] 0.0
        %227 = vst [vmem:[#allocation2 + $0x30] sm:$0xff] 0.0
        %228 = vst [vmem:[#allocation2 + $0x38] sm:$0xff] 0.0
        %229 = vst [vmem:[#allocation2 + $0x40] sm:$0xff] 0.0
        %230 = vst [vmem:[#allocation2 + $0x48] sm:$0xff] 0.0
        %231 = vst [vmem:[#allocation2 + $0x50] sm:$0xff] 0.0
        %232 = vst [vmem:[#allocation2 + $0x58] sm:$0xff] 0.0
        %233 = vst [vmem:[#allocation2 + $0x60] sm:$0xff] 0.0
        %234 = vst [vmem:[#allocation2 + $0x68] sm:$0xff] 0.0
        %235 = vst [vmem:[#allocation2 + $0x70] sm:$0xff] 0.0
        %236 = vst [vmem:[#allocation2 + $0x78] sm:$0xff] 0.0
        %237 = vst [vmem:[#allocation2 + $0x80] sm:$0xff] 0.0
        %238 = vst [vmem:[#allocation2 + $0x88] sm:$0xff] 0.0
        %239 = vst [vmem:[#allocation2 + $0x90] sm:$0xff] 0.0
        %240 = vst [vmem:[#allocation2 + $0x98] sm:$0xff] 0.0
        %241 = vst [vmem:[#allocation2 + $0xa0] sm:$0xff] 0.0
        %242 = vst [vmem:[#allocation2 + $0xa8] sm:$0xff] 0.0
        %243 = vst [vmem:[#allocation2 + $0xb0] sm:$0xff] 0.0
        %244 = vst [vmem:[#allocation2 + $0xb8] sm:$0xff] 0.0
        %245 = vst [vmem:[#allocation2 + $0xc0] sm:$0xff] 0.0
        %246 = vst [vmem:[#allocation2 + $0xc8] sm:$0xff] 0.0
        %247 = vst [vmem:[#allocation2 + $0xd0] sm:$0xff] 0.0
        %248 = vst [vmem:[#allocation2 + $0xd8] sm:$0xff] 0.0
        %249 = vst [vmem:[#allocation2 + $0xe0] sm:$0xff] 0.0
        %250 = vst [vmem:[#allocation2 + $0xe8] sm:$0xff] 0.0
        %251 = vst [vmem:[#allocation2 + $0xf0] sm:$0xff] 0.0
        %252 = vst [vmem:[#allocation2 + $0xf8] sm:$0xff] 0.0
      $region36: #{prediction_head.2} parent=31 // pred_fallthru
        _
      %v253 = vld [vmem:[%s204] sm:$0xf]
      %v254 = vld [vmem:[%s204 + $0x8] sm:$0xf]
      %v255 = vld [vmem:[%s204 + $0x10] sm:$0xf]
      %v256 = vld [vmem:[%s204 + $0x18] sm:$0xf]
      %v257 = vld [vmem:[%s204 + $0x20] sm:$0xf]
      %v258 = vld [vmem:[%s204 + $0x28] sm:$0xf]
      %v259 = vld [vmem:[%s204 + $0x30] sm:$0xf]
      %v260 = vld [vmem:[%s204 + $0x38] sm:$0xf]
      %v261 = vld [vmem:[%s209] sm:$0xf]
      %v262 = vld [vmem:[%s209 + $0x4] sm:$0xf]
      %v263 = vld [vmem:[%s209 + $0x8] sm:$0xf]
      %v264 = vld [vmem:[%s209 + $0xc] sm:$0xf]
      %v265 = vld [vmem:[%s204 + $0x4] sm:$0x1]
      %v266 = vld [vmem:[%s204 + $0xc] sm:$0x1]
      %v267 = vld [vmem:[%s204 + $0x14] sm:$0x1]
      %v268 = vld [vmem:[%s204 + $0x1c] sm:$0x1]
      %v269 = vld [vmem:[%s204 + $0x24] sm:$0x1]
      %v270 = vld [vmem:[%s204 + $0x2c] sm:$0x1]
      %v271 = vld [vmem:[%s204 + $0x34] sm:$0x1]
      %v272 = vld [vmem:[%s204 + $0x3c] sm:$0x1]
      %vm273 = vsmask.f32 3328
      %vm274 = vsmask.f32 7440
      %vm275 = vmor %vm273, %vm274
      %v277 = vshrl.u32 %v253, 16
      %v279 = vrot.slane %v277, 4
      %v280 = vshll.u32 %v253, 16
      %v282 = vrot.slane %v280, 5
      %v283 = vor.u32 %v279, %v282
      %v284 = vrot.slane %v283, 4
      %v286 = vshll.u32 %v265, 16
      %v288 = vrot.slane %v286, 5
      %v289 = vsel %vm275, %v284, %v288
      %v291 = vshrl.u32 %v254, 16
      %v293 = vrot.slane %v291, 4
      %v294 = vshll.u32 %v254, 16
      %v296 = vrot.slane %v294, 5
      %v297 = vor.u32 %v293, %v296
      %v298 = vrot.slane %v297, 4
      %v300 = vshll.u32 %v266, 16
      %v302 = vrot.slane %v300, 5
      %v303 = vsel %vm275, %v298, %v302
      %v305 = vshrl.u32 %v255, 16
      %v307 = vrot.slane %v305, 4
      %v308 = vshll.u32 %v255, 16
      %v310 = vrot.slane %v308, 5
      %v311 = vor.u32 %v307, %v310
      %v312 = vrot.slane %v311, 4
      %v314 = vshll.u32 %v267, 16
      %v316 = vrot.slane %v314, 5
      %v317 = vsel %vm275, %v312, %v316
      %v319 = vshrl.u32 %v256, 16
      %v321 = vrot.slane %v319, 4
      %v322 = vshll.u32 %v256, 16
      %v324 = vrot.slane %v322, 5
      %v325 = vor.u32 %v321, %v324
      %v326 = vrot.slane %v325, 4
      %v328 = vshll.u32 %v268, 16
      %v330 = vrot.slane %v328, 5
      %v331 = vsel %vm275, %v326, %v330
      %v333 = vshrl.u32 %v257, 16
      %v335 = vrot.slane %v333, 4
      %v336 = vshll.u32 %v257, 16
      %v338 = vrot.slane %v336, 5
      %v339 = vor.u32 %v335, %v338
      %v340 = vrot.slane %v339, 4
      %v342 = vshll.u32 %v269, 16
      %v344 = vrot.slane %v342, 5
      %v345 = vsel %vm275, %v340, %v344
      %v347 = vshrl.u32 %v258, 16
      %v349 = vrot.slane %v347, 4
      %v350 = vshll.u32 %v258, 16
      %v352 = vrot.slane %v350, 5
      %v353 = vor.u32 %v349, %v352
      %v354 = vrot.slane %v353, 4
      %v356 = vshll.u32 %v270, 16
      %v358 = vrot.slane %v356, 5
      %v359 = vsel %vm275, %v354, %v358
      %v361 = vshrl.u32 %v259, 16
      %v363 = vrot.slane %v361, 4
      %v364 = vshll.u32 %v259, 16
      %v366 = vrot.slane %v364, 5
      %v367 = vor.u32 %v363, %v366
      %v368 = vrot.slane %v367, 4
      %v370 = vshll.u32 %v271, 16
      %v372 = vrot.slane %v370, 5
      %v373 = vsel %vm275, %v368, %v372
      %v375 = vshrl.u32 %v260, 16
      %v377 = vrot.slane %v375, 4
      %v378 = vshll.u32 %v260, 16
      %v380 = vrot.slane %v378, 5
      %v381 = vor.u32 %v377, %v380
      %v382 = vrot.slane %v381, 4
      %v384 = vshll.u32 %v272, 16
      %v386 = vrot.slane %v384, 5
      %v387 = vsel %vm275, %v382, %v386
      %s388 = scalar_lea.vmem %s209, 16
      %v389 = vld [vmem:[%s388] sm:$0xf]
      %v390 = vld [vmem:[%s388 + $0x4] sm:$0xf]
      %v391 = vld [vmem:[%s388 + $0x8] sm:$0xf]
      %v392 = vld [vmem:[%s388 + $0xc] sm:$0xf]
      %v393 = vunpack.c.l.b16 %v289
      %v394 = vunpack.c.l.b16 %v303
      %v395 = vunpack.c.l.b16 %v317
      %v396 = vunpack.c.l.b16 %v331
      %v397 = vunpack.c.l.b16 %v345
      %v398 = vunpack.c.l.b16 %v359
      %v399 = vunpack.c.l.b16 %v373
      %v400 = vunpack.c.l.b16 %v387
      %v401 = vpack.c.b16 %v394, %v393
      %v402 = vpack.c.b16 %v396, %v395
      %v403 = vpack.c.b16 %v398, %v397
      %v404 = vpack.c.b16 %v400, %v399
      %v409 = vunpack.c.l.b16 %v389
      %v410 = vunpack.c.l.b16 %v390
      %v411 = vunpack.c.l.b16 %v391
      %v412 = vunpack.c.l.b16 %v392
      %v413 = vpack.c.b16 %v410, %v409
      %v414 = vpack.c.b16 %v412, %v411
      %vm417 = vcmask 261120
      %v419 = vsel %vm417, %v401, 0
      %v422 = vsel %vm417, %v402, 0
      %v425 = vsel %vm417, %v403, 0
      %v428 = vsel %vm417, %v404, 0
      %430 = vmatpush.bf16.msra.mxu0 0
      %431 = vmatpush.bf16.msra.mxu0 0
      %432 = vmatpush.bf16.msra.mxu0 0
      %433 = vmatpush.bf16.msra.mxu0 0
      %434 = vmatpush.bf16.msra.mxu0 0
      %435 = vmatpush.bf16.msra.mxu0 0
      %436 = vmatpush.bf16.msra.mxu0 %v414
      %437 = vmatpush.bf16.msra.mxu0 %v413
      %438 = vmatmul.bf16.gmra.mxu0 %v419
      %v439 = vpop.f32.mrf.mxu0
      %v440 = vadd.f32 0.0, %v439
      %v441 = vpop.f32.mrf.mxu0
      %v442 = vadd.f32 0.0, %v441
      %443 = vmatmul.bf16.gmra.mxu0 %v422
      %v444 = vpop.f32.mrf.mxu0
      %v445 = vadd.f32 0.0, %v444
      %v446 = vpop.f32.mrf.mxu0
      %v447 = vadd.f32 0.0, %v446
      %448 = vmatmul.bf16.gmra.mxu0 %v425
      %v449 = vpop.f32.mrf.mxu0
      %v450 = vadd.f32 0.0, %v449
      %v451 = vpop.f32.mrf.mxu0
      %v452 = vadd.f32 0.0, %v451
      %453 = vmatmul.bf16.gmra.mxu0 %v428
      %v454 = vpop.f32.mrf.mxu0
      %v455 = vadd.f32 0.0, %v454
      %v456 = vpop.f32.mrf.mxu0
      %v457 = vadd.f32 0.0, %v456
      %458 = vdwg.mxu0
      %v467 = vunpack.c.l.b16 %v253
      %v468 = vunpack.c.l.b16 %v254
      %v469 = vunpack.c.l.b16 %v255
      %v470 = vunpack.c.l.b16 %v256
      %v471 = vunpack.c.l.b16 %v257
      %v472 = vunpack.c.l.b16 %v258
      %v473 = vunpack.c.l.b16 %v259
      %v474 = vunpack.c.l.b16 %v260
      %v475 = vpack.c.b16 %v468, %v467
      %v476 = vpack.c.b16 %v470, %v469
      %v477 = vpack.c.b16 %v472, %v471
      %v478 = vpack.c.b16 %v474, %v473
      %v483 = vunpack.c.l.b16 %v261
      %v484 = vunpack.c.l.b16 %v262
      %v485 = vunpack.c.l.b16 %v263
      %v486 = vunpack.c.l.b16 %v264
      %v487 = vpack.c.b16 %v484, %v483
      %v488 = vpack.c.b16 %v486, %v485
      %v492 = vsel %vm417, %v475, 0
      %v495 = vsel %vm417, %v476, 0
      %v498 = vsel %vm417, %v477, 0
      %v501 = vsel %vm417, %v478, 0
      %503 = vmatpush.bf16.msra.mxu0 0
      %504 = vmatpush.bf16.msra.mxu0 0
      %505 = vmatpush.bf16.msra.mxu0 0
      %506 = vmatpush.bf16.msra.mxu0 0
      %507 = vmatpush.bf16.msra.mxu0 0
      %508 = vmatpush.bf16.msra.mxu0 0
      %509 = vmatpush.bf16.msra.mxu0 %v488
      %510 = vmatpush.bf16.msra.mxu0 %v487
      %511 = vmatmul.bf16.gmra.mxu0 %v492
      %v512 = vpop.f32.mrf.mxu0
      %v513 = vadd.f32 %v440, %v512
      %v514 = vpop.f32.mrf.mxu0
      %v515 = vadd.f32 %v442, %v514
      %516 = vmatmul.bf16.gmra.mxu0 %v495
      %v517 = vpop.f32.mrf.mxu0
      %v518 = vadd.f32 %v445, %v517
      %v519 = vpop.f32.mrf.mxu0
      %v520 = vadd.f32 %v447, %v519
      %521 = vmatmul.bf16.gmra.mxu0 %v498
      %v522 = vpop.f32.mrf.mxu0
      %v523 = vadd.f32 %v450, %v522
      %v524 = vpop.f32.mrf.mxu0
      %v525 = vadd.f32 %v452, %v524
      %526 = vmatmul.bf16.gmra.mxu0 %v501
      %v527 = vpop.f32.mrf.mxu0
      %v528 = vadd.f32 %v455, %v527
      %v529 = vpop.f32.mrf.mxu0
      %v530 = vadd.f32 %v457, %v529
      %531 = vdwg.mxu0
      %s532 = scalar_lea.vmem %s204, 8
      %v533 = vld [vmem:[%s532] sm:$0xf]
      %v534 = vld [vmem:[%s532 + $0x8] sm:$0xf]
      %v535 = vld [vmem:[%s532 + $0x10] sm:$0xf]
      %v536 = vld [vmem:[%s532 + $0x18] sm:$0xf]
      %v537 = vld [vmem:[%s532 + $0x20] sm:$0xf]
      %v538 = vld [vmem:[%s532 + $0x28] sm:$0xf]
      %v539 = vld [vmem:[%s532 + $0x30] sm:$0xf]
      %v540 = vld [vmem:[%s532 + $0x38] sm:$0xf]
      %s541 = scalar_lea.vmem %s209, 32
      %v542 = vld [vmem:[%s541] sm:$0xf]
      %v543 = vld [vmem:[%s541 + $0x4] sm:$0xf]
      %v544 = vld [vmem:[%s541 + $0x8] sm:$0xf]
      %v545 = vld [vmem:[%s541 + $0xc] sm:$0xf]
      %v554 = vunpack.c.l.b16 %v533
      %v555 = vunpack.c.l.b16 %v534
      %v556 = vunpack.c.l.b16 %v535
      %v557 = vunpack.c.l.b16 %v536
      %v558 = vunpack.c.l.b16 %v537
      %v559 = vunpack.c.l.b16 %v538
      %v560 = vunpack.c.l.b16 %v539
      %v561 = vunpack.c.l.b16 %v540
      %v562 = vpack.c.b16 %v555, %v554
      %v563 = vpack.c.b16 %v557, %v556
      %v564 = vpack.c.b16 %v559, %v558
      %v565 = vpack.c.b16 %v561, %v560
      %v570 = vunpack.c.l.b16 %v542
      %v571 = vunpack.c.l.b16 %v543
      %v572 = vunpack.c.l.b16 %v544
      %v573 = vunpack.c.l.b16 %v545
      %v574 = vpack.c.b16 %v571, %v570
      %v575 = vpack.c.b16 %v573, %v572
      %v579 = vsel %vm417, %v562, 0
      %v582 = vsel %vm417, %v563, 0
      %v585 = vsel %vm417, %v564, 0
      %v588 = vsel %vm417, %v565, 0
      %590 = vmatpush.bf16.msra.mxu0 0
      %591 = vmatpush.bf16.msra.mxu0 0
      %592 = vmatpush.bf16.msra.mxu0 0
      %593 = vmatpush.bf16.msra.mxu0 0
      %594 = vmatpush.bf16.msra.mxu0 0
      %595 = vmatpush.bf16.msra.mxu0 0
      %596 = vmatpush.bf16.msra.mxu0 %v575
      %597 = vmatpush.bf16.msra.mxu0 %v574
      %598 = vmatmul.bf16.gmra.mxu0 %v579
      %v599 = vpop.f32.mrf.mxu0
      %v600 = vadd.f32 0.0, %v599
      %v601 = vpop.f32.mrf.mxu0
      %v602 = vadd.f32 0.0, %v601
      %603 = vmatmul.bf16.gmra.mxu0 %v582
      %v604 = vpop.f32.mrf.mxu0
      %v605 = vadd.f32 0.0, %v604
      %v606 = vpop.f32.mrf.mxu0
      %v607 = vadd.f32 0.0, %v606
      %608 = vmatmul.bf16.gmra.mxu0 %v585
      %v609 = vpop.f32.mrf.mxu0
      %v610 = vadd.f32 0.0, %v609
      %v611 = vpop.f32.mrf.mxu0
      %v612 = vadd.f32 0.0, %v611
      %613 = vmatmul.bf16.gmra.mxu0 %v588
      %v614 = vpop.f32.mrf.mxu0
      %v615 = vadd.f32 0.0, %v614
      %v616 = vpop.f32.mrf.mxu0
      %v617 = vadd.f32 0.0, %v616
      %618 = vdwg.mxu0
      %v619 = vadd.f32 %v513, %v600
      %v620 = vadd.f32 %v515, %v602
      %v621 = vadd.f32 %v518, %v605
      %v622 = vadd.f32 %v520, %v607
      %v623 = vadd.f32 %v523, %v610
      %v624 = vadd.f32 %v525, %v612
      %v625 = vadd.f32 %v528, %v615
      %v626 = vadd.f32 %v530, %v617
      %v627 = vld [vmem:[%s532] sm:$0xf]
      %v628 = vld [vmem:[%s532 + $0x4] sm:$0x1]
      %v629 = vld [vmem:[%s532 + $0x8] sm:$0xf]
      %v630 = vld [vmem:[%s532 + $0xc] sm:$0x1]
      %v631 = vld [vmem:[%s532 + $0x10] sm:$0xf]
      %v632 = vld [vmem:[%s532 + $0x14] sm:$0x1]
      %v633 = vld [vmem:[%s532 + $0x18] sm:$0xf]
      %v634 = vld [vmem:[%s532 + $0x1c] sm:$0x1]
      %v635 = vld [vmem:[%s532 + $0x20] sm:$0xf]
      %v636 = vld [vmem:[%s532 + $0x24] sm:$0x1]
      %v637 = vld [vmem:[%s532 + $0x28] sm:$0xf]
      %v638 = vld [vmem:[%s532 + $0x2c] sm:$0x1]
      %v639 = vld [vmem:[%s532 + $0x30] sm:$0xf]
      %v640 = vld [vmem:[%s532 + $0x34] sm:$0x1]
      %v641 = vld [vmem:[%s532 + $0x38] sm:$0xf]
      %v642 = vld [vmem:[%s532 + $0x3c] sm:$0x1]
      %v644 = vshrl.u32 %v627, 16
      %v646 = vrot.slane %v644, 4
      %v647 = vshll.u32 %v627, 16
      %v649 = vrot.slane %v647, 5
      %v650 = vor.u32 %v646, %v649
      %v651 = vrot.slane %v650, 4
      %v653 = vshll.u32 %v628, 16
      %v655 = vrot.slane %v653, 5
      %v656 = vsel %vm275, %v651, %v655
      %v658 = vshrl.u32 %v629, 16
      %v660 = vrot.slane %v658, 4
      %v661 = vshll.u32 %v629, 16
      %v663 = vrot.slane %v661, 5
      %v664 = vor.u32 %v660, %v663
      %v665 = vrot.slane %v664, 4
      %v667 = vshll.u32 %v630, 16
      %v669 = vrot.slane %v667, 5
      %v670 = vsel %vm275, %v665, %v669
      %v672 = vshrl.u32 %v631, 16
      %v674 = vrot.slane %v672, 4
      %v675 = vshll.u32 %v631, 16
      %v677 = vrot.slane %v675, 5
      %v678 = vor.u32 %v674, %v677
      %v679 = vrot.slane %v678, 4
      %v681 = vshll.u32 %v632, 16
      %v683 = vrot.slane %v681, 5
      %v684 = vsel %vm275, %v679, %v683
      %v686 = vshrl.u32 %v633, 16
      %v688 = vrot.slane %v686, 4
      %v689 = vshll.u32 %v633, 16
      %v691 = vrot.slane %v689, 5
      %v692 = vor.u32 %v688, %v691
      %v693 = vrot.slane %v692, 4
      %v695 = vshll.u32 %v634, 16
      %v697 = vrot.slane %v695, 5
      %v698 = vsel %vm275, %v693, %v697
      %v700 = vshrl.u32 %v635, 16
      %v702 = vrot.slane %v700, 4
      %v703 = vshll.u32 %v635, 16
      %v705 = vrot.slane %v703, 5
      %v706 = vor.u32 %v702, %v705
      %v707 = vrot.slane %v706, 4
      %v709 = vshll.u32 %v636, 16
      %v711 = vrot.slane %v709, 5
      %v712 = vsel %vm275, %v707, %v711
      %v714 = vshrl.u32 %v637, 16
      %v716 = vrot.slane %v714, 4
      %v717 = vshll.u32 %v637, 16
      %v719 = vrot.slane %v717, 5
      %v720 = vor.u32 %v716, %v719
      %v721 = vrot.slane %v720, 4
      %v723 = vshll.u32 %v638, 16
      %v725 = vrot.slane %v723, 5
      %v726 = vsel %vm275, %v721, %v725
      %v728 = vshrl.u32 %v639, 16
      %v730 = vrot.slane %v728, 4
      %v731 = vshll.u32 %v639, 16
      %v733 = vrot.slane %v731, 5
      %v734 = vor.u32 %v730, %v733
      %v735 = vrot.slane %v734, 4
      %v737 = vshll.u32 %v640, 16
      %v739 = vrot.slane %v737, 5
      %v740 = vsel %vm275, %v735, %v739
      %v742 = vshrl.u32 %v641, 16
      %v744 = vrot.slane %v742, 4
      %v745 = vshll.u32 %v641, 16
      %v747 = vrot.slane %v745, 5
      %v748 = vor.u32 %v744, %v747
      %v749 = vrot.slane %v748, 4
      %v751 = vshll.u32 %v642, 16
      %v753 = vrot.slane %v751, 5
      %v754 = vsel %vm275, %v749, %v753
      %s755 = scalar_lea.vmem %s209, 48
      %v756 = vld [vmem:[%s755] sm:$0xf]
      %v757 = vld [vmem:[%s755 + $0x4] sm:$0xf]
      %v758 = vld [vmem:[%s755 + $0x8] sm:$0xf]
      %v759 = vld [vmem:[%s755 + $0xc] sm:$0xf]
      %v760 = vunpack.c.l.b16 %v656
      %v761 = vunpack.c.l.b16 %v670
      %v762 = vunpack.c.l.b16 %v684
      %v763 = vunpack.c.l.b16 %v698
      %v764 = vunpack.c.l.b16 %v712
      %v765 = vunpack.c.l.b16 %v726
      %v766 = vunpack.c.l.b16 %v740
      %v767 = vunpack.c.l.b16 %v754
      %v768 = vpack.c.b16 %v761, %v760
      %v769 = vpack.c.b16 %v763, %v762
      %v770 = vpack.c.b16 %v765, %v764
      %v771 = vpack.c.b16 %v767, %v766
      %v776 = vunpack.c.l.b16 %v756
      %v777 = vunpack.c.l.b16 %v757
      %v778 = vunpack.c.l.b16 %v758
      %v779 = vunpack.c.l.b16 %v759
      %v780 = vpack.c.b16 %v777, %v776
      %v781 = vpack.c.b16 %v779, %v778
      %v785 = vsel %vm417, %v768, 0
      %v788 = vsel %vm417, %v769, 0
      %v791 = vsel %vm417, %v770, 0
      %v794 = vsel %vm417, %v771, 0
      %796 = vmatpush.bf16.msra.mxu0 0
      %797 = vmatpush.bf16.msra.mxu0 0
      %798 = vmatpush.bf16.msra.mxu0 0
      %799 = vmatpush.bf16.msra.mxu0 0
      %800 = vmatpush.bf16.msra.mxu0 0
      %801 = vmatpush.bf16.msra.mxu0 0
      %802 = vmatpush.bf16.msra.mxu0 %v781
      %803 = vmatpush.bf16.msra.mxu0 %v780
      %804 = vmatmul.bf16.gmra.mxu0 %v785
      %v805 = vpop.f32.mrf.mxu0
      %v806 = vadd.f32 0.0, %v805
      %v807 = vpop.f32.mrf.mxu0
      %v808 = vadd.f32 0.0, %v807
      %809 = vmatmul.bf16.gmra.mxu0 %v788
      %v810 = vpop.f32.mrf.mxu0
      %v811 = vadd.f32 0.0, %v810
      %v812 = vpop.f32.mrf.mxu0
      %v813 = vadd.f32 0.0, %v812
      %814 = vmatmul.bf16.gmra.mxu0 %v791
      %v815 = vpop.f32.mrf.mxu0
      %v816 = vadd.f32 0.0, %v815
      %v817 = vpop.f32.mrf.mxu0
      %v818 = vadd.f32 0.0, %v817
      %819 = vmatmul.bf16.gmra.mxu0 %v794
      %v820 = vpop.f32.mrf.mxu0
      %v821 = vadd.f32 0.0, %v820
      %v822 = vpop.f32.mrf.mxu0
      %v823 = vadd.f32 0.0, %v822
      %824 = vdwg.mxu0
      %v825 = vadd.f32 %v619, %v806
      %v826 = vadd.f32 %v620, %v808
      %v827 = vadd.f32 %v621, %v811
      %v828 = vadd.f32 %v622, %v813
      %v829 = vadd.f32 %v623, %v816
      %v830 = vadd.f32 %v624, %v818
      %v831 = vadd.f32 %v625, %v821
      %v832 = vadd.f32 %v626, %v823
      %v833 = vld [vmem:[#allocation2] sm:$0xff]
      %v834 = vld [vmem:[#allocation2 + $0x8] sm:$0xff]
      %v835 = vld [vmem:[#allocation2 + $0x10] sm:$0xff]
      %v836 = vld [vmem:[#allocation2 + $0x18] sm:$0xff]
      %v837 = vld [vmem:[#allocation2 + $0x20] sm:$0xff]
      %v838 = vld [vmem:[#allocation2 + $0x28] sm:$0xff]
      %v839 = vld [vmem:[#allocation2 + $0x30] sm:$0xff]
      %v840 = vld [vmem:[#allocation2 + $0x38] sm:$0xff]
      %v841 = vadd.f32 %v833, %v825
      %v842 = vadd.f32 %v834, %v826
      %v843 = vadd.f32 %v835, %v827
      %v844 = vadd.f32 %v836, %v828
      %v845 = vadd.f32 %v837, %v829
      %v846 = vadd.f32 %v838, %v830
      %v847 = vadd.f32 %v839, %v831
      %v848 = vadd.f32 %v840, %v832
      %849 = vst [vmem:[#allocation2] sm:$0xff] %v841
      %850 = vst [vmem:[#allocation2 + $0x8] sm:$0xff] %v842
      %851 = vst [vmem:[#allocation2 + $0x10] sm:$0xff] %v843
      %852 = vst [vmem:[#allocation2 + $0x18] sm:$0xff] %v844
      %853 = vst [vmem:[#allocation2 + $0x20] sm:$0xff] %v845
      %854 = vst [vmem:[#allocation2 + $0x28] sm:$0xff] %v846
      %855 = vst [vmem:[#allocation2 + $0x30] sm:$0xff] %v847
      %856 = vst [vmem:[#allocation2 + $0x38] sm:$0xff] %v848
      %v857 = vld [vmem:[%s204] sm:$0xf]
      %v858 = vld [vmem:[%s204 + $0x4] sm:$0x1]
      %v859 = vld [vmem:[%s204 + $0x8] sm:$0xf]
      %v860 = vld [vmem:[%s204 + $0xc] sm:$0x1]
      %v861 = vld [vmem:[%s204 + $0x10] sm:$0xf]
      %v862 = vld [vmem:[%s204 + $0x14] sm:$0x1]
      %v863 = vld [vmem:[%s204 + $0x18] sm:$0xf]
      %v864 = vld [vmem:[%s204 + $0x1c] sm:$0x1]
      %v865 = vld [vmem:[%s204 + $0x20] sm:$0xf]
      %v866 = vld [vmem:[%s204 + $0x24] sm:$0x1]
      %v867 = vld [vmem:[%s204 + $0x28] sm:$0xf]
      %v868 = vld [vmem:[%s204 + $0x2c] sm:$0x1]
      %v869 = vld [vmem:[%s204 + $0x30] sm:$0xf]
      %v870 = vld [vmem:[%s204 + $0x34] sm:$0x1]
      %v871 = vld [vmem:[%s204 + $0x38] sm:$0xf]
      %v872 = vld [vmem:[%s204 + $0x3c] sm:$0x1]
      %v874 = vshrl.u32 %v857, 16
      %v876 = vrot.slane %v874, 4
      %v877 = vshll.u32 %v857, 16
      %v879 = vrot.slane %v877, 5
      %v880 = vor.u32 %v876, %v879
      %v881 = vrot.slane %v880, 4
      %v883 = vshll.u32 %v858, 16
      %v885 = vrot.slane %v883, 5
      %v886 = vsel %vm275, %v881, %v885
      %v888 = vshrl.u32 %v859, 16
      %v890 = vrot.slane %v888, 4
      %v891 = vshll.u32 %v859, 16
      %v893 = vrot.slane %v891, 5
      %v894 = vor.u32 %v890, %v893
      %v895 = vrot.slane %v894, 4
      %v897 = vshll.u32 %v860, 16
      %v899 = vrot.slane %v897, 5
      %v900 = vsel %vm275, %v895, %v899
      %v902 = vshrl.u32 %v861, 16
      %v904 = vrot.slane %v902, 4
      %v905 = vshll.u32 %v861, 16
      %v907 = vrot.slane %v905, 5
      %v908 = vor.u32 %v904, %v907
      %v909 = vrot.slane %v908, 4
      %v911 = vshll.u32 %v862, 16
      %v913 = vrot.slane %v911, 5
      %v914 = vsel %vm275, %v909, %v913
      %v916 = vshrl.u32 %v863, 16
      %v918 = vrot.slane %v916, 4
      %v919 = vshll.u32 %v863, 16
      %v921 = vrot.slane %v919, 5
      %v922 = vor.u32 %v918, %v921
      %v923 = vrot.slane %v922, 4
      %v925 = vshll.u32 %v864, 16
      %v927 = vrot.slane %v925, 5
      %v928 = vsel %vm275, %v923, %v927
      %v930 = vshrl.u32 %v865, 16
      %v932 = vrot.slane %v930, 4
      %v933 = vshll.u32 %v865, 16
      %v935 = vrot.slane %v933, 5
      %v936 = vor.u32 %v932, %v935
      %v937 = vrot.slane %v936, 4
      %v939 = vshll.u32 %v866, 16
      %v941 = vrot.slane %v939, 5
      %v942 = vsel %vm275, %v937, %v941
      %v944 = vshrl.u32 %v867, 16
      %v946 = vrot.slane %v944, 4
      %v947 = vshll.u32 %v867, 16
      %v949 = vrot.slane %v947, 5
      %v950 = vor.u32 %v946, %v949
      %v951 = vrot.slane %v950, 4
      %v953 = vshll.u32 %v868, 16
      %v955 = vrot.slane %v953, 5
      %v956 = vsel %vm275, %v951, %v955
      %v958 = vshrl.u32 %v869, 16
      %v960 = vrot.slane %v958, 4
      %v961 = vshll.u32 %v869, 16
      %v963 = vrot.slane %v961, 5
      %v964 = vor.u32 %v960, %v963
      %v965 = vrot.slane %v964, 4
      %v967 = vshll.u32 %v870, 16
      %v969 = vrot.slane %v967, 5
      %v970 = vsel %vm275, %v965, %v969
      %v972 = vshrl.u32 %v871, 16
      %v974 = vrot.slane %v972, 4
      %v975 = vshll.u32 %v871, 16
      %v977 = vrot.slane %v975, 5
      %v978 = vor.u32 %v974, %v977
      %v979 = vrot.slane %v978, 4
      %v981 = vshll.u32 %v872, 16
      %v983 = vrot.slane %v981, 5
      %v984 = vsel %vm275, %v979, %v983
      %s985 = scalar_lea.vmem %s209, 64
      %v986 = vld [vmem:[%s985] sm:$0xf]
      %v987 = vld [vmem:[%s985 + $0x4] sm:$0xf]
      %v988 = vld [vmem:[%s985 + $0x8] sm:$0xf]
      %v989 = vld [vmem:[%s985 + $0xc] sm:$0xf]
      %v990 = vld [vmem:[%s204] sm:$0xe]
      %v991 = vld [vmem:[%s204 + $0x8] sm:$0xe]
      %v992 = vld [vmem:[%s204 + $0x10] sm:$0xe]
      %v993 = vld [vmem:[%s204 + $0x18] sm:$0xe]
      %v994 = vld [vmem:[%s204 + $0x20] sm:$0xe]
      %v995 = vld [vmem:[%s204 + $0x28] sm:$0xe]
      %v996 = vld [vmem:[%s204 + $0x30] sm:$0xe]
      %v997 = vld [vmem:[%s204 + $0x38] sm:$0xe]
      %vm1014 = vcmask 1042432
      %vm1015 = vcmask 1046532
      %vm1016 = vmor %vm1014, %vm1015
      %v1017 = vrot.slane %v990, 5
      %v1018 = vrot.slane %v1017, 4
      %v1019 = vrot.slane %v858, 5
      %v1020 = vsel %vm1016, %v1018, %v1019
      %v1021 = vrot.slane %v991, 5
      %v1022 = vrot.slane %v1021, 4
      %v1023 = vrot.slane %v860, 5
      %v1024 = vsel %vm1016, %v1022, %v1023
      %v1025 = vrot.slane %v992, 5
      %v1026 = vrot.slane %v1025, 4
      %v1027 = vrot.slane %v862, 5
      %v1028 = vsel %vm1016, %v1026, %v1027
      %v1029 = vrot.slane %v993, 5
      %v1030 = vrot.slane %v1029, 4
      %v1031 = vrot.slane %v864, 5
      %v1032 = vsel %vm1016, %v1030, %v1031
      %v1033 = vrot.slane %v994, 5
      %v1034 = vrot.slane %v1033, 4
      %v1035 = vrot.slane %v866, 5
      %v1036 = vsel %vm1016, %v1034, %v1035
      %v1037 = vrot.slane %v995, 5
      %v1038 = vrot.slane %v1037, 4
      %v1039 = vrot.slane %v868, 5
      %v1040 = vsel %vm1016, %v1038, %v1039
      %v1041 = vrot.slane %v996, 5
      %v1042 = vrot.slane %v1041, 4
      %v1043 = vrot.slane %v870, 5
      %v1044 = vsel %vm1016, %v1042, %v1043
      %v1045 = vrot.slane %v997, 5
      %v1046 = vrot.slane %v1045, 4
      %v1047 = vrot.slane %v872, 5
      %v1048 = vsel %vm1016, %v1046, %v1047
      %s1049 = scalar_lea.vmem %s209, 80
      %v1050 = vld [vmem:[%s1049] sm:$0xf]
      %v1051 = vld [vmem:[%s1049 + $0x4] sm:$0xf]
      %v1052 = vld [vmem:[%s1049 + $0x8] sm:$0xf]
      %v1053 = vld [vmem:[%s1049 + $0xc] sm:$0xf]
      %v1054 = vunpack.c.l.b16 %v1020
      %v1055 = vunpack.c.l.b16 %v1024
      %v1056 = vunpack.c.l.b16 %v1028
      %v1057 = vunpack.c.l.b16 %v1032
      %v1058 = vunpack.c.l.b16 %v1036
      %v1059 = vunpack.c.l.b16 %v1040
      %v1060 = vunpack.c.l.b16 %v1044
      %v1061 = vunpack.c.l.b16 %v1048
      %v1062 = vpack.c.b16 %v1055, %v1054
      %v1063 = vpack.c.b16 %v1057, %v1056
      %v1064 = vpack.c.b16 %v1059, %v1058
      %v1065 = vpack.c.b16 %v1061, %v1060
      %v1070 = vunpack.c.l.b16 %v1050
      %v1071 = vunpack.c.l.b16 %v1051
      %v1072 = vunpack.c.l.b16 %v1052
      %v1073 = vunpack.c.l.b16 %v1053
      %v1074 = vpack.c.b16 %v1071, %v1070
      %v1075 = vpack.c.b16 %v1073, %v1072
      %v1079 = vsel %vm417, %v1062, 0
      %v1082 = vsel %vm417, %v1063, 0
      %v1085 = vsel %vm417, %v1064, 0
      %v1088 = vsel %vm417, %v1065, 0
      %1090 = vmatpush.bf16.msra.mxu0 0
      %1091 = vmatpush.bf16.msra.mxu0 0
      %1092 = vmatpush.bf16.msra.mxu0 0
      %1093 = vmatpush.bf16.msra.mxu0 0
      %1094 = vmatpush.bf16.msra.mxu0 0
      %1095 = vmatpush.bf16.msra.mxu0 0
      %1096 = vmatpush.bf16.msra.mxu0 %v1075
      %1097 = vmatpush.bf16.msra.mxu0 %v1074
      %1098 = vmatmul.bf16.gmra.mxu0 %v1079
      %v1099 = vpop.f32.mrf.mxu0
      %v1100 = vadd.f32 0.0, %v1099
      %v1101 = vpop.f32.mrf.mxu0
      %v1102 = vadd.f32 0.0, %v1101
      %1103 = vmatmul.bf16.gmra.mxu0 %v1082
      %v1104 = vpop.f32.mrf.mxu0
      %v1105 = vadd.f32 0.0, %v1104
      %v1106 = vpop.f32.mrf.mxu0
      %v1107 = vadd.f32 0.0, %v1106
      %1108 = vmatmul.bf16.gmra.mxu0 %v1085
      %v1109 = vpop.f32.mrf.mxu0
      %v1110 = vadd.f32 0.0, %v1109
      %v1111 = vpop.f32.mrf.mxu0
      %v1112 = vadd.f32 0.0, %v1111
      %1113 = vmatmul.bf16.gmra.mxu0 %v1088
      %v1114 = vpop.f32.mrf.mxu0
      %v1115 = vadd.f32 0.0, %v1114
      %v1116 = vpop.f32.mrf.mxu0
      %v1117 = vadd.f32 0.0, %v1116
      %1118 = vdwg.mxu0
      %v1119 = vunpack.c.l.b16 %v886
      %v1120 = vunpack.c.l.b16 %v900
      %v1121 = vunpack.c.l.b16 %v914
      %v1122 = vunpack.c.l.b16 %v928
      %v1123 = vunpack.c.l.b16 %v942
      %v1124 = vunpack.c.l.b16 %v956
      %v1125 = vunpack.c.l.b16 %v970
      %v1126 = vunpack.c.l.b16 %v984
      %v1127 = vpack.c.b16 %v1120, %v1119
      %v1128 = vpack.c.b16 %v1122, %v1121
      %v1129 = vpack.c.b16 %v1124, %v1123
      %v1130 = vpack.c.b16 %v1126, %v1125
      %v1135 = vunpack.c.l.b16 %v986
      %v1136 = vunpack.c.l.b16 %v987
      %v1137 = vunpack.c.l.b16 %v988
      %v1138 = vunpack.c.l.b16 %v989
      %v1139 = vpack.c.b16 %v1136, %v1135
      %v1140 = vpack.c.b16 %v1138, %v1137
      %v1144 = vsel %vm417, %v1127, 0
      %v1147 = vsel %vm417, %v1128, 0
      %v1150 = vsel %vm417, %v1129, 0
      %v1153 = vsel %vm417, %v1130, 0
      %1155 = vmatpush.bf16.msra.mxu0 0
      %1156 = vmatpush.bf16.msra.mxu0 0
      %1157 = vmatpush.bf16.msra.mxu0 0
      %1158 = vmatpush.bf16.msra.mxu0 0
      %1159 = vmatpush.bf16.msra.mxu0 0
      %1160 = vmatpush.bf16.msra.mxu0 0
      %1161 = vmatpush.bf16.msra.mxu0 %v1140
      %1162 = vmatpush.bf16.msra.mxu0 %v1139
      %1163 = vmatmul.bf16.gmra.mxu0 %v1144
      %v1164 = vpop.f32.mrf.mxu0
      %v1165 = vadd.f32 %v1100, %v1164
      %v1166 = vpop.f32.mrf.mxu0
      %v1167 = vadd.f32 %v1102, %v1166
      %1168 = vmatmul.bf16.gmra.mxu0 %v1147
      %v1169 = vpop.f32.mrf.mxu0
      %v1170 = vadd.f32 %v1105, %v1169
      %v1171 = vpop.f32.mrf.mxu0
      %v1172 = vadd.f32 %v1107, %v1171
      %1173 = vmatmul.bf16.gmra.mxu0 %v1150
      %v1174 = vpop.f32.mrf.mxu0
      %v1175 = vadd.f32 %v1110, %v1174
      %v1176 = vpop.f32.mrf.mxu0
      %v1177 = vadd.f32 %v1112, %v1176
      %1178 = vmatmul.bf16.gmra.mxu0 %v1153
      %v1179 = vpop.f32.mrf.mxu0
      %v1180 = vadd.f32 %v1115, %v1179
      %v1181 = vpop.f32.mrf.mxu0
      %v1182 = vadd.f32 %v1117, %v1181
      %1183 = vdwg.mxu0
      %v1184 = vld [vmem:[%s532] sm:$0xf]
      %v1185 = vld [vmem:[%s532 + $0x4] sm:$0x1]
      %v1186 = vld [vmem:[%s532 + $0x8] sm:$0xf]
      %v1187 = vld [vmem:[%s532 + $0xc] sm:$0x1]
      %v1188 = vld [vmem:[%s532 + $0x10] sm:$0xf]
      %v1189 = vld [vmem:[%s532 + $0x14] sm:$0x1]
      %v1190 = vld [vmem:[%s532 + $0x18] sm:$0xf]
      %v1191 = vld [vmem:[%s532 + $0x1c] sm:$0x1]
      %v1192 = vld [vmem:[%s532 + $0x20] sm:$0xf]
      %v1193 = vld [vmem:[%s532 + $0x24] sm:$0x1]
      %v1194 = vld [vmem:[%s532 + $0x28] sm:$0xf]
      %v1195 = vld [vmem:[%s532 + $0x2c] sm:$0x1]
      %v1196 = vld [vmem:[%s532 + $0x30] sm:$0xf]
      %v1197 = vld [vmem:[%s532 + $0x34] sm:$0x1]
      %v1198 = vld [vmem:[%s532 + $0x38] sm:$0xf]
      %v1199 = vld [vmem:[%s532 + $0x3c] sm:$0x1]
      %v1201 = vshrl.u32 %v1184, 16
      %v1203 = vrot.slane %v1201, 4
      %v1204 = vshll.u32 %v1184, 16
      %v1206 = vrot.slane %v1204, 5
      %v1207 = vor.u32 %v1203, %v1206
      %v1208 = vrot.slane %v1207, 4
      %v1210 = vshll.u32 %v1185, 16
      %v1212 = vrot.slane %v1210, 5
      %v1213 = vsel %vm275, %v1208, %v1212
      %v1215 = vshrl.u32 %v1186, 16
      %v1217 = vrot.slane %v1215, 4
      %v1218 = vshll.u32 %v1186, 16
      %v1220 = vrot.slane %v1218, 5
      %v1221 = vor.u32 %v1217, %v1220
      %v1222 = vrot.slane %v1221, 4
      %v1224 = vshll.u32 %v1187, 16
      %v1226 = vrot.slane %v1224, 5
      %v1227 = vsel %vm275, %v1222, %v1226
      %v1229 = vshrl.u32 %v1188, 16
      %v1231 = vrot.slane %v1229, 4
      %v1232 = vshll.u32 %v1188, 16
      %v1234 = vrot.slane %v1232, 5
      %v1235 = vor.u32 %v1231, %v1234
      %v1236 = vrot.slane %v1235, 4
      %v1238 = vshll.u32 %v1189, 16
      %v1240 = vrot.slane %v1238, 5
      %v1241 = vsel %vm275, %v1236, %v1240
      %v1243 = vshrl.u32 %v1190, 16
      %v1245 = vrot.slane %v1243, 4
      %v1246 = vshll.u32 %v1190, 16
      %v1248 = vrot.slane %v1246, 5
      %v1249 = vor.u32 %v1245, %v1248
      %v1250 = vrot.slane %v1249, 4
      %v1252 = vshll.u32 %v1191, 16
      %v1254 = vrot.slane %v1252, 5
      %v1255 = vsel %vm275, %v1250, %v1254
      %v1257 = vshrl.u32 %v1192, 16
      %v1259 = vrot.slane %v1257, 4
      %v1260 = vshll.u32 %v1192, 16
      %v1262 = vrot.slane %v1260, 5
      %v1263 = vor.u32 %v1259, %v1262
      %v1264 = vrot.slane %v1263, 4
      %v1266 = vshll.u32 %v1193, 16
      %v1268 = vrot.slane %v1266, 5
      %v1269 = vsel %vm275, %v1264, %v1268
      %v1271 = vshrl.u32 %v1194, 16
      %v1273 = vrot.slane %v1271, 4
      %v1274 = vshll.u32 %v1194, 16
      %v1276 = vrot.slane %v1274, 5
      %v1277 = vor.u32 %v1273, %v1276
      %v1278 = vrot.slane %v1277, 4
      %v1280 = vshll.u32 %v1195, 16
      %v1282 = vrot.slane %v1280, 5
      %v1283 = vsel %vm275, %v1278, %v1282
      %v1285 = vshrl.u32 %v1196, 16
      %v1287 = vrot.slane %v1285, 4
      %v1288 = vshll.u32 %v1196, 16
      %v1290 = vrot.slane %v1288, 5
      %v1291 = vor.u32 %v1287, %v1290
      %v1292 = vrot.slane %v1291, 4
      %v1294 = vshll.u32 %v1197, 16
      %v1296 = vrot.slane %v1294, 5
      %v1297 = vsel %vm275, %v1292, %v1296
      %v1299 = vshrl.u32 %v1198, 16
      %v1301 = vrot.slane %v1299, 4
      %v1302 = vshll.u32 %v1198, 16
      %v1304 = vrot.slane %v1302, 5
      %v1305 = vor.u32 %v1301, %v1304
      %v1306 = vrot.slane %v1305, 4
      %v1308 = vshll.u32 %v1199, 16
      %v1310 = vrot.slane %v1308, 5
      %v1311 = vsel %vm275, %v1306, %v1310
      %s1312 = scalar_lea.vmem %s209, 96
      %v1313 = vld [vmem:[%s1312] sm:$0xf]
      %v1314 = vld [vmem:[%s1312 + $0x4] sm:$0xf]
      %v1315 = vld [vmem:[%s1312 + $0x8] sm:$0xf]
      %v1316 = vld [vmem:[%s1312 + $0xc] sm:$0xf]
      %v1317 = vunpack.c.l.b16 %v1213
      %v1318 = vunpack.c.l.b16 %v1227
      %v1319 = vunpack.c.l.b16 %v1241
      %v1320 = vunpack.c.l.b16 %v1255
      %v1321 = vunpack.c.l.b16 %v1269
      %v1322 = vunpack.c.l.b16 %v1283
      %v1323 = vunpack.c.l.b16 %v1297
      %v1324 = vunpack.c.l.b16 %v1311
      %v1325 = vpack.c.b16 %v1318, %v1317
      %v1326 = vpack.c.b16 %v1320, %v1319
      %v1327 = vpack.c.b16 %v1322, %v1321
      %v1328 = vpack.c.b16 %v1324, %v1323
      %v1333 = vunpack.c.l.b16 %v1313
      %v1334 = vunpack.c.l.b16 %v1314
      %v1335 = vunpack.c.l.b16 %v1315
      %v1336 = vunpack.c.l.b16 %v1316
      %v1337 = vpack.c.b16 %v1334, %v1333
      %v1338 = vpack.c.b16 %v1336, %v1335
      %v1342 = vsel %vm417, %v1325, 0
      %v1345 = vsel %vm417, %v1326, 0
      %v1348 = vsel %vm417, %v1327, 0
      %v1351 = vsel %vm417, %v1328, 0
      %1353 = vmatpush.bf16.msra.mxu0 0
      %1354 = vmatpush.bf16.msra.mxu0 0
      %1355 = vmatpush.bf16.msra.mxu0 0
      %1356 = vmatpush.bf16.msra.mxu0 0
      %1357 = vmatpush.bf16.msra.mxu0 0
      %1358 = vmatpush.bf16.msra.mxu0 0
      %1359 = vmatpush.bf16.msra.mxu0 %v1338
      %1360 = vmatpush.bf16.msra.mxu0 %v1337
      %1361 = vmatmul.bf16.gmra.mxu0 %v1342
      %v1362 = vpop.f32.mrf.mxu0
      %v1363 = vadd.f32 0.0, %v1362
      %v1364 = vpop.f32.mrf.mxu0
      %v1365 = vadd.f32 0.0, %v1364
      %1366 = vmatmul.bf16.gmra.mxu0 %v1345
      %v1367 = vpop.f32.mrf.mxu0
      %v1368 = vadd.f32 0.0, %v1367
      %v1369 = vpop.f32.mrf.mxu0
      %v1370 = vadd.f32 0.0, %v1369
      %1371 = vmatmul.bf16.gmra.mxu0 %v1348
      %v1372 = vpop.f32.mrf.mxu0
      %v1373 = vadd.f32 0.0, %v1372
      %v1374 = vpop.f32.mrf.mxu0
      %v1375 = vadd.f32 0.0, %v1374
      %1376 = vmatmul.bf16.gmra.mxu0 %v1351
      %v1377 = vpop.f32.mrf.mxu0
      %v1378 = vadd.f32 0.0, %v1377
      %v1379 = vpop.f32.mrf.mxu0
      %v1380 = vadd.f32 0.0, %v1379
      %1381 = vdwg.mxu0
      %v1382 = vadd.f32 %v1165, %v1363
      %v1383 = vadd.f32 %v1167, %v1365
      %v1384 = vadd.f32 %v1170, %v1368
      %v1385 = vadd.f32 %v1172, %v1370
      %v1386 = vadd.f32 %v1175, %v1373
      %v1387 = vadd.f32 %v1177, %v1375
      %v1388 = vadd.f32 %v1180, %v1378
      %v1389 = vadd.f32 %v1182, %v1380
      %v1390 = vld [vmem:[%s532] sm:$0xe]
      %v1391 = vld [vmem:[%s532 + $0x8] sm:$0xe]
      %v1392 = vld [vmem:[%s532 + $0x10] sm:$0xe]
      %v1393 = vld [vmem:[%s532 + $0x18] sm:$0xe]
      %v1394 = vld [vmem:[%s532 + $0x20] sm:$0xe]
      %v1395 = vld [vmem:[%s532 + $0x28] sm:$0xe]
      %v1396 = vld [vmem:[%s532 + $0x30] sm:$0xe]
      %v1397 = vld [vmem:[%s532 + $0x38] sm:$0xe]
      %v1414 = vrot.slane %v1390, 5
      %v1415 = vrot.slane %v1414, 4
      %v1416 = vrot.slane %v1185, 5
      %v1417 = vsel %vm1016, %v1415, %v1416
      %v1418 = vrot.slane %v1391, 5
      %v1419 = vrot.slane %v1418, 4
      %v1420 = vrot.slane %v1187, 5
      %v1421 = vsel %vm1016, %v1419, %v1420
      %v1422 = vrot.slane %v1392, 5
      %v1423 = vrot.slane %v1422, 4
      %v1424 = vrot.slane %v1189, 5
      %v1425 = vsel %vm1016, %v1423, %v1424
      %v1426 = vrot.slane %v1393, 5
      %v1427 = vrot.slane %v1426, 4
      %v1428 = vrot.slane %v1191, 5
      %v1429 = vsel %vm1016, %v1427, %v1428
      %v1430 = vrot.slane %v1394, 5
      %v1431 = vrot.slane %v1430, 4
      %v1432 = vrot.slane %v1193, 5
      %v1433 = vsel %vm1016, %v1431, %v1432
      %v1434 = vrot.slane %v1395, 5
      %v1435 = vrot.slane %v1434, 4
      %v1436 = vrot.slane %v1195, 5
      %v1437 = vsel %vm1016, %v1435, %v1436
      %v1438 = vrot.slane %v1396, 5
      %v1439 = vrot.slane %v1438, 4
      %v1440 = vrot.slane %v1197, 5
      %v1441 = vsel %vm1016, %v1439, %v1440
      %v1442 = vrot.slane %v1397, 5
      %v1443 = vrot.slane %v1442, 4
      %v1444 = vrot.slane %v1199, 5
      %v1445 = vsel %vm1016, %v1443, %v1444
      %s1446 = scalar_lea.vmem %s209, 112
      %v1447 = vld [vmem:[%s1446] sm:$0xf]
      %v1448 = vld [vmem:[%s1446 + $0x4] sm:$0xf]
      %v1449 = vld [vmem:[%s1446 + $0x8] sm:$0xf]
      %v1450 = vld [vmem:[%s1446 + $0xc] sm:$0xf]
      %v1451 = vunpack.c.l.b16 %v1417
      %v1452 = vunpack.c.l.b16 %v1421
      %v1453 = vunpack.c.l.b16 %v1425
      %v1454 = vunpack.c.l.b16 %v1429
      %v1455 = vunpack.c.l.b16 %v1433
      %v1456 = vunpack.c.l.b16 %v1437
      %v1457 = vunpack.c.l.b16 %v1441
      %v1458 = vunpack.c.l.b16 %v1445
      %v1459 = vpack.c.b16 %v1452, %v1451
      %v1460 = vpack.c.b16 %v1454, %v1453
      %v1461 = vpack.c.b16 %v1456, %v1455
      %v1462 = vpack.c.b16 %v1458, %v1457
      %v1467 = vunpack.c.l.b16 %v1447
      %v1468 = vunpack.c.l.b16 %v1448
      %v1469 = vunpack.c.l.b16 %v1449
      %v1470 = vunpack.c.l.b16 %v1450
      %v1471 = vpack.c.b16 %v1468, %v1467
      %v1472 = vpack.c.b16 %v1470, %v1469
      %v1476 = vsel %vm417, %v1459, 0
      %v1479 = vsel %vm417, %v1460, 0
      %v1482 = vsel %vm417, %v1461, 0
      %v1485 = vsel %vm417, %v1462, 0
      %1487 = vmatpush.bf16.msra.mxu0 0
      %1488 = vmatpush.bf16.msra.mxu0 0
      %1489 = vmatpush.bf16.msra.mxu0 0
      %1490 = vmatpush.bf16.msra.mxu0 0
      %1491 = vmatpush.bf16.msra.mxu0 0
      %1492 = vmatpush.bf16.msra.mxu0 0
      %1493 = vmatpush.bf16.msra.mxu0 %v1472
      %1494 = vmatpush.bf16.msra.mxu0 %v1471
      %1495 = vmatmul.bf16.gmra.mxu0 %v1476
      %v1496 = vpop.f32.mrf.mxu0
      %v1497 = vadd.f32 0.0, %v1496
      %v1498 = vpop.f32.mrf.mxu0
      %v1499 = vadd.f32 0.0, %v1498
      %1500 = vmatmul.bf16.gmra.mxu0 %v1479
      %v1501 = vpop.f32.mrf.mxu0
      %v1502 = vadd.f32 0.0, %v1501
      %v1503 = vpop.f32.mrf.mxu0
      %v1504 = vadd.f32 0.0, %v1503
      %1505 = vmatmul.bf16.gmra.mxu0 %v1482
      %v1506 = vpop.f32.mrf.mxu0
      %v1507 = vadd.f32 0.0, %v1506
      %v1508 = vpop.f32.mrf.mxu0
      %v1509 = vadd.f32 0.0, %v1508
      %1510 = vmatmul.bf16.gmra.mxu0 %v1485
      %v1511 = vpop.f32.mrf.mxu0
      %v1512 = vadd.f32 0.0, %v1511
      %v1513 = vpop.f32.mrf.mxu0
      %v1514 = vadd.f32 0.0, %v1513
      %1515 = vdwg.mxu0
      %v1516 = vadd.f32 %v1382, %v1497
      %v1517 = vadd.f32 %v1383, %v1499
      %v1518 = vadd.f32 %v1384, %v1502
      %v1519 = vadd.f32 %v1385, %v1504
      %v1520 = vadd.f32 %v1386, %v1507
      %v1521 = vadd.f32 %v1387, %v1509
      %v1522 = vadd.f32 %v1388, %v1512
      %v1523 = vadd.f32 %v1389, %v1514
      %s1524 = scalar_lea.vmem [#allocation2], 64
      %v1525 = vld [vmem:[%s1524] sm:$0xff]
      %v1526 = vld [vmem:[%s1524 + $0x8] sm:$0xff]
      %v1527 = vld [vmem:[%s1524 + $0x10] sm:$0xff]
      %v1528 = vld [vmem:[%s1524 + $0x18] sm:$0xff]
      %v1529 = vld [vmem:[%s1524 + $0x20] sm:$0xff]
      %v1530 = vld [vmem:[%s1524 + $0x28] sm:$0xff]
      %v1531 = vld [vmem:[%s1524 + $0x30] sm:$0xff]
      %v1532 = vld [vmem:[%s1524 + $0x38] sm:$0xff]
      %v1533 = vadd.f32 %v1525, %v1516
      %v1534 = vadd.f32 %v1526, %v1517
      %v1535 = vadd.f32 %v1527, %v1518
      %v1536 = vadd.f32 %v1528, %v1519
      %v1537 = vadd.f32 %v1529, %v1520
      %v1538 = vadd.f32 %v1530, %v1521
      %v1539 = vadd.f32 %v1531, %v1522
      %v1540 = vadd.f32 %v1532, %v1523
      %1541 = vst [vmem:[%s1524] sm:$0xff] %v1533
      %1542 = vst [vmem:[%s1524 + $0x8] sm:$0xff] %v1534
      %1543 = vst [vmem:[%s1524 + $0x10] sm:$0xff] %v1535
      %1544 = vst [vmem:[%s1524 + $0x18] sm:$0xff] %v1536
      %1545 = vst [vmem:[%s1524 + $0x20] sm:$0xff] %v1537
      %1546 = vst [vmem:[%s1524 + $0x28] sm:$0xff] %v1538
      %1547 = vst [vmem:[%s1524 + $0x30] sm:$0xff] %v1539
      %1548 = vst [vmem:[%s1524 + $0x38] sm:$0xff] %v1540
      %v1549 = vld [vmem:[%s532] sm:$0xf]
      %v1550 = vld [vmem:[%s532 + $0x8] sm:$0xf]
      %v1551 = vld [vmem:[%s532 + $0x10] sm:$0xf]
      %v1552 = vld [vmem:[%s532 + $0x18] sm:$0xf]
      %v1553 = vld [vmem:[%s532 + $0x20] sm:$0xf]
      %v1554 = vld [vmem:[%s532 + $0x28] sm:$0xf]
      %v1555 = vld [vmem:[%s532 + $0x30] sm:$0xf]
      %v1556 = vld [vmem:[%s532 + $0x38] sm:$0xf]
      %s1557 = scalar_lea.vmem %s209, 128
      %v1558 = vld [vmem:[%s1557] sm:$0xf]
      %v1559 = vld [vmem:[%s1557 + $0x4] sm:$0xf]
      %v1560 = vld [vmem:[%s1557 + $0x8] sm:$0xf]
      %v1561 = vld [vmem:[%s1557 + $0xc] sm:$0xf]
      %v1562 = vld [vmem:[%s532 + $0x4] sm:$0x1]
      %v1563 = vld [vmem:[%s532 + $0xc] sm:$0x1]
      %v1564 = vld [vmem:[%s532 + $0x14] sm:$0x1]
      %v1565 = vld [vmem:[%s532 + $0x1c] sm:$0x1]
      %v1566 = vld [vmem:[%s532 + $0x24] sm:$0x1]
      %v1567 = vld [vmem:[%s532 + $0x2c] sm:$0x1]
      %v1568 = vld [vmem:[%s532 + $0x34] sm:$0x1]
      %v1569 = vld [vmem:[%s532 + $0x3c] sm:$0x1]
      %v1571 = vshrl.u32 %v1549, 16
      %v1573 = vrot.slane %v1571, 4
      %v1574 = vshll.u32 %v1549, 16
      %v1576 = vrot.slane %v1574, 5
      %v1577 = vor.u32 %v1573, %v1576
      %v1578 = vrot.slane %v1577, 4
      %v1580 = vshll.u32 %v1562, 16
      %v1582 = vrot.slane %v1580, 5
      %v1583 = vsel %vm275, %v1578, %v1582
      %v1585 = vshrl.u32 %v1550, 16
      %v1587 = vrot.slane %v1585, 4
      %v1588 = vshll.u32 %v1550, 16
      %v1590 = vrot.slane %v1588, 5
      %v1591 = vor.u32 %v1587, %v1590
      %v1592 = vrot.slane %v1591, 4
      %v1594 = vshll.u32 %v1563, 16
      %v1596 = vrot.slane %v1594, 5
      %v1597 = vsel %vm275, %v1592, %v1596
      %v1599 = vshrl.u32 %v1551, 16
      %v1601 = vrot.slane %v1599, 4
      %v1602 = vshll.u32 %v1551, 16
      %v1604 = vrot.slane %v1602, 5
      %v1605 = vor.u32 %v1601, %v1604
      %v1606 = vrot.slane %v1605, 4
      %v1608 = vshll.u32 %v1564, 16
      %v1610 = vrot.slane %v1608, 5
      %v1611 = vsel %vm275, %v1606, %v1610
      %v1613 = vshrl.u32 %v1552, 16
      %v1615 = vrot.slane %v1613, 4
      %v1616 = vshll.u32 %v1552, 16
      %v1618 = vrot.slane %v1616, 5
      %v1619 = vor.u32 %v1615, %v1618
      %v1620 = vrot.slane %v1619, 4
      %v1622 = vshll.u32 %v1565, 16
      %v1624 = vrot.slane %v1622, 5
      %v1625 = vsel %vm275, %v1620, %v1624
      %v1627 = vshrl.u32 %v1553, 16
      %v1629 = vrot.slane %v1627, 4
      %v1630 = vshll.u32 %v1553, 16
      %v1632 = vrot.slane %v1630, 5
      %v1633 = vor.u32 %v1629, %v1632
      %v1634 = vrot.slane %v1633, 4
      %v1636 = vshll.u32 %v1566, 16
      %v1638 = vrot.slane %v1636, 5
      %v1639 = vsel %vm275, %v1634, %v1638
      %v1641 = vshrl.u32 %v1554, 16
      %v1643 = vrot.slane %v1641, 4
      %v1644 = vshll.u32 %v1554, 16
      %v1646 = vrot.slane %v1644, 5
      %v1647 = vor.u32 %v1643, %v1646
      %v1648 = vrot.slane %v1647, 4
      %v1650 = vshll.u32 %v1567, 16
      %v1652 = vrot.slane %v1650, 5
      %v1653 = vsel %vm275, %v1648, %v1652
      %v1655 = vshrl.u32 %v1555, 16
      %v1657 = vrot.slane %v1655, 4
      %v1658 = vshll.u32 %v1555, 16
      %v1660 = vrot.slane %v1658, 5
      %v1661 = vor.u32 %v1657, %v1660
      %v1662 = vrot.slane %v1661, 4
      %v1664 = vshll.u32 %v1568, 16
      %v1666 = vrot.slane %v1664, 5
      %v1667 = vsel %vm275, %v1662, %v1666
      %v1669 = vshrl.u32 %v1556, 16
      %v1671 = vrot.slane %v1669, 4
      %v1672 = vshll.u32 %v1556, 16
      %v1674 = vrot.slane %v1672, 5
      %v1675 = vor.u32 %v1671, %v1674
      %v1676 = vrot.slane %v1675, 4
      %v1678 = vshll.u32 %v1569, 16
      %v1680 = vrot.slane %v1678, 5
      %v1681 = vsel %vm275, %v1676, %v1680
      %s1682 = scalar_lea.vmem %s209, 144
      %v1683 = vld [vmem:[%s1682] sm:$0xf]
      %v1684 = vld [vmem:[%s1682 + $0x4] sm:$0xf]
      %v1685 = vld [vmem:[%s1682 + $0x8] sm:$0xf]
      %v1686 = vld [vmem:[%s1682 + $0xc] sm:$0xf]
      %v1687 = vunpack.c.l.b16 %v1583
      %v1688 = vunpack.c.l.b16 %v1597
      %v1689 = vunpack.c.l.b16 %v1611
      %v1690 = vunpack.c.l.b16 %v1625
      %v1691 = vunpack.c.l.b16 %v1639
      %v1692 = vunpack.c.l.b16 %v1653
      %v1693 = vunpack.c.l.b16 %v1667
      %v1694 = vunpack.c.l.b16 %v1681
      %v1695 = vpack.c.b16 %v1688, %v1687
      %v1696 = vpack.c.b16 %v1690, %v1689
      %v1697 = vpack.c.b16 %v1692, %v1691
      %v1698 = vpack.c.b16 %v1694, %v1693
      %v1703 = vunpack.c.l.b16 %v1683
      %v1704 = vunpack.c.l.b16 %v1684
      %v1705 = vunpack.c.l.b16 %v1685
      %v1706 = vunpack.c.l.b16 %v1686
      %v1707 = vpack.c.b16 %v1704, %v1703
      %v1708 = vpack.c.b16 %v1706, %v1705
      %v1712 = vsel %vm417, %v1695, 0
      %v1715 = vsel %vm417, %v1696, 0
      %v1718 = vsel %vm417, %v1697, 0
      %v1721 = vsel %vm417, %v1698, 0
      %1723 = vmatpush.bf16.msra.mxu0 0
      %1724 = vmatpush.bf16.msra.mxu0 0
      %1725 = vmatpush.bf16.msra.mxu0 0
      %1726 = vmatpush.bf16.msra.mxu0 0
      %1727 = vmatpush.bf16.msra.mxu0 0
      %1728 = vmatpush.bf16.msra.mxu0 0
      %1729 = vmatpush.bf16.msra.mxu0 %v1708
      %1730 = vmatpush.bf16.msra.mxu0 %v1707
      %1731 = vmatmul.bf16.gmra.mxu0 %v1712
      %v1732 = vpop.f32.mrf.mxu0
      %v1733 = vadd.f32 0.0, %v1732
      %v1734 = vpop.f32.mrf.mxu0
      %v1735 = vadd.f32 0.0, %v1734
      %1736 = vmatmul.bf16.gmra.mxu0 %v1715
      %v1737 = vpop.f32.mrf.mxu0
      %v1738 = vadd.f32 0.0, %v1737
      %v1739 = vpop.f32.mrf.mxu0
      %v1740 = vadd.f32 0.0, %v1739
      %1741 = vmatmul.bf16.gmra.mxu0 %v1718
      %v1742 = vpop.f32.mrf.mxu0
      %v1743 = vadd.f32 0.0, %v1742
      %v1744 = vpop.f32.mrf.mxu0
      %v1745 = vadd.f32 0.0, %v1744
      %1746 = vmatmul.bf16.gmra.mxu0 %v1721
      %v1747 = vpop.f32.mrf.mxu0
      %v1748 = vadd.f32 0.0, %v1747
      %v1749 = vpop.f32.mrf.mxu0
      %v1750 = vadd.f32 0.0, %v1749
      %1751 = vdwg.mxu0
      %v1760 = vunpack.c.l.b16 %v1549
      %v1761 = vunpack.c.l.b16 %v1550
      %v1762 = vunpack.c.l.b16 %v1551
      %v1763 = vunpack.c.l.b16 %v1552
      %v1764 = vunpack.c.l.b16 %v1553
      %v1765 = vunpack.c.l.b16 %v1554
      %v1766 = vunpack.c.l.b16 %v1555
      %v1767 = vunpack.c.l.b16 %v1556
      %v1768 = vpack.c.b16 %v1761, %v1760
      %v1769 = vpack.c.b16 %v1763, %v1762
      %v1770 = vpack.c.b16 %v1765, %v1764
      %v1771 = vpack.c.b16 %v1767, %v1766
      %v1776 = vunpack.c.l.b16 %v1558
      %v1777 = vunpack.c.l.b16 %v1559
      %v1778 = vunpack.c.l.b16 %v1560
      %v1779 = vunpack.c.l.b16 %v1561
      %v1780 = vpack.c.b16 %v1777, %v1776
      %v1781 = vpack.c.b16 %v1779, %v1778
      %v1785 = vsel %vm417, %v1768, 0
      %v1788 = vsel %vm417, %v1769, 0
      %v1791 = vsel %vm417, %v1770, 0
      %v1794 = vsel %vm417, %v1771, 0
      %1796 = vmatpush.bf16.msra.mxu0 0
      %1797 = vmatpush.bf16.msra.mxu0 0
      %1798 = vmatpush.bf16.msra.mxu0 0
      %1799 = vmatpush.bf16.msra.mxu0 0
      %1800 = vmatpush.bf16.msra.mxu0 0
      %1801 = vmatpush.bf16.msra.mxu0 0
      %1802 = vmatpush.bf16.msra.mxu0 %v1781
      %1803 = vmatpush.bf16.msra.mxu0 %v1780
      %1804 = vmatmul.bf16.gmra.mxu0 %v1785
      %v1805 = vpop.f32.mrf.mxu0
      %v1806 = vadd.f32 %v1733, %v1805
      %v1807 = vpop.f32.mrf.mxu0
      %v1808 = vadd.f32 %v1735, %v1807
      %1809 = vmatmul.bf16.gmra.mxu0 %v1788
      %v1810 = vpop.f32.mrf.mxu0
      %v1811 = vadd.f32 %v1738, %v1810
      %v1812 = vpop.f32.mrf.mxu0
      %v1813 = vadd.f32 %v1740, %v1812
      %1814 = vmatmul.bf16.gmra.mxu0 %v1791
      %v1815 = vpop.f32.mrf.mxu0
      %v1816 = vadd.f32 %v1743, %v1815
      %v1817 = vpop.f32.mrf.mxu0
      %v1818 = vadd.f32 %v1745, %v1817
      %1819 = vmatmul.bf16.gmra.mxu0 %v1794
      %v1820 = vpop.f32.mrf.mxu0
      %v1821 = vadd.f32 %v1748, %v1820
      %v1822 = vpop.f32.mrf.mxu0
      %v1823 = vadd.f32 %v1750, %v1822
      %1824 = vdwg.mxu0
      %s1825 = scalar_lea.vmem %s204, 16
      %v1826 = vld [vmem:[%s1825] sm:$0xf]
      %v1827 = vld [vmem:[%s1825 + $0x8] sm:$0xf]
      %v1828 = vld [vmem:[%s1825 + $0x10] sm:$0xf]
      %v1829 = vld [vmem:[%s1825 + $0x18] sm:$0xf]
      %v1830 = vld [vmem:[%s1825 + $0x20] sm:$0xf]
      %v1831 = vld [vmem:[%s1825 + $0x28] sm:$0xf]
      %v1832 = vld [vmem:[%s1825 + $0x30] sm:$0xf]
      %v1833 = vld [vmem:[%s1825 + $0x38] sm:$0xf]
      %s1834 = scalar_lea.vmem %s209, 160
      %v1835 = vld [vmem:[%s1834] sm:$0xf]
      %v1836 = vld [vmem:[%s1834 + $0x4] sm:$0xf]
      %v1837 = vld [vmem:[%s1834 + $0x8] sm:$0xf]
      %v1838 = vld [vmem:[%s1834 + $0xc] sm:$0xf]
      %v1847 = vunpack.c.l.b16 %v1826
      %v1848 = vunpack.c.l.b16 %v1827
      %v1849 = vunpack.c.l.b16 %v1828
      %v1850 = vunpack.c.l.b16 %v1829
      %v1851 = vunpack.c.l.b16 %v1830
      %v1852 = vunpack.c.l.b16 %v1831
      %v1853 = vunpack.c.l.b16 %v1832
      %v1854 = vunpack.c.l.b16 %v1833
      %v1855 = vpack.c.b16 %v1848, %v1847
      %v1856 = vpack.c.b16 %v1850, %v1849
      %v1857 = vpack.c.b16 %v1852, %v1851
      %v1858 = vpack.c.b16 %v1854, %v1853
      %v1863 = vunpack.c.l.b16 %v1835
      %v1864 = vunpack.c.l.b16 %v1836
      %v1865 = vunpack.c.l.b16 %v1837
      %v1866 = vunpack.c.l.b16 %v1838
      %v1867 = vpack.c.b16 %v1864, %v1863
      %v1868 = vpack.c.b16 %v1866, %v1865
      %v1872 = vsel %vm417, %v1855, 0
      %v1875 = vsel %vm417, %v1856, 0
      %v1878 = vsel %vm417, %v1857, 0
      %v1881 = vsel %vm417, %v1858, 0
      %1883 = vmatpush.bf16.msra.mxu0 0
      %1884 = vmatpush.bf16.msra.mxu0 0
      %1885 = vmatpush.bf16.msra.mxu0 0
      %1886 = vmatpush.bf16.msra.mxu0 0
      %1887 = vmatpush.bf16.msra.mxu0 0
      %1888 = vmatpush.bf16.msra.mxu0 0
      %1889 = vmatpush.bf16.msra.mxu0 %v1868
      %1890 = vmatpush.bf16.msra.mxu0 %v1867
      %1891 = vmatmul.bf16.gmra.mxu0 %v1872
      %v1892 = vpop.f32.mrf.mxu0
      %v1893 = vadd.f32 0.0, %v1892
      %v1894 = vpop.f32.mrf.mxu0
      %v1895 = vadd.f32 0.0, %v1894
      %1896 = vmatmul.bf16.gmra.mxu0 %v1875
      %v1897 = vpop.f32.mrf.mxu0
      %v1898 = vadd.f32 0.0, %v1897
      %v1899 = vpop.f32.mrf.mxu0
      %v1900 = vadd.f32 0.0, %v1899
      %1901 = vmatmul.bf16.gmra.mxu0 %v1878
      %v1902 = vpop.f32.mrf.mxu0
      %v1903 = vadd.f32 0.0, %v1902
      %v1904 = vpop.f32.mrf.mxu0
      %v1905 = vadd.f32 0.0, %v1904
      %1906 = vmatmul.bf16.gmra.mxu0 %v1881
      %v1907 = vpop.f32.mrf.mxu0
      %v1908 = vadd.f32 0.0, %v1907
      %v1909 = vpop.f32.mrf.mxu0
      %v1910 = vadd.f32 0.0, %v1909
      %1911 = vdwg.mxu0
      %v1912 = vadd.f32 %v1806, %v1893
      %v1913 = vadd.f32 %v1808, %v1895
      %v1914 = vadd.f32 %v1811, %v1898
      %v1915 = vadd.f32 %v1813, %v1900
      %v1916 = vadd.f32 %v1816, %v1903
      %v1917 = vadd.f32 %v1818, %v1905
      %v1918 = vadd.f32 %v1821, %v1908
      %v1919 = vadd.f32 %v1823, %v1910
      %v1920 = vld [vmem:[%s1825] sm:$0xf]
      %v1921 = vld [vmem:[%s1825 + $0x4] sm:$0x1]
      %v1922 = vld [vmem:[%s1825 + $0x8] sm:$0xf]
      %v1923 = vld [vmem:[%s1825 + $0xc] sm:$0x1]
      %v1924 = vld [vmem:[%s1825 + $0x10] sm:$0xf]
      %v1925 = vld [vmem:[%s1825 + $0x14] sm:$0x1]
      %v1926 = vld [vmem:[%s1825 + $0x18] sm:$0xf]
      %v1927 = vld [vmem:[%s1825 + $0x1c] sm:$0x1]
      %v1928 = vld [vmem:[%s1825 + $0x20] sm:$0xf]
      %v1929 = vld [vmem:[%s1825 + $0x24] sm:$0x1]
      %v1930 = vld [vmem:[%s1825 + $0x28] sm:$0xf]
      %v1931 = vld [vmem:[%s1825 + $0x2c] sm:$0x1]
      %v1932 = vld [vmem:[%s1825 + $0x30] sm:$0xf]
      %v1933 = vld [vmem:[%s1825 + $0x34] sm:$0x1]
      %v1934 = vld [vmem:[%s1825 + $0x38] sm:$0xf]
      %v1935 = vld [vmem:[%s1825 + $0x3c] sm:$0x1]
      %v1937 = vshrl.u32 %v1920, 16
      %v1939 = vrot.slane %v1937, 4
      %v1940 = vshll.u32 %v1920, 16
      %v1942 = vrot.slane %v1940, 5
      %v1943 = vor.u32 %v1939, %v1942
      %v1944 = vrot.slane %v1943, 4
      %v1946 = vshll.u32 %v1921, 16
      %v1948 = vrot.slane %v1946, 5
      %v1949 = vsel %vm275, %v1944, %v1948
      %v1951 = vshrl.u32 %v1922, 16
      %v1953 = vrot.slane %v1951, 4
      %v1954 = vshll.u32 %v1922, 16
      %v1956 = vrot.slane %v1954, 5
      %v1957 = vor.u32 %v1953, %v1956
      %v1958 = vrot.slane %v1957, 4
      %v1960 = vshll.u32 %v1923, 16
      %v1962 = vrot.slane %v1960, 5
      %v1963 = vsel %vm275, %v1958, %v1962
      %v1965 = vshrl.u32 %v1924, 16
      %v1967 = vrot.slane %v1965, 4
      %v1968 = vshll.u32 %v1924, 16
      %v1970 = vrot.slane %v1968, 5
      %v1971 = vor.u32 %v1967, %v1970
      %v1972 = vrot.slane %v1971, 4
      %v1974 = vshll.u32 %v1925, 16
      %v1976 = vrot.slane %v1974, 5
      %v1977 = vsel %vm275, %v1972, %v1976
      %v1979 = vshrl.u32 %v1926, 16
      %v1981 = vrot.slane %v1979, 4
      %v1982 = vshll.u32 %v1926, 16
      %v1984 = vrot.slane %v1982, 5
      %v1985 = vor.u32 %v1981, %v1984
      %v1986 = vrot.slane %v1985, 4
      %v1988 = vshll.u32 %v1927, 16
      %v1990 = vrot.slane %v1988, 5
      %v1991 = vsel %vm275, %v1986, %v1990
      %v1993 = vshrl.u32 %v1928, 16
      %v1995 = vrot.slane %v1993, 4
      %v1996 = vshll.u32 %v1928, 16
      %v1998 = vrot.slane %v1996, 5
      %v1999 = vor.u32 %v1995, %v1998
      %v2000 = vrot.slane %v1999, 4
      %v2002 = vshll.u32 %v1929, 16
      %v2004 = vrot.slane %v2002, 5
      %v2005 = vsel %vm275, %v2000, %v2004
      %v2007 = vshrl.u32 %v1930, 16
      %v2009 = vrot.slane %v2007, 4
      %v2010 = vshll.u32 %v1930, 16
      %v2012 = vrot.slane %v2010, 5
      %v2013 = vor.u32 %v2009, %v2012
      %v2014 = vrot.slane %v2013, 4
      %v2016 = vshll.u32 %v1931, 16
      %v2018 = vrot.slane %v2016, 5
      %v2019 = vsel %vm275, %v2014, %v2018
      %v2021 = vshrl.u32 %v1932, 16
      %v2023 = vrot.slane %v2021, 4
      %v2024 = vshll.u32 %v1932, 16
      %v2026 = vrot.slane %v2024, 5
      %v2027 = vor.u32 %v2023, %v2026
      %v2028 = vrot.slane %v2027, 4
      %v2030 = vshll.u32 %v1933, 16
      %v2032 = vrot.slane %v2030, 5
      %v2033 = vsel %vm275, %v2028, %v2032
      %v2035 = vshrl.u32 %v1934, 16
      %v2037 = vrot.slane %v2035, 4
      %v2038 = vshll.u32 %v1934, 16
      %v2040 = vrot.slane %v2038, 5
      %v2041 = vor.u32 %v2037, %v2040
      %v2042 = vrot.slane %v2041, 4
      %v2044 = vshll.u32 %v1935, 16
      %v2046 = vrot.slane %v2044, 5
      %v2047 = vsel %vm275, %v2042, %v2046
      %s2048 = scalar_lea.vmem %s209, 176
      %v2049 = vld [vmem:[%s2048] sm:$0xf]
      %v2050 = vld [vmem:[%s2048 + $0x4] sm:$0xf]
      %v2051 = vld [vmem:[%s2048 + $0x8] sm:$0xf]
      %v2052 = vld [vmem:[%s2048 + $0xc] sm:$0xf]
      %v2053 = vunpack.c.l.b16 %v1949
      %v2054 = vunpack.c.l.b16 %v1963
      %v2055 = vunpack.c.l.b16 %v1977
      %v2056 = vunpack.c.l.b16 %v1991
      %v2057 = vunpack.c.l.b16 %v2005
      %v2058 = vunpack.c.l.b16 %v2019
      %v2059 = vunpack.c.l.b16 %v2033
      %v2060 = vunpack.c.l.b16 %v2047
      %v2061 = vpack.c.b16 %v2054, %v2053
      %v2062 = vpack.c.b16 %v2056, %v2055
      %v2063 = vpack.c.b16 %v2058, %v2057
      %v2064 = vpack.c.b16 %v2060, %v2059
      %v2069 = vunpack.c.l.b16 %v2049
      %v2070 = vunpack.c.l.b16 %v2050
      %v2071 = vunpack.c.l.b16 %v2051
      %v2072 = vunpack.c.l.b16 %v2052
      %v2073 = vpack.c.b16 %v2070, %v2069
      %v2074 = vpack.c.b16 %v2072, %v2071
      %v2078 = vsel %vm417, %v2061, 0
      %v2081 = vsel %vm417, %v2062, 0
      %v2084 = vsel %vm417, %v2063, 0
      %v2087 = vsel %vm417, %v2064, 0
      %2089 = vmatpush.bf16.msra.mxu0 0
      %2090 = vmatpush.bf16.msra.mxu0 0
      %2091 = vmatpush.bf16.msra.mxu0 0
      %2092 = vmatpush.bf16.msra.mxu0 0
      %2093 = vmatpush.bf16.msra.mxu0 0
      %2094 = vmatpush.bf16.msra.mxu0 0
      %2095 = vmatpush.bf16.msra.mxu0 %v2074
      %2096 = vmatpush.bf16.msra.mxu0 %v2073
      %2097 = vmatmul.bf16.gmra.mxu0 %v2078
      %v2098 = vpop.f32.mrf.mxu0
      %v2099 = vadd.f32 0.0, %v2098
      %v2100 = vpop.f32.mrf.mxu0
      %v2101 = vadd.f32 0.0, %v2100
      %2102 = vmatmul.bf16.gmra.mxu0 %v2081
      %v2103 = vpop.f32.mrf.mxu0
      %v2104 = vadd.f32 0.0, %v2103
      %v2105 = vpop.f32.mrf.mxu0
      %v2106 = vadd.f32 0.0, %v2105
      %2107 = vmatmul.bf16.gmra.mxu0 %v2084
      %v2108 = vpop.f32.mrf.mxu0
      %v2109 = vadd.f32 0.0, %v2108
      %v2110 = vpop.f32.mrf.mxu0
      %v2111 = vadd.f32 0.0, %v2110
      %2112 = vmatmul.bf16.gmra.mxu0 %v2087
      %v2113 = vpop.f32.mrf.mxu0
      %v2114 = vadd.f32 0.0, %v2113
      %v2115 = vpop.f32.mrf.mxu0
      %v2116 = vadd.f32 0.0, %v2115
      %2117 = vdwg.mxu0
      %v2118 = vadd.f32 %v1912, %v2099
      %v2119 = vadd.f32 %v1913, %v2101
      %v2120 = vadd.f32 %v1914, %v2104
      %v2121 = vadd.f32 %v1915, %v2106
      %v2122 = vadd.f32 %v1916, %v2109
      %v2123 = vadd.f32 %v1917, %v2111
      %v2124 = vadd.f32 %v1918, %v2114
      %v2125 = vadd.f32 %v1919, %v2116
      %s2126 = scalar_lea.vmem [#allocation2], 128
      %v2127 = vld [vmem:[%s2126] sm:$0xff]
      %v2128 = vld [vmem:[%s2126 + $0x8] sm:$0xff]
      %v2129 = vld [vmem:[%s2126 + $0x10] sm:$0xff]
      %v2130 = vld [vmem:[%s2126 + $0x18] sm:$0xff]
      %v2131 = vld [vmem:[%s2126 + $0x20] sm:$0xff]
      %v2132 = vld [vmem:[%s2126 + $0x28] sm:$0xff]
      %v2133 = vld [vmem:[%s2126 + $0x30] sm:$0xff]
      %v2134 = vld [vmem:[%s2126 + $0x38] sm:$0xff]
      %v2135 = vadd.f32 %v2127, %v2118
      %v2136 = vadd.f32 %v2128, %v2119
      %v2137 = vadd.f32 %v2129, %v2120
      %v2138 = vadd.f32 %v2130, %v2121
      %v2139 = vadd.f32 %v2131, %v2122
      %v2140 = vadd.f32 %v2132, %v2123
      %v2141 = vadd.f32 %v2133, %v2124
      %v2142 = vadd.f32 %v2134, %v2125
      %2143 = vst [vmem:[%s2126] sm:$0xff] %v2135
      %2144 = vst [vmem:[%s2126 + $0x8] sm:$0xff] %v2136
      %2145 = vst [vmem:[%s2126 + $0x10] sm:$0xff] %v2137
      %2146 = vst [vmem:[%s2126 + $0x18] sm:$0xff] %v2138
      %2147 = vst [vmem:[%s2126 + $0x20] sm:$0xff] %v2139
      %2148 = vst [vmem:[%s2126 + $0x28] sm:$0xff] %v2140
      %2149 = vst [vmem:[%s2126 + $0x30] sm:$0xff] %v2141
      %2150 = vst [vmem:[%s2126 + $0x38] sm:$0xff] %v2142
      %v2151 = vld [vmem:[%s532] sm:$0xf]
      %v2152 = vld [vmem:[%s532 + $0x4] sm:$0x1]
      %v2153 = vld [vmem:[%s532 + $0x8] sm:$0xf]
      %v2154 = vld [vmem:[%s532 + $0xc] sm:$0x1]
      %v2155 = vld [vmem:[%s532 + $0x10] sm:$0xf]
      %v2156 = vld [vmem:[%s532 + $0x14] sm:$0x1]
      %v2157 = vld [vmem:[%s532 + $0x18] sm:$0xf]
      %v2158 = vld [vmem:[%s532 + $0x1c] sm:$0x1]
      %v2159 = vld [vmem:[%s532 + $0x20] sm:$0xf]
      %v2160 = vld [vmem:[%s532 + $0x24] sm:$0x1]
      %v2161 = vld [vmem:[%s532 + $0x28] sm:$0xf]
      %v2162 = vld [vmem:[%s532 + $0x2c] sm:$0x1]
      %v2163 = vld [vmem:[%s532 + $0x30] sm:$0xf]
      %v2164 = vld [vmem:[%s532 + $0x34] sm:$0x1]
      %v2165 = vld [vmem:[%s532 + $0x38] sm:$0xf]
      %v2166 = vld [vmem:[%s532 + $0x3c] sm:$0x1]
      %v2168 = vshrl.u32 %v2151, 16
      %v2170 = vrot.slane %v2168, 4
      %v2171 = vshll.u32 %v2151, 16
      %v2173 = vrot.slane %v2171, 5
      %v2174 = vor.u32 %v2170, %v2173
      %v2175 = vrot.slane %v2174, 4
      %v2177 = vshll.u32 %v2152, 16
      %v2179 = vrot.slane %v2177, 5
      %v2180 = vsel %vm275, %v2175, %v2179
      %v2182 = vshrl.u32 %v2153, 16
      %v2184 = vrot.slane %v2182, 4
      %v2185 = vshll.u32 %v2153, 16
      %v2187 = vrot.slane %v2185, 5
      %v2188 = vor.u32 %v2184, %v2187
      %v2189 = vrot.slane %v2188, 4
      %v2191 = vshll.u32 %v2154, 16
      %v2193 = vrot.slane %v2191, 5
      %v2194 = vsel %vm275, %v2189, %v2193
      %v2196 = vshrl.u32 %v2155, 16
      %v2198 = vrot.slane %v2196, 4
      %v2199 = vshll.u32 %v2155, 16
      %v2201 = vrot.slane %v2199, 5
      %v2202 = vor.u32 %v2198, %v2201
      %v2203 = vrot.slane %v2202, 4
      %v2205 = vshll.u32 %v2156, 16
      %v2207 = vrot.slane %v2205, 5
      %v2208 = vsel %vm275, %v2203, %v2207
      %v2210 = vshrl.u32 %v2157, 16
      %v2212 = vrot.slane %v2210, 4
      %v2213 = vshll.u32 %v2157, 16
      %v2215 = vrot.slane %v2213, 5
      %v2216 = vor.u32 %v2212, %v2215
      %v2217 = vrot.slane %v2216, 4
      %v2219 = vshll.u32 %v2158, 16
      %v2221 = vrot.slane %v2219, 5
      %v2222 = vsel %vm275, %v2217, %v2221
      %v2224 = vshrl.u32 %v2159, 16
      %v2226 = vrot.slane %v2224, 4
      %v2227 = vshll.u32 %v2159, 16
      %v2229 = vrot.slane %v2227, 5
      %v2230 = vor.u32 %v2226, %v2229
      %v2231 = vrot.slane %v2230, 4
      %v2233 = vshll.u32 %v2160, 16
      %v2235 = vrot.slane %v2233, 5
      %v2236 = vsel %vm275, %v2231, %v2235
      %v2238 = vshrl.u32 %v2161, 16
      %v2240 = vrot.slane %v2238, 4
      %v2241 = vshll.u32 %v2161, 16
      %v2243 = vrot.slane %v2241, 5
      %v2244 = vor.u32 %v2240, %v2243
      %v2245 = vrot.slane %v2244, 4
      %v2247 = vshll.u32 %v2162, 16
      %v2249 = vrot.slane %v2247, 5
      %v2250 = vsel %vm275, %v2245, %v2249
      %v2252 = vshrl.u32 %v2163, 16
      %v2254 = vrot.slane %v2252, 4
      %v2255 = vshll.u32 %v2163, 16
      %v2257 = vrot.slane %v2255, 5
      %v2258 = vor.u32 %v2254, %v2257
      %v2259 = vrot.slane %v2258, 4
      %v2261 = vshll.u32 %v2164, 16
      %v2263 = vrot.slane %v2261, 5
      %v2264 = vsel %vm275, %v2259, %v2263
      %v2266 = vshrl.u32 %v2165, 16
      %v2268 = vrot.slane %v2266, 4
      %v2269 = vshll.u32 %v2165, 16
      %v2271 = vrot.slane %v2269, 5
      %v2272 = vor.u32 %v2268, %v2271
      %v2273 = vrot.slane %v2272, 4
      %v2275 = vshll.u32 %v2166, 16
      %v2277 = vrot.slane %v2275, 5
      %v2278 = vsel %vm275, %v2273, %v2277
      %s2279 = scalar_lea.vmem %s209, 192
      %v2280 = vld [vmem:[%s2279] sm:$0xf]
      %v2281 = vld [vmem:[%s2279 + $0x4] sm:$0xf]
      %v2282 = vld [vmem:[%s2279 + $0x8] sm:$0xf]
      %v2283 = vld [vmem:[%s2279 + $0xc] sm:$0xf]
      %v2284 = vld [vmem:[%s532] sm:$0xe]
      %v2285 = vld [vmem:[%s532 + $0x8] sm:$0xe]
      %v2286 = vld [vmem:[%s532 + $0x10] sm:$0xe]
      %v2287 = vld [vmem:[%s532 + $0x18] sm:$0xe]
      %v2288 = vld [vmem:[%s532 + $0x20] sm:$0xe]
      %v2289 = vld [vmem:[%s532 + $0x28] sm:$0xe]
      %v2290 = vld [vmem:[%s532 + $0x30] sm:$0xe]
      %v2291 = vld [vmem:[%s532 + $0x38] sm:$0xe]
      %v2308 = vrot.slane %v2284, 5
      %v2309 = vrot.slane %v2308, 4
      %v2310 = vrot.slane %v2152, 5
      %v2311 = vsel %vm1016, %v2309, %v2310
      %v2312 = vrot.slane %v2285, 5
      %v2313 = vrot.slane %v2312, 4
      %v2314 = vrot.slane %v2154, 5
      %v2315 = vsel %vm1016, %v2313, %v2314
      %v2316 = vrot.slane %v2286, 5
      %v2317 = vrot.slane %v2316, 4
      %v2318 = vrot.slane %v2156, 5
      %v2319 = vsel %vm1016, %v2317, %v2318
      %v2320 = vrot.slane %v2287, 5
      %v2321 = vrot.slane %v2320, 4
      %v2322 = vrot.slane %v2158, 5
      %v2323 = vsel %vm1016, %v2321, %v2322
      %v2324 = vrot.slane %v2288, 5
      %v2325 = vrot.slane %v2324, 4
      %v2326 = vrot.slane %v2160, 5
      %v2327 = vsel %vm1016, %v2325, %v2326
      %v2328 = vrot.slane %v2289, 5
      %v2329 = vrot.slane %v2328, 4
      %v2330 = vrot.slane %v2162, 5
      %v2331 = vsel %vm1016, %v2329, %v2330
      %v2332 = vrot.slane %v2290, 5
      %v2333 = vrot.slane %v2332, 4
      %v2334 = vrot.slane %v2164, 5
      %v2335 = vsel %vm1016, %v2333, %v2334
      %v2336 = vrot.slane %v2291, 5
      %v2337 = vrot.slane %v2336, 4
      %v2338 = vrot.slane %v2166, 5
      %v2339 = vsel %vm1016, %v2337, %v2338
      %s2340 = scalar_lea.vmem %s209, 208
      %v2341 = vld [vmem:[%s2340] sm:$0xf]
      %v2342 = vld [vmem:[%s2340 + $0x4] sm:$0xf]
      %v2343 = vld [vmem:[%s2340 + $0x8] sm:$0xf]
      %v2344 = vld [vmem:[%s2340 + $0xc] sm:$0xf]
      %v2345 = vunpack.c.l.b16 %v2311
      %v2346 = vunpack.c.l.b16 %v2315
      %v2347 = vunpack.c.l.b16 %v2319
      %v2348 = vunpack.c.l.b16 %v2323
      %v2349 = vunpack.c.l.b16 %v2327
      %v2350 = vunpack.c.l.b16 %v2331
      %v2351 = vunpack.c.l.b16 %v2335
      %v2352 = vunpack.c.l.b16 %v2339
      %v2353 = vpack.c.b16 %v2346, %v2345
      %v2354 = vpack.c.b16 %v2348, %v2347
      %v2355 = vpack.c.b16 %v2350, %v2349
      %v2356 = vpack.c.b16 %v2352, %v2351
      %v2361 = vunpack.c.l.b16 %v2341
      %v2362 = vunpack.c.l.b16 %v2342
      %v2363 = vunpack.c.l.b16 %v2343
      %v2364 = vunpack.c.l.b16 %v2344
      %v2365 = vpack.c.b16 %v2362, %v2361
      %v2366 = vpack.c.b16 %v2364, %v2363
      %v2370 = vsel %vm417, %v2353, 0
      %v2373 = vsel %vm417, %v2354, 0
      %v2376 = vsel %vm417, %v2355, 0
      %v2379 = vsel %vm417, %v2356, 0
      %2381 = vmatpush.bf16.msra.mxu0 0
      %2382 = vmatpush.bf16.msra.mxu0 0
      %2383 = vmatpush.bf16.msra.mxu0 0
      %2384 = vmatpush.bf16.msra.mxu0 0
      %2385 = vmatpush.bf16.msra.mxu0 0
      %2386 = vmatpush.bf16.msra.mxu0 0
      %2387 = vmatpush.bf16.msra.mxu0 %v2366
      %2388 = vmatpush.bf16.msra.mxu0 %v2365
      %2389 = vmatmul.bf16.gmra.mxu0 %v2370
      %v2390 = vpop.f32.mrf.mxu0
      %v2391 = vadd.f32 0.0, %v2390
      %v2392 = vpop.f32.mrf.mxu0
      %v2393 = vadd.f32 0.0, %v2392
      %2394 = vmatmul.bf16.gmra.mxu0 %v2373
      %v2395 = vpop.f32.mrf.mxu0
      %v2396 = vadd.f32 0.0, %v2395
      %v2397 = vpop.f32.mrf.mxu0
      %v2398 = vadd.f32 0.0, %v2397
      %2399 = vmatmul.bf16.gmra.mxu0 %v2376
      %v2400 = vpop.f32.mrf.mxu0
      %v2401 = vadd.f32 0.0, %v2400
      %v2402 = vpop.f32.mrf.mxu0
      %v2403 = vadd.f32 0.0, %v2402
      %2404 = vmatmul.bf16.gmra.mxu0 %v2379
      %v2405 = vpop.f32.mrf.mxu0
      %v2406 = vadd.f32 0.0, %v2405
      %v2407 = vpop.f32.mrf.mxu0
      %v2408 = vadd.f32 0.0, %v2407
      %2409 = vdwg.mxu0
      %v2410 = vunpack.c.l.b16 %v2180
      %v2411 = vunpack.c.l.b16 %v2194
      %v2412 = vunpack.c.l.b16 %v2208
      %v2413 = vunpack.c.l.b16 %v2222
      %v2414 = vunpack.c.l.b16 %v2236
      %v2415 = vunpack.c.l.b16 %v2250
      %v2416 = vunpack.c.l.b16 %v2264
      %v2417 = vunpack.c.l.b16 %v2278
      %v2418 = vpack.c.b16 %v2411, %v2410
      %v2419 = vpack.c.b16 %v2413, %v2412
      %v2420 = vpack.c.b16 %v2415, %v2414
      %v2421 = vpack.c.b16 %v2417, %v2416
      %v2426 = vunpack.c.l.b16 %v2280
      %v2427 = vunpack.c.l.b16 %v2281
      %v2428 = vunpack.c.l.b16 %v2282
      %v2429 = vunpack.c.l.b16 %v2283
      %v2430 = vpack.c.b16 %v2427, %v2426
      %v2431 = vpack.c.b16 %v2429, %v2428
      %v2435 = vsel %vm417, %v2418, 0
      %v2438 = vsel %vm417, %v2419, 0
      %v2441 = vsel %vm417, %v2420, 0
      %v2444 = vsel %vm417, %v2421, 0
      %2446 = vmatpush.bf16.msra.mxu0 0
      %2447 = vmatpush.bf16.msra.mxu0 0
      %2448 = vmatpush.bf16.msra.mxu0 0
      %2449 = vmatpush.bf16.msra.mxu0 0
      %2450 = vmatpush.bf16.msra.mxu0 0
      %2451 = vmatpush.bf16.msra.mxu0 0
      %2452 = vmatpush.bf16.msra.mxu0 %v2431
      %2453 = vmatpush.bf16.msra.mxu0 %v2430
      %2454 = vmatmul.bf16.gmra.mxu0 %v2435
      %v2455 = vpop.f32.mrf.mxu0
      %v2456 = vadd.f32 %v2391, %v2455
      %v2457 = vpop.f32.mrf.mxu0
      %v2458 = vadd.f32 %v2393, %v2457
      %2459 = vmatmul.bf16.gmra.mxu0 %v2438
      %v2460 = vpop.f32.mrf.mxu0
      %v2461 = vadd.f32 %v2396, %v2460
      %v2462 = vpop.f32.mrf.mxu0
      %v2463 = vadd.f32 %v2398, %v2462
      %2464 = vmatmul.bf16.gmra.mxu0 %v2441
      %v2465 = vpop.f32.mrf.mxu0
      %v2466 = vadd.f32 %v2401, %v2465
      %v2467 = vpop.f32.mrf.mxu0
      %v2468 = vadd.f32 %v2403, %v2467
      %2469 = vmatmul.bf16.gmra.mxu0 %v2444
      %v2470 = vpop.f32.mrf.mxu0
      %v2471 = vadd.f32 %v2406, %v2470
      %v2472 = vpop.f32.mrf.mxu0
      %v2473 = vadd.f32 %v2408, %v2472
      %2474 = vdwg.mxu0
      %v2475 = vld [vmem:[%s1825] sm:$0xf]
      %v2476 = vld [vmem:[%s1825 + $0x4] sm:$0x1]
      %v2477 = vld [vmem:[%s1825 + $0x8] sm:$0xf]
      %v2478 = vld [vmem:[%s1825 + $0xc] sm:$0x1]
      %v2479 = vld [vmem:[%s1825 + $0x10] sm:$0xf]
      %v2480 = vld [vmem:[%s1825 + $0x14] sm:$0x1]
      %v2481 = vld [vmem:[%s1825 + $0x18] sm:$0xf]
      %v2482 = vld [vmem:[%s1825 + $0x1c] sm:$0x1]
      %v2483 = vld [vmem:[%s1825 + $0x20] sm:$0xf]
      %v2484 = vld [vmem:[%s1825 + $0x24] sm:$0x1]
      %v2485 = vld [vmem:[%s1825 + $0x28] sm:$0xf]
      %v2486 = vld [vmem:[%s1825 + $0x2c] sm:$0x1]
      %v2487 = vld [vmem:[%s1825 + $0x30] sm:$0xf]
      %v2488 = vld [vmem:[%s1825 + $0x34] sm:$0x1]
      %v2489 = vld [vmem:[%s1825 + $0x38] sm:$0xf]
      %v2490 = vld [vmem:[%s1825 + $0x3c] sm:$0x1]
      %v2492 = vshrl.u32 %v2475, 16
      %v2494 = vrot.slane %v2492, 4
      %v2495 = vshll.u32 %v2475, 16
      %v2497 = vrot.slane %v2495, 5
      %v2498 = vor.u32 %v2494, %v2497
      %v2499 = vrot.slane %v2498, 4
      %v2501 = vshll.u32 %v2476, 16
      %v2503 = vrot.slane %v2501, 5
      %v2504 = vsel %vm275, %v2499, %v2503
      %v2506 = vshrl.u32 %v2477, 16
      %v2508 = vrot.slane %v2506, 4
      %v2509 = vshll.u32 %v2477, 16
      %v2511 = vrot.slane %v2509, 5
      %v2512 = vor.u32 %v2508, %v2511
      %v2513 = vrot.slane %v2512, 4
      %v2515 = vshll.u32 %v2478, 16
      %v2517 = vrot.slane %v2515, 5
      %v2518 = vsel %vm275, %v2513, %v2517
      %v2520 = vshrl.u32 %v2479, 16
      %v2522 = vrot.slane %v2520, 4
      %v2523 = vshll.u32 %v2479, 16
      %v2525 = vrot.slane %v2523, 5
      %v2526 = vor.u32 %v2522, %v2525
      %v2527 = vrot.slane %v2526, 4
      %v2529 = vshll.u32 %v2480, 16
      %v2531 = vrot.slane %v2529, 5
      %v2532 = vsel %vm275, %v2527, %v2531
      %v2534 = vshrl.u32 %v2481, 16
      %v2536 = vrot.slane %v2534, 4
      %v2537 = vshll.u32 %v2481, 16
      %v2539 = vrot.slane %v2537, 5
      %v2540 = vor.u32 %v2536, %v2539
      %v2541 = vrot.slane %v2540, 4
      %v2543 = vshll.u32 %v2482, 16
      %v2545 = vrot.slane %v2543, 5
      %v2546 = vsel %vm275, %v2541, %v2545
      %v2548 = vshrl.u32 %v2483, 16
      %v2550 = vrot.slane %v2548, 4
      %v2551 = vshll.u32 %v2483, 16
      %v2553 = vrot.slane %v2551, 5
      %v2554 = vor.u32 %v2550, %v2553
      %v2555 = vrot.slane %v2554, 4
      %v2557 = vshll.u32 %v2484, 16
      %v2559 = vrot.slane %v2557, 5
      %v2560 = vsel %vm275, %v2555, %v2559
      %v2562 = vshrl.u32 %v2485, 16
      %v2564 = vrot.slane %v2562, 4
      %v2565 = vshll.u32 %v2485, 16
      %v2567 = vrot.slane %v2565, 5
      %v2568 = vor.u32 %v2564, %v2567
      %v2569 = vrot.slane %v2568, 4
      %v2571 = vshll.u32 %v2486, 16
      %v2573 = vrot.slane %v2571, 5
      %v2574 = vsel %vm275, %v2569, %v2573
      %v2576 = vshrl.u32 %v2487, 16
      %v2578 = vrot.slane %v2576, 4
      %v2579 = vshll.u32 %v2487, 16
      %v2581 = vrot.slane %v2579, 5
      %v2582 = vor.u32 %v2578, %v2581
      %v2583 = vrot.slane %v2582, 4
      %v2585 = vshll.u32 %v2488, 16
      %v2587 = vrot.slane %v2585, 5
      %v2588 = vsel %vm275, %v2583, %v2587
      %v2590 = vshrl.u32 %v2489, 16
      %v2592 = vrot.slane %v2590, 4
      %v2593 = vshll.u32 %v2489, 16
      %v2595 = vrot.slane %v2593, 5
      %v2596 = vor.u32 %v2592, %v2595
      %v2597 = vrot.slane %v2596, 4
      %v2599 = vshll.u32 %v2490, 16
      %v2601 = vrot.slane %v2599, 5
      %v2602 = vsel %vm275, %v2597, %v2601
      %s2603 = scalar_lea.vmem %s209, 224
      %v2604 = vld [vmem:[%s2603] sm:$0xf]
      %v2605 = vld [vmem:[%s2603 + $0x4] sm:$0xf]
      %v2606 = vld [vmem:[%s2603 + $0x8] sm:$0xf]
      %v2607 = vld [vmem:[%s2603 + $0xc] sm:$0xf]
      %v2608 = vunpack.c.l.b16 %v2504
      %v2609 = vunpack.c.l.b16 %v2518
      %v2610 = vunpack.c.l.b16 %v2532
      %v2611 = vunpack.c.l.b16 %v2546
      %v2612 = vunpack.c.l.b16 %v2560
      %v2613 = vunpack.c.l.b16 %v2574
      %v2614 = vunpack.c.l.b16 %v2588
      %v2615 = vunpack.c.l.b16 %v2602
      %v2616 = vpack.c.b16 %v2609, %v2608
      %v2617 = vpack.c.b16 %v2611, %v2610
      %v2618 = vpack.c.b16 %v2613, %v2612
      %v2619 = vpack.c.b16 %v2615, %v2614
      %v2624 = vunpack.c.l.b16 %v2604
      %v2625 = vunpack.c.l.b16 %v2605
      %v2626 = vunpack.c.l.b16 %v2606
      %v2627 = vunpack.c.l.b16 %v2607
      %v2628 = vpack.c.b16 %v2625, %v2624
      %v2629 = vpack.c.b16 %v2627, %v2626
      %v2633 = vsel %vm417, %v2616, 0
      %v2636 = vsel %vm417, %v2617, 0
      %v2639 = vsel %vm417, %v2618, 0
      %v2642 = vsel %vm417, %v2619, 0
      %2644 = vmatpush.bf16.msra.mxu0 0
      %2645 = vmatpush.bf16.msra.mxu0 0
      %2646 = vmatpush.bf16.msra.mxu0 0
      %2647 = vmatpush.bf16.msra.mxu0 0
      %2648 = vmatpush.bf16.msra.mxu0 0
      %2649 = vmatpush.bf16.msra.mxu0 0
      %2650 = vmatpush.bf16.msra.mxu0 %v2629
      %2651 = vmatpush.bf16.msra.mxu0 %v2628
      %2652 = vmatmul.bf16.gmra.mxu0 %v2633
      %v2653 = vpop.f32.mrf.mxu0
      %v2654 = vadd.f32 0.0, %v2653
      %v2655 = vpop.f32.mrf.mxu0
      %v2656 = vadd.f32 0.0, %v2655
      %2657 = vmatmul.bf16.gmra.mxu0 %v2636
      %v2658 = vpop.f32.mrf.mxu0
      %v2659 = vadd.f32 0.0, %v2658
      %v2660 = vpop.f32.mrf.mxu0
      %v2661 = vadd.f32 0.0, %v2660
      %2662 = vmatmul.bf16.gmra.mxu0 %v2639
      %v2663 = vpop.f32.mrf.mxu0
      %v2664 = vadd.f32 0.0, %v2663
      %v2665 = vpop.f32.mrf.mxu0
      %v2666 = vadd.f32 0.0, %v2665
      %2667 = vmatmul.bf16.gmra.mxu0 %v2642
      %v2668 = vpop.f32.mrf.mxu0
      %v2669 = vadd.f32 0.0, %v2668
      %v2670 = vpop.f32.mrf.mxu0
      %v2671 = vadd.f32 0.0, %v2670
      %2672 = vdwg.mxu0
      %v2673 = vadd.f32 %v2456, %v2654
      %v2674 = vadd.f32 %v2458, %v2656
      %v2675 = vadd.f32 %v2461, %v2659
      %v2676 = vadd.f32 %v2463, %v2661
      %v2677 = vadd.f32 %v2466, %v2664
      %v2678 = vadd.f32 %v2468, %v2666
      %v2679 = vadd.f32 %v2471, %v2669
      %v2680 = vadd.f32 %v2473, %v2671
      %v2681 = vld [vmem:[%s1825] sm:$0xe]
      %v2682 = vld [vmem:[%s1825 + $0x8] sm:$0xe]
      %v2683 = vld [vmem:[%s1825 + $0x10] sm:$0xe]
      %v2684 = vld [vmem:[%s1825 + $0x18] sm:$0xe]
      %v2685 = vld [vmem:[%s1825 + $0x20] sm:$0xe]
      %v2686 = vld [vmem:[%s1825 + $0x28] sm:$0xe]
      %v2687 = vld [vmem:[%s1825 + $0x30] sm:$0xe]
      %v2688 = vld [vmem:[%s1825 + $0x38] sm:$0xe]
      %v2705 = vrot.slane %v2681, 5
      %v2706 = vrot.slane %v2705, 4
      %v2707 = vrot.slane %v2476, 5
      %v2708 = vsel %vm1016, %v2706, %v2707
      %v2709 = vrot.slane %v2682, 5
      %v2710 = vrot.slane %v2709, 4
      %v2711 = vrot.slane %v2478, 5
      %v2712 = vsel %vm1016, %v2710, %v2711
      %v2713 = vrot.slane %v2683, 5
      %v2714 = vrot.slane %v2713, 4
      %v2715 = vrot.slane %v2480, 5
      %v2716 = vsel %vm1016, %v2714, %v2715
      %v2717 = vrot.slane %v2684, 5
      %v2718 = vrot.slane %v2717, 4
      %v2719 = vrot.slane %v2482, 5
      %v2720 = vsel %vm1016, %v2718, %v2719
      %v2721 = vrot.slane %v2685, 5
      %v2722 = vrot.slane %v2721, 4
      %v2723 = vrot.slane %v2484, 5
      %v2724 = vsel %vm1016, %v2722, %v2723
      %v2725 = vrot.slane %v2686, 5
      %v2726 = vrot.slane %v2725, 4
      %v2727 = vrot.slane %v2486, 5
      %v2728 = vsel %vm1016, %v2726, %v2727
      %v2729 = vrot.slane %v2687, 5
      %v2730 = vrot.slane %v2729, 4
      %v2731 = vrot.slane %v2488, 5
      %v2732 = vsel %vm1016, %v2730, %v2731
      %v2733 = vrot.slane %v2688, 5
      %v2734 = vrot.slane %v2733, 4
      %v2735 = vrot.slane %v2490, 5
      %v2736 = vsel %vm1016, %v2734, %v2735
      %s2737 = scalar_lea.vmem %s209, 240
      %v2738 = vld [vmem:[%s2737] sm:$0xf]
      %v2739 = vld [vmem:[%s2737 + $0x4] sm:$0xf]
      %v2740 = vld [vmem:[%s2737 + $0x8] sm:$0xf]
      %v2741 = vld [vmem:[%s2737 + $0xc] sm:$0xf]
      %v2742 = vunpack.c.l.b16 %v2708
      %v2743 = vunpack.c.l.b16 %v2712
      %v2744 = vunpack.c.l.b16 %v2716
      %v2745 = vunpack.c.l.b16 %v2720
      %v2746 = vunpack.c.l.b16 %v2724
      %v2747 = vunpack.c.l.b16 %v2728
      %v2748 = vunpack.c.l.b16 %v2732
      %v2749 = vunpack.c.l.b16 %v2736
      %v2750 = vpack.c.b16 %v2743, %v2742
      %v2751 = vpack.c.b16 %v2745, %v2744
      %v2752 = vpack.c.b16 %v2747, %v2746
      %v2753 = vpack.c.b16 %v2749, %v2748
      %v2758 = vunpack.c.l.b16 %v2738
      %v2759 = vunpack.c.l.b16 %v2739
      %v2760 = vunpack.c.l.b16 %v2740
      %v2761 = vunpack.c.l.b16 %v2741
      %v2762 = vpack.c.b16 %v2759, %v2758
      %v2763 = vpack.c.b16 %v2761, %v2760
      %v2767 = vsel %vm417, %v2750, 0
      %v2770 = vsel %vm417, %v2751, 0
      %v2773 = vsel %vm417, %v2752, 0
      %v2776 = vsel %vm417, %v2753, 0
      %2778 = vmatpush.bf16.msra.mxu0 0
      %2779 = vmatpush.bf16.msra.mxu0 0
      %2780 = vmatpush.bf16.msra.mxu0 0
      %2781 = vmatpush.bf16.msra.mxu0 0
      %2782 = vmatpush.bf16.msra.mxu0 0
      %2783 = vmatpush.bf16.msra.mxu0 0
      %2784 = vmatpush.bf16.msra.mxu0 %v2763
      %2785 = vmatpush.bf16.msra.mxu0 %v2762
      %2786 = vmatmul.bf16.gmra.mxu0 %v2767
      %v2787 = vpop.f32.mrf.mxu0
      %v2788 = vadd.f32 0.0, %v2787
      %v2789 = vpop.f32.mrf.mxu0
      %v2790 = vadd.f32 0.0, %v2789
      %2791 = vmatmul.bf16.gmra.mxu0 %v2770
      %v2792 = vpop.f32.mrf.mxu0
      %v2793 = vadd.f32 0.0, %v2792
      %v2794 = vpop.f32.mrf.mxu0
      %v2795 = vadd.f32 0.0, %v2794
      %2796 = vmatmul.bf16.gmra.mxu0 %v2773
      %v2797 = vpop.f32.mrf.mxu0
      %v2798 = vadd.f32 0.0, %v2797
      %v2799 = vpop.f32.mrf.mxu0
      %v2800 = vadd.f32 0.0, %v2799
      %2801 = vmatmul.bf16.gmra.mxu0 %v2776
      %v2802 = vpop.f32.mrf.mxu0
      %v2803 = vadd.f32 0.0, %v2802
      %v2804 = vpop.f32.mrf.mxu0
      %v2805 = vadd.f32 0.0, %v2804
      %2806 = vdwg.mxu0
      %v2807 = vadd.f32 %v2673, %v2788
      %v2808 = vadd.f32 %v2674, %v2790
      %v2809 = vadd.f32 %v2675, %v2793
      %v2810 = vadd.f32 %v2676, %v2795
      %v2811 = vadd.f32 %v2677, %v2798
      %v2812 = vadd.f32 %v2678, %v2800
      %v2813 = vadd.f32 %v2679, %v2803
      %v2814 = vadd.f32 %v2680, %v2805
      %s2815 = scalar_lea.vmem [#allocation2], 192
      %v2816 = vld [vmem:[%s2815] sm:$0xff]
      %v2817 = vld [vmem:[%s2815 + $0x8] sm:$0xff]
      %v2818 = vld [vmem:[%s2815 + $0x10] sm:$0xff]
      %v2819 = vld [vmem:[%s2815 + $0x18] sm:$0xff]
      %v2820 = vld [vmem:[%s2815 + $0x20] sm:$0xff]
      %v2821 = vld [vmem:[%s2815 + $0x28] sm:$0xff]
      %v2822 = vld [vmem:[%s2815 + $0x30] sm:$0xff]
      %v2823 = vld [vmem:[%s2815 + $0x38] sm:$0xff]
      %v2824 = vadd.f32 %v2816, %v2807
      %v2825 = vadd.f32 %v2817, %v2808
      %v2826 = vadd.f32 %v2818, %v2809
      %v2827 = vadd.f32 %v2819, %v2810
      %v2828 = vadd.f32 %v2820, %v2811
      %v2829 = vadd.f32 %v2821, %v2812
      %v2830 = vadd.f32 %v2822, %v2813
      %v2831 = vadd.f32 %v2823, %v2814
      %2832 = vst [vmem:[%s2815] sm:$0xff] %v2824
      %2833 = vst [vmem:[%s2815 + $0x8] sm:$0xff] %v2825
      %2834 = vst [vmem:[%s2815 + $0x10] sm:$0xff] %v2826
      %2835 = vst [vmem:[%s2815 + $0x18] sm:$0xff] %v2827
      %2836 = vst [vmem:[%s2815 + $0x20] sm:$0xff] %v2828
      %2837 = vst [vmem:[%s2815 + $0x28] sm:$0xff] %v2829
      %2838 = vst [vmem:[%s2815 + $0x30] sm:$0xff] %v2830
      %2839 = vst [vmem:[%s2815 + $0x38] sm:$0xff] %v2831
      // Predicated region
      $region37: #{prediction_head.2} parent=31 // pred_check
        %p2840 = pneg %p217
      $region38: #{prediction_head.2} parent=31 // pred_check_branch
        %2842 = sbr.rel (%p2840) target = $region40
      $region39: #{prediction_head.2} parent=31 // pred_region
        %v2843 = vld [vmem:[%s2] sm:$0x1]
        %v2844 = vld [vmem:[#allocation2] sm:$0xff]
        %v2845 = vld [vmem:[#allocation2 + $0x8] sm:$0xff]
        %v2846 = vld [vmem:[#allocation2 + $0x10] sm:$0xff]
        %v2847 = vld [vmem:[#allocation2 + $0x18] sm:$0xff]
        %v2848 = vld [vmem:[#allocation2 + $0x20] sm:$0xff]
        %v2849 = vld [vmem:[#allocation2 + $0x28] sm:$0xff]
        %v2850 = vld [vmem:[#allocation2 + $0x30] sm:$0xff]
        %v2851 = vld [vmem:[#allocation2 + $0x38] sm:$0xff]
        %v2853 = vperm.slane %v2843, 0
        %v2855 = vadd.f32 %v2844, %v2853
        %v2856 = vadd.f32 %v2845, %v2853
        %v2857 = vadd.f32 %v2846, %v2853
        %v2858 = vadd.f32 %v2847, %v2853
        %v2859 = vadd.f32 %v2848, %v2853
        %v2860 = vadd.f32 %v2849, %v2853
        %v2861 = vadd.f32 %v2850, %v2853
        %v2862 = vadd.f32 %v2851, %v2853
        %v2863 = vpack.c.bf16 %v2855, %v2855
        %v2864 = vpack.c.bf16 %v2856, %v2856
        %v2865 = vpack.c.bf16 %v2857, %v2857
        %v2866 = vpack.c.bf16 %v2858, %v2858
        %v2867 = vpack.c.bf16 %v2859, %v2859
        %v2868 = vpack.c.bf16 %v2860, %v2860
        %v2869 = vpack.c.bf16 %v2861, %v2861
        %v2870 = vpack.c.bf16 %v2862, %v2862
        %2871 = vst [vmem:[%s215] sm:$0xf] %v2863
        %2872 = vst [vmem:[%s215 + $0x10] sm:$0xf] %v2864
        %2873 = vst [vmem:[%s215 + $0x20] sm:$0xf] %v2865
        %2874 = vst [vmem:[%s215 + $0x30] sm:$0xf] %v2866
        %2875 = vst [vmem:[%s215 + $0x40] sm:$0xf] %v2867
        %2876 = vst [vmem:[%s215 + $0x50] sm:$0xf] %v2868
        %2877 = vst [vmem:[%s215 + $0x60] sm:$0xf] %v2869
        %2878 = vst [vmem:[%s215 + $0x70] sm:$0xf] %v2870
        %v2879 = vld [vmem:[%s1524] sm:$0xff]
        %v2880 = vld [vmem:[%s1524 + $0x8] sm:$0xff]
        %v2881 = vld [vmem:[%s1524 + $0x10] sm:$0xff]
        %v2882 = vld [vmem:[%s1524 + $0x18] sm:$0xff]
        %v2883 = vld [vmem:[%s1524 + $0x20] sm:$0xff]
        %v2884 = vld [vmem:[%s1524 + $0x28] sm:$0xff]
        %v2885 = vld [vmem:[%s1524 + $0x30] sm:$0xff]
        %v2886 = vld [vmem:[%s1524 + $0x38] sm:$0xff]
        %v2887 = vadd.f32 %v2879, %v2853
        %v2888 = vadd.f32 %v2880, %v2853
        %v2889 = vadd.f32 %v2881, %v2853
        %v2890 = vadd.f32 %v2882, %v2853
        %v2891 = vadd.f32 %v2883, %v2853
        %v2892 = vadd.f32 %v2884, %v2853
        %v2893 = vadd.f32 %v2885, %v2853
        %v2894 = vadd.f32 %v2886, %v2853
        %v2895 = vpack.c.bf16 %v2887, %v2887
        %v2896 = vpack.c.bf16 %v2888, %v2888
        %v2897 = vpack.c.bf16 %v2889, %v2889
        %v2898 = vpack.c.bf16 %v2890, %v2890
        %v2899 = vpack.c.bf16 %v2891, %v2891
        %v2900 = vpack.c.bf16 %v2892, %v2892
        %v2901 = vpack.c.bf16 %v2893, %v2893
        %v2902 = vpack.c.bf16 %v2894, %v2894
        %2903 = vst [vmem:[%s215 + $0x4] sm:$0xf] %v2895
        %2904 = vst [vmem:[%s215 + $0x14] sm:$0xf] %v2896
        %2905 = vst [vmem:[%s215 + $0x24] sm:$0xf] %v2897
        %2906 = vst [vmem:[%s215 + $0x34] sm:$0xf] %v2898
        %2907 = vst [vmem:[%s215 + $0x44] sm:$0xf] %v2899
        %2908 = vst [vmem:[%s215 + $0x54] sm:$0xf] %v2900
        %2909 = vst [vmem:[%s215 + $0x64] sm:$0xf] %v2901
        %2910 = vst [vmem:[%s215 + $0x74] sm:$0xf] %v2902
        %v2911 = vld [vmem:[%s2126] sm:$0xff]
        %v2912 = vld [vmem:[%s2126 + $0x8] sm:$0xff]
        %v2913 = vld [vmem:[%s2126 + $0x10] sm:$0xff]
        %v2914 = vld [vmem:[%s2126 + $0x18] sm:$0xff]
        %v2915 = vld [vmem:[%s2126 + $0x20] sm:$0xff]
        %v2916 = vld [vmem:[%s2126 + $0x28] sm:$0xff]
        %v2917 = vld [vmem:[%s2126 + $0x30] sm:$0xff]
        %v2918 = vld [vmem:[%s2126 + $0x38] sm:$0xff]
        %v2919 = vadd.f32 %v2911, %v2853
        %v2920 = vadd.f32 %v2912, %v2853
        %v2921 = vadd.f32 %v2913, %v2853
        %v2922 = vadd.f32 %v2914, %v2853
        %v2923 = vadd.f32 %v2915, %v2853
        %v2924 = vadd.f32 %v2916, %v2853
        %v2925 = vadd.f32 %v2917, %v2853
        %v2926 = vadd.f32 %v2918, %v2853
        %v2927 = vpack.c.bf16 %v2919, %v2919
        %v2928 = vpack.c.bf16 %v2920, %v2920
        %v2929 = vpack.c.bf16 %v2921, %v2921
        %v2930 = vpack.c.bf16 %v2922, %v2922
        %v2931 = vpack.c.bf16 %v2923, %v2923
        %v2932 = vpack.c.bf16 %v2924, %v2924
        %v2933 = vpack.c.bf16 %v2925, %v2925
        %v2934 = vpack.c.bf16 %v2926, %v2926
        %s2935 = scalar_lea.vmem %s215, 8
        %2936 = vst [vmem:[%s2935] sm:$0xf] %v2927
        %2937 = vst [vmem:[%s2935 + $0x10] sm:$0xf] %v2928
        %2938 = vst [vmem:[%s2935 + $0x20] sm:$0xf] %v2929
        %2939 = vst [vmem:[%s2935 + $0x30] sm:$0xf] %v2930
        %2940 = vst [vmem:[%s2935 + $0x40] sm:$0xf] %v2931
        %2941 = vst [vmem:[%s2935 + $0x50] sm:$0xf] %v2932
        %2942 = vst [vmem:[%s2935 + $0x60] sm:$0xf] %v2933
        %2943 = vst [vmem:[%s2935 + $0x70] sm:$0xf] %v2934
        %v2944 = vld [vmem:[%s2815] sm:$0xff]
        %v2945 = vld [vmem:[%s2815 + $0x8] sm:$0xff]
        %v2946 = vld [vmem:[%s2815 + $0x10] sm:$0xff]
        %v2947 = vld [vmem:[%s2815 + $0x18] sm:$0xff]
        %v2948 = vld [vmem:[%s2815 + $0x20] sm:$0xff]
        %v2949 = vld [vmem:[%s2815 + $0x28] sm:$0xff]
        %v2950 = vld [vmem:[%s2815 + $0x30] sm:$0xff]
        %v2951 = vld [vmem:[%s2815 + $0x38] sm:$0xff]
        %v2952 = vadd.f32 %v2944, %v2853
        %v2953 = vadd.f32 %v2945, %v2853
        %v2954 = vadd.f32 %v2946, %v2853
        %v2955 = vadd.f32 %v2947, %v2853
        %v2956 = vadd.f32 %v2948, %v2853
        %v2957 = vadd.f32 %v2949, %v2853
        %v2958 = vadd.f32 %v2950, %v2853
        %v2959 = vadd.f32 %v2951, %v2853
        %v2960 = vpack.c.bf16 %v2952, %v2952
        %v2961 = vpack.c.bf16 %v2953, %v2953
        %v2962 = vpack.c.bf16 %v2954, %v2954
        %v2963 = vpack.c.bf16 %v2955, %v2955
        %v2964 = vpack.c.bf16 %v2956, %v2956
        %v2965 = vpack.c.bf16 %v2957, %v2957
        %v2966 = vpack.c.bf16 %v2958, %v2958
        %v2967 = vpack.c.bf16 %v2959, %v2959
        %2968 = vst [vmem:[%s2935 + $0x4] sm:$0xf] %v2960
        %2969 = vst [vmem:[%s2935 + $0x14] sm:$0xf] %v2961
        %2970 = vst [vmem:[%s2935 + $0x24] sm:$0xf] %v2962
        %2971 = vst [vmem:[%s2935 + $0x34] sm:$0xf] %v2963
        %2972 = vst [vmem:[%s2935 + $0x44] sm:$0xf] %v2964
        %2973 = vst [vmem:[%s2935 + $0x54] sm:$0xf] %v2965
        %2974 = vst [vmem:[%s2935 + $0x64] sm:$0xf] %v2966
        %2975 = vst [vmem:[%s2935 + $0x74] sm:$0xf] %v2967
      $region40: #{prediction_head.2} parent=31 // pred_fallthru
        _
      %p2976 = scmp.lt.s32.totalorder %s18, 1
      %s2977 = scalar_select %p2976, %s18, 1
      %s2978 = smul.addr %s2977, 32
      %s2979 = smul.addr %s2978, 4
      %s2980 = scalar_lea.vmem %s3, %s2979
      // Predicated region
      $region41: #{prediction_head.2} parent=31 // pred_check
        %p2981 = pneg %p119
      $region42: #{prediction_head.2} parent=31 // pred_check_branch
        %2983 = sbr.rel (%p2981) target = $region44
      $region43: #{prediction_head.2} parent=31 // pred_region
        _
      $region44: #{prediction_head.2} parent=31 // pred_fallthru
        _
    $region32: #{prediction_head.2} parent=5 // pred_fallthru
      _
    %p2984 = scmp.le.s32.totalorder 2, %s9
    // Predicated region
    $region45: #{prediction_head.2} parent=5 // pred_check
      %p2985 = pneg %p2984
    $region46: #{prediction_head.2} parent=5 // pred_check_branch
      %2987 = sbr.rel (%p2985) target = $region48
    $region47: #{prediction_head.2} parent=5 // pred_region
      %s2988 = ssub.s32 %s9, 2
      // Predicated region
      $region49: #{prediction_head.2} parent=47 // pred_check
        %p2989 = pneg %p125
      $region50: #{prediction_head.2} parent=47 // pred_check_branch
        %2991 = sbr.rel (%p2989) target = $region52
      $region51: #{prediction_head.2} parent=47 // pred_region
        %p2992 = scmp.lt.s32.totalorder %s20, 1
        %s2993 = scalar_select %p2992, %s20, 1
        %s2994 = smul.addr %s2993, 32
        %s2995 = smul.addr %s2994, 4
        %s2996 = scalar_lea.vmem %s3, %s2995
      $region52: #{prediction_head.2} parent=47 // pred_fallthru
        _
    $region48: #{prediction_head.2} parent=5 // pred_fallthru
      _
  $region6: #{prediction_head.2} parent=0 // loop_footer
    %s13 = sadd.s32 1, %s9
  $region7: #{prediction_head.2} parent=0 // loop_footer_branch
    %8 = sbr.rel target = $region3
  $region8: #{prediction_head.2} parent=0 // loop_exit
    _

// kernel: prediction_head.3
$region0: #{prediction_head.3}
  #allocation0 [shape = 'u32[]', space=smem, size = 0x4, offset = 0x4, fixed_abs, tag = 'smem constant byte address 0x4 - core index']
  #allocation1 [shape = 'u32[72,128]{1,0:T(1,128)}', space=vmem, size = 0x9000, scoped, tag = 'internal scratch']
  #allocation2 [shape = 'f32[4,16,16,128]{3,2,1,0:T(8,128)}', space=vmem, size = 0x80000, scoped, tag = 'scratch operand']
  %s0 = inlined_call_operand.vmem [shape: bf16[2,18,18,128], index: 0, kind: input, shape index: {}]
  %s1 = inlined_call_operand.vmem [shape: bf16[4,4,128,128], index: 1, kind: input, shape index: {}]
  %s2 = inlined_call_operand.vmem [shape: f32[1,128], index: 2, kind: input, shape index: {}]
  %s3 = inlined_call_operand.vmem [shape: f32[2,16,2,16,256], index: 3, kind: output, shape index: {}]
  %s4 = sld [smem:[#allocation0]]
  $region53: #{prediction_head.3} parent=0
    _
  %s6 = ssub.s32 1, %s4
  %s7 = scalar_select 0, %s6, %s4
  loop: start=0, step=1, limit=4
  $region2: #{prediction_head.3} parent=0 // loop_pre_header
    _
  $region3: #{prediction_head.3} parent=0 // loop_header
    %s9 = sphi 0, %s13
    %p10 = scmp.ge.s32.totalorder %s9, 4
    %s16 = sphi 0, %s28
    %s17 = sphi 0, %s24
    %s18 = sphi 0, %s16
    %s19 = sphi 0, %s17
    %s20 = sphi 0, %s18
    %s21 = sphi 0, %s19
    %s33 = sphi 0, %s35
    %s36 = sphi 0, %s33
    %s37 = sphi 0, %s36
    %s53 = sphi 0, %s37
    %s59 = sphi 0, %s61
    %s62 = sphi 0, %s59
    %s63 = sphi 0, %s62
    %s79 = sphi 0, %s63
    %s83 = sphi 0, %s83
    %s85 = sphi 0, %s83
    %s86 = sphi 0, %s85
    %s100 = sphi 0, %s86
    %s106 = sphi 0, %s108
    %s109 = sphi 0, %s106
    %s110 = sphi 0, %s109
    %s126 = sphi 0, %s110
  $region4: #{prediction_head.3} parent=0 // loop_header_branch
    %12 = sbr.rel (%p10) target = $region8
  $region5: #{prediction_head.3} parent=0 // loop_body
    %s14 = ssub.s32 %s9, 1
    %s15 = ssub.s32 %s9, 2
    %s22 = sadd.s32 1, %s17
    %p23 = scmp.ge.s32.totalorder %s22, 1
    %s24 = scalar_select %p23, 0, %s22
    %s25 = sadd.s32 1, %s16
    %s26 = scalar_select %p23, %s25, %s16
    %p27 = scmp.ge.s32.totalorder %s26, 2
    %s28 = scalar_select %p27, 0, %s26
    %s29 = ssub.s32 %s16, %s28
    %s30 = ssub.s32 %s17, %s24
    %s31 = sor.u32 %s29, %s30
    %p32 = scmp.eq.s32.totalorder %s31, 0
    %s34 = sadd.s32 %s33, 1
    %s35 = scalar_select %p32, %s33, %s34
    %p38 = pneg %p32
    %p39 = scmp.eq.s32.totalorder %s9, 1
    %p40 = por %p38, %p39
    %p41 = scmp.ne.s32.totalorder %s33, %s36
    %p42 = scmp.eq.s32.totalorder %s9, 0
    %p43 = por %p41, %p42
    %p44 = scmp.ne.s32.totalorder %s33, %s36
    %p45 = scmp.eq.s32.totalorder %s14, 1
    %p46 = por %p44, %p45
    %p47 = scmp.ne.s32.totalorder %s36, %s37
    %p48 = scmp.eq.s32.totalorder %s14, 0
    %p49 = por %p47, %p48
    %p50 = scmp.ne.s32.totalorder %s36, %s37
    %p51 = scmp.eq.s32.totalorder %s15, 1
    %p52 = por %p50, %p51
    %p54 = scmp.ne.s32.totalorder %s37, %s53
    %p55 = scmp.eq.s32.totalorder %s15, 0
    %p56 = por %p54, %p55
    %s57 = ssub.s32 %s17, %s24
    %p58 = scmp.eq.s32.totalorder %s57, 0
    %s60 = sadd.s32 %s59, 1
    %s61 = scalar_select %p58, %s59, %s60
    %p64 = pneg %p58
    %p65 = scmp.eq.s32.totalorder %s9, 1
    %p66 = por %p64, %p65
    %p67 = scmp.ne.s32.totalorder %s59, %s62
    %p68 = scmp.eq.s32.totalorder %s9, 0
    %p69 = por %p67, %p68
    %p70 = scmp.ne.s32.totalorder %s59, %s62
    %p71 = scmp.eq.s32.totalorder %s14, 1
    %p72 = por %p70, %p71
    %p73 = scmp.ne.s32.totalorder %s62, %s63
    %p74 = scmp.eq.s32.totalorder %s14, 0
    %p75 = por %p73, %p74
    %p76 = scmp.ne.s32.totalorder %s62, %s63
    %p77 = scmp.eq.s32.totalorder %s15, 1
    %p78 = por %p76, %p77
    %p80 = scmp.ne.s32.totalorder %s63, %s79
    %p81 = scmp.eq.s32.totalorder %s15, 0
    %p82 = por %p80, %p81
    %s84 = sadd.s32 %s83, 1
    %p87 = scmp.eq.s32.totalorder %s9, 1
    %p88 = scmp.ne.s32.totalorder %s83, %s85
    %p89 = scmp.eq.s32.totalorder %s9, 0
    %p90 = por %p88, %p89
    %p91 = scmp.ne.s32.totalorder %s83, %s85
    %p92 = scmp.eq.s32.totalorder %s14, 1
    %p93 = por %p91, %p92
    %p94 = scmp.ne.s32.totalorder %s85, %s86
    %p95 = scmp.eq.s32.totalorder %s14, 0
    %p96 = por %p94, %p95
    %p97 = scmp.ne.s32.totalorder %s85, %s86
    %p98 = scmp.eq.s32.totalorder %s15, 1
    %p99 = por %p97, %p98
    %p101 = scmp.ne.s32.totalorder %s86, %s100
    %p102 = scmp.eq.s32.totalorder %s15, 0
    %p103 = por %p101, %p102
    %s104 = ssub.s32 %s16, %s28
    %p105 = scmp.eq.s32.totalorder %s104, 0
    %s107 = sadd.s32 %s106, 1
    %s108 = scalar_select %p105, %s106, %s107
    %p111 = pneg %p105
    %p112 = scmp.eq.s32.totalorder %s9, 1
    %p113 = por %p111, %p112
    %p114 = scmp.ne.s32.totalorder %s106, %s109
    %p115 = scmp.eq.s32.totalorder %s9, 0
    %p116 = por %p114, %p115
    %p117 = scmp.ne.s32.totalorder %s106, %s109
    %p118 = scmp.eq.s32.totalorder %s14, 1
    %p119 = por %p117, %p118
    %p120 = scmp.ne.s32.totalorder %s109, %s110
    %p121 = scmp.eq.s32.totalorder %s14, 0
    %p122 = por %p120, %p121
    %p123 = scmp.ne.s32.totalorder %s109, %s110
    %p124 = scmp.eq.s32.totalorder %s15, 1
    %p125 = por %p123, %p124
    %p127 = scmp.ne.s32.totalorder %s110, %s126
    %p128 = scmp.eq.s32.totalorder %s15, 0
    %p129 = por %p127, %p128
    %p130 = scmp.le.s32.totalorder 1, %s9
    %p131 = scmp.lt.s32.totalorder %s9, 3
    %p132 = pnand %p130, %p131
    %p133 = pneg %p132
    // Predicated region
    $region9: #{prediction_head.3} parent=5 // pred_check
      _
    $region10: #{prediction_head.3} parent=5 // pred_check_branch
      %135 = sbr.rel (%p132) target = $region12
    $region11: #{prediction_head.3} parent=5 // pred_region
      %s136 = ssub.s32 %s9, 1
      // Predicated region
      $region13: #{prediction_head.3} parent=11 // pred_check
        %p137 = pneg %p75
      $region14: #{prediction_head.3} parent=11 // pred_check_branch
        %139 = sbr.rel (%p137) target = $region16
      $region15: #{prediction_head.3} parent=11 // pred_region
        %s140 = smul.u32 16, %s19
        %p141 = scmp.lt.s32.totalorder %s140, 15
        %s142 = scalar_select %p141, %s140, 15
        %s143 = smul.addr %s142, 4
        %s144 = scalar_lea.vmem %s1, %s143
        %s145 = smul.u32 16, %s19
      $region16: #{prediction_head.3} parent=11 // pred_fallthru
        _
      // Predicated region
      $region17: #{prediction_head.3} parent=11 // pred_check
        %p146 = pneg %p96
      $region18: #{prediction_head.3} parent=11 // pred_check_branch
        %148 = sbr.rel (%p146) target = $region20
      $region19: #{prediction_head.3} parent=11 // pred_region
        _
      $region20: #{prediction_head.3} parent=11 // pred_fallthru
        _
    $region12: #{prediction_head.3} parent=5 // pred_fallthru
      _
    %p149 = scmp.lt.s32.totalorder %s9, 2
    // Predicated region
    $region21: #{prediction_head.3} parent=5 // pred_check
      %p150 = pneg %p149
    $region22: #{prediction_head.3} parent=5 // pred_check_branch
      %152 = sbr.rel (%p150) target = $region24
    $region23: #{prediction_head.3} parent=5 // pred_region
      // Predicated region
      $region25: #{prediction_head.3} parent=23 // pred_check
        %p153 = pneg %p43
      $region26: #{prediction_head.3} parent=23 // pred_check_branch
        %155 = sbr.rel (%p153) target = $region28
      $region27: #{prediction_head.3} parent=23 // pred_region
        %p156 = scmp.lt.s32.totalorder %s16, 1
        %s157 = scalar_select %p156, %s16, 1
        %p158 = scmp.lt.s32.totalorder %s17, 0
        %s159 = scalar_select %p158, %s17, 0
        %s160 = smul.addr %s157, 54
        %s161 = sadd.s32 %s159, %s160
        %s162 = smul.addr %s161, 4
        %s163 = scalar_lea.vmem %s0, %s162
      $region28: #{prediction_head.3} parent=23 // pred_fallthru
        _
    $region24: #{prediction_head.3} parent=5 // pred_fallthru
      _
    %p164 = scmp.le.s32.totalorder 1, %s9
    %p165 = scmp.lt.s32.totalorder %s9, 3
    %p166 = pnand %p164, %p165
    %p167 = pneg %p166
    // Predicated region
    $region29: #{prediction_head.3} parent=5 // pred_check
      _
    $region30: #{prediction_head.3} parent=5 // pred_check_branch
      %169 = sbr.rel (%p166) target = $region32
    $region31: #{prediction_head.3} parent=5 // pred_region
      %s170 = ssub.s32 %s9, 1
      %p171 = scmp.lt.s32.totalorder %s18, 1
      %s172 = scalar_select %p171, %s18, 1
      %p173 = scmp.lt.s32.totalorder %s19, 0
      %s174 = scalar_select %p173, %s19, 0
      %s175 = smul.addr %s172, 54
      %s176 = sadd.s32 %s174, %s175
      %s177 = smul.addr %s176, 4
      %s178 = scalar_lea.vmem %s0, %s177
      %p179 = pneg %p49
      %p180 = pneg %p46
      %s181 = smul.u32 16, %s19
      %p182 = scmp.lt.s32.totalorder %s181, 15
      %s183 = scalar_select %p182, %s181, 15
      %s184 = smul.addr %s183, 4
      %s185 = scalar_lea.vmem %s1, %s184
      %p186 = pneg %p75
      %p187 = pneg %p72
      %p188 = pneg %p96
      %p189 = pneg %p93
      %p190 = pneg %p122
      %p191 = pneg %p119
      %p192 = scmp.lt.s32.totalorder %s18, 1
      %s193 = scalar_select %p192, %s18, 1
      %s194 = smul.addr %s193, 128
      %s195 = smul.addr %s194, 8
      %s196 = scalar_lea.vmem %s3, %s195
      %p197 = scmp.lt.s32.totalorder %s18, 1
      %s198 = scalar_select %p197, %s18, 1
      %p199 = scmp.lt.s32.totalorder %s19, 0
      %s200 = scalar_select %p199, %s19, 0
      %s201 = smul.addr %s198, 54
      %s202 = sadd.s32 %s200, %s201
      %s203 = smul.addr %s202, 4
      %s204 = scalar_lea.vmem %s0, %s203
      %s205 = smul.u32 16, %s19
      %p206 = scmp.lt.s32.totalorder %s205, 15
      %s207 = scalar_select %p206, %s205, 15
      %s208 = smul.addr %s207, 4
      %s209 = scalar_lea.vmem %s1, %s208
      %s210 = smul.u32 16, %s19
      %p211 = scmp.lt.s32.totalorder %s18, 1
      %s212 = scalar_select %p211, %s18, 1
      %s213 = smul.addr %s212, 128
      %s214 = smul.addr %s213, 8
      %s215 = scalar_lea.vmem %s3, %s214
      %p216 = scmp.eq.s32.totalorder %s19, 0
      // Predicated region
      $region33: #{prediction_head.3} parent=31 // pred_check
        %p217 = pneg %p216
      $region34: #{prediction_head.3} parent=31 // pred_check_branch
        %219 = sbr.rel (%p217) target = $region36
      $region35: #{prediction_head.3} parent=31 // pred_region
        %220 = vst [vmem:[#allocation2] sm:$0xff] 0.0
        %221 = vst [vmem:[#allocation2 + $0x8] sm:$0xff] 0.0
        %222 = vst [vmem:[#allocation2 + $0x10] sm:$0xff] 0.0
        %223 = vst [vmem:[#allocation2 + $0x18] sm:$0xff] 0.0
        %224 = vst [vmem:[#allocation2 + $0x20] sm:$0xff] 0.0
        %225 = vst [vmem:[#allocation2 + $0x28] sm:$0xff] 0.0
        %226 = vst [vmem:[#allocation2 + $0x30] sm:$0xff] 0.0
        %227 = vst [vmem:[#allocation2 + $0x38] sm:$0xff] 0.0
        %228 = vst [vmem:[#allocation2 + $0x40] sm:$0xff] 0.0
        %229 = vst [vmem:[#allocation2 + $0x48] sm:$0xff] 0.0
        %230 = vst [vmem:[#allocation2 + $0x50] sm:$0xff] 0.0
        %231 = vst [vmem:[#allocation2 + $0x58] sm:$0xff] 0.0
        %232 = vst [vmem:[#allocation2 + $0x60] sm:$0xff] 0.0
        %233 = vst [vmem:[#allocation2 + $0x68] sm:$0xff] 0.0
        %234 = vst [vmem:[#allocation2 + $0x70] sm:$0xff] 0.0
        %235 = vst [vmem:[#allocation2 + $0x78] sm:$0xff] 0.0
        %236 = vst [vmem:[#allocation2 + $0x80] sm:$0xff] 0.0
        %237 = vst [vmem:[#allocation2 + $0x88] sm:$0xff] 0.0
        %238 = vst [vmem:[#allocation2 + $0x90] sm:$0xff] 0.0
        %239 = vst [vmem:[#allocation2 + $0x98] sm:$0xff] 0.0
        %240 = vst [vmem:[#allocation2 + $0xa0] sm:$0xff] 0.0
        %241 = vst [vmem:[#allocation2 + $0xa8] sm:$0xff] 0.0
        %242 = vst [vmem:[#allocation2 + $0xb0] sm:$0xff] 0.0
        %243 = vst [vmem:[#allocation2 + $0xb8] sm:$0xff] 0.0
        %244 = vst [vmem:[#allocation2 + $0xc0] sm:$0xff] 0.0
        %245 = vst [vmem:[#allocation2 + $0xc8] sm:$0xff] 0.0
        %246 = vst [vmem:[#allocation2 + $0xd0] sm:$0xff] 0.0
        %247 = vst [vmem:[#allocation2 + $0xd8] sm:$0xff] 0.0
        %248 = vst [vmem:[#allocation2 + $0xe0] sm:$0xff] 0.0
        %249 = vst [vmem:[#allocation2 + $0xe8] sm:$0xff] 0.0
        %250 = vst [vmem:[#allocation2 + $0xf0] sm:$0xff] 0.0
        %251 = vst [vmem:[#allocation2 + $0xf8] sm:$0xff] 0.0
        %252 = vst [vmem:[#allocation2 + $0x100] sm:$0xff] 0.0
        %253 = vst [vmem:[#allocation2 + $0x108] sm:$0xff] 0.0
        %254 = vst [vmem:[#allocation2 + $0x110] sm:$0xff] 0.0
        %255 = vst [vmem:[#allocation2 + $0x118] sm:$0xff] 0.0
        %256 = vst [vmem:[#allocation2 + $0x120] sm:$0xff] 0.0
        %257 = vst [vmem:[#allocation2 + $0x128] sm:$0xff] 0.0
        %258 = vst [vmem:[#allocation2 + $0x130] sm:$0xff] 0.0
        %259 = vst [vmem:[#allocation2 + $0x138] sm:$0xff] 0.0
        %260 = vst [vmem:[#allocation2 + $0x140] sm:$0xff] 0.0
        %261 = vst [vmem:[#allocation2 + $0x148] sm:$0xff] 0.0
        %262 = vst [vmem:[#allocation2 + $0x150] sm:$0xff] 0.0
        %263 = vst [vmem:[#allocation2 + $0x158] sm:$0xff] 0.0
        %264 = vst [vmem:[#allocation2 + $0x160] sm:$0xff] 0.0
        %265 = vst [vmem:[#allocation2 + $0x168] sm:$0xff] 0.0
        %266 = vst [vmem:[#allocation2 + $0x170] sm:$0xff] 0.0
        %267 = vst [vmem:[#allocation2 + $0x178] sm:$0xff] 0.0
        %268 = vst [vmem:[#allocation2 + $0x180] sm:$0xff] 0.0
        %269 = vst [vmem:[#allocation2 + $0x188] sm:$0xff] 0.0
        %270 = vst [vmem:[#allocation2 + $0x190] sm:$0xff] 0.0
        %271 = vst [vmem:[#allocation2 + $0x198] sm:$0xff] 0.0
        %272 = vst [vmem:[#allocation2 + $0x1a0] sm:$0xff] 0.0
        %273 = vst [vmem:[#allocation2 + $0x1a8] sm:$0xff] 0.0
        %274 = vst [vmem:[#allocation2 + $0x1b0] sm:$0xff] 0.0
        %275 = vst [vmem:[#allocation2 + $0x1b8] sm:$0xff] 0.0
        %276 = vst [vmem:[#allocation2 + $0x1c0] sm:$0xff] 0.0
        %277 = vst [vmem:[#allocation2 + $0x1c8] sm:$0xff] 0.0
        %278 = vst [vmem:[#allocation2 + $0x1d0] sm:$0xff] 0.0
        %279 = vst [vmem:[#allocation2 + $0x1d8] sm:$0xff] 0.0
        %280 = vst [vmem:[#allocation2 + $0x1e0] sm:$0xff] 0.0
        %281 = vst [vmem:[#allocation2 + $0x1e8] sm:$0xff] 0.0
        %282 = vst [vmem:[#allocation2 + $0x1f0] sm:$0xff] 0.0
        %283 = vst [vmem:[#allocation2 + $0x1f8] sm:$0xff] 0.0
        %284 = vst [vmem:[#allocation2 + $0x200] sm:$0xff] 0.0
        %285 = vst [vmem:[#allocation2 + $0x208] sm:$0xff] 0.0
        %286 = vst [vmem:[#allocation2 + $0x210] sm:$0xff] 0.0
        %287 = vst [vmem:[#allocation2 + $0x218] sm:$0xff] 0.0
        %288 = vst [vmem:[#allocation2 + $0x220] sm:$0xff] 0.0
        %289 = vst [vmem:[#allocation2 + $0x228] sm:$0xff] 0.0
        %290 = vst [vmem:[#allocation2 + $0x230] sm:$0xff] 0.0
        %291 = vst [vmem:[#allocation2 + $0x238] sm:$0xff] 0.0
        %292 = vst [vmem:[#allocation2 + $0x240] sm:$0xff] 0.0
        %293 = vst [vmem:[#allocation2 + $0x248] sm:$0xff] 0.0
        %294 = vst [vmem:[#allocation2 + $0x250] sm:$0xff] 0.0
        %295 = vst [vmem:[#allocation2 + $0x258] sm:$0xff] 0.0
        %296 = vst [vmem:[#allocation2 + $0x260] sm:$0xff] 0.0
        %297 = vst [vmem:[#allocation2 + $0x268] sm:$0xff] 0.0
        %298 = vst [vmem:[#allocation2 + $0x270] sm:$0xff] 0.0
        %299 = vst [vmem:[#allocation2 + $0x278] sm:$0xff] 0.0
        %300 = vst [vmem:[#allocation2 + $0x280] sm:$0xff] 0.0
        %301 = vst [vmem:[#allocation2 + $0x288] sm:$0xff] 0.0
        %302 = vst [vmem:[#allocation2 + $0x290] sm:$0xff] 0.0
        %303 = vst [vmem:[#allocation2 + $0x298] sm:$0xff] 0.0
        %304 = vst [vmem:[#allocation2 + $0x2a0] sm:$0xff] 0.0
        %305 = vst [vmem:[#allocation2 + $0x2a8] sm:$0xff] 0.0
        %306 = vst [vmem:[#allocation2 + $0x2b0] sm:$0xff] 0.0
        %307 = vst [vmem:[#allocation2 + $0x2b8] sm:$0xff] 0.0
        %308 = vst [vmem:[#allocation2 + $0x2c0] sm:$0xff] 0.0
        %309 = vst [vmem:[#allocation2 + $0x2c8] sm:$0xff] 0.0
        %310 = vst [vmem:[#allocation2 + $0x2d0] sm:$0xff] 0.0
        %311 = vst [vmem:[#allocation2 + $0x2d8] sm:$0xff] 0.0
        %312 = vst [vmem:[#allocation2 + $0x2e0] sm:$0xff] 0.0
        %313 = vst [vmem:[#allocation2 + $0x2e8] sm:$0xff] 0.0
        %314 = vst [vmem:[#allocation2 + $0x2f0] sm:$0xff] 0.0
        %315 = vst [vmem:[#allocation2 + $0x2f8] sm:$0xff] 0.0
        %316 = vst [vmem:[#allocation2 + $0x300] sm:$0xff] 0.0
        %317 = vst [vmem:[#allocation2 + $0x308] sm:$0xff] 0.0
        %318 = vst [vmem:[#allocation2 + $0x310] sm:$0xff] 0.0
        %319 = vst [vmem:[#allocation2 + $0x318] sm:$0xff] 0.0
        %320 = vst [vmem:[#allocation2 + $0x320] sm:$0xff] 0.0
        %321 = vst [vmem:[#allocation2 + $0x328] sm:$0xff] 0.0
        %322 = vst [vmem:[#allocation2 + $0x330] sm:$0xff] 0.0
        %323 = vst [vmem:[#allocation2 + $0x338] sm:$0xff] 0.0
        %324 = vst [vmem:[#allocation2 + $0x340] sm:$0xff] 0.0
        %325 = vst [vmem:[#allocation2 + $0x348] sm:$0xff] 0.0
        %326 = vst [vmem:[#allocation2 + $0x350] sm:$0xff] 0.0
        %327 = vst [vmem:[#allocation2 + $0x358] sm:$0xff] 0.0
        %328 = vst [vmem:[#allocation2 + $0x360] sm:$0xff] 0.0
        %329 = vst [vmem:[#allocation2 + $0x368] sm:$0xff] 0.0
        %330 = vst [vmem:[#allocation2 + $0x370] sm:$0xff] 0.0
        %331 = vst [vmem:[#allocation2 + $0x378] sm:$0xff] 0.0
        %332 = vst [vmem:[#allocation2 + $0x380] sm:$0xff] 0.0
        %333 = vst [vmem:[#allocation2 + $0x388] sm:$0xff] 0.0
        %334 = vst [vmem:[#allocation2 + $0x390] sm:$0xff] 0.0
        %335 = vst [vmem:[#allocation2 + $0x398] sm:$0xff] 0.0
        %336 = vst [vmem:[#allocation2 + $0x3a0] sm:$0xff] 0.0
        %337 = vst [vmem:[#allocation2 + $0x3a8] sm:$0xff] 0.0
        %338 = vst [vmem:[#allocation2 + $0x3b0] sm:$0xff] 0.0
        %339 = vst [vmem:[#allocation2 + $0x3b8] sm:$0xff] 0.0
        %340 = vst [vmem:[#allocation2 + $0x3c0] sm:$0xff] 0.0
        %341 = vst [vmem:[#allocation2 + $0x3c8] sm:$0xff] 0.0
        %342 = vst [vmem:[#allocation2 + $0x3d0] sm:$0xff] 0.0
        %343 = vst [vmem:[#allocation2 + $0x3d8] sm:$0xff] 0.0
        %344 = vst [vmem:[#allocation2 + $0x3e0] sm:$0xff] 0.0
        %345 = vst [vmem:[#allocation2 + $0x3e8] sm:$0xff] 0.0
        %346 = vst [vmem:[#allocation2 + $0x3f0] sm:$0xff] 0.0
        %347 = vst [vmem:[#allocation2 + $0x3f8] sm:$0xff] 0.0
      $region36: #{prediction_head.3} parent=31 // pred_fallthru
        _
      %v348 = vld [vmem:[%s204] sm:$0xf]
      %v349 = vld [vmem:[%s204 + $0x4] sm:$0xf]
      %v350 = vld [vmem:[%s204 + $0xc] sm:$0xf]
      %v351 = vld [vmem:[%s204 + $0x10] sm:$0xf]
      %v352 = vld [vmem:[%s204 + $0x18] sm:$0xf]
      %v353 = vld [vmem:[%s204 + $0x1c] sm:$0xf]
      %v354 = vld [vmem:[%s204 + $0x24] sm:$0xf]
      %v355 = vld [vmem:[%s204 + $0x28] sm:$0xf]
      %v356 = vld [vmem:[%s204 + $0x30] sm:$0xf]
      %v357 = vld [vmem:[%s204 + $0x34] sm:$0xf]
      %v358 = vld [vmem:[%s204 + $0x3c] sm:$0xf]
      %v359 = vld [vmem:[%s204 + $0x40] sm:$0xf]
      %v360 = vld [vmem:[%s204 + $0x48] sm:$0xf]
      %v361 = vld [vmem:[%s204 + $0x4c] sm:$0xf]
      %v362 = vld [vmem:[%s204 + $0x54] sm:$0xf]
      %v363 = vld [vmem:[%s204 + $0x58] sm:$0xf]
      %v364 = vld [vmem:[%s204 + $0x60] sm:$0xf]
      %v365 = vld [vmem:[%s204 + $0x64] sm:$0xf]
      %v366 = vld [vmem:[%s204 + $0x6c] sm:$0xf]
      %v367 = vld [vmem:[%s204 + $0x70] sm:$0xf]
      %v368 = vld [vmem:[%s204 + $0x78] sm:$0xf]
      %v369 = vld [vmem:[%s204 + $0x7c] sm:$0xf]
      %v370 = vld [vmem:[%s204 + $0x84] sm:$0xf]
      %v371 = vld [vmem:[%s204 + $0x88] sm:$0xf]
      %v372 = vld [vmem:[%s204 + $0x90] sm:$0xf]
      %v373 = vld [vmem:[%s204 + $0x94] sm:$0xf]
      %v374 = vld [vmem:[%s204 + $0x9c] sm:$0xf]
      %v375 = vld [vmem:[%s204 + $0xa0] sm:$0xf]
      %v376 = vld [vmem:[%s204 + $0xa8] sm:$0xf]
      %v377 = vld [vmem:[%s204 + $0xac] sm:$0xf]
      %v378 = vld [vmem:[%s204 + $0xb4] sm:$0xf]
      %v379 = vld [vmem:[%s204 + $0xb8] sm:$0xf]
      %v380 = vld [vmem:[%s209] sm:$0xf]
      %v381 = vld [vmem:[%s209 + $0x4] sm:$0xf]
      %v382 = vld [vmem:[%s209 + $0x8] sm:$0xf]
      %v383 = vld [vmem:[%s209 + $0xc] sm:$0xf]
      %v384 = vld [vmem:[%s209 + $0x10] sm:$0xf]
      %v385 = vld [vmem:[%s209 + $0x14] sm:$0xf]
      %v386 = vld [vmem:[%s209 + $0x18] sm:$0xf]
      %v387 = vld [vmem:[%s209 + $0x1c] sm:$0xf]
      %v388 = vld [vmem:[%s209 + $0x20] sm:$0xf]
      %v389 = vld [vmem:[%s209 + $0x24] sm:$0xf]
      %v390 = vld [vmem:[%s209 + $0x28] sm:$0xf]
      %v391 = vld [vmem:[%s209 + $0x2c] sm:$0xf]
      %v392 = vld [vmem:[%s209 + $0x30] sm:$0xf]
      %v393 = vld [vmem:[%s209 + $0x34] sm:$0xf]
      %v394 = vld [vmem:[%s209 + $0x38] sm:$0xf]
      %v395 = vld [vmem:[%s209 + $0x3c] sm:$0xf]
      %v396 = vld [vmem:[%s204 + $0x8] sm:$0x1]
      %v397 = vld [vmem:[%s204 + $0x14] sm:$0x1]
      %v398 = vld [vmem:[%s204 + $0x20] sm:$0x1]
      %v399 = vld [vmem:[%s204 + $0x2c] sm:$0x1]
      %v400 = vld [vmem:[%s204 + $0x38] sm:$0x1]
      %v401 = vld [vmem:[%s204 + $0x44] sm:$0x1]
      %v402 = vld [vmem:[%s204 + $0x50] sm:$0x1]
      %v403 = vld [vmem:[%s204 + $0x5c] sm:$0x1]
      %v404 = vld [vmem:[%s204 + $0x68] sm:$0x1]
      %v405 = vld [vmem:[%s204 + $0x74] sm:$0x1]
      %v406 = vld [vmem:[%s204 + $0x80] sm:$0x1]
      %v407 = vld [vmem:[%s204 + $0x8c] sm:$0x1]
      %v408 = vld [vmem:[%s204 + $0x98] sm:$0x1]
      %v409 = vld [vmem:[%s204 + $0xa4] sm:$0x1]
      %v410 = vld [vmem:[%s204 + $0xb0] sm:$0x1]
      %v411 = vld [vmem:[%s204 + $0xbc] sm:$0x1]
      %vm412 = vsmask.f32 3328
      %vm413 = vsmask.f32 7440
      %vm414 = vmor %vm412, %vm413
      %v416 = vshrl.u32 %v348, 16
      %v418 = vrot.slane %v416, 4
      %v419 = vshll.u32 %v348, 16
      %v421 = vrot.slane %v419, 5
      %v422 = vor.u32 %v418, %v421
      %v423 = vrot.slane %v422, 4
      %v425 = vshll.u32 %v349, 16
      %v427 = vrot.slane %v425, 5
      %v428 = vsel %vm414, %v423, %v427
      %v429 = vshrl.u32 %v349, 16
      %v431 = vrot.slane %v429, 4
      %v432 = vor.u32 %v431, %v427
      %v433 = vrot.slane %v432, 4
      %v435 = vshll.u32 %v396, 16
      %v437 = vrot.slane %v435, 5
      %v438 = vsel %vm414, %v433, %v437
      %v440 = vshrl.u32 %v350, 16
      %v442 = vrot.slane %v440, 4
      %v443 = vshll.u32 %v350, 16
      %v445 = vrot.slane %v443, 5
      %v446 = vor.u32 %v442, %v445
      %v447 = vrot.slane %v446, 4
      %v449 = vshll.u32 %v351, 16
      %v451 = vrot.slane %v449, 5
      %v452 = vsel %vm414, %v447, %v451
      %v453 = vshrl.u32 %v351, 16
      %v455 = vrot.slane %v453, 4
      %v456 = vor.u32 %v455, %v451
      %v457 = vrot.slane %v456, 4
      %v459 = vshll.u32 %v397, 16
      %v461 = vrot.slane %v459, 5
      %v462 = vsel %vm414, %v457, %v461
      %v464 = vshrl.u32 %v352, 16
      %v466 = vrot.slane %v464, 4
      %v467 = vshll.u32 %v352, 16
      %v469 = vrot.slane %v467, 5
      %v470 = vor.u32 %v466, %v469
      %v471 = vrot.slane %v470, 4
      %v473 = vshll.u32 %v353, 16
      %v475 = vrot.slane %v473, 5
      %v476 = vsel %vm414, %v471, %v475
      %v477 = vshrl.u32 %v353, 16
      %v479 = vrot.slane %v477, 4
      %v480 = vor.u32 %v479, %v475
      %v481 = vrot.slane %v480, 4
      %v483 = vshll.u32 %v398, 16
      %v485 = vrot.slane %v483, 5
      %v486 = vsel %vm414, %v481, %v485
      %v488 = vshrl.u32 %v354, 16
      %v490 = vrot.slane %v488, 4
      %v491 = vshll.u32 %v354, 16
      %v493 = vrot.slane %v491, 5
      %v494 = vor.u32 %v490, %v493
      %v495 = vrot.slane %v494, 4
      %v497 = vshll.u32 %v355, 16
      %v499 = vrot.slane %v497, 5
      %v500 = vsel %vm414, %v495, %v499
      %v501 = vshrl.u32 %v355, 16
      %v503 = vrot.slane %v501, 4
      %v504 = vor.u32 %v503, %v499
      %v505 = vrot.slane %v504, 4
      %v507 = vshll.u32 %v399, 16
      %v509 = vrot.slane %v507, 5
      %v510 = vsel %vm414, %v505, %v509
      %v512 = vshrl.u32 %v356, 16
      %v514 = vrot.slane %v512, 4
      %v515 = vshll.u32 %v356, 16
      %v517 = vrot.slane %v515, 5
      %v518 = vor.u32 %v514, %v517
      %v519 = vrot.slane %v518, 4
      %v521 = vshll.u32 %v357, 16
      %v523 = vrot.slane %v521, 5
      %v524 = vsel %vm414, %v519, %v523
      %v525 = vshrl.u32 %v357, 16
      %v527 = vrot.slane %v525, 4
      %v528 = vor.u32 %v527, %v523
      %v529 = vrot.slane %v528, 4
      %v531 = vshll.u32 %v400, 16
      %v533 = vrot.slane %v531, 5
      %v534 = vsel %vm414, %v529, %v533
      %v536 = vshrl.u32 %v358, 16
      %v538 = vrot.slane %v536, 4
      %v539 = vshll.u32 %v358, 16
      %v541 = vrot.slane %v539, 5
      %v542 = vor.u32 %v538, %v541
      %v543 = vrot.slane %v542, 4
      %v545 = vshll.u32 %v359, 16
      %v547 = vrot.slane %v545, 5
      %v548 = vsel %vm414, %v543, %v547
      %v549 = vshrl.u32 %v359, 16
      %v551 = vrot.slane %v549, 4
      %v552 = vor.u32 %v551, %v547
      %v553 = vrot.slane %v552, 4
      %v555 = vshll.u32 %v401, 16
      %v557 = vrot.slane %v555, 5
      %v558 = vsel %vm414, %v553, %v557
      %v560 = vshrl.u32 %v360, 16
      %v562 = vrot.slane %v560, 4
      %v563 = vshll.u32 %v360, 16
      %v565 = vrot.slane %v563, 5
      %v566 = vor.u32 %v562, %v565
      %v567 = vrot.slane %v566, 4
      %v569 = vshll.u32 %v361, 16
      %v571 = vrot.slane %v569, 5
      %v572 = vsel %vm414, %v567, %v571
      %v573 = vshrl.u32 %v361, 16
      %v575 = vrot.slane %v573, 4
      %v576 = vor.u32 %v575, %v571
      %v577 = vrot.slane %v576, 4
      %v579 = vshll.u32 %v402, 16
      %v581 = vrot.slane %v579, 5
      %v582 = vsel %vm414, %v577, %v581
      %v584 = vshrl.u32 %v362, 16
      %v586 = vrot.slane %v584, 4
      %v587 = vshll.u32 %v362, 16
      %v589 = vrot.slane %v587, 5
      %v590 = vor.u32 %v586, %v589
      %v591 = vrot.slane %v590, 4
      %v593 = vshll.u32 %v363, 16
      %v595 = vrot.slane %v593, 5
      %v596 = vsel %vm414, %v591, %v595
      %v597 = vshrl.u32 %v363, 16
      %v599 = vrot.slane %v597, 4
      %v600 = vor.u32 %v599, %v595
      %v601 = vrot.slane %v600, 4
      %v603 = vshll.u32 %v403, 16
      %v605 = vrot.slane %v603, 5
      %v606 = vsel %vm414, %v601, %v605
      %v608 = vshrl.u32 %v364, 16
      %v610 = vrot.slane %v608, 4
      %v611 = vshll.u32 %v364, 16
      %v613 = vrot.slane %v611, 5
      %v614 = vor.u32 %v610, %v613
      %v615 = vrot.slane %v614, 4
      %v617 = vshll.u32 %v365, 16
      %v619 = vrot.slane %v617, 5
      %v620 = vsel %vm414, %v615, %v619
      %v621 = vshrl.u32 %v365, 16
      %v623 = vrot.slane %v621, 4
      %v624 = vor.u32 %v623, %v619
      %v625 = vrot.slane %v624, 4
      %v627 = vshll.u32 %v404, 16
      %v629 = vrot.slane %v627, 5
      %v630 = vsel %vm414, %v625, %v629
      %v632 = vshrl.u32 %v366, 16
      %v634 = vrot.slane %v632, 4
      %v635 = vshll.u32 %v366, 16
      %v637 = vrot.slane %v635, 5
      %v638 = vor.u32 %v634, %v637
      %v639 = vrot.slane %v638, 4
      %v641 = vshll.u32 %v367, 16
      %v643 = vrot.slane %v641, 5
      %v644 = vsel %vm414, %v639, %v643
      %v645 = vshrl.u32 %v367, 16
      %v647 = vrot.slane %v645, 4
      %v648 = vor.u32 %v647, %v643
      %v649 = vrot.slane %v648, 4
      %v651 = vshll.u32 %v405, 16
      %v653 = vrot.slane %v651, 5
      %v654 = vsel %vm414, %v649, %v653
      %v656 = vshrl.u32 %v368, 16
      %v658 = vrot.slane %v656, 4
      %v659 = vshll.u32 %v368, 16
      %v661 = vrot.slane %v659, 5
      %v662 = vor.u32 %v658, %v661
      %v663 = vrot.slane %v662, 4
      %v665 = vshll.u32 %v369, 16
      %v667 = vrot.slane %v665, 5
      %v668 = vsel %vm414, %v663, %v667
      %v669 = vshrl.u32 %v369, 16
      %v671 = vrot.slane %v669, 4
      %v672 = vor.u32 %v671, %v667
      %v673 = vrot.slane %v672, 4
      %v675 = vshll.u32 %v406, 16
      %v677 = vrot.slane %v675, 5
      %v678 = vsel %vm414, %v673, %v677
      %v680 = vshrl.u32 %v370, 16
      %v682 = vrot.slane %v680, 4
      %v683 = vshll.u32 %v370, 16
      %v685 = vrot.slane %v683, 5
      %v686 = vor.u32 %v682, %v685
      %v687 = vrot.slane %v686, 4
      %v689 = vshll.u32 %v371, 16
      %v691 = vrot.slane %v689, 5
      %v692 = vsel %vm414, %v687, %v691
      %v693 = vshrl.u32 %v371, 16
      %v695 = vrot.slane %v693, 4
      %v696 = vor.u32 %v695, %v691
      %v697 = vrot.slane %v696, 4
      %v699 = vshll.u32 %v407, 16
      %v701 = vrot.slane %v699, 5
      %v702 = vsel %vm414, %v697, %v701
      %v704 = vshrl.u32 %v372, 16
      %v706 = vrot.slane %v704, 4
      %v707 = vshll.u32 %v372, 16
      %v709 = vrot.slane %v707, 5
      %v710 = vor.u32 %v706, %v709
      %v711 = vrot.slane %v710, 4
      %v713 = vshll.u32 %v373, 16
      %v715 = vrot.slane %v713, 5
      %v716 = vsel %vm414, %v711, %v715
      %v717 = vshrl.u32 %v373, 16
      %v719 = vrot.slane %v717, 4
      %v720 = vor.u32 %v719, %v715
      %v721 = vrot.slane %v720, 4
      %v723 = vshll.u32 %v408, 16
      %v725 = vrot.slane %v723, 5
      %v726 = vsel %vm414, %v721, %v725
      %v728 = vshrl.u32 %v374, 16
      %v730 = vrot.slane %v728, 4
      %v731 = vshll.u32 %v374, 16
      %v733 = vrot.slane %v731, 5
      %v734 = vor.u32 %v730, %v733
      %v735 = vrot.slane %v734, 4
      %v737 = vshll.u32 %v375, 16
      %v739 = vrot.slane %v737, 5
      %v740 = vsel %vm414, %v735, %v739
      %v741 = vshrl.u32 %v375, 16
      %v743 = vrot.slane %v741, 4
      %v744 = vor.u32 %v743, %v739
      %v745 = vrot.slane %v744, 4
      %v747 = vshll.u32 %v409, 16
      %v749 = vrot.slane %v747, 5
      %v750 = vsel %vm414, %v745, %v749
      %v752 = vshrl.u32 %v376, 16
      %v754 = vrot.slane %v752, 4
      %v755 = vshll.u32 %v376, 16
      %v757 = vrot.slane %v755, 5
      %v758 = vor.u32 %v754, %v757
      %v759 = vrot.slane %v758, 4
      %v761 = vshll.u32 %v377, 16
      %v763 = vrot.slane %v761, 5
      %v764 = vsel %vm414, %v759, %v763
      %v765 = vshrl.u32 %v377, 16
      %v767 = vrot.slane %v765, 4
      %v768 = vor.u32 %v767, %v763
      %v769 = vrot.slane %v768, 4
      %v771 = vshll.u32 %v410, 16
      %v773 = vrot.slane %v771, 5
      %v774 = vsel %vm414, %v769, %v773
      %v776 = vshrl.u32 %v378, 16
      %v778 = vrot.slane %v776, 4
      %v779 = vshll.u32 %v378, 16
      %v781 = vrot.slane %v779, 5
      %v782 = vor.u32 %v778, %v781
      %v783 = vrot.slane %v782, 4
      %v785 = vshll.u32 %v379, 16
      %v787 = vrot.slane %v785, 5
      %v788 = vsel %vm414, %v783, %v787
      %v789 = vshrl.u32 %v379, 16
      %v791 = vrot.slane %v789, 4
      %v792 = vor.u32 %v791, %v787
      %v793 = vrot.slane %v792, 4
      %v795 = vshll.u32 %v411, 16
      %v797 = vrot.slane %v795, 5
      %v798 = vsel %vm414, %v793, %v797
      %s799 = scalar_lea.vmem %s209, 64
      %v800 = vld [vmem:[%s799] sm:$0xf]
      %v801 = vld [vmem:[%s799 + $0x4] sm:$0xf]
      %v802 = vld [vmem:[%s799 + $0x8] sm:$0xf]
      %v803 = vld [vmem:[%s799 + $0xc] sm:$0xf]
      %v804 = vld [vmem:[%s799 + $0x10] sm:$0xf]
      %v805 = vld [vmem:[%s799 + $0x14] sm:$0xf]
      %v806 = vld [vmem:[%s799 + $0x18] sm:$0xf]
      %v807 = vld [vmem:[%s799 + $0x1c] sm:$0xf]
      %v808 = vld [vmem:[%s799 + $0x20] sm:$0xf]
      %v809 = vld [vmem:[%s799 + $0x24] sm:$0xf]
      %v810 = vld [vmem:[%s799 + $0x28] sm:$0xf]
      %v811 = vld [vmem:[%s799 + $0x2c] sm:$0xf]
      %v812 = vld [vmem:[%s799 + $0x30] sm:$0xf]
      %v813 = vld [vmem:[%s799 + $0x34] sm:$0xf]
      %v814 = vld [vmem:[%s799 + $0x38] sm:$0xf]
      %v815 = vld [vmem:[%s799 + $0x3c] sm:$0xf]
      %v816 = vunpack.c.l.b16 %v428
      %v817 = vunpack.c.l.b16 %v438
      %v818 = vunpack.c.l.b16 %v452
      %v819 = vunpack.c.l.b16 %v462
      %v820 = vunpack.c.l.b16 %v476
      %v821 = vunpack.c.l.b16 %v486
      %v822 = vunpack.c.l.b16 %v500
      %v823 = vunpack.c.l.b16 %v510
      %v824 = vunpack.c.l.b16 %v524
      %v825 = vunpack.c.l.b16 %v534
      %v826 = vunpack.c.l.b16 %v548
      %v827 = vunpack.c.l.b16 %v558
      %v828 = vunpack.c.l.b16 %v572
      %v829 = vunpack.c.l.b16 %v582
      %v830 = vunpack.c.l.b16 %v596
      %v831 = vunpack.c.l.b16 %v606
      %v832 = vunpack.c.l.b16 %v620
      %v833 = vunpack.c.l.b16 %v630
      %v834 = vunpack.c.l.b16 %v644
      %v835 = vunpack.c.l.b16 %v654
      %v836 = vunpack.c.l.b16 %v668
      %v837 = vunpack.c.l.b16 %v678
      %v838 = vunpack.c.l.b16 %v692
      %v839 = vunpack.c.l.b16 %v702
      %v840 = vunpack.c.l.b16 %v716
      %v841 = vunpack.c.l.b16 %v726
      %v842 = vunpack.c.l.b16 %v740
      %v843 = vunpack.c.l.b16 %v750
      %v844 = vunpack.c.l.b16 %v764
      %v845 = vunpack.c.l.b16 %v774
      %v846 = vunpack.c.l.b16 %v788
      %v847 = vunpack.c.l.b16 %v798
      %v848 = vpack.c.b16 %v817, %v816
      %v849 = vpack.c.b16 %v819, %v818
      %v850 = vpack.c.b16 %v821, %v820
      %v851 = vpack.c.b16 %v823, %v822
      %v852 = vpack.c.b16 %v825, %v824
      %v853 = vpack.c.b16 %v827, %v826
      %v854 = vpack.c.b16 %v829, %v828
      %v855 = vpack.c.b16 %v831, %v830
      %v856 = vpack.c.b16 %v833, %v832
      %v857 = vpack.c.b16 %v835, %v834
      %v858 = vpack.c.b16 %v837, %v836
      %v859 = vpack.c.b16 %v839, %v838
      %v860 = vpack.c.b16 %v841, %v840
      %v861 = vpack.c.b16 %v843, %v842
      %v862 = vpack.c.b16 %v845, %v844
      %v863 = vpack.c.b16 %v847, %v846
      %v896 = vunpack.c.l.b16 %v800
      %v897 = vunpack.c.l.b16 %v801
      %v898 = vunpack.c.l.b16 %v802
      %v899 = vunpack.c.l.b16 %v803
      %v900 = vunpack.c.l.b16 %v804
      %v901 = vunpack.c.l.b16 %v805
      %v902 = vunpack.c.l.b16 %v806
      %v903 = vunpack.c.l.b16 %v807
      %v904 = vunpack.c.l.b16 %v808
      %v905 = vunpack.c.l.b16 %v809
      %v906 = vunpack.c.l.b16 %v810
      %v907 = vunpack.c.l.b16 %v811
      %v908 = vunpack.c.l.b16 %v812
      %v909 = vunpack.c.l.b16 %v813
      %v910 = vunpack.c.l.b16 %v814
      %v911 = vunpack.c.l.b16 %v815
      %v912 = vpack.c.b16 %v897, %v896
      %v913 = vpack.c.b16 %v899, %v898
      %v914 = vpack.c.b16 %v901, %v900
      %v915 = vpack.c.b16 %v903, %v902
      %v916 = vpack.c.b16 %v905, %v904
      %v917 = vpack.c.b16 %v907, %v906
      %v918 = vpack.c.b16 %v909, %v908
      %v919 = vpack.c.b16 %v911, %v910
      %928 = vmatpush.bf16.msra.mxu0 %v919
      %929 = vmatpush.bf16.msra.mxu0 %v918
      %930 = vmatpush.bf16.msra.mxu0 %v917
      %931 = vmatpush.bf16.msra.mxu0 %v916
      %932 = vmatpush.bf16.msra.mxu0 %v915
      %933 = vmatpush.bf16.msra.mxu0 %v914
      %934 = vmatpush.bf16.msra.mxu0 %v913
      %935 = vmatpush.bf16.msra.mxu0 %v912
      %936 = vmatmul.bf16.gmra.mxu0 %v848
      %v937 = vpop.f32.mrf.mxu0
      %v938 = vadd.f32 0.0, %v937
      %v939 = vpop.f32.mrf.mxu0
      %v940 = vadd.f32 0.0, %v939
      %941 = vmatmul.bf16.gmra.mxu0 %v849
      %v942 = vpop.f32.mrf.mxu0
      %v943 = vadd.f32 0.0, %v942
      %v944 = vpop.f32.mrf.mxu0
      %v945 = vadd.f32 0.0, %v944
      %946 = vmatmul.bf16.gmra.mxu0 %v850
      %v947 = vpop.f32.mrf.mxu0
      %v948 = vadd.f32 0.0, %v947
      %v949 = vpop.f32.mrf.mxu0
      %v950 = vadd.f32 0.0, %v949
      %951 = vmatmul.bf16.gmra.mxu0 %v851
      %v952 = vpop.f32.mrf.mxu0
      %v953 = vadd.f32 0.0, %v952
      %v954 = vpop.f32.mrf.mxu0
      %v955 = vadd.f32 0.0, %v954
      %956 = vmatmul.bf16.gmra.mxu0 %v852
      %v957 = vpop.f32.mrf.mxu0
      %v958 = vadd.f32 0.0, %v957
      %v959 = vpop.f32.mrf.mxu0
      %v960 = vadd.f32 0.0, %v959
      %961 = vmatmul.bf16.gmra.mxu0 %v853
      %v962 = vpop.f32.mrf.mxu0
      %v963 = vadd.f32 0.0, %v962
      %v964 = vpop.f32.mrf.mxu0
      %v965 = vadd.f32 0.0, %v964
      %966 = vmatmul.bf16.gmra.mxu0 %v854
      %v967 = vpop.f32.mrf.mxu0
      %v968 = vadd.f32 0.0, %v967
      %v969 = vpop.f32.mrf.mxu0
      %v970 = vadd.f32 0.0, %v969
      %971 = vmatmul.bf16.gmra.mxu0 %v855
      %v972 = vpop.f32.mrf.mxu0
      %v973 = vadd.f32 0.0, %v972
      %v974 = vpop.f32.mrf.mxu0
      %v975 = vadd.f32 0.0, %v974
      %976 = vmatmul.bf16.gmra.mxu0 %v856
      %v977 = vpop.f32.mrf.mxu0
      %v978 = vadd.f32 0.0, %v977
      %v979 = vpop.f32.mrf.mxu0
      %v980 = vadd.f32 0.0, %v979
      %981 = vmatmul.bf16.gmra.mxu0 %v857
      %v982 = vpop.f32.mrf.mxu0
      %v983 = vadd.f32 0.0, %v982
      %v984 = vpop.f32.mrf.mxu0
      %v985 = vadd.f32 0.0, %v984
      %986 = vmatmul.bf16.gmra.mxu0 %v858
      %v987 = vpop.f32.mrf.mxu0
      %v988 = vadd.f32 0.0, %v987
      %v989 = vpop.f32.mrf.mxu0
      %v990 = vadd.f32 0.0, %v989
      %991 = vmatmul.bf16.gmra.mxu0 %v859
      %v992 = vpop.f32.mrf.mxu0
      %v993 = vadd.f32 0.0, %v992
      %v994 = vpop.f32.mrf.mxu0
      %v995 = vadd.f32 0.0, %v994
      %996 = vmatmul.bf16.gmra.mxu0 %v860
      %v997 = vpop.f32.mrf.mxu0
      %v998 = vadd.f32 0.0, %v997
      %v999 = vpop.f32.mrf.mxu0
      %v1000 = vadd.f32 0.0, %v999
      %1001 = vmatmul.bf16.gmra.mxu0 %v861
      %v1002 = vpop.f32.mrf.mxu0
      %v1003 = vadd.f32 0.0, %v1002
      %v1004 = vpop.f32.mrf.mxu0
      %v1005 = vadd.f32 0.0, %v1004
      %1006 = vmatmul.bf16.gmra.mxu0 %v862
      %v1007 = vpop.f32.mrf.mxu0
      %v1008 = vadd.f32 0.0, %v1007
      %v1009 = vpop.f32.mrf.mxu0
      %v1010 = vadd.f32 0.0, %v1009
      %1011 = vmatmul.bf16.gmra.mxu0 %v863
      %v1012 = vpop.f32.mrf.mxu0
      %v1013 = vadd.f32 0.0, %v1012
      %v1014 = vpop.f32.mrf.mxu0
      %v1015 = vadd.f32 0.0, %v1014
      %1016 = vdwg.mxu0
      %v1049 = vunpack.c.l.b16 %v348
      %v1050 = vunpack.c.l.b16 %v349
      %v1051 = vunpack.c.l.b16 %v350
      %v1052 = vunpack.c.l.b16 %v351
      %v1053 = vunpack.c.l.b16 %v352
      %v1054 = vunpack.c.l.b16 %v353
      %v1055 = vunpack.c.l.b16 %v354
      %v1056 = vunpack.c.l.b16 %v355
      %v1057 = vunpack.c.l.b16 %v356
      %v1058 = vunpack.c.l.b16 %v357
      %v1059 = vunpack.c.l.b16 %v358
      %v1060 = vunpack.c.l.b16 %v359
      %v1061 = vunpack.c.l.b16 %v360
      %v1062 = vunpack.c.l.b16 %v361
      %v1063 = vunpack.c.l.b16 %v362
      %v1064 = vunpack.c.l.b16 %v363
      %v1065 = vunpack.c.l.b16 %v364
      %v1066 = vunpack.c.l.b16 %v365
      %v1067 = vunpack.c.l.b16 %v366
      %v1068 = vunpack.c.l.b16 %v367
      %v1069 = vunpack.c.l.b16 %v368
      %v1070 = vunpack.c.l.b16 %v369
      %v1071 = vunpack.c.l.b16 %v370
      %v1072 = vunpack.c.l.b16 %v371
      %v1073 = vunpack.c.l.b16 %v372
      %v1074 = vunpack.c.l.b16 %v373
      %v1075 = vunpack.c.l.b16 %v374
      %v1076 = vunpack.c.l.b16 %v375
      %v1077 = vunpack.c.l.b16 %v376
      %v1078 = vunpack.c.l.b16 %v377
      %v1079 = vunpack.c.l.b16 %v378
      %v1080 = vunpack.c.l.b16 %v379
      %v1081 = vpack.c.b16 %v1050, %v1049
      %v1082 = vpack.c.b16 %v1052, %v1051
      %v1083 = vpack.c.b16 %v1054, %v1053
      %v1084 = vpack.c.b16 %v1056, %v1055
      %v1085 = vpack.c.b16 %v1058, %v1057
      %v1086 = vpack.c.b16 %v1060, %v1059
      %v1087 = vpack.c.b16 %v1062, %v1061
      %v1088 = vpack.c.b16 %v1064, %v1063
      %v1089 = vpack.c.b16 %v1066, %v1065
      %v1090 = vpack.c.b16 %v1068, %v1067
      %v1091 = vpack.c.b16 %v1070, %v1069
      %v1092 = vpack.c.b16 %v1072, %v1071
      %v1093 = vpack.c.b16 %v1074, %v1073
      %v1094 = vpack.c.b16 %v1076, %v1075
      %v1095 = vpack.c.b16 %v1078, %v1077
      %v1096 = vpack.c.b16 %v1080, %v1079
      %v1129 = vunpack.c.l.b16 %v380
      %v1130 = vunpack.c.l.b16 %v381
      %v1131 = vunpack.c.l.b16 %v382
      %v1132 = vunpack.c.l.b16 %v383
      %v1133 = vunpack.c.l.b16 %v384
      %v1134 = vunpack.c.l.b16 %v385
      %v1135 = vunpack.c.l.b16 %v386
      %v1136 = vunpack.c.l.b16 %v387
      %v1137 = vunpack.c.l.b16 %v388
      %v1138 = vunpack.c.l.b16 %v389
      %v1139 = vunpack.c.l.b16 %v390
      %v1140 = vunpack.c.l.b16 %v391
      %v1141 = vunpack.c.l.b16 %v392
      %v1142 = vunpack.c.l.b16 %v393
      %v1143 = vunpack.c.l.b16 %v394
      %v1144 = vunpack.c.l.b16 %v395
      %v1145 = vpack.c.b16 %v1130, %v1129
      %v1146 = vpack.c.b16 %v1132, %v1131
      %v1147 = vpack.c.b16 %v1134, %v1133
      %v1148 = vpack.c.b16 %v1136, %v1135
      %v1149 = vpack.c.b16 %v1138, %v1137
      %v1150 = vpack.c.b16 %v1140, %v1139
      %v1151 = vpack.c.b16 %v1142, %v1141
      %v1152 = vpack.c.b16 %v1144, %v1143
      %1161 = vmatpush.bf16.msra.mxu0 %v1152
      %1162 = vmatpush.bf16.msra.mxu0 %v1151
      %1163 = vmatpush.bf16.msra.mxu0 %v1150
      %1164 = vmatpush.bf16.msra.mxu0 %v1149
      %1165 = vmatpush.bf16.msra.mxu0 %v1148
      %1166 = vmatpush.bf16.msra.mxu0 %v1147
      %1167 = vmatpush.bf16.msra.mxu0 %v1146
      %1168 = vmatpush.bf16.msra.mxu0 %v1145
      %1169 = vmatmul.bf16.gmra.mxu0 %v1081
      %v1170 = vpop.f32.mrf.mxu0
      %v1171 = vadd.f32 %v938, %v1170
      %v1172 = vpop.f32.mrf.mxu0
      %v1173 = vadd.f32 %v940, %v1172
      %1174 = vmatmul.bf16.gmra.mxu0 %v1082
      %v1175 = vpop.f32.mrf.mxu0
      %v1176 = vadd.f32 %v943, %v1175
      %v1177 = vpop.f32.mrf.mxu0
      %v1178 = vadd.f32 %v945, %v1177
      %1179 = vmatmul.bf16.gmra.mxu0 %v1083
      %v1180 = vpop.f32.mrf.mxu0
      %v1181 = vadd.f32 %v948, %v1180
      %v1182 = vpop.f32.mrf.mxu0
      %v1183 = vadd.f32 %v950, %v1182
      %1184 = vmatmul.bf16.gmra.mxu0 %v1084
      %v1185 = vpop.f32.mrf.mxu0
      %v1186 = vadd.f32 %v953, %v1185
      %v1187 = vpop.f32.mrf.mxu0
      %v1188 = vadd.f32 %v955, %v1187
      %1189 = vmatmul.bf16.gmra.mxu0 %v1085
      %v1190 = vpop.f32.mrf.mxu0
      %v1191 = vadd.f32 %v958, %v1190
      %v1192 = vpop.f32.mrf.mxu0
      %v1193 = vadd.f32 %v960, %v1192
      %1194 = vmatmul.bf16.gmra.mxu0 %v1086
      %v1195 = vpop.f32.mrf.mxu0
      %v1196 = vadd.f32 %v963, %v1195
      %v1197 = vpop.f32.mrf.mxu0
      %v1198 = vadd.f32 %v965, %v1197
      %1199 = vmatmul.bf16.gmra.mxu0 %v1087
      %v1200 = vpop.f32.mrf.mxu0
      %v1201 = vadd.f32 %v968, %v1200
      %v1202 = vpop.f32.mrf.mxu0
      %v1203 = vadd.f32 %v970, %v1202
      %1204 = vmatmul.bf16.gmra.mxu0 %v1088
      %v1205 = vpop.f32.mrf.mxu0
      %v1206 = vadd.f32 %v973, %v1205
      %v1207 = vpop.f32.mrf.mxu0
      %v1208 = vadd.f32 %v975, %v1207
      %1209 = vmatmul.bf16.gmra.mxu0 %v1089
      %v1210 = vpop.f32.mrf.mxu0
      %v1211 = vadd.f32 %v978, %v1210
      %v1212 = vpop.f32.mrf.mxu0
      %v1213 = vadd.f32 %v980, %v1212
      %1214 = vmatmul.bf16.gmra.mxu0 %v1090
      %v1215 = vpop.f32.mrf.mxu0
      %v1216 = vadd.f32 %v983, %v1215
      %v1217 = vpop.f32.mrf.mxu0
      %v1218 = vadd.f32 %v985, %v1217
      %1219 = vmatmul.bf16.gmra.mxu0 %v1091
      %v1220 = vpop.f32.mrf.mxu0
      %v1221 = vadd.f32 %v988, %v1220
      %v1222 = vpop.f32.mrf.mxu0
      %v1223 = vadd.f32 %v990, %v1222
      %1224 = vmatmul.bf16.gmra.mxu0 %v1092
      %v1225 = vpop.f32.mrf.mxu0
      %v1226 = vadd.f32 %v993, %v1225
      %v1227 = vpop.f32.mrf.mxu0
      %v1228 = vadd.f32 %v995, %v1227
      %1229 = vmatmul.bf16.gmra.mxu0 %v1093
      %v1230 = vpop.f32.mrf.mxu0
      %v1231 = vadd.f32 %v998, %v1230
      %v1232 = vpop.f32.mrf.mxu0
      %v1233 = vadd.f32 %v1000, %v1232
      %1234 = vmatmul.bf16.gmra.mxu0 %v1094
      %v1235 = vpop.f32.mrf.mxu0
      %v1236 = vadd.f32 %v1003, %v1235
      %v1237 = vpop.f32.mrf.mxu0
      %v1238 = vadd.f32 %v1005, %v1237
      %1239 = vmatmul.bf16.gmra.mxu0 %v1095
      %v1240 = vpop.f32.mrf.mxu0
      %v1241 = vadd.f32 %v1008, %v1240
      %v1242 = vpop.f32.mrf.mxu0
      %v1243 = vadd.f32 %v1010, %v1242
      %1244 = vmatmul.bf16.gmra.mxu0 %v1096
      %v1245 = vpop.f32.mrf.mxu0
      %v1246 = vadd.f32 %v1013, %v1245
      %v1247 = vpop.f32.mrf.mxu0
      %v1248 = vadd.f32 %v1015, %v1247
      %1249 = vdwg.mxu0
      %s1250 = scalar_lea.vmem %s204, 12
      %v1251 = vld [vmem:[%s1250] sm:$0xf]
      %v1252 = vld [vmem:[%s1250 + $0x4] sm:$0xf]
      %v1253 = vld [vmem:[%s1250 + $0xc] sm:$0xf]
      %v1254 = vld [vmem:[%s1250 + $0x10] sm:$0xf]
      %v1255 = vld [vmem:[%s1250 + $0x18] sm:$0xf]
      %v1256 = vld [vmem:[%s1250 + $0x1c] sm:$0xf]
      %v1257 = vld [vmem:[%s1250 + $0x24] sm:$0xf]
      %v1258 = vld [vmem:[%s1250 + $0x28] sm:$0xf]
      %v1259 = vld [vmem:[%s1250 + $0x30] sm:$0xf]
      %v1260 = vld [vmem:[%s1250 + $0x34] sm:$0xf]
      %v1261 = vld [vmem:[%s1250 + $0x3c] sm:$0xf]
      %v1262 = vld [vmem:[%s1250 + $0x40] sm:$0xf]
      %v1263 = vld [vmem:[%s1250 + $0x48] sm:$0xf]
      %v1264 = vld [vmem:[%s1250 + $0x4c] sm:$0xf]
      %v1265 = vld [vmem:[%s1250 + $0x54] sm:$0xf]
      %v1266 = vld [vmem:[%s1250 + $0x58] sm:$0xf]
      %v1267 = vld [vmem:[%s1250 + $0x60] sm:$0xf]
      %v1268 = vld [vmem:[%s1250 + $0x64] sm:$0xf]
      %v1269 = vld [vmem:[%s1250 + $0x6c] sm:$0xf]
      %v1270 = vld [vmem:[%s1250 + $0x70] sm:$0xf]
      %v1271 = vld [vmem:[%s1250 + $0x78] sm:$0xf]
      %v1272 = vld [vmem:[%s1250 + $0x7c] sm:$0xf]
      %v1273 = vld [vmem:[%s1250 + $0x84] sm:$0xf]
      %v1274 = vld [vmem:[%s1250 + $0x88] sm:$0xf]
      %v1275 = vld [vmem:[%s1250 + $0x90] sm:$0xf]
      %v1276 = vld [vmem:[%s1250 + $0x94] sm:$0xf]
      %v1277 = vld [vmem:[%s1250 + $0x9c] sm:$0xf]
      %v1278 = vld [vmem:[%s1250 + $0xa0] sm:$0xf]
      %v1279 = vld [vmem:[%s1250 + $0xa8] sm:$0xf]
      %v1280 = vld [vmem:[%s1250 + $0xac] sm:$0xf]
      %v1281 = vld [vmem:[%s1250 + $0xb4] sm:$0xf]
      %v1282 = vld [vmem:[%s1250 + $0xb8] sm:$0xf]
      %s1283 = scalar_lea.vmem %s209, 128
      %v1284 = vld [vmem:[%s1283] sm:$0xf]
      %v1285 = vld [vmem:[%s1283 + $0x4] sm:$0xf]
      %v1286 = vld [vmem:[%s1283 + $0x8] sm:$0xf]
      %v1287 = vld [vmem:[%s1283 + $0xc] sm:$0xf]
      %v1288 = vld [vmem:[%s1283 + $0x10] sm:$0xf]
      %v1289 = vld [vmem:[%s1283 + $0x14] sm:$0xf]
      %v1290 = vld [vmem:[%s1283 + $0x18] sm:$0xf]
      %v1291 = vld [vmem:[%s1283 + $0x1c] sm:$0xf]
      %v1292 = vld [vmem:[%s1283 + $0x20] sm:$0xf]
      %v1293 = vld [vmem:[%s1283 + $0x24] sm:$0xf]
      %v1294 = vld [vmem:[%s1283 + $0x28] sm:$0xf]
      %v1295 = vld [vmem:[%s1283 + $0x2c] sm:$0xf]
      %v1296 = vld [vmem:[%s1283 + $0x30] sm:$0xf]
      %v1297 = vld [vmem:[%s1283 + $0x34] sm:$0xf]
      %v1298 = vld [vmem:[%s1283 + $0x38] sm:$0xf]
      %v1299 = vld [vmem:[%s1283 + $0x3c] sm:$0xf]
      %v1332 = vunpack.c.l.b16 %v1251
      %v1333 = vunpack.c.l.b16 %v1252
      %v1334 = vunpack.c.l.b16 %v1253
      %v1335 = vunpack.c.l.b16 %v1254
      %v1336 = vunpack.c.l.b16 %v1255
      %v1337 = vunpack.c.l.b16 %v1256
      %v1338 = vunpack.c.l.b16 %v1257
      %v1339 = vunpack.c.l.b16 %v1258
      %v1340 = vunpack.c.l.b16 %v1259
      %v1341 = vunpack.c.l.b16 %v1260
      %v1342 = vunpack.c.l.b16 %v1261
      %v1343 = vunpack.c.l.b16 %v1262
      %v1344 = vunpack.c.l.b16 %v1263
      %v1345 = vunpack.c.l.b16 %v1264
      %v1346 = vunpack.c.l.b16 %v1265
      %v1347 = vunpack.c.l.b16 %v1266
      %v1348 = vunpack.c.l.b16 %v1267
      %v1349 = vunpack.c.l.b16 %v1268
      %v1350 = vunpack.c.l.b16 %v1269
      %v1351 = vunpack.c.l.b16 %v1270
      %v1352 = vunpack.c.l.b16 %v1271
      %v1353 = vunpack.c.l.b16 %v1272
      %v1354 = vunpack.c.l.b16 %v1273
      %v1355 = vunpack.c.l.b16 %v1274
      %v1356 = vunpack.c.l.b16 %v1275
      %v1357 = vunpack.c.l.b16 %v1276
      %v1358 = vunpack.c.l.b16 %v1277
      %v1359 = vunpack.c.l.b16 %v1278
      %v1360 = vunpack.c.l.b16 %v1279
      %v1361 = vunpack.c.l.b16 %v1280
      %v1362 = vunpack.c.l.b16 %v1281
      %v1363 = vunpack.c.l.b16 %v1282
      %v1364 = vpack.c.b16 %v1333, %v1332
      %v1365 = vpack.c.b16 %v1335, %v1334
      %v1366 = vpack.c.b16 %v1337, %v1336
      %v1367 = vpack.c.b16 %v1339, %v1338
      %v1368 = vpack.c.b16 %v1341, %v1340
      %v1369 = vpack.c.b16 %v1343, %v1342
      %v1370 = vpack.c.b16 %v1345, %v1344
      %v1371 = vpack.c.b16 %v1347, %v1346
      %v1372 = vpack.c.b16 %v1349, %v1348
      %v1373 = vpack.c.b16 %v1351, %v1350
      %v1374 = vpack.c.b16 %v1353, %v1352
      %v1375 = vpack.c.b16 %v1355, %v1354
      %v1376 = vpack.c.b16 %v1357, %v1356
      %v1377 = vpack.c.b16 %v1359, %v1358
      %v1378 = vpack.c.b16 %v1361, %v1360
      %v1379 = vpack.c.b16 %v1363, %v1362
      %v1412 = vunpack.c.l.b16 %v1284
      %v1413 = vunpack.c.l.b16 %v1285
      %v1414 = vunpack.c.l.b16 %v1286
      %v1415 = vunpack.c.l.b16 %v1287
      %v1416 = vunpack.c.l.b16 %v1288
      %v1417 = vunpack.c.l.b16 %v1289
      %v1418 = vunpack.c.l.b16 %v1290
      %v1419 = vunpack.c.l.b16 %v1291
      %v1420 = vunpack.c.l.b16 %v1292
      %v1421 = vunpack.c.l.b16 %v1293
      %v1422 = vunpack.c.l.b16 %v1294
      %v1423 = vunpack.c.l.b16 %v1295
      %v1424 = vunpack.c.l.b16 %v1296
      %v1425 = vunpack.c.l.b16 %v1297
      %v1426 = vunpack.c.l.b16 %v1298
      %v1427 = vunpack.c.l.b16 %v1299
      %v1428 = vpack.c.b16 %v1413, %v1412
      %v1429 = vpack.c.b16 %v1415, %v1414
      %v1430 = vpack.c.b16 %v1417, %v1416
      %v1431 = vpack.c.b16 %v1419, %v1418
      %v1432 = vpack.c.b16 %v1421, %v1420
      %v1433 = vpack.c.b16 %v1423, %v1422
      %v1434 = vpack.c.b16 %v1425, %v1424
      %v1435 = vpack.c.b16 %v1427, %v1426
      %1444 = vmatpush.bf16.msra.mxu0 %v1435
      %1445 = vmatpush.bf16.msra.mxu0 %v1434
      %1446 = vmatpush.bf16.msra.mxu0 %v1433
      %1447 = vmatpush.bf16.msra.mxu0 %v1432
      %1448 = vmatpush.bf16.msra.mxu0 %v1431
      %1449 = vmatpush.bf16.msra.mxu0 %v1430
      %1450 = vmatpush.bf16.msra.mxu0 %v1429
      %1451 = vmatpush.bf16.msra.mxu0 %v1428
      %1452 = vmatmul.bf16.gmra.mxu0 %v1364
      %v1453 = vpop.f32.mrf.mxu0
      %v1454 = vadd.f32 0.0, %v1453
      %v1455 = vpop.f32.mrf.mxu0
      %v1456 = vadd.f32 0.0, %v1455
      %1457 = vmatmul.bf16.gmra.mxu0 %v1365
      %v1458 = vpop.f32.mrf.mxu0
      %v1459 = vadd.f32 0.0, %v1458
      %v1460 = vpop.f32.mrf.mxu0
      %v1461 = vadd.f32 0.0, %v1460
      %1462 = vmatmul.bf16.gmra.mxu0 %v1366
      %v1463 = vpop.f32.mrf.mxu0
      %v1464 = vadd.f32 0.0, %v1463
      %v1465 = vpop.f32.mrf.mxu0
      %v1466 = vadd.f32 0.0, %v1465
      %1467 = vmatmul.bf16.gmra.mxu0 %v1367
      %v1468 = vpop.f32.mrf.mxu0
      %v1469 = vadd.f32 0.0, %v1468
      %v1470 = vpop.f32.mrf.mxu0
      %v1471 = vadd.f32 0.0, %v1470
      %1472 = vmatmul.bf16.gmra.mxu0 %v1368
      %v1473 = vpop.f32.mrf.mxu0
      %v1474 = vadd.f32 0.0, %v1473
      %v1475 = vpop.f32.mrf.mxu0
      %v1476 = vadd.f32 0.0, %v1475
      %1477 = vmatmul.bf16.gmra.mxu0 %v1369
      %v1478 = vpop.f32.mrf.mxu0
      %v1479 = vadd.f32 0.0, %v1478
      %v1480 = vpop.f32.mrf.mxu0
      %v1481 = vadd.f32 0.0, %v1480
      %1482 = vmatmul.bf16.gmra.mxu0 %v1370
      %v1483 = vpop.f32.mrf.mxu0
      %v1484 = vadd.f32 0.0, %v1483
      %v1485 = vpop.f32.mrf.mxu0
      %v1486 = vadd.f32 0.0, %v1485
      %1487 = vmatmul.bf16.gmra.mxu0 %v1371
      %v1488 = vpop.f32.mrf.mxu0
      %v1489 = vadd.f32 0.0, %v1488
      %v1490 = vpop.f32.mrf.mxu0
      %v1491 = vadd.f32 0.0, %v1490
      %1492 = vmatmul.bf16.gmra.mxu0 %v1372
      %v1493 = vpop.f32.mrf.mxu0
      %v1494 = vadd.f32 0.0, %v1493
      %v1495 = vpop.f32.mrf.mxu0
      %v1496 = vadd.f32 0.0, %v1495
      %1497 = vmatmul.bf16.gmra.mxu0 %v1373
      %v1498 = vpop.f32.mrf.mxu0
      %v1499 = vadd.f32 0.0, %v1498
      %v1500 = vpop.f32.mrf.mxu0
      %v1501 = vadd.f32 0.0, %v1500
      %1502 = vmatmul.bf16.gmra.mxu0 %v1374
      %v1503 = vpop.f32.mrf.mxu0
      %v1504 = vadd.f32 0.0, %v1503
      %v1505 = vpop.f32.mrf.mxu0
      %v1506 = vadd.f32 0.0, %v1505
      %1507 = vmatmul.bf16.gmra.mxu0 %v1375
      %v1508 = vpop.f32.mrf.mxu0
      %v1509 = vadd.f32 0.0, %v1508
      %v1510 = vpop.f32.mrf.mxu0
      %v1511 = vadd.f32 0.0, %v1510
      %1512 = vmatmul.bf16.gmra.mxu0 %v1376
      %v1513 = vpop.f32.mrf.mxu0
      %v1514 = vadd.f32 0.0, %v1513
      %v1515 = vpop.f32.mrf.mxu0
      %v1516 = vadd.f32 0.0, %v1515
      %1517 = vmatmul.bf16.gmra.mxu0 %v1377
      %v1518 = vpop.f32.mrf.mxu0
      %v1519 = vadd.f32 0.0, %v1518
      %v1520 = vpop.f32.mrf.mxu0
      %v1521 = vadd.f32 0.0, %v1520
      %1522 = vmatmul.bf16.gmra.mxu0 %v1378
      %v1523 = vpop.f32.mrf.mxu0
      %v1524 = vadd.f32 0.0, %v1523
      %v1525 = vpop.f32.mrf.mxu0
      %v1526 = vadd.f32 0.0, %v1525
      %1527 = vmatmul.bf16.gmra.mxu0 %v1379
      %v1528 = vpop.f32.mrf.mxu0
      %v1529 = vadd.f32 0.0, %v1528
      %v1530 = vpop.f32.mrf.mxu0
      %v1531 = vadd.f32 0.0, %v1530
      %1532 = vdwg.mxu0
      %v1533 = vadd.f32 %v1171, %v1454
      %v1534 = vadd.f32 %v1173, %v1456
      %v1535 = vadd.f32 %v1176, %v1459
      %v1536 = vadd.f32 %v1178, %v1461
      %v1537 = vadd.f32 %v1181, %v1464
      %v1538 = vadd.f32 %v1183, %v1466
      %v1539 = vadd.f32 %v1186, %v1469
      %v1540 = vadd.f32 %v1188, %v1471
      %v1541 = vadd.f32 %v1191, %v1474
      %v1542 = vadd.f32 %v1193, %v1476
      %v1543 = vadd.f32 %v1196, %v1479
      %v1544 = vadd.f32 %v1198, %v1481
      %v1545 = vadd.f32 %v1201, %v1484
      %v1546 = vadd.f32 %v1203, %v1486
      %v1547 = vadd.f32 %v1206, %v1489
      %v1548 = vadd.f32 %v1208, %v1491
      %v1549 = vadd.f32 %v1211, %v1494
      %v1550 = vadd.f32 %v1213, %v1496
      %v1551 = vadd.f32 %v1216, %v1499
      %v1552 = vadd.f32 %v1218, %v1501
      %v1553 = vadd.f32 %v1221, %v1504
      %v1554 = vadd.f32 %v1223, %v1506
      %v1555 = vadd.f32 %v1226, %v1509
      %v1556 = vadd.f32 %v1228, %v1511
      %v1557 = vadd.f32 %v1231, %v1514
      %v1558 = vadd.f32 %v1233, %v1516
      %v1559 = vadd.f32 %v1236, %v1519
      %v1560 = vadd.f32 %v1238, %v1521
      %v1561 = vadd.f32 %v1241, %v1524
      %v1562 = vadd.f32 %v1243, %v1526
      %v1563 = vadd.f32 %v1246, %v1529
      %v1564 = vadd.f32 %v1248, %v1531
      %v1565 = vld [vmem:[%s1250] sm:$0xf]
      %v1566 = vld [vmem:[%s1250 + $0x4] sm:$0xf]
      %v1567 = vld [vmem:[%s1250 + $0x8] sm:$0x1]
      %v1568 = vld [vmem:[%s1250 + $0xc] sm:$0xf]
      %v1569 = vld [vmem:[%s1250 + $0x10] sm:$0xf]
      %v1570 = vld [vmem:[%s1250 + $0x14] sm:$0x1]
      %v1571 = vld [vmem:[%s1250 + $0x18] sm:$0xf]
      %v1572 = vld [vmem:[%s1250 + $0x1c] sm:$0xf]
      %v1573 = vld [vmem:[%s1250 + $0x20] sm:$0x1]
      %v1574 = vld [vmem:[%s1250 + $0x24] sm:$0xf]
      %v1575 = vld [vmem:[%s1250 + $0x28] sm:$0xf]
      %v1576 = vld [vmem:[%s1250 + $0x2c] sm:$0x1]
      %v1577 = vld [vmem:[%s1250 + $0x30] sm:$0xf]
      %v1578 = vld [vmem:[%s1250 + $0x34] sm:$0xf]
      %v1579 = vld [vmem:[%s1250 + $0x38] sm:$0x1]
      %v1580 = vld [vmem:[%s1250 + $0x3c] sm:$0xf]
      %v1581 = vld [vmem:[%s1250 + $0x40] sm:$0xf]
      %v1582 = vld [vmem:[%s1250 + $0x44] sm:$0x1]
      %v1583 = vld [vmem:[%s1250 + $0x48] sm:$0xf]
      %v1584 = vld [vmem:[%s1250 + $0x4c] sm:$0xf]
      %v1585 = vld [vmem:[%s1250 + $0x50] sm:$0x1]
      %v1586 = vld [vmem:[%s1250 + $0x54] sm:$0xf]
      %v1587 = vld [vmem:[%s1250 + $0x58] sm:$0xf]
      %v1588 = vld [vmem:[%s1250 + $0x5c] sm:$0x1]
      %v1589 = vld [vmem:[%s1250 + $0x60] sm:$0xf]
      %v1590 = vld [vmem:[%s1250 + $0x64] sm:$0xf]
      %v1591 = vld [vmem:[%s1250 + $0x68] sm:$0x1]
      %v1592 = vld [vmem:[%s1250 + $0x6c] sm:$0xf]
      %v1593 = vld [vmem:[%s1250 + $0x70] sm:$0xf]
      %v1594 = vld [vmem:[%s1250 + $0x74] sm:$0x1]
      %v1595 = vld [vmem:[%s1250 + $0x78] sm:$0xf]
      %v1596 = vld [vmem:[%s1250 + $0x7c] sm:$0xf]
      %v1597 = vld [vmem:[%s1250 + $0x80] sm:$0x1]
      %v1598 = vld [vmem:[%s1250 + $0x84] sm:$0xf]
      %v1599 = vld [vmem:[%s1250 + $0x88] sm:$0xf]
      %v1600 = vld [vmem:[%s1250 + $0x8c] sm:$0x1]
      %v1601 = vld [vmem:[%s1250 + $0x90] sm:$0xf]
      %v1602 = vld [vmem:[%s1250 + $0x94] sm:$0xf]
      %v1603 = vld [vmem:[%s1250 + $0x98] sm:$0x1]
      %v1604 = vld [vmem:[%s1250 + $0x9c] sm:$0xf]
      %v1605 = vld [vmem:[%s1250 + $0xa0] sm:$0xf]
      %v1606 = vld [vmem:[%s1250 + $0xa4] sm:$0x1]
      %v1607 = vld [vmem:[%s1250 + $0xa8] sm:$0xf]
      %v1608 = vld [vmem:[%s1250 + $0xac] sm:$0xf]
      %v1609 = vld [vmem:[%s1250 + $0xb0] sm:$0x1]
      %v1610 = vld [vmem:[%s1250 + $0xb4] sm:$0xf]
      %v1611 = vld [vmem:[%s1250 + $0xb8] sm:$0xf]
      %v1612 = vld [vmem:[%s1250 + $0xbc] sm:$0x1]
      %v1614 = vshrl.u32 %v1565, 16
      %v1616 = vrot.slane %v1614, 4
      %v1617 = vshll.u32 %v1565, 16
      %v1619 = vrot.slane %v1617, 5
      %v1620 = vor.u32 %v1616, %v1619
      %v1621 = vrot.slane %v1620, 4
      %v1623 = vshll.u32 %v1566, 16
      %v1625 = vrot.slane %v1623, 5
      %v1626 = vsel %vm414, %v1621, %v1625
      %v1627 = vshrl.u32 %v1566, 16
      %v1629 = vrot.slane %v1627, 4
      %v1630 = vor.u32 %v1629, %v1625
      %v1631 = vrot.slane %v1630, 4
      %v1633 = vshll.u32 %v1567, 16
      %v1635 = vrot.slane %v1633, 5
      %v1636 = vsel %vm414, %v1631, %v1635
      %v1638 = vshrl.u32 %v1568, 16
      %v1640 = vrot.slane %v1638, 4
      %v1641 = vshll.u32 %v1568, 16
      %v1643 = vrot.slane %v1641, 5
      %v1644 = vor.u32 %v1640, %v1643
      %v1645 = vrot.slane %v1644, 4
      %v1647 = vshll.u32 %v1569, 16
      %v1649 = vrot.slane %v1647, 5
      %v1650 = vsel %vm414, %v1645, %v1649
      %v1651 = vshrl.u32 %v1569, 16
      %v1653 = vrot.slane %v1651, 4
      %v1654 = vor.u32 %v1653, %v1649
      %v1655 = vrot.slane %v1654, 4
      %v1657 = vshll.u32 %v1570, 16
      %v1659 = vrot.slane %v1657, 5
      %v1660 = vsel %vm414, %v1655, %v1659
      %v1662 = vshrl.u32 %v1571, 16
      %v1664 = vrot.slane %v1662, 4
      %v1665 = vshll.u32 %v1571, 16
      %v1667 = vrot.slane %v1665, 5
      %v1668 = vor.u32 %v1664, %v1667
      %v1669 = vrot.slane %v1668, 4
      %v1671 = vshll.u32 %v1572, 16
      %v1673 = vrot.slane %v1671, 5
      %v1674 = vsel %vm414, %v1669, %v1673
      %v1675 = vshrl.u32 %v1572, 16
      %v1677 = vrot.slane %v1675, 4
      %v1678 = vor.u32 %v1677, %v1673
      %v1679 = vrot.slane %v1678, 4
      %v1681 = vshll.u32 %v1573, 16
      %v1683 = vrot.slane %v1681, 5
      %v1684 = vsel %vm414, %v1679, %v1683
      %v1686 = vshrl.u32 %v1574, 16
      %v1688 = vrot.slane %v1686, 4
      %v1689 = vshll.u32 %v1574, 16
      %v1691 = vrot.slane %v1689, 5
      %v1692 = vor.u32 %v1688, %v1691
      %v1693 = vrot.slane %v1692, 4
      %v1695 = vshll.u32 %v1575, 16
      %v1697 = vrot.slane %v1695, 5
      %v1698 = vsel %vm414, %v1693, %v1697
      %v1699 = vshrl.u32 %v1575, 16
      %v1701 = vrot.slane %v1699, 4
      %v1702 = vor.u32 %v1701, %v1697
      %v1703 = vrot.slane %v1702, 4
      %v1705 = vshll.u32 %v1576, 16
      %v1707 = vrot.slane %v1705, 5
      %v1708 = vsel %vm414, %v1703, %v1707
      %v1710 = vshrl.u32 %v1577, 16
      %v1712 = vrot.slane %v1710, 4
      %v1713 = vshll.u32 %v1577, 16
      %v1715 = vrot.slane %v1713, 5
      %v1716 = vor.u32 %v1712, %v1715
      %v1717 = vrot.slane %v1716, 4
      %v1719 = vshll.u32 %v1578, 16
      %v1721 = vrot.slane %v1719, 5
      %v1722 = vsel %vm414, %v1717, %v1721
      %v1723 = vshrl.u32 %v1578, 16
      %v1725 = vrot.slane %v1723, 4
      %v1726 = vor.u32 %v1725, %v1721
      %v1727 = vrot.slane %v1726, 4
      %v1729 = vshll.u32 %v1579, 16
      %v1731 = vrot.slane %v1729, 5
      %v1732 = vsel %vm414, %v1727, %v1731
      %v1734 = vshrl.u32 %v1580, 16
      %v1736 = vrot.slane %v1734, 4
      %v1737 = vshll.u32 %v1580, 16
      %v1739 = vrot.slane %v1737, 5
      %v1740 = vor.u32 %v1736, %v1739
      %v1741 = vrot.slane %v1740, 4
      %v1743 = vshll.u32 %v1581, 16
      %v1745 = vrot.slane %v1743, 5
      %v1746 = vsel %vm414, %v1741, %v1745
      %v1747 = vshrl.u32 %v1581, 16
      %v1749 = vrot.slane %v1747, 4
      %v1750 = vor.u32 %v1749, %v1745
      %v1751 = vrot.slane %v1750, 4
      %v1753 = vshll.u32 %v1582, 16
      %v1755 = vrot.slane %v1753, 5
      %v1756 = vsel %vm414, %v1751, %v1755
      %v1758 = vshrl.u32 %v1583, 16
      %v1760 = vrot.slane %v1758, 4
      %v1761 = vshll.u32 %v1583, 16
      %v1763 = vrot.slane %v1761, 5
      %v1764 = vor.u32 %v1760, %v1763
      %v1765 = vrot.slane %v1764, 4
      %v1767 = vshll.u32 %v1584, 16
      %v1769 = vrot.slane %v1767, 5
      %v1770 = vsel %vm414, %v1765, %v1769
      %v1771 = vshrl.u32 %v1584, 16
      %v1773 = vrot.slane %v1771, 4
      %v1774 = vor.u32 %v1773, %v1769
      %v1775 = vrot.slane %v1774, 4
      %v1777 = vshll.u32 %v1585, 16
      %v1779 = vrot.slane %v1777, 5
      %v1780 = vsel %vm414, %v1775, %v1779
      %v1782 = vshrl.u32 %v1586, 16
      %v1784 = vrot.slane %v1782, 4
      %v1785 = vshll.u32 %v1586, 16
      %v1787 = vrot.slane %v1785, 5
      %v1788 = vor.u32 %v1784, %v1787
      %v1789 = vrot.slane %v1788, 4
      %v1791 = vshll.u32 %v1587, 16
      %v1793 = vrot.slane %v1791, 5
      %v1794 = vsel %vm414, %v1789, %v1793
      %v1795 = vshrl.u32 %v1587, 16
      %v1797 = vrot.slane %v1795, 4
      %v1798 = vor.u32 %v1797, %v1793
      %v1799 = vrot.slane %v1798, 4
      %v1801 = vshll.u32 %v1588, 16
      %v1803 = vrot.slane %v1801, 5
      %v1804 = vsel %vm414, %v1799, %v1803
      %v1806 = vshrl.u32 %v1589, 16
      %v1808 = vrot.slane %v1806, 4
      %v1809 = vshll.u32 %v1589, 16
      %v1811 = vrot.slane %v1809, 5
      %v1812 = vor.u32 %v1808, %v1811
      %v1813 = vrot.slane %v1812, 4
      %v1815 = vshll.u32 %v1590, 16
      %v1817 = vrot.slane %v1815, 5
      %v1818 = vsel %vm414, %v1813, %v1817
      %v1819 = vshrl.u32 %v1590, 16
      %v1821 = vrot.slane %v1819, 4
      %v1822 = vor.u32 %v1821, %v1817
      %v1823 = vrot.slane %v1822, 4
      %v1825 = vshll.u32 %v1591, 16
      %v1827 = vrot.slane %v1825, 5
      %v1828 = vsel %vm414, %v1823, %v1827
      %v1830 = vshrl.u32 %v1592, 16
      %v1832 = vrot.slane %v1830, 4
      %v1833 = vshll.u32 %v1592, 16
      %v1835 = vrot.slane %v1833, 5
      %v1836 = vor.u32 %v1832, %v1835
      %v1837 = vrot.slane %v1836, 4
      %v1839 = vshll.u32 %v1593, 16
      %v1841 = vrot.slane %v1839, 5
      %v1842 = vsel %vm414, %v1837, %v1841
      %v1843 = vshrl.u32 %v1593, 16
      %v1845 = vrot.slane %v1843, 4
      %v1846 = vor.u32 %v1845, %v1841
      %v1847 = vrot.slane %v1846, 4
      %v1849 = vshll.u32 %v1594, 16
      %v1851 = vrot.slane %v1849, 5
      %v1852 = vsel %vm414, %v1847, %v1851
      %v1854 = vshrl.u32 %v1595, 16
      %v1856 = vrot.slane %v1854, 4
      %v1857 = vshll.u32 %v1595, 16
      %v1859 = vrot.slane %v1857, 5
      %v1860 = vor.u32 %v1856, %v1859
      %v1861 = vrot.slane %v1860, 4
      %v1863 = vshll.u32 %v1596, 16
      %v1865 = vrot.slane %v1863, 5
      %v1866 = vsel %vm414, %v1861, %v1865
      %v1867 = vshrl.u32 %v1596, 16
      %v1869 = vrot.slane %v1867, 4
      %v1870 = vor.u32 %v1869, %v1865
      %v1871 = vrot.slane %v1870, 4
      %v1873 = vshll.u32 %v1597, 16
      %v1875 = vrot.slane %v1873, 5
      %v1876 = vsel %vm414, %v1871, %v1875
      %v1878 = vshrl.u32 %v1598, 16
      %v1880 = vrot.slane %v1878, 4
      %v1881 = vshll.u32 %v1598, 16
      %v1883 = vrot.slane %v1881, 5
      %v1884 = vor.u32 %v1880, %v1883
      %v1885 = vrot.slane %v1884, 4
      %v1887 = vshll.u32 %v1599, 16
      %v1889 = vrot.slane %v1887, 5
      %v1890 = vsel %vm414, %v1885, %v1889
      %v1891 = vshrl.u32 %v1599, 16
      %v1893 = vrot.slane %v1891, 4
      %v1894 = vor.u32 %v1893, %v1889
      %v1895 = vrot.slane %v1894, 4
      %v1897 = vshll.u32 %v1600, 16
      %v1899 = vrot.slane %v1897, 5
      %v1900 = vsel %vm414, %v1895, %v1899
      %v1902 = vshrl.u32 %v1601, 16
      %v1904 = vrot.slane %v1902, 4
      %v1905 = vshll.u32 %v1601, 16
      %v1907 = vrot.slane %v1905, 5
      %v1908 = vor.u32 %v1904, %v1907
      %v1909 = vrot.slane %v1908, 4
      %v1911 = vshll.u32 %v1602, 16
      %v1913 = vrot.slane %v1911, 5
      %v1914 = vsel %vm414, %v1909, %v1913
      %v1915 = vshrl.u32 %v1602, 16
      %v1917 = vrot.slane %v1915, 4
      %v1918 = vor.u32 %v1917, %v1913
      %v1919 = vrot.slane %v1918, 4
      %v1921 = vshll.u32 %v1603, 16
      %v1923 = vrot.slane %v1921, 5
      %v1924 = vsel %vm414, %v1919, %v1923
      %v1926 = vshrl.u32 %v1604, 16
      %v1928 = vrot.slane %v1926, 4
      %v1929 = vshll.u32 %v1604, 16
      %v1931 = vrot.slane %v1929, 5
      %v1932 = vor.u32 %v1928, %v1931
      %v1933 = vrot.slane %v1932, 4
      %v1935 = vshll.u32 %v1605, 16
      %v1937 = vrot.slane %v1935, 5
      %v1938 = vsel %vm414, %v1933, %v1937
      %v1939 = vshrl.u32 %v1605, 16
      %v1941 = vrot.slane %v1939, 4
      %v1942 = vor.u32 %v1941, %v1937
      %v1943 = vrot.slane %v1942, 4
      %v1945 = vshll.u32 %v1606, 16
      %v1947 = vrot.slane %v1945, 5
      %v1948 = vsel %vm414, %v1943, %v1947
      %v1950 = vshrl.u32 %v1607, 16
      %v1952 = vrot.slane %v1950, 4
      %v1953 = vshll.u32 %v1607, 16
      %v1955 = vrot.slane %v1953, 5
      %v1956 = vor.u32 %v1952, %v1955
      %v1957 = vrot.slane %v1956, 4
      %v1959 = vshll.u32 %v1608, 16
      %v1961 = vrot.slane %v1959, 5
      %v1962 = vsel %vm414, %v1957, %v1961
      %v1963 = vshrl.u32 %v1608, 16
      %v1965 = vrot.slane %v1963, 4
      %v1966 = vor.u32 %v1965, %v1961
      %v1967 = vrot.slane %v1966, 4
      %v1969 = vshll.u32 %v1609, 16
      %v1971 = vrot.slane %v1969, 5
      %v1972 = vsel %vm414, %v1967, %v1971
      %v1974 = vshrl.u32 %v1610, 16
      %v1976 = vrot.slane %v1974, 4
      %v1977 = vshll.u32 %v1610, 16
      %v1979 = vrot.slane %v1977, 5
      %v1980 = vor.u32 %v1976, %v1979
      %v1981 = vrot.slane %v1980, 4
      %v1983 = vshll.u32 %v1611, 16
      %v1985 = vrot.slane %v1983, 5
      %v1986 = vsel %vm414, %v1981, %v1985
      %v1987 = vshrl.u32 %v1611, 16
      %v1989 = vrot.slane %v1987, 4
      %v1990 = vor.u32 %v1989, %v1985
      %v1991 = vrot.slane %v1990, 4
      %v1993 = vshll.u32 %v1612, 16
      %v1995 = vrot.slane %v1993, 5
      %v1996 = vsel %vm414, %v1991, %v1995
      %s1997 = scalar_lea.vmem %s209, 192
      %v1998 = vld [vmem:[%s1997] sm:$0xf]
      %v1999 = vld [vmem:[%s1997 + $0x4] sm:$0xf]
      %v2000 = vld [vmem:[%s1997 + $0x8] sm:$0xf]
      %v2001 = vld [vmem:[%s1997 + $0xc] sm:$0xf]
      %v2002 = vld [vmem:[%s1997 + $0x10] sm:$0xf]
      %v2003 = vld [vmem:[%s1997 + $0x14] sm:$0xf]
      %v2004 = vld [vmem:[%s1997 + $0x18] sm:$0xf]
      %v2005 = vld [vmem:[%s1997 + $0x1c] sm:$0xf]
      %v2006 = vld [vmem:[%s1997 + $0x20] sm:$0xf]
      %v2007 = vld [vmem:[%s1997 + $0x24] sm:$0xf]
      %v2008 = vld [vmem:[%s1997 + $0x28] sm:$0xf]
      %v2009 = vld [vmem:[%s1997 + $0x2c] sm:$0xf]
      %v2010 = vld [vmem:[%s1997 + $0x30] sm:$0xf]
      %v2011 = vld [vmem:[%s1997 + $0x34] sm:$0xf]
      %v2012 = vld [vmem:[%s1997 + $0x38] sm:$0xf]
      %v2013 = vld [vmem:[%s1997 + $0x3c] sm:$0xf]
      %v2014 = vunpack.c.l.b16 %v1626
      %v2015 = vunpack.c.l.b16 %v1636
      %v2016 = vunpack.c.l.b16 %v1650
      %v2017 = vunpack.c.l.b16 %v1660
      %v2018 = vunpack.c.l.b16 %v1674
      %v2019 = vunpack.c.l.b16 %v1684
      %v2020 = vunpack.c.l.b16 %v1698
      %v2021 = vunpack.c.l.b16 %v1708
      %v2022 = vunpack.c.l.b16 %v1722
      %v2023 = vunpack.c.l.b16 %v1732
      %v2024 = vunpack.c.l.b16 %v1746
      %v2025 = vunpack.c.l.b16 %v1756
      %v2026 = vunpack.c.l.b16 %v1770
      %v2027 = vunpack.c.l.b16 %v1780
      %v2028 = vunpack.c.l.b16 %v1794
      %v2029 = vunpack.c.l.b16 %v1804
      %v2030 = vunpack.c.l.b16 %v1818
      %v2031 = vunpack.c.l.b16 %v1828
      %v2032 = vunpack.c.l.b16 %v1842
      %v2033 = vunpack.c.l.b16 %v1852
      %v2034 = vunpack.c.l.b16 %v1866
      %v2035 = vunpack.c.l.b16 %v1876
      %v2036 = vunpack.c.l.b16 %v1890
      %v2037 = vunpack.c.l.b16 %v1900
      %v2038 = vunpack.c.l.b16 %v1914
      %v2039 = vunpack.c.l.b16 %v1924
      %v2040 = vunpack.c.l.b16 %v1938
      %v2041 = vunpack.c.l.b16 %v1948
      %v2042 = vunpack.c.l.b16 %v1962
      %v2043 = vunpack.c.l.b16 %v1972
      %v2044 = vunpack.c.l.b16 %v1986
      %v2045 = vunpack.c.l.b16 %v1996
      %v2046 = vpack.c.b16 %v2015, %v2014
      %v2047 = vpack.c.b16 %v2017, %v2016
      %v2048 = vpack.c.b16 %v2019, %v2018
      %v2049 = vpack.c.b16 %v2021, %v2020
      %v2050 = vpack.c.b16 %v2023, %v2022
      %v2051 = vpack.c.b16 %v2025, %v2024
      %v2052 = vpack.c.b16 %v2027, %v2026
      %v2053 = vpack.c.b16 %v2029, %v2028
      %v2054 = vpack.c.b16 %v2031, %v2030
      %v2055 = vpack.c.b16 %v2033, %v2032
      %v2056 = vpack.c.b16 %v2035, %v2034
      %v2057 = vpack.c.b16 %v2037, %v2036
      %v2058 = vpack.c.b16 %v2039, %v2038
      %v2059 = vpack.c.b16 %v2041, %v2040
      %v2060 = vpack.c.b16 %v2043, %v2042
      %v2061 = vpack.c.b16 %v2045, %v2044
      %v2094 = vunpack.c.l.b16 %v1998
      %v2095 = vunpack.c.l.b16 %v1999
      %v2096 = vunpack.c.l.b16 %v2000
      %v2097 = vunpack.c.l.b16 %v2001
      %v2098 = vunpack.c.l.b16 %v2002
      %v2099 = vunpack.c.l.b16 %v2003
      %v2100 = vunpack.c.l.b16 %v2004
      %v2101 = vunpack.c.l.b16 %v2005
      %v2102 = vunpack.c.l.b16 %v2006
      %v2103 = vunpack.c.l.b16 %v2007
      %v2104 = vunpack.c.l.b16 %v2008
      %v2105 = vunpack.c.l.b16 %v2009
      %v2106 = vunpack.c.l.b16 %v2010
      %v2107 = vunpack.c.l.b16 %v2011
      %v2108 = vunpack.c.l.b16 %v2012
      %v2109 = vunpack.c.l.b16 %v2013
      %v2110 = vpack.c.b16 %v2095, %v2094
      %v2111 = vpack.c.b16 %v2097, %v2096
      %v2112 = vpack.c.b16 %v2099, %v2098
      %v2113 = vpack.c.b16 %v2101, %v2100
      %v2114 = vpack.c.b16 %v2103, %v2102
      %v2115 = vpack.c.b16 %v2105, %v2104
      %v2116 = vpack.c.b16 %v2107, %v2106
      %v2117 = vpack.c.b16 %v2109, %v2108
      %2126 = vmatpush.bf16.msra.mxu0 %v2117
      %2127 = vmatpush.bf16.msra.mxu0 %v2116
      %2128 = vmatpush.bf16.msra.mxu0 %v2115
      %2129 = vmatpush.bf16.msra.mxu0 %v2114
      %2130 = vmatpush.bf16.msra.mxu0 %v2113
      %2131 = vmatpush.bf16.msra.mxu0 %v2112
      %2132 = vmatpush.bf16.msra.mxu0 %v2111
      %2133 = vmatpush.bf16.msra.mxu0 %v2110
      %2134 = vmatmul.bf16.gmra.mxu0 %v2046
      %v2135 = vpop.f32.mrf.mxu0
      %v2136 = vadd.f32 0.0, %v2135
      %v2137 = vpop.f32.mrf.mxu0
      %v2138 = vadd.f32 0.0, %v2137
      %2139 = vmatmul.bf16.gmra.mxu0 %v2047
      %v2140 = vpop.f32.mrf.mxu0
      %v2141 = vadd.f32 0.0, %v2140
      %v2142 = vpop.f32.mrf.mxu0
      %v2143 = vadd.f32 0.0, %v2142
      %2144 = vmatmul.bf16.gmra.mxu0 %v2048
      %v2145 = vpop.f32.mrf.mxu0
      %v2146 = vadd.f32 0.0, %v2145
      %v2147 = vpop.f32.mrf.mxu0
      %v2148 = vadd.f32 0.0, %v2147
      %2149 = vmatmul.bf16.gmra.mxu0 %v2049
      %v2150 = vpop.f32.mrf.mxu0
      %v2151 = vadd.f32 0.0, %v2150
      %v2152 = vpop.f32.mrf.mxu0
      %v2153 = vadd.f32 0.0, %v2152
      %2154 = vmatmul.bf16.gmra.mxu0 %v2050
      %v2155 = vpop.f32.mrf.mxu0
      %v2156 = vadd.f32 0.0, %v2155
      %v2157 = vpop.f32.mrf.mxu0
      %v2158 = vadd.f32 0.0, %v2157
      %2159 = vmatmul.bf16.gmra.mxu0 %v2051
      %v2160 = vpop.f32.mrf.mxu0
      %v2161 = vadd.f32 0.0, %v2160
      %v2162 = vpop.f32.mrf.mxu0
      %v2163 = vadd.f32 0.0, %v2162
      %2164 = vmatmul.bf16.gmra.mxu0 %v2052
      %v2165 = vpop.f32.mrf.mxu0
      %v2166 = vadd.f32 0.0, %v2165
      %v2167 = vpop.f32.mrf.mxu0
      %v2168 = vadd.f32 0.0, %v2167
      %2169 = vmatmul.bf16.gmra.mxu0 %v2053
      %v2170 = vpop.f32.mrf.mxu0
      %v2171 = vadd.f32 0.0, %v2170
      %v2172 = vpop.f32.mrf.mxu0
      %v2173 = vadd.f32 0.0, %v2172
      %2174 = vmatmul.bf16.gmra.mxu0 %v2054
      %v2175 = vpop.f32.mrf.mxu0
      %v2176 = vadd.f32 0.0, %v2175
      %v2177 = vpop.f32.mrf.mxu0
      %v2178 = vadd.f32 0.0, %v2177
      %2179 = vmatmul.bf16.gmra.mxu0 %v2055
      %v2180 = vpop.f32.mrf.mxu0
      %v2181 = vadd.f32 0.0, %v2180
      %v2182 = vpop.f32.mrf.mxu0
      %v2183 = vadd.f32 0.0, %v2182
      %2184 = vmatmul.bf16.gmra.mxu0 %v2056
      %v2185 = vpop.f32.mrf.mxu0
      %v2186 = vadd.f32 0.0, %v2185
      %v2187 = vpop.f32.mrf.mxu0
      %v2188 = vadd.f32 0.0, %v2187
      %2189 = vmatmul.bf16.gmra.mxu0 %v2057
      %v2190 = vpop.f32.mrf.mxu0
      %v2191 = vadd.f32 0.0, %v2190
      %v2192 = vpop.f32.mrf.mxu0
      %v2193 = vadd.f32 0.0, %v2192
      %2194 = vmatmul.bf16.gmra.mxu0 %v2058
      %v2195 = vpop.f32.mrf.mxu0
      %v2196 = vadd.f32 0.0, %v2195
      %v2197 = vpop.f32.mrf.mxu0
      %v2198 = vadd.f32 0.0, %v2197
      %2199 = vmatmul.bf16.gmra.mxu0 %v2059
      %v2200 = vpop.f32.mrf.mxu0
      %v2201 = vadd.f32 0.0, %v2200
      %v2202 = vpop.f32.mrf.mxu0
      %v2203 = vadd.f32 0.0, %v2202
      %2204 = vmatmul.bf16.gmra.mxu0 %v2060
      %v2205 = vpop.f32.mrf.mxu0
      %v2206 = vadd.f32 0.0, %v2205
      %v2207 = vpop.f32.mrf.mxu0
      %v2208 = vadd.f32 0.0, %v2207
      %2209 = vmatmul.bf16.gmra.mxu0 %v2061
      %v2210 = vpop.f32.mrf.mxu0
      %v2211 = vadd.f32 0.0, %v2210
      %v2212 = vpop.f32.mrf.mxu0
      %v2213 = vadd.f32 0.0, %v2212
      %2214 = vdwg.mxu0
      %v2215 = vadd.f32 %v1533, %v2136
      %v2216 = vadd.f32 %v1534, %v2138
      %v2217 = vadd.f32 %v1535, %v2141
      %v2218 = vadd.f32 %v1536, %v2143
      %v2219 = vadd.f32 %v1537, %v2146
      %v2220 = vadd.f32 %v1538, %v2148
      %v2221 = vadd.f32 %v1539, %v2151
      %v2222 = vadd.f32 %v1540, %v2153
      %v2223 = vadd.f32 %v1541, %v2156
      %v2224 = vadd.f32 %v1542, %v2158
      %v2225 = vadd.f32 %v1543, %v2161
      %v2226 = vadd.f32 %v1544, %v2163
      %v2227 = vadd.f32 %v1545, %v2166
      %v2228 = vadd.f32 %v1546, %v2168
      %v2229 = vadd.f32 %v1547, %v2171
      %v2230 = vadd.f32 %v1548, %v2173
      %v2231 = vadd.f32 %v1549, %v2176
      %v2232 = vadd.f32 %v1550, %v2178
      %v2233 = vadd.f32 %v1551, %v2181
      %v2234 = vadd.f32 %v1552, %v2183
      %v2235 = vadd.f32 %v1553, %v2186
      %v2236 = vadd.f32 %v1554, %v2188
      %v2237 = vadd.f32 %v1555, %v2191
      %v2238 = vadd.f32 %v1556, %v2193
      %v2239 = vadd.f32 %v1557, %v2196
      %v2240 = vadd.f32 %v1558, %v2198
      %v2241 = vadd.f32 %v1559, %v2201
      %v2242 = vadd.f32 %v1560, %v2203
      %v2243 = vadd.f32 %v1561, %v2206
      %v2244 = vadd.f32 %v1562, %v2208
      %v2245 = vadd.f32 %v1563, %v2211
      %v2246 = vadd.f32 %v1564, %v2213
      %v2247 = vld [vmem:[#allocation2] sm:$0xff]
      %v2248 = vld [vmem:[#allocation2 + $0x8] sm:$0xff]
      %v2249 = vld [vmem:[#allocation2 + $0x10] sm:$0xff]
      %v2250 = vld [vmem:[#allocation2 + $0x18] sm:$0xff]
      %v2251 = vld [vmem:[#allocation2 + $0x20] sm:$0xff]
      %v2252 = vld [vmem:[#allocation2 + $0x28] sm:$0xff]
      %v2253 = vld [vmem:[#allocation2 + $0x30] sm:$0xff]
      %v2254 = vld [vmem:[#allocation2 + $0x38] sm:$0xff]
      %v2255 = vld [vmem:[#allocation2 + $0x40] sm:$0xff]
      %v2256 = vld [vmem:[#allocation2 + $0x48] sm:$0xff]
      %v2257 = vld [vmem:[#allocation2 + $0x50] sm:$0xff]
      %v2258 = vld [vmem:[#allocation2 + $0x58] sm:$0xff]
      %v2259 = vld [vmem:[#allocation2 + $0x60] sm:$0xff]
      %v2260 = vld [vmem:[#allocation2 + $0x68] sm:$0xff]
      %v2261 = vld [vmem:[#allocation2 + $0x70] sm:$0xff]
      %v2262 = vld [vmem:[#allocation2 + $0x78] sm:$0xff]
      %v2263 = vld [vmem:[#allocation2 + $0x80] sm:$0xff]
      %v2264 = vld [vmem:[#allocation2 + $0x88] sm:$0xff]
      %v2265 = vld [vmem:[#allocation2 + $0x90] sm:$0xff]
      %v2266 = vld [vmem:[#allocation2 + $0x98] sm:$0xff]
      %v2267 = vld [vmem:[#allocation2 + $0xa0] sm:$0xff]
      %v2268 = vld [vmem:[#allocation2 + $0xa8] sm:$0xff]
      %v2269 = vld [vmem:[#allocation2 + $0xb0] sm:$0xff]
      %v2270 = vld [vmem:[#allocation2 + $0xb8] sm:$0xff]
      %v2271 = vld [vmem:[#allocation2 + $0xc0] sm:$0xff]
      %v2272 = vld [vmem:[#allocation2 + $0xc8] sm:$0xff]
      %v2273 = vld [vmem:[#allocation2 + $0xd0] sm:$0xff]
      %v2274 = vld [vmem:[#allocation2 + $0xd8] sm:$0xff]
      %v2275 = vld [vmem:[#allocation2 + $0xe0] sm:$0xff]
      %v2276 = vld [vmem:[#allocation2 + $0xe8] sm:$0xff]
      %v2277 = vld [vmem:[#allocation2 + $0xf0] sm:$0xff]
      %v2278 = vld [vmem:[#allocation2 + $0xf8] sm:$0xff]
      %v2279 = vadd.f32 %v2247, %v2215
      %v2280 = vadd.f32 %v2248, %v2216
      %v2281 = vadd.f32 %v2249, %v2217
      %v2282 = vadd.f32 %v2250, %v2218
      %v2283 = vadd.f32 %v2251, %v2219
      %v2284 = vadd.f32 %v2252, %v2220
      %v2285 = vadd.f32 %v2253, %v2221
      %v2286 = vadd.f32 %v2254, %v2222
      %v2287 = vadd.f32 %v2255, %v2223
      %v2288 = vadd.f32 %v2256, %v2224
      %v2289 = vadd.f32 %v2257, %v2225
      %v2290 = vadd.f32 %v2258, %v2226
      %v2291 = vadd.f32 %v2259, %v2227
      %v2292 = vadd.f32 %v2260, %v2228
      %v2293 = vadd.f32 %v2261, %v2229
      %v2294 = vadd.f32 %v2262, %v2230
      %v2295 = vadd.f32 %v2263, %v2231
      %v2296 = vadd.f32 %v2264, %v2232
      %v2297 = vadd.f32 %v2265, %v2233
      %v2298 = vadd.f32 %v2266, %v2234
      %v2299 = vadd.f32 %v2267, %v2235
      %v2300 = vadd.f32 %v2268, %v2236
      %v2301 = vadd.f32 %v2269, %v2237
      %v2302 = vadd.f32 %v2270, %v2238
      %v2303 = vadd.f32 %v2271, %v2239
      %v2304 = vadd.f32 %v2272, %v2240
      %v2305 = vadd.f32 %v2273, %v2241
      %v2306 = vadd.f32 %v2274, %v2242
      %v2307 = vadd.f32 %v2275, %v2243
      %v2308 = vadd.f32 %v2276, %v2244
      %v2309 = vadd.f32 %v2277, %v2245
      %v2310 = vadd.f32 %v2278, %v2246
      %2311 = vst [vmem:[#allocation2] sm:$0xff] %v2279
      %2312 = vst [vmem:[#allocation2 + $0x8] sm:$0xff] %v2280
      %2313 = vst [vmem:[#allocation2 + $0x10] sm:$0xff] %v2281
      %2314 = vst [vmem:[#allocation2 + $0x18] sm:$0xff] %v2282
      %2315 = vst [vmem:[#allocation2 + $0x20] sm:$0xff] %v2283
      %2316 = vst [vmem:[#allocation2 + $0x28] sm:$0xff] %v2284
      %2317 = vst [vmem:[#allocation2 + $0x30] sm:$0xff] %v2285
      %2318 = vst [vmem:[#allocation2 + $0x38] sm:$0xff] %v2286
      %2319 = vst [vmem:[#allocation2 + $0x40] sm:$0xff] %v2287
      %2320 = vst [vmem:[#allocation2 + $0x48] sm:$0xff] %v2288
      %2321 = vst [vmem:[#allocation2 + $0x50] sm:$0xff] %v2289
      %2322 = vst [vmem:[#allocation2 + $0x58] sm:$0xff] %v2290
      %2323 = vst [vmem:[#allocation2 + $0x60] sm:$0xff] %v2291
      %2324 = vst [vmem:[#allocation2 + $0x68] sm:$0xff] %v2292
      %2325 = vst [vmem:[#allocation2 + $0x70] sm:$0xff] %v2293
      %2326 = vst [vmem:[#allocation2 + $0x78] sm:$0xff] %v2294
      %2327 = vst [vmem:[#allocation2 + $0x80] sm:$0xff] %v2295
      %2328 = vst [vmem:[#allocation2 + $0x88] sm:$0xff] %v2296
      %2329 = vst [vmem:[#allocation2 + $0x90] sm:$0xff] %v2297
      %2330 = vst [vmem:[#allocation2 + $0x98] sm:$0xff] %v2298
      %2331 = vst [vmem:[#allocation2 + $0xa0] sm:$0xff] %v2299
      %2332 = vst [vmem:[#allocation2 + $0xa8] sm:$0xff] %v2300
      %2333 = vst [vmem:[#allocation2 + $0xb0] sm:$0xff] %v2301
      %2334 = vst [vmem:[#allocation2 + $0xb8] sm:$0xff] %v2302
      %2335 = vst [vmem:[#allocation2 + $0xc0] sm:$0xff] %v2303
      %2336 = vst [vmem:[#allocation2 + $0xc8] sm:$0xff] %v2304
      %2337 = vst [vmem:[#allocation2 + $0xd0] sm:$0xff] %v2305
      %2338 = vst [vmem:[#allocation2 + $0xd8] sm:$0xff] %v2306
      %2339 = vst [vmem:[#allocation2 + $0xe0] sm:$0xff] %v2307
      %2340 = vst [vmem:[#allocation2 + $0xe8] sm:$0xff] %v2308
      %2341 = vst [vmem:[#allocation2 + $0xf0] sm:$0xff] %v2309
      %2342 = vst [vmem:[#allocation2 + $0xf8] sm:$0xff] %v2310
      %v2343 = vld [vmem:[%s204] sm:$0xf]
      %v2344 = vld [vmem:[%s204 + $0x4] sm:$0xf]
      %v2345 = vld [vmem:[%s204 + $0x8] sm:$0x1]
      %v2346 = vld [vmem:[%s204 + $0xc] sm:$0xf]
      %v2347 = vld [vmem:[%s204 + $0x10] sm:$0xf]
      %v2348 = vld [vmem:[%s204 + $0x14] sm:$0x1]
      %v2349 = vld [vmem:[%s204 + $0x18] sm:$0xf]
      %v2350 = vld [vmem:[%s204 + $0x1c] sm:$0xf]
      %v2351 = vld [vmem:[%s204 + $0x20] sm:$0x1]
      %v2352 = vld [vmem:[%s204 + $0x24] sm:$0xf]
      %v2353 = vld [vmem:[%s204 + $0x28] sm:$0xf]
      %v2354 = vld [vmem:[%s204 + $0x2c] sm:$0x1]
      %v2355 = vld [vmem:[%s204 + $0x30] sm:$0xf]
      %v2356 = vld [vmem:[%s204 + $0x34] sm:$0xf]
      %v2357 = vld [vmem:[%s204 + $0x38] sm:$0x1]
      %v2358 = vld [vmem:[%s204 + $0x3c] sm:$0xf]
      %v2359 = vld [vmem:[%s204 + $0x40] sm:$0xf]
      %v2360 = vld [vmem:[%s204 + $0x44] sm:$0x1]
      %v2361 = vld [vmem:[%s204 + $0x48] sm:$0xf]
      %v2362 = vld [vmem:[%s204 + $0x4c] sm:$0xf]
      %v2363 = vld [vmem:[%s204 + $0x50] sm:$0x1]
      %v2364 = vld [vmem:[%s204 + $0x54] sm:$0xf]
      %v2365 = vld [vmem:[%s204 + $0x58] sm:$0xf]
      %v2366 = vld [vmem:[%s204 + $0x5c] sm:$0x1]
      %v2367 = vld [vmem:[%s204 + $0x60] sm:$0xf]
      %v2368 = vld [vmem:[%s204 + $0x64] sm:$0xf]
      %v2369 = vld [vmem:[%s204 + $0x68] sm:$0x1]
      %v2370 = vld [vmem:[%s204 + $0x6c] sm:$0xf]
      %v2371 = vld [vmem:[%s204 + $0x70] sm:$0xf]
      %v2372 = vld [vmem:[%s204 + $0x74] sm:$0x1]
      %v2373 = vld [vmem:[%s204 + $0x78] sm:$0xf]
      %v2374 = vld [vmem:[%s204 + $0x7c] sm:$0xf]
      %v2375 = vld [vmem:[%s204 + $0x80] sm:$0x1]
      %v2376 = vld [vmem:[%s204 + $0x84] sm:$0xf]
      %v2377 = vld [vmem:[%s204 + $0x88] sm:$0xf]
      %v2378 = vld [vmem:[%s204 + $0x8c] sm:$0x1]
      %v2379 = vld [vmem:[%s204 + $0x90] sm:$0xf]
      %v2380 = vld [vmem:[%s204 + $0x94] sm:$0xf]
      %v2381 = vld [vmem:[%s204 + $0x98] sm:$0x1]
      %v2382 = vld [vmem:[%s204 + $0x9c] sm:$0xf]
      %v2383 = vld [vmem:[%s204 + $0xa0] sm:$0xf]
      %v2384 = vld [vmem:[%s204 + $0xa4] sm:$0x1]
      %v2385 = vld [vmem:[%s204 + $0xa8] sm:$0xf]
      %v2386 = vld [vmem:[%s204 + $0xac] sm:$0xf]
      %v2387 = vld [vmem:[%s204 + $0xb0] sm:$0x1]
      %v2388 = vld [vmem:[%s204 + $0xb4] sm:$0xf]
      %v2389 = vld [vmem:[%s204 + $0xb8] sm:$0xf]
      %v2390 = vld [vmem:[%s204 + $0xbc] sm:$0x1]
      %v2392 = vshrl.u32 %v2343, 16
      %v2394 = vrot.slane %v2392, 4
      %v2395 = vshll.u32 %v2343, 16
      %v2397 = vrot.slane %v2395, 5
      %v2398 = vor.u32 %v2394, %v2397
      %v2399 = vrot.slane %v2398, 4
      %v2401 = vshll.u32 %v2344, 16
      %v2403 = vrot.slane %v2401, 5
      %v2404 = vsel %vm414, %v2399, %v2403
      %v2405 = vshrl.u32 %v2344, 16
      %v2407 = vrot.slane %v2405, 4
      %v2408 = vor.u32 %v2407, %v2403
      %v2409 = vrot.slane %v2408, 4
      %v2411 = vshll.u32 %v2345, 16
      %v2413 = vrot.slane %v2411, 5
      %v2414 = vsel %vm414, %v2409, %v2413
      %v2416 = vshrl.u32 %v2346, 16
      %v2418 = vrot.slane %v2416, 4
      %v2419 = vshll.u32 %v2346, 16
      %v2421 = vrot.slane %v2419, 5
      %v2422 = vor.u32 %v2418, %v2421
      %v2423 = vrot.slane %v2422, 4
      %v2425 = vshll.u32 %v2347, 16
      %v2427 = vrot.slane %v2425, 5
      %v2428 = vsel %vm414, %v2423, %v2427
      %v2429 = vshrl.u32 %v2347, 16
      %v2431 = vrot.slane %v2429, 4
      %v2432 = vor.u32 %v2431, %v2427
      %v2433 = vrot.slane %v2432, 4
      %v2435 = vshll.u32 %v2348, 16
      %v2437 = vrot.slane %v2435, 5
      %v2438 = vsel %vm414, %v2433, %v2437
      %v2440 = vshrl.u32 %v2349, 16
      %v2442 = vrot.slane %v2440, 4
      %v2443 = vshll.u32 %v2349, 16
      %v2445 = vrot.slane %v2443, 5
      %v2446 = vor.u32 %v2442, %v2445
      %v2447 = vrot.slane %v2446, 4
      %v2449 = vshll.u32 %v2350, 16
      %v2451 = vrot.slane %v2449, 5
      %v2452 = vsel %vm414, %v2447, %v2451
      %v2453 = vshrl.u32 %v2350, 16
      %v2455 = vrot.slane %v2453, 4
      %v2456 = vor.u32 %v2455, %v2451
      %v2457 = vrot.slane %v2456, 4
      %v2459 = vshll.u32 %v2351, 16
      %v2461 = vrot.slane %v2459, 5
      %v2462 = vsel %vm414, %v2457, %v2461
      %v2464 = vshrl.u32 %v2352, 16
      %v2466 = vrot.slane %v2464, 4
      %v2467 = vshll.u32 %v2352, 16
      %v2469 = vrot.slane %v2467, 5
      %v2470 = vor.u32 %v2466, %v2469
      %v2471 = vrot.slane %v2470, 4
      %v2473 = vshll.u32 %v2353, 16
      %v2475 = vrot.slane %v2473, 5
      %v2476 = vsel %vm414, %v2471, %v2475
      %v2477 = vshrl.u32 %v2353, 16
      %v2479 = vrot.slane %v2477, 4
      %v2480 = vor.u32 %v2479, %v2475
      %v2481 = vrot.slane %v2480, 4
      %v2483 = vshll.u32 %v2354, 16
      %v2485 = vrot.slane %v2483, 5
      %v2486 = vsel %vm414, %v2481, %v2485
      %v2488 = vshrl.u32 %v2355, 16
      %v2490 = vrot.slane %v2488, 4
      %v2491 = vshll.u32 %v2355, 16
      %v2493 = vrot.slane %v2491, 5
      %v2494 = vor.u32 %v2490, %v2493
      %v2495 = vrot.slane %v2494, 4
      %v2497 = vshll.u32 %v2356, 16
      %v2499 = vrot.slane %v2497, 5
      %v2500 = vsel %vm414, %v2495, %v2499
      %v2501 = vshrl.u32 %v2356, 16
      %v2503 = vrot.slane %v2501, 4
      %v2504 = vor.u32 %v2503, %v2499
      %v2505 = vrot.slane %v2504, 4
      %v2507 = vshll.u32 %v2357, 16
      %v2509 = vrot.slane %v2507, 5
      %v2510 = vsel %vm414, %v2505, %v2509
      %v2512 = vshrl.u32 %v2358, 16
      %v2514 = vrot.slane %v2512, 4
      %v2515 = vshll.u32 %v2358, 16
      %v2517 = vrot.slane %v2515, 5
      %v2518 = vor.u32 %v2514, %v2517
      %v2519 = vrot.slane %v2518, 4
      %v2521 = vshll.u32 %v2359, 16
      %v2523 = vrot.slane %v2521, 5
      %v2524 = vsel %vm414, %v2519, %v2523
      %v2525 = vshrl.u32 %v2359, 16
      %v2527 = vrot.slane %v2525, 4
      %v2528 = vor.u32 %v2527, %v2523
      %v2529 = vrot.slane %v2528, 4
      %v2531 = vshll.u32 %v2360, 16
      %v2533 = vrot.slane %v2531, 5
      %v2534 = vsel %vm414, %v2529, %v2533
      %v2536 = vshrl.u32 %v2361, 16
      %v2538 = vrot.slane %v2536, 4
      %v2539 = vshll.u32 %v2361, 16
      %v2541 = vrot.slane %v2539, 5
      %v2542 = vor.u32 %v2538, %v2541
      %v2543 = vrot.slane %v2542, 4
      %v2545 = vshll.u32 %v2362, 16
      %v2547 = vrot.slane %v2545, 5
      %v2548 = vsel %vm414, %v2543, %v2547
      %v2549 = vshrl.u32 %v2362, 16
      %v2551 = vrot.slane %v2549, 4
      %v2552 = vor.u32 %v2551, %v2547
      %v2553 = vrot.slane %v2552, 4
      %v2555 = vshll.u32 %v2363, 16
      %v2557 = vrot.slane %v2555, 5
      %v2558 = vsel %vm414, %v2553, %v2557
      %v2560 = vshrl.u32 %v2364, 16
      %v2562 = vrot.slane %v2560, 4
      %v2563 = vshll.u32 %v2364, 16
      %v2565 = vrot.slane %v2563, 5
      %v2566 = vor.u32 %v2562, %v2565
      %v2567 = vrot.slane %v2566, 4
      %v2569 = vshll.u32 %v2365, 16
      %v2571 = vrot.slane %v2569, 5
      %v2572 = vsel %vm414, %v2567, %v2571
      %v2573 = vshrl.u32 %v2365, 16
      %v2575 = vrot.slane %v2573, 4
      %v2576 = vor.u32 %v2575, %v2571
      %v2577 = vrot.slane %v2576, 4
      %v2579 = vshll.u32 %v2366, 16
      %v2581 = vrot.slane %v2579, 5
      %v2582 = vsel %vm414, %v2577, %v2581
      %v2584 = vshrl.u32 %v2367, 16
      %v2586 = vrot.slane %v2584, 4
      %v2587 = vshll.u32 %v2367, 16
      %v2589 = vrot.slane %v2587, 5
      %v2590 = vor.u32 %v2586, %v2589
      %v2591 = vrot.slane %v2590, 4
      %v2593 = vshll.u32 %v2368, 16
      %v2595 = vrot.slane %v2593, 5
      %v2596 = vsel %vm414, %v2591, %v2595
      %v2597 = vshrl.u32 %v2368, 16
      %v2599 = vrot.slane %v2597, 4
      %v2600 = vor.u32 %v2599, %v2595
      %v2601 = vrot.slane %v2600, 4
      %v2603 = vshll.u32 %v2369, 16
      %v2605 = vrot.slane %v2603, 5
      %v2606 = vsel %vm414, %v2601, %v2605
      %v2608 = vshrl.u32 %v2370, 16
      %v2610 = vrot.slane %v2608, 4
      %v2611 = vshll.u32 %v2370, 16
      %v2613 = vrot.slane %v2611, 5
      %v2614 = vor.u32 %v2610, %v2613
      %v2615 = vrot.slane %v2614, 4
      %v2617 = vshll.u32 %v2371, 16
      %v2619 = vrot.slane %v2617, 5
      %v2620 = vsel %vm414, %v2615, %v2619
      %v2621 = vshrl.u32 %v2371, 16
      %v2623 = vrot.slane %v2621, 4
      %v2624 = vor.u32 %v2623, %v2619
      %v2625 = vrot.slane %v2624, 4
      %v2627 = vshll.u32 %v2372, 16
      %v2629 = vrot.slane %v2627, 5
      %v2630 = vsel %vm414, %v2625, %v2629
      %v2632 = vshrl.u32 %v2373, 16
      %v2634 = vrot.slane %v2632, 4
      %v2635 = vshll.u32 %v2373, 16
      %v2637 = vrot.slane %v2635, 5
      %v2638 = vor.u32 %v2634, %v2637
      %v2639 = vrot.slane %v2638, 4
      %v2641 = vshll.u32 %v2374, 16
      %v2643 = vrot.slane %v2641, 5
      %v2644 = vsel %vm414, %v2639, %v2643
      %v2645 = vshrl.u32 %v2374, 16
      %v2647 = vrot.slane %v2645, 4
      %v2648 = vor.u32 %v2647, %v2643
      %v2649 = vrot.slane %v2648, 4
      %v2651 = vshll.u32 %v2375, 16
      %v2653 = vrot.slane %v2651, 5
      %v2654 = vsel %vm414, %v2649, %v2653
      %v2656 = vshrl.u32 %v2376, 16
      %v2658 = vrot.slane %v2656, 4
      %v2659 = vshll.u32 %v2376, 16
      %v2661 = vrot.slane %v2659, 5
      %v2662 = vor.u32 %v2658, %v2661
      %v2663 = vrot.slane %v2662, 4
      %v2665 = vshll.u32 %v2377, 16
      %v2667 = vrot.slane %v2665, 5
      %v2668 = vsel %vm414, %v2663, %v2667
      %v2669 = vshrl.u32 %v2377, 16
      %v2671 = vrot.slane %v2669, 4
      %v2672 = vor.u32 %v2671, %v2667
      %v2673 = vrot.slane %v2672, 4
      %v2675 = vshll.u32 %v2378, 16
      %v2677 = vrot.slane %v2675, 5
      %v2678 = vsel %vm414, %v2673, %v2677
      %v2680 = vshrl.u32 %v2379, 16
      %v2682 = vrot.slane %v2680, 4
      %v2683 = vshll.u32 %v2379, 16
      %v2685 = vrot.slane %v2683, 5
      %v2686 = vor.u32 %v2682, %v2685
      %v2687 = vrot.slane %v2686, 4
      %v2689 = vshll.u32 %v2380, 16
      %v2691 = vrot.slane %v2689, 5
      %v2692 = vsel %vm414, %v2687, %v2691
      %v2693 = vshrl.u32 %v2380, 16
      %v2695 = vrot.slane %v2693, 4
      %v2696 = vor.u32 %v2695, %v2691
      %v2697 = vrot.slane %v2696, 4
      %v2699 = vshll.u32 %v2381, 16
      %v2701 = vrot.slane %v2699, 5
      %v2702 = vsel %vm414, %v2697, %v2701
      %v2704 = vshrl.u32 %v2382, 16
      %v2706 = vrot.slane %v2704, 4
      %v2707 = vshll.u32 %v2382, 16
      %v2709 = vrot.slane %v2707, 5
      %v2710 = vor.u32 %v2706, %v2709
      %v2711 = vrot.slane %v2710, 4
      %v2713 = vshll.u32 %v2383, 16
      %v2715 = vrot.slane %v2713, 5
      %v2716 = vsel %vm414, %v2711, %v2715
      %v2717 = vshrl.u32 %v2383, 16
      %v2719 = vrot.slane %v2717, 4
      %v2720 = vor.u32 %v2719, %v2715
      %v2721 = vrot.slane %v2720, 4
      %v2723 = vshll.u32 %v2384, 16
      %v2725 = vrot.slane %v2723, 5
      %v2726 = vsel %vm414, %v2721, %v2725
      %v2728 = vshrl.u32 %v2385, 16
      %v2730 = vrot.slane %v2728, 4
      %v2731 = vshll.u32 %v2385, 16
      %v2733 = vrot.slane %v2731, 5
      %v2734 = vor.u32 %v2730, %v2733
      %v2735 = vrot.slane %v2734, 4
      %v2737 = vshll.u32 %v2386, 16
      %v2739 = vrot.slane %v2737, 5
      %v2740 = vsel %vm414, %v2735, %v2739
      %v2741 = vshrl.u32 %v2386, 16
      %v2743 = vrot.slane %v2741, 4
      %v2744 = vor.u32 %v2743, %v2739
      %v2745 = vrot.slane %v2744, 4
      %v2747 = vshll.u32 %v2387, 16
      %v2749 = vrot.slane %v2747, 5
      %v2750 = vsel %vm414, %v2745, %v2749
      %v2752 = vshrl.u32 %v2388, 16
      %v2754 = vrot.slane %v2752, 4
      %v2755 = vshll.u32 %v2388, 16
      %v2757 = vrot.slane %v2755, 5
      %v2758 = vor.u32 %v2754, %v2757
      %v2759 = vrot.slane %v2758, 4
      %v2761 = vshll.u32 %v2389, 16
      %v2763 = vrot.slane %v2761, 5
      %v2764 = vsel %vm414, %v2759, %v2763
      %v2765 = vshrl.u32 %v2389, 16
      %v2767 = vrot.slane %v2765, 4
      %v2768 = vor.u32 %v2767, %v2763
      %v2769 = vrot.slane %v2768, 4
      %v2771 = vshll.u32 %v2390, 16
      %v2773 = vrot.slane %v2771, 5
      %v2774 = vsel %vm414, %v2769, %v2773
      %s2775 = scalar_lea.vmem %s209, 256
      %v2776 = vld [vmem:[%s2775] sm:$0xf]
      %v2777 = vld [vmem:[%s2775 + $0x4] sm:$0xf]
      %v2778 = vld [vmem:[%s2775 + $0x8] sm:$0xf]
      %v2779 = vld [vmem:[%s2775 + $0xc] sm:$0xf]
      %v2780 = vld [vmem:[%s2775 + $0x10] sm:$0xf]
      %v2781 = vld [vmem:[%s2775 + $0x14] sm:$0xf]
      %v2782 = vld [vmem:[%s2775 + $0x18] sm:$0xf]
      %v2783 = vld [vmem:[%s2775 + $0x1c] sm:$0xf]
      %v2784 = vld [vmem:[%s2775 + $0x20] sm:$0xf]
      %v2785 = vld [vmem:[%s2775 + $0x24] sm:$0xf]
      %v2786 = vld [vmem:[%s2775 + $0x28] sm:$0xf]
      %v2787 = vld [vmem:[%s2775 + $0x2c] sm:$0xf]
      %v2788 = vld [vmem:[%s2775 + $0x30] sm:$0xf]
      %v2789 = vld [vmem:[%s2775 + $0x34] sm:$0xf]
      %v2790 = vld [vmem:[%s2775 + $0x38] sm:$0xf]
      %v2791 = vld [vmem:[%s2775 + $0x3c] sm:$0xf]
      %v2792 = vld [vmem:[%s204] sm:$0xe]
      %v2793 = vld [vmem:[%s204 + $0xc] sm:$0xe]
      %v2794 = vld [vmem:[%s204 + $0x18] sm:$0xe]
      %v2795 = vld [vmem:[%s204 + $0x24] sm:$0xe]
      %v2796 = vld [vmem:[%s204 + $0x30] sm:$0xe]
      %v2797 = vld [vmem:[%s204 + $0x3c] sm:$0xe]
      %v2798 = vld [vmem:[%s204 + $0x48] sm:$0xe]
      %v2799 = vld [vmem:[%s204 + $0x54] sm:$0xe]
      %v2800 = vld [vmem:[%s204 + $0x60] sm:$0xe]
      %v2801 = vld [vmem:[%s204 + $0x6c] sm:$0xe]
      %v2802 = vld [vmem:[%s204 + $0x78] sm:$0xe]
      %v2803 = vld [vmem:[%s204 + $0x84] sm:$0xe]
      %v2804 = vld [vmem:[%s204 + $0x90] sm:$0xe]
      %v2805 = vld [vmem:[%s204 + $0x9c] sm:$0xe]
      %v2806 = vld [vmem:[%s204 + $0xa8] sm:$0xe]
      %v2807 = vld [vmem:[%s204 + $0xb4] sm:$0xe]
      %vm2856 = vcmask 1042432
      %vm2857 = vcmask 1046532
      %vm2858 = vmor %vm2856, %vm2857
      %v2859 = vrot.slane %v2792, 5
      %v2860 = vrot.slane %v2859, 4
      %v2861 = vrot.slane %v2344, 5
      %v2862 = vsel %vm2858, %v2860, %v2861
      %v2863 = vrot.slane %v2861, 4
      %v2864 = vrot.slane %v2345, 5
      %v2865 = vsel %vm2858, %v2863, %v2864
      %v2866 = vrot.slane %v2793, 5
      %v2867 = vrot.slane %v2866, 4
      %v2868 = vrot.slane %v2347, 5
      %v2869 = vsel %vm2858, %v2867, %v2868
      %v2870 = vrot.slane %v2868, 4
      %v2871 = vrot.slane %v2348, 5
      %v2872 = vsel %vm2858, %v2870, %v2871
      %v2873 = vrot.slane %v2794, 5
      %v2874 = vrot.slane %v2873, 4
      %v2875 = vrot.slane %v2350, 5
      %v2876 = vsel %vm2858, %v2874, %v2875
      %v2877 = vrot.slane %v2875, 4
      %v2878 = vrot.slane %v2351, 5
      %v2879 = vsel %vm2858, %v2877, %v2878
      %v2880 = vrot.slane %v2795, 5
      %v2881 = vrot.slane %v2880, 4
      %v2882 = vrot.slane %v2353, 5
      %v2883 = vsel %vm2858, %v2881, %v2882
      %v2884 = vrot.slane %v2882, 4
      %v2885 = vrot.slane %v2354, 5
      %v2886 = vsel %vm2858, %v2884, %v2885
      %v2887 = vrot.slane %v2796, 5
      %v2888 = vrot.slane %v2887, 4
      %v2889 = vrot.slane %v2356, 5
      %v2890 = vsel %vm2858, %v2888, %v2889
      %v2891 = vrot.slane %v2889, 4
      %v2892 = vrot.slane %v2357, 5
      %v2893 = vsel %vm2858, %v2891, %v2892
      %v2894 = vrot.slane %v2797, 5
      %v2895 = vrot.slane %v2894, 4
      %v2896 = vrot.slane %v2359, 5
      %v2897 = vsel %vm2858, %v2895, %v2896
      %v2898 = vrot.slane %v2896, 4
      %v2899 = vrot.slane %v2360, 5
      %v2900 = vsel %vm2858, %v2898, %v2899
      %v2901 = vrot.slane %v2798, 5
      %v2902 = vrot.slane %v2901, 4
      %v2903 = vrot.slane %v2362, 5
      %v2904 = vsel %vm2858, %v2902, %v2903
      %v2905 = vrot.slane %v2903, 4
      %v2906 = vrot.slane %v2363, 5
      %v2907 = vsel %vm2858, %v2905, %v2906
      %v2908 = vrot.slane %v2799, 5
      %v2909 = vrot.slane %v2908, 4
      %v2910 = vrot.slane %v2365, 5
      %v2911 = vsel %vm2858, %v2909, %v2910
      %v2912 = vrot.slane %v2910, 4
      %v2913 = vrot.slane %v2366, 5
      %v2914 = vsel %vm2858, %v2912, %v2913
      %v2915 = vrot.slane %v2800, 5
      %v2916 = vrot.slane %v2915, 4
      %v2917 = vrot.slane %v2368, 5
      %v2918 = vsel %vm2858, %v2916, %v2917
      %v2919 = vrot.slane %v2917, 4
      %v2920 = vrot.slane %v2369, 5
      %v2921 = vsel %vm2858, %v2919, %v2920
      %v2922 = vrot.slane %v2801, 5
      %v2923 = vrot.slane %v2922, 4
      %v2924 = vrot.slane %v2371, 5
      %v2925 = vsel %vm2858, %v2923, %v2924
      %v2926 = vrot.slane %v2924, 4
      %v2927 = vrot.slane %v2372, 5
      %v2928 = vsel %vm2858, %v2926, %v2927
      %v2929 = vrot.slane %v2802, 5
      %v2930 = vrot.slane %v2929, 4
      %v2931 = vrot.slane %v2374, 5
      %v2932 = vsel %vm2858, %v2930, %v2931
      %v2933 = vrot.slane %v2931, 4
      %v2934 = vrot.slane %v2375, 5
      %v2935 = vsel %vm2858, %v2933, %v2934
      %v2936 = vrot.slane %v2803, 5
      %v2937 = vrot.slane %v2936, 4
      %v2938 = vrot.slane %v2377, 5
      %v2939 = vsel %vm2858, %v2937, %v2938
      %v2940 = vrot.slane %v2938, 4
      %v2941 = vrot.slane %v2378, 5
      %v2942 = vsel %vm2858, %v2940, %v2941
      %v2943 = vrot.slane %v2804, 5
      %v2944 = vrot.slane %v2943, 4
      %v2945 = vrot.slane %v2380, 5
      %v2946 = vsel %vm2858, %v2944, %v2945
      %v2947 = vrot.slane %v2945, 4
      %v2948 = vrot.slane %v2381, 5
      %v2949 = vsel %vm2858, %v2947, %v2948
      %v2950 = vrot.slane %v2805, 5
      %v2951 = vrot.slane %v2950, 4
      %v2952 = vrot.slane %v2383, 5
      %v2953 = vsel %vm2858, %v2951, %v2952
      %v2954 = vrot.slane %v2952, 4
      %v2955 = vrot.slane %v2384, 5
      %v2956 = vsel %vm2858, %v2954, %v2955
      %v2957 = vrot.slane %v2806, 5
      %v2958 = vrot.slane %v2957, 4
      %v2959 = vrot.slane %v2386, 5
      %v2960 = vsel %vm2858, %v2958, %v2959
      %v2961 = vrot.slane %v2959, 4
      %v2962 = vrot.slane %v2387, 5
      %v2963 = vsel %vm2858, %v2961, %v2962
      %v2964 = vrot.slane %v2807, 5
      %v2965 = vrot.slane %v2964, 4
      %v2966 = vrot.slane %v2389, 5
      %v2967 = vsel %vm2858, %v2965, %v2966
      %v2968 = vrot.slane %v2966, 4
      %v2969 = vrot.slane %v2390, 5
      %v2970 = vsel %vm2858, %v2968, %v2969
      %s2971 = scalar_lea.vmem %s209, 320
      %v2972 = vld [vmem:[%s2971] sm:$0xf]
      %v2973 = vld [vmem:[%s2971 + $0x4] sm:$0xf]
      %v2974 = vld [vmem:[%s2971 + $0x8] sm:$0xf]
      %v2975 = vld [vmem:[%s2971 + $0xc] sm:$0xf]
      %v2976 = vld [vmem:[%s2971 + $0x10] sm:$0xf]
      %v2977 = vld [vmem:[%s2971 + $0x14] sm:$0xf]
      %v2978 = vld [vmem:[%s2971 + $0x18] sm:$0xf]
      %v2979 = vld [vmem:[%s2971 + $0x1c] sm:$0xf]
      %v2980 = vld [vmem:[%s2971 + $0x20] sm:$0xf]
      %v2981 = vld [vmem:[%s2971 + $0x24] sm:$0xf]
      %v2982 = vld [vmem:[%s2971 + $0x28] sm:$0xf]
      %v2983 = vld [vmem:[%s2971 + $0x2c] sm:$0xf]
      %v2984 = vld [vmem:[%s2971 + $0x30] sm:$0xf]
      %v2985 = vld [vmem:[%s2971 + $0x34] sm:$0xf]
      %v2986 = vld [vmem:[%s2971 + $0x38] sm:$0xf]
      %v2987 = vld [vmem:[%s2971 + $0x3c] sm:$0xf]
      %v2988 = vunpack.c.l.b16 %v2862
      %v2989 = vunpack.c.l.b16 %v2865
      %v2990 = vunpack.c.l.b16 %v2869
      %v2991 = vunpack.c.l.b16 %v2872
      %v2992 = vunpack.c.l.b16 %v2876
      %v2993 = vunpack.c.l.b16 %v2879
      %v2994 = vunpack.c.l.b16 %v2883
      %v2995 = vunpack.c.l.b16 %v2886
      %v2996 = vunpack.c.l.b16 %v2890
      %v2997 = vunpack.c.l.b16 %v2893
      %v2998 = vunpack.c.l.b16 %v2897
      %v2999 = vunpack.c.l.b16 %v2900
      %v3000 = vunpack.c.l.b16 %v2904
      %v3001 = vunpack.c.l.b16 %v2907
      %v3002 = vunpack.c.l.b16 %v2911
      %v3003 = vunpack.c.l.b16 %v2914
      %v3004 = vunpack.c.l.b16 %v2918
      %v3005 = vunpack.c.l.b16 %v2921
      %v3006 = vunpack.c.l.b16 %v2925
      %v3007 = vunpack.c.l.b16 %v2928
      %v3008 = vunpack.c.l.b16 %v2932
      %v3009 = vunpack.c.l.b16 %v2935
      %v3010 = vunpack.c.l.b16 %v2939
      %v3011 = vunpack.c.l.b16 %v2942
      %v3012 = vunpack.c.l.b16 %v2946
      %v3013 = vunpack.c.l.b16 %v2949
      %v3014 = vunpack.c.l.b16 %v2953
      %v3015 = vunpack.c.l.b16 %v2956
      %v3016 = vunpack.c.l.b16 %v2960
      %v3017 = vunpack.c.l.b16 %v2963
      %v3018 = vunpack.c.l.b16 %v2967
      %v3019 = vunpack.c.l.b16 %v2970
      %v3020 = vpack.c.b16 %v2989, %v2988
      %v3021 = vpack.c.b16 %v2991, %v2990
      %v3022 = vpack.c.b16 %v2993, %v2992
      %v3023 = vpack.c.b16 %v2995, %v2994
      %v3024 = vpack.c.b16 %v2997, %v2996
      %v3025 = vpack.c.b16 %v2999, %v2998
      %v3026 = vpack.c.b16 %v3001, %v3000
      %v3027 = vpack.c.b16 %v3003, %v3002
      %v3028 = vpack.c.b16 %v3005, %v3004
      %v3029 = vpack.c.b16 %v3007, %v3006
      %v3030 = vpack.c.b16 %v3009, %v3008
      %v3031 = vpack.c.b16 %v3011, %v3010
      %v3032 = vpack.c.b16 %v3013, %v3012
      %v3033 = vpack.c.b16 %v3015, %v3014
      %v3034 = vpack.c.b16 %v3017, %v3016
      %v3035 = vpack.c.b16 %v3019, %v3018
      %v3068 = vunpack.c.l.b16 %v2972
      %v3069 = vunpack.c.l.b16 %v2973
      %v3070 = vunpack.c.l.b16 %v2974
      %v3071 = vunpack.c.l.b16 %v2975
      %v3072 = vunpack.c.l.b16 %v2976
      %v3073 = vunpack.c.l.b16 %v2977
      %v3074 = vunpack.c.l.b16 %v2978
      %v3075 = vunpack.c.l.b16 %v2979
      %v3076 = vunpack.c.l.b16 %v2980
      %v3077 = vunpack.c.l.b16 %v2981
      %v3078 = vunpack.c.l.b16 %v2982
      %v3079 = vunpack.c.l.b16 %v2983
      %v3080 = vunpack.c.l.b16 %v2984
      %v3081 = vunpack.c.l.b16 %v2985
      %v3082 = vunpack.c.l.b16 %v2986
      %v3083 = vunpack.c.l.b16 %v2987
      %v3084 = vpack.c.b16 %v3069, %v3068
      %v3085 = vpack.c.b16 %v3071, %v3070
      %v3086 = vpack.c.b16 %v3073, %v3072
      %v3087 = vpack.c.b16 %v3075, %v3074
      %v3088 = vpack.c.b16 %v3077, %v3076
      %v3089 = vpack.c.b16 %v3079, %v3078
      %v3090 = vpack.c.b16 %v3081, %v3080
      %v3091 = vpack.c.b16 %v3083, %v3082
      %3100 = vmatpush.bf16.msra.mxu0 %v3091
      %3101 = vmatpush.bf16.msra.mxu0 %v3090
      %3102 = vmatpush.bf16.msra.mxu0 %v3089
      %3103 = vmatpush.bf16.msra.mxu0 %v3088
      %3104 = vmatpush.bf16.msra.mxu0 %v3087
      %3105 = vmatpush.bf16.msra.mxu0 %v3086
      %3106 = vmatpush.bf16.msra.mxu0 %v3085
      %3107 = vmatpush.bf16.msra.mxu0 %v3084
      %3108 = vmatmul.bf16.gmra.mxu0 %v3020
      %v3109 = vpop.f32.mrf.mxu0
      %v3110 = vadd.f32 0.0, %v3109
      %v3111 = vpop.f32.mrf.mxu0
      %v3112 = vadd.f32 0.0, %v3111
      %3113 = vmatmul.bf16.gmra.mxu0 %v3021
      %v3114 = vpop.f32.mrf.mxu0
      %v3115 = vadd.f32 0.0, %v3114
      %v3116 = vpop.f32.mrf.mxu0
      %v3117 = vadd.f32 0.0, %v3116
      %3118 = vmatmul.bf16.gmra.mxu0 %v3022
      %v3119 = vpop.f32.mrf.mxu0
      %v3120 = vadd.f32 0.0, %v3119
      %v3121 = vpop.f32.mrf.mxu0
      %v3122 = vadd.f32 0.0, %v3121
      %3123 = vmatmul.bf16.gmra.mxu0 %v3023
      %v3124 = vpop.f32.mrf.mxu0
      %v3125 = vadd.f32 0.0, %v3124
      %v3126 = vpop.f32.mrf.mxu0
      %v3127 = vadd.f32 0.0, %v3126
      %3128 = vmatmul.bf16.gmra.mxu0 %v3024
      %v3129 = vpop.f32.mrf.mxu0
      %v3130 = vadd.f32 0.0, %v3129
      %v3131 = vpop.f32.mrf.mxu0
      %v3132 = vadd.f32 0.0, %v3131
      %3133 = vmatmul.bf16.gmra.mxu0 %v3025
      %v3134 = vpop.f32.mrf.mxu0
      %v3135 = vadd.f32 0.0, %v3134
      %v3136 = vpop.f32.mrf.mxu0
      %v3137 = vadd.f32 0.0, %v3136
      %3138 = vmatmul.bf16.gmra.mxu0 %v3026
      %v3139 = vpop.f32.mrf.mxu0
      %v3140 = vadd.f32 0.0, %v3139
      %v3141 = vpop.f32.mrf.mxu0
      %v3142 = vadd.f32 0.0, %v3141
      %3143 = vmatmul.bf16.gmra.mxu0 %v3027
      %v3144 = vpop.f32.mrf.mxu0
      %v3145 = vadd.f32 0.0, %v3144
      %v3146 = vpop.f32.mrf.mxu0
      %v3147 = vadd.f32 0.0, %v3146
      %3148 = vmatmul.bf16.gmra.mxu0 %v3028
      %v3149 = vpop.f32.mrf.mxu0
      %v3150 = vadd.f32 0.0, %v3149
      %v3151 = vpop.f32.mrf.mxu0
      %v3152 = vadd.f32 0.0, %v3151
      %3153 = vmatmul.bf16.gmra.mxu0 %v3029
      %v3154 = vpop.f32.mrf.mxu0
      %v3155 = vadd.f32 0.0, %v3154
      %v3156 = vpop.f32.mrf.mxu0
      %v3157 = vadd.f32 0.0, %v3156
      %3158 = vmatmul.bf16.gmra.mxu0 %v3030
      %v3159 = vpop.f32.mrf.mxu0
      %v3160 = vadd.f32 0.0, %v3159
      %v3161 = vpop.f32.mrf.mxu0
      %v3162 = vadd.f32 0.0, %v3161
      %3163 = vmatmul.bf16.gmra.mxu0 %v3031
      %v3164 = vpop.f32.mrf.mxu0
      %v3165 = vadd.f32 0.0, %v3164
      %v3166 = vpop.f32.mrf.mxu0
      %v3167 = vadd.f32 0.0, %v3166
      %3168 = vmatmul.bf16.gmra.mxu0 %v3032
      %v3169 = vpop.f32.mrf.mxu0
      %v3170 = vadd.f32 0.0, %v3169
      %v3171 = vpop.f32.mrf.mxu0
      %v3172 = vadd.f32 0.0, %v3171
      %3173 = vmatmul.bf16.gmra.mxu0 %v3033
      %v3174 = vpop.f32.mrf.mxu0
      %v3175 = vadd.f32 0.0, %v3174
      %v3176 = vpop.f32.mrf.mxu0
      %v3177 = vadd.f32 0.0, %v3176
      %3178 = vmatmul.bf16.gmra.mxu0 %v3034
      %v3179 = vpop.f32.mrf.mxu0
      %v3180 = vadd.f32 0.0, %v3179
      %v3181 = vpop.f32.mrf.mxu0
      %v3182 = vadd.f32 0.0, %v3181
      %3183 = vmatmul.bf16.gmra.mxu0 %v3035
      %v3184 = vpop.f32.mrf.mxu0
      %v3185 = vadd.f32 0.0, %v3184
      %v3186 = vpop.f32.mrf.mxu0
      %v3187 = vadd.f32 0.0, %v3186
      %3188 = vdwg.mxu0
      %v3189 = vunpack.c.l.b16 %v2404
      %v3190 = vunpack.c.l.b16 %v2414
      %v3191 = vunpack.c.l.b16 %v2428
      %v3192 = vunpack.c.l.b16 %v2438
      %v3193 = vunpack.c.l.b16 %v2452
      %v3194 = vunpack.c.l.b16 %v2462
      %v3195 = vunpack.c.l.b16 %v2476
      %v3196 = vunpack.c.l.b16 %v2486
      %v3197 = vunpack.c.l.b16 %v2500
      %v3198 = vunpack.c.l.b16 %v2510
      %v3199 = vunpack.c.l.b16 %v2524
      %v3200 = vunpack.c.l.b16 %v2534
      %v3201 = vunpack.c.l.b16 %v2548
      %v3202 = vunpack.c.l.b16 %v2558
      %v3203 = vunpack.c.l.b16 %v2572
      %v3204 = vunpack.c.l.b16 %v2582
      %v3205 = vunpack.c.l.b16 %v2596
      %v3206 = vunpack.c.l.b16 %v2606
      %v3207 = vunpack.c.l.b16 %v2620
      %v3208 = vunpack.c.l.b16 %v2630
      %v3209 = vunpack.c.l.b16 %v2644
      %v3210 = vunpack.c.l.b16 %v2654
      %v3211 = vunpack.c.l.b16 %v2668
      %v3212 = vunpack.c.l.b16 %v2678
      %v3213 = vunpack.c.l.b16 %v2692
      %v3214 = vunpack.c.l.b16 %v2702
      %v3215 = vunpack.c.l.b16 %v2716
      %v3216 = vunpack.c.l.b16 %v2726
      %v3217 = vunpack.c.l.b16 %v2740
      %v3218 = vunpack.c.l.b16 %v2750
      %v3219 = vunpack.c.l.b16 %v2764
      %v3220 = vunpack.c.l.b16 %v2774
      %v3221 = vpack.c.b16 %v3190, %v3189
      %v3222 = vpack.c.b16 %v3192, %v3191
      %v3223 = vpack.c.b16 %v3194, %v3193
      %v3224 = vpack.c.b16 %v3196, %v3195
      %v3225 = vpack.c.b16 %v3198, %v3197
      %v3226 = vpack.c.b16 %v3200, %v3199
      %v3227 = vpack.c.b16 %v3202, %v3201
      %v3228 = vpack.c.b16 %v3204, %v3203
      %v3229 = vpack.c.b16 %v3206, %v3205
      %v3230 = vpack.c.b16 %v3208, %v3207
      %v3231 = vpack.c.b16 %v3210, %v3209
      %v3232 = vpack.c.b16 %v3212, %v3211
      %v3233 = vpack.c.b16 %v3214, %v3213
      %v3234 = vpack.c.b16 %v3216, %v3215
      %v3235 = vpack.c.b16 %v3218, %v3217
      %v3236 = vpack.c.b16 %v3220, %v3219
      %v3269 = vunpack.c.l.b16 %v2776
      %v3270 = vunpack.c.l.b16 %v2777
      %v3271 = vunpack.c.l.b16 %v2778
      %v3272 = vunpack.c.l.b16 %v2779
      %v3273 = vunpack.c.l.b16 %v2780
      %v3274 = vunpack.c.l.b16 %v2781
      %v3275 = vunpack.c.l.b16 %v2782
      %v3276 = vunpack.c.l.b16 %v2783
      %v3277 = vunpack.c.l.b16 %v2784
      %v3278 = vunpack.c.l.b16 %v2785
      %v3279 = vunpack.c.l.b16 %v2786
      %v3280 = vunpack.c.l.b16 %v2787
      %v3281 = vunpack.c.l.b16 %v2788
      %v3282 = vunpack.c.l.b16 %v2789
      %v3283 = vunpack.c.l.b16 %v2790
      %v3284 = vunpack.c.l.b16 %v2791
      %v3285 = vpack.c.b16 %v3270, %v3269
      %v3286 = vpack.c.b16 %v3272, %v3271
      %v3287 = vpack.c.b16 %v3274, %v3273
      %v3288 = vpack.c.b16 %v3276, %v3275
      %v3289 = vpack.c.b16 %v3278, %v3277
      %v3290 = vpack.c.b16 %v3280, %v3279
      %v3291 = vpack.c.b16 %v3282, %v3281
      %v3292 = vpack.c.b16 %v3284, %v3283
      %3301 = vmatpush.bf16.msra.mxu0 %v3292
      %3302 = vmatpush.bf16.msra.mxu0 %v3291
      %3303 = vmatpush.bf16.msra.mxu0 %v3290
      %3304 = vmatpush.bf16.msra.mxu0 %v3289
      %3305 = vmatpush.bf16.msra.mxu0 %v3288
      %3306 = vmatpush.bf16.msra.mxu0 %v3287
      %3307 = vmatpush.bf16.msra.mxu0 %v3286
      %3308 = vmatpush.bf16.msra.mxu0 %v3285
      %3309 = vmatmul.bf16.gmra.mxu0 %v3221
      %v3310 = vpop.f32.mrf.mxu0
      %v3311 = vadd.f32 %v3110, %v3310
      %v3312 = vpop.f32.mrf.mxu0
      %v3313 = vadd.f32 %v3112, %v3312
      %3314 = vmatmul.bf16.gmra.mxu0 %v3222
      %v3315 = vpop.f32.mrf.mxu0
      %v3316 = vadd.f32 %v3115, %v3315
      %v3317 = vpop.f32.mrf.mxu0
      %v3318 = vadd.f32 %v3117, %v3317
      %3319 = vmatmul.bf16.gmra.mxu0 %v3223
      %v3320 = vpop.f32.mrf.mxu0
      %v3321 = vadd.f32 %v3120, %v3320
      %v3322 = vpop.f32.mrf.mxu0
      %v3323 = vadd.f32 %v3122, %v3322
      %3324 = vmatmul.bf16.gmra.mxu0 %v3224
      %v3325 = vpop.f32.mrf.mxu0
      %v3326 = vadd.f32 %v3125, %v3325
      %v3327 = vpop.f32.mrf.mxu0
      %v3328 = vadd.f32 %v3127, %v3327
      %3329 = vmatmul.bf16.gmra.mxu0 %v3225
      %v3330 = vpop.f32.mrf.mxu0
      %v3331 = vadd.f32 %v3130, %v3330
      %v3332 = vpop.f32.mrf.mxu0
      %v3333 = vadd.f32 %v3132, %v3332
      %3334 = vmatmul.bf16.gmra.mxu0 %v3226
      %v3335 = vpop.f32.mrf.mxu0
      %v3336 = vadd.f32 %v3135, %v3335
      %v3337 = vpop.f32.mrf.mxu0
      %v3338 = vadd.f32 %v3137, %v3337
      %3339 = vmatmul.bf16.gmra.mxu0 %v3227
      %v3340 = vpop.f32.mrf.mxu0
      %v3341 = vadd.f32 %v3140, %v3340
      %v3342 = vpop.f32.mrf.mxu0
      %v3343 = vadd.f32 %v3142, %v3342
      %3344 = vmatmul.bf16.gmra.mxu0 %v3228
      %v3345 = vpop.f32.mrf.mxu0
      %v3346 = vadd.f32 %v3145, %v3345
      %v3347 = vpop.f32.mrf.mxu0
      %v3348 = vadd.f32 %v3147, %v3347
      %3349 = vmatmul.bf16.gmra.mxu0 %v3229
      %v3350 = vpop.f32.mrf.mxu0
      %v3351 = vadd.f32 %v3150, %v3350
      %v3352 = vpop.f32.mrf.mxu0
      %v3353 = vadd.f32 %v3152, %v3352
      %3354 = vmatmul.bf16.gmra.mxu0 %v3230
      %v3355 = vpop.f32.mrf.mxu0
      %v3356 = vadd.f32 %v3155, %v3355
      %v3357 = vpop.f32.mrf.mxu0
      %v3358 = vadd.f32 %v3157, %v3357
      %3359 = vmatmul.bf16.gmra.mxu0 %v3231
      %v3360 = vpop.f32.mrf.mxu0
      %v3361 = vadd.f32 %v3160, %v3360
      %v3362 = vpop.f32.mrf.mxu0
      %v3363 = vadd.f32 %v3162, %v3362
      %3364 = vmatmul.bf16.gmra.mxu0 %v3232
      %v3365 = vpop.f32.mrf.mxu0
      %v3366 = vadd.f32 %v3165, %v3365
      %v3367 = vpop.f32.mrf.mxu0
      %v3368 = vadd.f32 %v3167, %v3367
      %3369 = vmatmul.bf16.gmra.mxu0 %v3233
      %v3370 = vpop.f32.mrf.mxu0
      %v3371 = vadd.f32 %v3170, %v3370
      %v3372 = vpop.f32.mrf.mxu0
      %v3373 = vadd.f32 %v3172, %v3372
      %3374 = vmatmul.bf16.gmra.mxu0 %v3234
      %v3375 = vpop.f32.mrf.mxu0
      %v3376 = vadd.f32 %v3175, %v3375
      %v3377 = vpop.f32.mrf.mxu0
      %v3378 = vadd.f32 %v3177, %v3377
      %3379 = vmatmul.bf16.gmra.mxu0 %v3235
      %v3380 = vpop.f32.mrf.mxu0
      %v3381 = vadd.f32 %v3180, %v3380
      %v3382 = vpop.f32.mrf.mxu0
      %v3383 = vadd.f32 %v3182, %v3382
      %3384 = vmatmul.bf16.gmra.mxu0 %v3236
      %v3385 = vpop.f32.mrf.mxu0
      %v3386 = vadd.f32 %v3185, %v3385
      %v3387 = vpop.f32.mrf.mxu0
      %v3388 = vadd.f32 %v3187, %v3387
      %3389 = vdwg.mxu0
      %v3390 = vld [vmem:[%s1250] sm:$0xf]
      %v3391 = vld [vmem:[%s1250 + $0x4] sm:$0xf]
      %v3392 = vld [vmem:[%s1250 + $0x8] sm:$0x1]
      %v3393 = vld [vmem:[%s1250 + $0xc] sm:$0xf]
      %v3394 = vld [vmem:[%s1250 + $0x10] sm:$0xf]
      %v3395 = vld [vmem:[%s1250 + $0x14] sm:$0x1]
      %v3396 = vld [vmem:[%s1250 + $0x18] sm:$0xf]
      %v3397 = vld [vmem:[%s1250 + $0x1c] sm:$0xf]
      %v3398 = vld [vmem:[%s1250 + $0x20] sm:$0x1]
      %v3399 = vld [vmem:[%s1250 + $0x24] sm:$0xf]
      %v3400 = vld [vmem:[%s1250 + $0x28] sm:$0xf]
      %v3401 = vld [vmem:[%s1250 + $0x2c] sm:$0x1]
      %v3402 = vld [vmem:[%s1250 + $0x30] sm:$0xf]
      %v3403 = vld [vmem:[%s1250 + $0x34] sm:$0xf]
      %v3404 = vld [vmem:[%s1250 + $0x38] sm:$0x1]
      %v3405 = vld [vmem:[%s1250 + $0x3c] sm:$0xf]
      %v3406 = vld [vmem:[%s1250 + $0x40] sm:$0xf]
      %v3407 = vld [vmem:[%s1250 + $0x44] sm:$0x1]
      %v3408 = vld [vmem:[%s1250 + $0x48] sm:$0xf]
      %v3409 = vld [vmem:[%s1250 + $0x4c] sm:$0xf]
      %v3410 = vld [vmem:[%s1250 + $0x50] sm:$0x1]
      %v3411 = vld [vmem:[%s1250 + $0x54] sm:$0xf]
      %v3412 = vld [vmem:[%s1250 + $0x58] sm:$0xf]
      %v3413 = vld [vmem:[%s1250 + $0x5c] sm:$0x1]
      %v3414 = vld [vmem:[%s1250 + $0x60] sm:$0xf]
      %v3415 = vld [vmem:[%s1250 + $0x64] sm:$0xf]
      %v3416 = vld [vmem:[%s1250 + $0x68] sm:$0x1]
      %v3417 = vld [vmem:[%s1250 + $0x6c] sm:$0xf]
      %v3418 = vld [vmem:[%s1250 + $0x70] sm:$0xf]
      %v3419 = vld [vmem:[%s1250 + $0x74] sm:$0x1]
      %v3420 = vld [vmem:[%s1250 + $0x78] sm:$0xf]
      %v3421 = vld [vmem:[%s1250 + $0x7c] sm:$0xf]
      %v3422 = vld [vmem:[%s1250 + $0x80] sm:$0x1]
      %v3423 = vld [vmem:[%s1250 + $0x84] sm:$0xf]
      %v3424 = vld [vmem:[%s1250 + $0x88] sm:$0xf]
      %v3425 = vld [vmem:[%s1250 + $0x8c] sm:$0x1]
      %v3426 = vld [vmem:[%s1250 + $0x90] sm:$0xf]
      %v3427 = vld [vmem:[%s1250 + $0x94] sm:$0xf]
      %v3428 = vld [vmem:[%s1250 + $0x98] sm:$0x1]
      %v3429 = vld [vmem:[%s1250 + $0x9c] sm:$0xf]
      %v3430 = vld [vmem:[%s1250 + $0xa0] sm:$0xf]
      %v3431 = vld [vmem:[%s1250 + $0xa4] sm:$0x1]
      %v3432 = vld [vmem:[%s1250 + $0xa8] sm:$0xf]
      %v3433 = vld [vmem:[%s1250 + $0xac] sm:$0xf]
      %v3434 = vld [vmem:[%s1250 + $0xb0] sm:$0x1]
      %v3435 = vld [vmem:[%s1250 + $0xb4] sm:$0xf]
      %v3436 = vld [vmem:[%s1250 + $0xb8] sm:$0xf]
      %v3437 = vld [vmem:[%s1250 + $0xbc] sm:$0x1]
      %v3439 = vshrl.u32 %v3390, 16
      %v3441 = vrot.slane %v3439, 4
      %v3442 = vshll.u32 %v3390, 16
      %v3444 = vrot.slane %v3442, 5
      %v3445 = vor.u32 %v3441, %v3444
      %v3446 = vrot.slane %v3445, 4
      %v3448 = vshll.u32 %v3391, 16
      %v3450 = vrot.slane %v3448, 5
      %v3451 = vsel %vm414, %v3446, %v3450
      %v3452 = vshrl.u32 %v3391, 16
      %v3454 = vrot.slane %v3452, 4
      %v3455 = vor.u32 %v3454, %v3450
      %v3456 = vrot.slane %v3455, 4
      %v3458 = vshll.u32 %v3392, 16
      %v3460 = vrot.slane %v3458, 5
      %v3461 = vsel %vm414, %v3456, %v3460
      %v3463 = vshrl.u32 %v3393, 16
      %v3465 = vrot.slane %v3463, 4
      %v3466 = vshll.u32 %v3393, 16
      %v3468 = vrot.slane %v3466, 5
      %v3469 = vor.u32 %v3465, %v3468
      %v3470 = vrot.slane %v3469, 4
      %v3472 = vshll.u32 %v3394, 16
      %v3474 = vrot.slane %v3472, 5
      %v3475 = vsel %vm414, %v3470, %v3474
      %v3476 = vshrl.u32 %v3394, 16
      %v3478 = vrot.slane %v3476, 4
      %v3479 = vor.u32 %v3478, %v3474
      %v3480 = vrot.slane %v3479, 4
      %v3482 = vshll.u32 %v3395, 16
      %v3484 = vrot.slane %v3482, 5
      %v3485 = vsel %vm414, %v3480, %v3484
      %v3487 = vshrl.u32 %v3396, 16
      %v3489 = vrot.slane %v3487, 4
      %v3490 = vshll.u32 %v3396, 16
      %v3492 = vrot.slane %v3490, 5
      %v3493 = vor.u32 %v3489, %v3492
      %v3494 = vrot.slane %v3493, 4
      %v3496 = vshll.u32 %v3397, 16
      %v3498 = vrot.slane %v3496, 5
      %v3499 = vsel %vm414, %v3494, %v3498
      %v3500 = vshrl.u32 %v3397, 16
      %v3502 = vrot.slane %v3500, 4
      %v3503 = vor.u32 %v3502, %v3498
      %v3504 = vrot.slane %v3503, 4
      %v3506 = vshll.u32 %v3398, 16
      %v3508 = vrot.slane %v3506, 5
      %v3509 = vsel %vm414, %v3504, %v3508
      %v3511 = vshrl.u32 %v3399, 16
      %v3513 = vrot.slane %v3511, 4
      %v3514 = vshll.u32 %v3399, 16
      %v3516 = vrot.slane %v3514, 5
      %v3517 = vor.u32 %v3513, %v3516
      %v3518 = vrot.slane %v3517, 4
      %v3520 = vshll.u32 %v3400, 16
      %v3522 = vrot.slane %v3520, 5
      %v3523 = vsel %vm414, %v3518, %v3522
      %v3524 = vshrl.u32 %v3400, 16
      %v3526 = vrot.slane %v3524, 4
      %v3527 = vor.u32 %v3526, %v3522
      %v3528 = vrot.slane %v3527, 4
      %v3530 = vshll.u32 %v3401, 16
      %v3532 = vrot.slane %v3530, 5
      %v3533 = vsel %vm414, %v3528, %v3532
      %v3535 = vshrl.u32 %v3402, 16
      %v3537 = vrot.slane %v3535, 4
      %v3538 = vshll.u32 %v3402, 16
      %v3540 = vrot.slane %v3538, 5
      %v3541 = vor.u32 %v3537, %v3540
      %v3542 = vrot.slane %v3541, 4
      %v3544 = vshll.u32 %v3403, 16
      %v3546 = vrot.slane %v3544, 5
      %v3547 = vsel %vm414, %v3542, %v3546
      %v3548 = vshrl.u32 %v3403, 16
      %v3550 = vrot.slane %v3548, 4
      %v3551 = vor.u32 %v3550, %v3546
      %v3552 = vrot.slane %v3551, 4
      %v3554 = vshll.u32 %v3404, 16
      %v3556 = vrot.slane %v3554, 5
      %v3557 = vsel %vm414, %v3552, %v3556
      %v3559 = vshrl.u32 %v3405, 16
      %v3561 = vrot.slane %v3559, 4
      %v3562 = vshll.u32 %v3405, 16
      %v3564 = vrot.slane %v3562, 5
      %v3565 = vor.u32 %v3561, %v3564
      %v3566 = vrot.slane %v3565, 4
      %v3568 = vshll.u32 %v3406, 16
      %v3570 = vrot.slane %v3568, 5
      %v3571 = vsel %vm414, %v3566, %v3570
      %v3572 = vshrl.u32 %v3406, 16
      %v3574 = vrot.slane %v3572, 4
      %v3575 = vor.u32 %v3574, %v3570
      %v3576 = vrot.slane %v3575, 4
      %v3578 = vshll.u32 %v3407, 16
      %v3580 = vrot.slane %v3578, 5
      %v3581 = vsel %vm414, %v3576, %v3580
      %v3583 = vshrl.u32 %v3408, 16
      %v3585 = vrot.slane %v3583, 4
      %v3586 = vshll.u32 %v3408, 16
      %v3588 = vrot.slane %v3586, 5
      %v3589 = vor.u32 %v3585, %v3588
      %v3590 = vrot.slane %v3589, 4
      %v3592 = vshll.u32 %v3409, 16
      %v3594 = vrot.slane %v3592, 5
      %v3595 = vsel %vm414, %v3590, %v3594
      %v3596 = vshrl.u32 %v3409, 16
      %v3598 = vrot.slane %v3596, 4
      %v3599 = vor.u32 %v3598, %v3594
      %v3600 = vrot.slane %v3599, 4
      %v3602 = vshll.u32 %v3410, 16
      %v3604 = vrot.slane %v3602, 5
      %v3605 = vsel %vm414, %v3600, %v3604
      %v3607 = vshrl.u32 %v3411, 16
      %v3609 = vrot.slane %v3607, 4
      %v3610 = vshll.u32 %v3411, 16
      %v3612 = vrot.slane %v3610, 5
      %v3613 = vor.u32 %v3609, %v3612
      %v3614 = vrot.slane %v3613, 4
      %v3616 = vshll.u32 %v3412, 16
      %v3618 = vrot.slane %v3616, 5
      %v3619 = vsel %vm414, %v3614, %v3618
      %v3620 = vshrl.u32 %v3412, 16
      %v3622 = vrot.slane %v3620, 4
      %v3623 = vor.u32 %v3622, %v3618
      %v3624 = vrot.slane %v3623, 4
      %v3626 = vshll.u32 %v3413, 16
      %v3628 = vrot.slane %v3626, 5
      %v3629 = vsel %vm414, %v3624, %v3628
      %v3631 = vshrl.u32 %v3414, 16
      %v3633 = vrot.slane %v3631, 4
      %v3634 = vshll.u32 %v3414, 16
      %v3636 = vrot.slane %v3634, 5
      %v3637 = vor.u32 %v3633, %v3636
      %v3638 = vrot.slane %v3637, 4
      %v3640 = vshll.u32 %v3415, 16
      %v3642 = vrot.slane %v3640, 5
      %v3643 = vsel %vm414, %v3638, %v3642
      %v3644 = vshrl.u32 %v3415, 16
      %v3646 = vrot.slane %v3644, 4
      %v3647 = vor.u32 %v3646, %v3642
      %v3648 = vrot.slane %v3647, 4
      %v3650 = vshll.u32 %v3416, 16
      %v3652 = vrot.slane %v3650, 5
      %v3653 = vsel %vm414, %v3648, %v3652
      %v3655 = vshrl.u32 %v3417, 16
      %v3657 = vrot.slane %v3655, 4
      %v3658 = vshll.u32 %v3417, 16
      %v3660 = vrot.slane %v3658, 5
      %v3661 = vor.u32 %v3657, %v3660
      %v3662 = vrot.slane %v3661, 4
      %v3664 = vshll.u32 %v3418, 16
      %v3666 = vrot.slane %v3664, 5
      %v3667 = vsel %vm414, %v3662, %v3666
      %v3668 = vshrl.u32 %v3418, 16
      %v3670 = vrot.slane %v3668, 4
      %v3671 = vor.u32 %v3670, %v3666
      %v3672 = vrot.slane %v3671, 4
      %v3674 = vshll.u32 %v3419, 16
      %v3676 = vrot.slane %v3674, 5
      %v3677 = vsel %vm414, %v3672, %v3676
      %v3679 = vshrl.u32 %v3420, 16
      %v3681 = vrot.slane %v3679, 4
      %v3682 = vshll.u32 %v3420, 16
      %v3684 = vrot.slane %v3682, 5
      %v3685 = vor.u32 %v3681, %v3684
      %v3686 = vrot.slane %v3685, 4
      %v3688 = vshll.u32 %v3421, 16
      %v3690 = vrot.slane %v3688, 5
      %v3691 = vsel %vm414, %v3686, %v3690
      %v3692 = vshrl.u32 %v3421, 16
      %v3694 = vrot.slane %v3692, 4
      %v3695 = vor.u32 %v3694, %v3690
      %v3696 = vrot.slane %v3695, 4
      %v3698 = vshll.u32 %v3422, 16
      %v3700 = vrot.slane %v3698, 5
      %v3701 = vsel %vm414, %v3696, %v3700
      %v3703 = vshrl.u32 %v3423, 16
      %v3705 = vrot.slane %v3703, 4
      %v3706 = vshll.u32 %v3423, 16
      %v3708 = vrot.slane %v3706, 5
      %v3709 = vor.u32 %v3705, %v3708
      %v3710 = vrot.slane %v3709, 4
      %v3712 = vshll.u32 %v3424, 16
      %v3714 = vrot.slane %v3712, 5
      %v3715 = vsel %vm414, %v3710, %v3714
      %v3716 = vshrl.u32 %v3424, 16
      %v3718 = vrot.slane %v3716, 4
      %v3719 = vor.u32 %v3718, %v3714
      %v3720 = vrot.slane %v3719, 4
      %v3722 = vshll.u32 %v3425, 16
      %v3724 = vrot.slane %v3722, 5
      %v3725 = vsel %vm414, %v3720, %v3724
      %v3727 = vshrl.u32 %v3426, 16
      %v3729 = vrot.slane %v3727, 4
      %v3730 = vshll.u32 %v3426, 16
      %v3732 = vrot.slane %v3730, 5
      %v3733 = vor.u32 %v3729, %v3732
      %v3734 = vrot.slane %v3733, 4
      %v3736 = vshll.u32 %v3427, 16
      %v3738 = vrot.slane %v3736, 5
      %v3739 = vsel %vm414, %v3734, %v3738
      %v3740 = vshrl.u32 %v3427, 16
      %v3742 = vrot.slane %v3740, 4
      %v3743 = vor.u32 %v3742, %v3738
      %v3744 = vrot.slane %v3743, 4
      %v3746 = vshll.u32 %v3428, 16
      %v3748 = vrot.slane %v3746, 5
      %v3749 = vsel %vm414, %v3744, %v3748
      %v3751 = vshrl.u32 %v3429, 16
      %v3753 = vrot.slane %v3751, 4
      %v3754 = vshll.u32 %v3429, 16
      %v3756 = vrot.slane %v3754, 5
      %v3757 = vor.u32 %v3753, %v3756
      %v3758 = vrot.slane %v3757, 4
      %v3760 = vshll.u32 %v3430, 16
      %v3762 = vrot.slane %v3760, 5
      %v3763 = vsel %vm414, %v3758, %v3762
      %v3764 = vshrl.u32 %v3430, 16
      %v3766 = vrot.slane %v3764, 4
      %v3767 = vor.u32 %v3766, %v3762
      %v3768 = vrot.slane %v3767, 4
      %v3770 = vshll.u32 %v3431, 16
      %v3772 = vrot.slane %v3770, 5
      %v3773 = vsel %vm414, %v3768, %v3772
      %v3775 = vshrl.u32 %v3432, 16
      %v3777 = vrot.slane %v3775, 4
      %v3778 = vshll.u32 %v3432, 16
      %v3780 = vrot.slane %v3778, 5
      %v3781 = vor.u32 %v3777, %v3780
      %v3782 = vrot.slane %v3781, 4
      %v3784 = vshll.u32 %v3433, 16
      %v3786 = vrot.slane %v3784, 5
      %v3787 = vsel %vm414, %v3782, %v3786
      %v3788 = vshrl.u32 %v3433, 16
      %v3790 = vrot.slane %v3788, 4
      %v3791 = vor.u32 %v3790, %v3786
      %v3792 = vrot.slane %v3791, 4
      %v3794 = vshll.u32 %v3434, 16
      %v3796 = vrot.slane %v3794, 5
      %v3797 = vsel %vm414, %v3792, %v3796
      %v3799 = vshrl.u32 %v3435, 16
      %v3801 = vrot.slane %v3799, 4
      %v3802 = vshll.u32 %v3435, 16
      %v3804 = vrot.slane %v3802, 5
      %v3805 = vor.u32 %v3801, %v3804
      %v3806 = vrot.slane %v3805, 4
      %v3808 = vshll.u32 %v3436, 16
      %v3810 = vrot.slane %v3808, 5
      %v3811 = vsel %vm414, %v3806, %v3810
      %v3812 = vshrl.u32 %v3436, 16
      %v3814 = vrot.slane %v3812, 4
      %v3815 = vor.u32 %v3814, %v3810
      %v3816 = vrot.slane %v3815, 4
      %v3818 = vshll.u32 %v3437, 16
      %v3820 = vrot.slane %v3818, 5
      %v3821 = vsel %vm414, %v3816, %v3820
      %s3822 = scalar_lea.vmem %s209, 384
      %v3823 = vld [vmem:[%s3822] sm:$0xf]
      %v3824 = vld [vmem:[%s3822 + $0x4] sm:$0xf]
      %v3825 = vld [vmem:[%s3822 + $0x8] sm:$0xf]
      %v3826 = vld [vmem:[%s3822 + $0xc] sm:$0xf]
      %v3827 = vld [vmem:[%s3822 + $0x10] sm:$0xf]
      %v3828 = vld [vmem:[%s3822 + $0x14] sm:$0xf]
      %v3829 = vld [vmem:[%s3822 + $0x18] sm:$0xf]
      %v3830 = vld [vmem:[%s3822 + $0x1c] sm:$0xf]
      %v3831 = vld [vmem:[%s3822 + $0x20] sm:$0xf]
      %v3832 = vld [vmem:[%s3822 + $0x24] sm:$0xf]
      %v3833 = vld [vmem:[%s3822 + $0x28] sm:$0xf]
      %v3834 = vld [vmem:[%s3822 + $0x2c] sm:$0xf]
      %v3835 = vld [vmem:[%s3822 + $0x30] sm:$0xf]
      %v3836 = vld [vmem:[%s3822 + $0x34] sm:$0xf]
      %v3837 = vld [vmem:[%s3822 + $0x38] sm:$0xf]
      %v3838 = vld [vmem:[%s3822 + $0x3c] sm:$0xf]
      %v3839 = vunpack.c.l.b16 %v3451
      %v3840 = vunpack.c.l.b16 %v3461
      %v3841 = vunpack.c.l.b16 %v3475
      %v3842 = vunpack.c.l.b16 %v3485
      %v3843 = vunpack.c.l.b16 %v3499
      %v3844 = vunpack.c.l.b16 %v3509
      %v3845 = vunpack.c.l.b16 %v3523
      %v3846 = vunpack.c.l.b16 %v3533
      %v3847 = vunpack.c.l.b16 %v3547
      %v3848 = vunpack.c.l.b16 %v3557
      %v3849 = vunpack.c.l.b16 %v3571
      %v3850 = vunpack.c.l.b16 %v3581
      %v3851 = vunpack.c.l.b16 %v3595
      %v3852 = vunpack.c.l.b16 %v3605
      %v3853 = vunpack.c.l.b16 %v3619
      %v3854 = vunpack.c.l.b16 %v3629
      %v3855 = vunpack.c.l.b16 %v3643
      %v3856 = vunpack.c.l.b16 %v3653
      %v3857 = vunpack.c.l.b16 %v3667
      %v3858 = vunpack.c.l.b16 %v3677
      %v3859 = vunpack.c.l.b16 %v3691
      %v3860 = vunpack.c.l.b16 %v3701
      %v3861 = vunpack.c.l.b16 %v3715
      %v3862 = vunpack.c.l.b16 %v3725
      %v3863 = vunpack.c.l.b16 %v3739
      %v3864 = vunpack.c.l.b16 %v3749
      %v3865 = vunpack.c.l.b16 %v3763
      %v3866 = vunpack.c.l.b16 %v3773
      %v3867 = vunpack.c.l.b16 %v3787
      %v3868 = vunpack.c.l.b16 %v3797
      %v3869 = vunpack.c.l.b16 %v3811
      %v3870 = vunpack.c.l.b16 %v3821
      %v3871 = vpack.c.b16 %v3840, %v3839
      %v3872 = vpack.c.b16 %v3842, %v3841
      %v3873 = vpack.c.b16 %v3844, %v3843
      %v3874 = vpack.c.b16 %v3846, %v3845
      %v3875 = vpack.c.b16 %v3848, %v3847
      %v3876 = vpack.c.b16 %v3850, %v3849
      %v3877 = vpack.c.b16 %v3852, %v3851
      %v3878 = vpack.c.b16 %v3854, %v3853
      %v3879 = vpack.c.b16 %v3856, %v3855
      %v3880 = vpack.c.b16 %v3858, %v3857
      %v3881 = vpack.c.b16 %v3860, %v3859
      %v3882 = vpack.c.b16 %v3862, %v3861
      %v3883 = vpack.c.b16 %v3864, %v3863
      %v3884 = vpack.c.b16 %v3866, %v3865
      %v3885 = vpack.c.b16 %v3868, %v3867
      %v3886 = vpack.c.b16 %v3870, %v3869
      %v3919 = vunpack.c.l.b16 %v3823
      %v3920 = vunpack.c.l.b16 %v3824
      %v3921 = vunpack.c.l.b16 %v3825
      %v3922 = vunpack.c.l.b16 %v3826
      %v3923 = vunpack.c.l.b16 %v3827
      %v3924 = vunpack.c.l.b16 %v3828
      %v3925 = vunpack.c.l.b16 %v3829
      %v3926 = vunpack.c.l.b16 %v3830
      %v3927 = vunpack.c.l.b16 %v3831
      %v3928 = vunpack.c.l.b16 %v3832
      %v3929 = vunpack.c.l.b16 %v3833
      %v3930 = vunpack.c.l.b16 %v3834
      %v3931 = vunpack.c.l.b16 %v3835
      %v3932 = vunpack.c.l.b16 %v3836
      %v3933 = vunpack.c.l.b16 %v3837
      %v3934 = vunpack.c.l.b16 %v3838
      %v3935 = vpack.c.b16 %v3920, %v3919
      %v3936 = vpack.c.b16 %v3922, %v3921
      %v3937 = vpack.c.b16 %v3924, %v3923
      %v3938 = vpack.c.b16 %v3926, %v3925
      %v3939 = vpack.c.b16 %v3928, %v3927
      %v3940 = vpack.c.b16 %v3930, %v3929
      %v3941 = vpack.c.b16 %v3932, %v3931
      %v3942 = vpack.c.b16 %v3934, %v3933
      %3951 = vmatpush.bf16.msra.mxu0 %v3942
      %3952 = vmatpush.bf16.msra.mxu0 %v3941
      %3953 = vmatpush.bf16.msra.mxu0 %v3940
      %3954 = vmatpush.bf16.msra.mxu0 %v3939
      %3955 = vmatpush.bf16.msra.mxu0 %v3938
      %3956 = vmatpush.bf16.msra.mxu0 %v3937
      %3957 = vmatpush.bf16.msra.mxu0 %v3936
      %3958 = vmatpush.bf16.msra.mxu0 %v3935
      %3959 = vmatmul.bf16.gmra.mxu0 %v3871
      %v3960 = vpop.f32.mrf.mxu0
      %v3961 = vadd.f32 0.0, %v3960
      %v3962 = vpop.f32.mrf.mxu0
      %v3963 = vadd.f32 0.0, %v3962
      %3964 = vmatmul.bf16.gmra.mxu0 %v3872
      %v3965 = vpop.f32.mrf.mxu0
      %v3966 = vadd.f32 0.0, %v3965
      %v3967 = vpop.f32.mrf.mxu0
      %v3968 = vadd.f32 0.0, %v3967
      %3969 = vmatmul.bf16.gmra.mxu0 %v3873
      %v3970 = vpop.f32.mrf.mxu0
      %v3971 = vadd.f32 0.0, %v3970
      %v3972 = vpop.f32.mrf.mxu0
      %v3973 = vadd.f32 0.0, %v3972
      %3974 = vmatmul.bf16.gmra.mxu0 %v3874
      %v3975 = vpop.f32.mrf.mxu0
      %v3976 = vadd.f32 0.0, %v3975
      %v3977 = vpop.f32.mrf.mxu0
      %v3978 = vadd.f32 0.0, %v3977
      %3979 = vmatmul.bf16.gmra.mxu0 %v3875
      %v3980 = vpop.f32.mrf.mxu0
      %v3981 = vadd.f32 0.0, %v3980
      %v3982 = vpop.f32.mrf.mxu0
      %v3983 = vadd.f32 0.0, %v3982
      %3984 = vmatmul.bf16.gmra.mxu0 %v3876
      %v3985 = vpop.f32.mrf.mxu0
      %v3986 = vadd.f32 0.0, %v3985
      %v3987 = vpop.f32.mrf.mxu0
      %v3988 = vadd.f32 0.0, %v3987
      %3989 = vmatmul.bf16.gmra.mxu0 %v3877
      %v3990 = vpop.f32.mrf.mxu0
      %v3991 = vadd.f32 0.0, %v3990
      %v3992 = vpop.f32.mrf.mxu0
      %v3993 = vadd.f32 0.0, %v3992
      %3994 = vmatmul.bf16.gmra.mxu0 %v3878
      %v3995 = vpop.f32.mrf.mxu0
      %v3996 = vadd.f32 0.0, %v3995
      %v3997 = vpop.f32.mrf.mxu0
      %v3998 = vadd.f32 0.0, %v3997
      %3999 = vmatmul.bf16.gmra.mxu0 %v3879
      %v4000 = vpop.f32.mrf.mxu0
      %v4001 = vadd.f32 0.0, %v4000
      %v4002 = vpop.f32.mrf.mxu0
      %v4003 = vadd.f32 0.0, %v4002
      %4004 = vmatmul.bf16.gmra.mxu0 %v3880
      %v4005 = vpop.f32.mrf.mxu0
      %v4006 = vadd.f32 0.0, %v4005
      %v4007 = vpop.f32.mrf.mxu0
      %v4008 = vadd.f32 0.0, %v4007
      %4009 = vmatmul.bf16.gmra.mxu0 %v3881
      %v4010 = vpop.f32.mrf.mxu0
      %v4011 = vadd.f32 0.0, %v4010
      %v4012 = vpop.f32.mrf.mxu0
      %v4013 = vadd.f32 0.0, %v4012
      %4014 = vmatmul.bf16.gmra.mxu0 %v3882
      %v4015 = vpop.f32.mrf.mxu0
      %v4016 = vadd.f32 0.0, %v4015
      %v4017 = vpop.f32.mrf.mxu0
      %v4018 = vadd.f32 0.0, %v4017
      %4019 = vmatmul.bf16.gmra.mxu0 %v3883
      %v4020 = vpop.f32.mrf.mxu0
      %v4021 = vadd.f32 0.0, %v4020
      %v4022 = vpop.f32.mrf.mxu0
      %v4023 = vadd.f32 0.0, %v4022
      %4024 = vmatmul.bf16.gmra.mxu0 %v3884
      %v4025 = vpop.f32.mrf.mxu0
      %v4026 = vadd.f32 0.0, %v4025
      %v4027 = vpop.f32.mrf.mxu0
      %v4028 = vadd.f32 0.0, %v4027
      %4029 = vmatmul.bf16.gmra.mxu0 %v3885
      %v4030 = vpop.f32.mrf.mxu0
      %v4031 = vadd.f32 0.0, %v4030
      %v4032 = vpop.f32.mrf.mxu0
      %v4033 = vadd.f32 0.0, %v4032
      %4034 = vmatmul.bf16.gmra.mxu0 %v3886
      %v4035 = vpop.f32.mrf.mxu0
      %v4036 = vadd.f32 0.0, %v4035
      %v4037 = vpop.f32.mrf.mxu0
      %v4038 = vadd.f32 0.0, %v4037
      %4039 = vdwg.mxu0
      %v4040 = vadd.f32 %v3311, %v3961
      %v4041 = vadd.f32 %v3313, %v3963
      %v4042 = vadd.f32 %v3316, %v3966
      %v4043 = vadd.f32 %v3318, %v3968
      %v4044 = vadd.f32 %v3321, %v3971
      %v4045 = vadd.f32 %v3323, %v3973
      %v4046 = vadd.f32 %v3326, %v3976
      %v4047 = vadd.f32 %v3328, %v3978
      %v4048 = vadd.f32 %v3331, %v3981
      %v4049 = vadd.f32 %v3333, %v3983
      %v4050 = vadd.f32 %v3336, %v3986
      %v4051 = vadd.f32 %v3338, %v3988
      %v4052 = vadd.f32 %v3341, %v3991
      %v4053 = vadd.f32 %v3343, %v3993
      %v4054 = vadd.f32 %v3346, %v3996
      %v4055 = vadd.f32 %v3348, %v3998
      %v4056 = vadd.f32 %v3351, %v4001
      %v4057 = vadd.f32 %v3353, %v4003
      %v4058 = vadd.f32 %v3356, %v4006
      %v4059 = vadd.f32 %v3358, %v4008
      %v4060 = vadd.f32 %v3361, %v4011
      %v4061 = vadd.f32 %v3363, %v4013
      %v4062 = vadd.f32 %v3366, %v4016
      %v4063 = vadd.f32 %v3368, %v4018
      %v4064 = vadd.f32 %v3371, %v4021
      %v4065 = vadd.f32 %v3373, %v4023
      %v4066 = vadd.f32 %v3376, %v4026
      %v4067 = vadd.f32 %v3378, %v4028
      %v4068 = vadd.f32 %v3381, %v4031
      %v4069 = vadd.f32 %v3383, %v4033
      %v4070 = vadd.f32 %v3386, %v4036
      %v4071 = vadd.f32 %v3388, %v4038
      %v4072 = vld [vmem:[%s1250] sm:$0xe]
      %v4073 = vld [vmem:[%s1250 + $0xc] sm:$0xe]
      %v4074 = vld [vmem:[%s1250 + $0x18] sm:$0xe]
      %v4075 = vld [vmem:[%s1250 + $0x24] sm:$0xe]
      %v4076 = vld [vmem:[%s1250 + $0x30] sm:$0xe]
      %v4077 = vld [vmem:[%s1250 + $0x3c] sm:$0xe]
      %v4078 = vld [vmem:[%s1250 + $0x48] sm:$0xe]
      %v4079 = vld [vmem:[%s1250 + $0x54] sm:$0xe]
      %v4080 = vld [vmem:[%s1250 + $0x60] sm:$0xe]
      %v4081 = vld [vmem:[%s1250 + $0x6c] sm:$0xe]
      %v4082 = vld [vmem:[%s1250 + $0x78] sm:$0xe]
      %v4083 = vld [vmem:[%s1250 + $0x84] sm:$0xe]
      %v4084 = vld [vmem:[%s1250 + $0x90] sm:$0xe]
      %v4085 = vld [vmem:[%s1250 + $0x9c] sm:$0xe]
      %v4086 = vld [vmem:[%s1250 + $0xa8] sm:$0xe]
      %v4087 = vld [vmem:[%s1250 + $0xb4] sm:$0xe]
      %v4136 = vrot.slane %v4072, 5
      %v4137 = vrot.slane %v4136, 4
      %v4138 = vrot.slane %v3391, 5
      %v4139 = vsel %vm2858, %v4137, %v4138
      %v4140 = vrot.slane %v4138, 4
      %v4141 = vrot.slane %v3392, 5
      %v4142 = vsel %vm2858, %v4140, %v4141
      %v4143 = vrot.slane %v4073, 5
      %v4144 = vrot.slane %v4143, 4
      %v4145 = vrot.slane %v3394, 5
      %v4146 = vsel %vm2858, %v4144, %v4145
      %v4147 = vrot.slane %v4145, 4
      %v4148 = vrot.slane %v3395, 5
      %v4149 = vsel %vm2858, %v4147, %v4148
      %v4150 = vrot.slane %v4074, 5
      %v4151 = vrot.slane %v4150, 4
      %v4152 = vrot.slane %v3397, 5
      %v4153 = vsel %vm2858, %v4151, %v4152
      %v4154 = vrot.slane %v4152, 4
      %v4155 = vrot.slane %v3398, 5
      %v4156 = vsel %vm2858, %v4154, %v4155
      %v4157 = vrot.slane %v4075, 5
      %v4158 = vrot.slane %v4157, 4
      %v4159 = vrot.slane %v3400, 5
      %v4160 = vsel %vm2858, %v4158, %v4159
      %v4161 = vrot.slane %v4159, 4
      %v4162 = vrot.slane %v3401, 5
      %v4163 = vsel %vm2858, %v4161, %v4162
      %v4164 = vrot.slane %v4076, 5
      %v4165 = vrot.slane %v4164, 4
      %v4166 = vrot.slane %v3403, 5
      %v4167 = vsel %vm2858, %v4165, %v4166
      %v4168 = vrot.slane %v4166, 4
      %v4169 = vrot.slane %v3404, 5
      %v4170 = vsel %vm2858, %v4168, %v4169
      %v4171 = vrot.slane %v4077, 5
      %v4172 = vrot.slane %v4171, 4
      %v4173 = vrot.slane %v3406, 5
      %v4174 = vsel %vm2858, %v4172, %v4173
      %v4175 = vrot.slane %v4173, 4
      %v4176 = vrot.slane %v3407, 5
      %v4177 = vsel %vm2858, %v4175, %v4176
      %v4178 = vrot.slane %v4078, 5
      %v4179 = vrot.slane %v4178, 4
      %v4180 = vrot.slane %v3409, 5
      %v4181 = vsel %vm2858, %v4179, %v4180
      %v4182 = vrot.slane %v4180, 4
      %v4183 = vrot.slane %v3410, 5
      %v4184 = vsel %vm2858, %v4182, %v4183
      %v4185 = vrot.slane %v4079, 5
      %v4186 = vrot.slane %v4185, 4
      %v4187 = vrot.slane %v3412, 5
      %v4188 = vsel %vm2858, %v4186, %v4187
      %v4189 = vrot.slane %v4187, 4
      %v4190 = vrot.slane %v3413, 5
      %v4191 = vsel %vm2858, %v4189, %v4190
      %v4192 = vrot.slane %v4080, 5
      %v4193 = vrot.slane %v4192, 4
      %v4194 = vrot.slane %v3415, 5
      %v4195 = vsel %vm2858, %v4193, %v4194
      %v4196 = vrot.slane %v4194, 4
      %v4197 = vrot.slane %v3416, 5
      %v4198 = vsel %vm2858, %v4196, %v4197
      %v4199 = vrot.slane %v4081, 5
      %v4200 = vrot.slane %v4199, 4
      %v4201 = vrot.slane %v3418, 5
      %v4202 = vsel %vm2858, %v4200, %v4201
      %v4203 = vrot.slane %v4201, 4
      %v4204 = vrot.slane %v3419, 5
      %v4205 = vsel %vm2858, %v4203, %v4204
      %v4206 = vrot.slane %v4082, 5
      %v4207 = vrot.slane %v4206, 4
      %v4208 = vrot.slane %v3421, 5
      %v4209 = vsel %vm2858, %v4207, %v4208
      %v4210 = vrot.slane %v4208, 4
      %v4211 = vrot.slane %v3422, 5
      %v4212 = vsel %vm2858, %v4210, %v4211
      %v4213 = vrot.slane %v4083, 5
      %v4214 = vrot.slane %v4213, 4
      %v4215 = vrot.slane %v3424, 5
      %v4216 = vsel %vm2858, %v4214, %v4215
      %v4217 = vrot.slane %v4215, 4
      %v4218 = vrot.slane %v3425, 5
      %v4219 = vsel %vm2858, %v4217, %v4218
      %v4220 = vrot.slane %v4084, 5
      %v4221 = vrot.slane %v4220, 4
      %v4222 = vrot.slane %v3427, 5
      %v4223 = vsel %vm2858, %v4221, %v4222
      %v4224 = vrot.slane %v4222, 4
      %v4225 = vrot.slane %v3428, 5
      %v4226 = vsel %vm2858, %v4224, %v4225
      %v4227 = vrot.slane %v4085, 5
      %v4228 = vrot.slane %v4227, 4
      %v4229 = vrot.slane %v3430, 5
      %v4230 = vsel %vm2858, %v4228, %v4229
      %v4231 = vrot.slane %v4229, 4
      %v4232 = vrot.slane %v3431, 5
      %v4233 = vsel %vm2858, %v4231, %v4232
      %v4234 = vrot.slane %v4086, 5
      %v4235 = vrot.slane %v4234, 4
      %v4236 = vrot.slane %v3433, 5
      %v4237 = vsel %vm2858, %v4235, %v4236
      %v4238 = vrot.slane %v4236, 4
      %v4239 = vrot.slane %v3434, 5
      %v4240 = vsel %vm2858, %v4238, %v4239
      %v4241 = vrot.slane %v4087, 5
      %v4242 = vrot.slane %v4241, 4
      %v4243 = vrot.slane %v3436, 5
      %v4244 = vsel %vm2858, %v4242, %v4243
      %v4245 = vrot.slane %v4243, 4
      %v4246 = vrot.slane %v3437, 5
      %v4247 = vsel %vm2858, %v4245, %v4246
      %s4248 = scalar_lea.vmem %s209, 448
      %v4249 = vld [vmem:[%s4248] sm:$0xf]
      %v4250 = vld [vmem:[%s4248 + $0x4] sm:$0xf]
      %v4251 = vld [vmem:[%s4248 + $0x8] sm:$0xf]
      %v4252 = vld [vmem:[%s4248 + $0xc] sm:$0xf]
      %v4253 = vld [vmem:[%s4248 + $0x10] sm:$0xf]
      %v4254 = vld [vmem:[%s4248 + $0x14] sm:$0xf]
      %v4255 = vld [vmem:[%s4248 + $0x18] sm:$0xf]
      %v4256 = vld [vmem:[%s4248 + $0x1c] sm:$0xf]
      %v4257 = vld [vmem:[%s4248 + $0x20] sm:$0xf]
      %v4258 = vld [vmem:[%s4248 + $0x24] sm:$0xf]
      %v4259 = vld [vmem:[%s4248 + $0x28] sm:$0xf]
      %v4260 = vld [vmem:[%s4248 + $0x2c] sm:$0xf]
      %v4261 = vld [vmem:[%s4248 + $0x30] sm:$0xf]
      %v4262 = vld [vmem:[%s4248 + $0x34] sm:$0xf]
      %v4263 = vld [vmem:[%s4248 + $0x38] sm:$0xf]
      %v4264 = vld [vmem:[%s4248 + $0x3c] sm:$0xf]
      %v4265 = vunpack.c.l.b16 %v4139
      %v4266 = vunpack.c.l.b16 %v4142
      %v4267 = vunpack.c.l.b16 %v4146
      %v4268 = vunpack.c.l.b16 %v4149
      %v4269 = vunpack.c.l.b16 %v4153
      %v4270 = vunpack.c.l.b16 %v4156
      %v4271 = vunpack.c.l.b16 %v4160
      %v4272 = vunpack.c.l.b16 %v4163
      %v4273 = vunpack.c.l.b16 %v4167
      %v4274 = vunpack.c.l.b16 %v4170
      %v4275 = vunpack.c.l.b16 %v4174
      %v4276 = vunpack.c.l.b16 %v4177
      %v4277 = vunpack.c.l.b16 %v4181
      %v4278 = vunpack.c.l.b16 %v4184
      %v4279 = vunpack.c.l.b16 %v4188
      %v4280 = vunpack.c.l.b16 %v4191
      %v4281 = vunpack.c.l.b16 %v4195
      %v4282 = vunpack.c.l.b16 %v4198
      %v4283 = vunpack.c.l.b16 %v4202
      %v4284 = vunpack.c.l.b16 %v4205
      %v4285 = vunpack.c.l.b16 %v4209
      %v4286 = vunpack.c.l.b16 %v4212
      %v4287 = vunpack.c.l.b16 %v4216
      %v4288 = vunpack.c.l.b16 %v4219
      %v4289 = vunpack.c.l.b16 %v4223
      %v4290 = vunpack.c.l.b16 %v4226
      %v4291 = vunpack.c.l.b16 %v4230
      %v4292 = vunpack.c.l.b16 %v4233
      %v4293 = vunpack.c.l.b16 %v4237
      %v4294 = vunpack.c.l.b16 %v4240
      %v4295 = vunpack.c.l.b16 %v4244
      %v4296 = vunpack.c.l.b16 %v4247
      %v4297 = vpack.c.b16 %v4266, %v4265
      %v4298 = vpack.c.b16 %v4268, %v4267
      %v4299 = vpack.c.b16 %v4270, %v4269
      %v4300 = vpack.c.b16 %v4272, %v4271
      %v4301 = vpack.c.b16 %v4274, %v4273
      %v4302 = vpack.c.b16 %v4276, %v4275
      %v4303 = vpack.c.b16 %v4278, %v4277
      %v4304 = vpack.c.b16 %v4280, %v4279
      %v4305 = vpack.c.b16 %v4282, %v4281
      %v4306 = vpack.c.b16 %v4284, %v4283
      %v4307 = vpack.c.b16 %v4286, %v4285
      %v4308 = vpack.c.b16 %v4288, %v4287
      %v4309 = vpack.c.b16 %v4290, %v4289
      %v4310 = vpack.c.b16 %v4292, %v4291
      %v4311 = vpack.c.b16 %v4294, %v4293
      %v4312 = vpack.c.b16 %v4296, %v4295
      %v4345 = vunpack.c.l.b16 %v4249
      %v4346 = vunpack.c.l.b16 %v4250
      %v4347 = vunpack.c.l.b16 %v4251
      %v4348 = vunpack.c.l.b16 %v4252
      %v4349 = vunpack.c.l.b16 %v4253
      %v4350 = vunpack.c.l.b16 %v4254
      %v4351 = vunpack.c.l.b16 %v4255
      %v4352 = vunpack.c.l.b16 %v4256
      %v4353 = vunpack.c.l.b16 %v4257
      %v4354 = vunpack.c.l.b16 %v4258
      %v4355 = vunpack.c.l.b16 %v4259
      %v4356 = vunpack.c.l.b16 %v4260
      %v4357 = vunpack.c.l.b16 %v4261
      %v4358 = vunpack.c.l.b16 %v4262
      %v4359 = vunpack.c.l.b16 %v4263
      %v4360 = vunpack.c.l.b16 %v4264
      %v4361 = vpack.c.b16 %v4346, %v4345
      %v4362 = vpack.c.b16 %v4348, %v4347
      %v4363 = vpack.c.b16 %v4350, %v4349
      %v4364 = vpack.c.b16 %v4352, %v4351
      %v4365 = vpack.c.b16 %v4354, %v4353
      %v4366 = vpack.c.b16 %v4356, %v4355
      %v4367 = vpack.c.b16 %v4358, %v4357
      %v4368 = vpack.c.b16 %v4360, %v4359
      %4377 = vmatpush.bf16.msra.mxu0 %v4368
      %4378 = vmatpush.bf16.msra.mxu0 %v4367
      %4379 = vmatpush.bf16.msra.mxu0 %v4366
      %4380 = vmatpush.bf16.msra.mxu0 %v4365
      %4381 = vmatpush.bf16.msra.mxu0 %v4364
      %4382 = vmatpush.bf16.msra.mxu0 %v4363
      %4383 = vmatpush.bf16.msra.mxu0 %v4362
      %4384 = vmatpush.bf16.msra.mxu0 %v4361
      %4385 = vmatmul.bf16.gmra.mxu0 %v4297
      %v4386 = vpop.f32.mrf.mxu0
      %v4387 = vadd.f32 0.0, %v4386
      %v4388 = vpop.f32.mrf.mxu0
      %v4389 = vadd.f32 0.0, %v4388
      %4390 = vmatmul.bf16.gmra.mxu0 %v4298
      %v4391 = vpop.f32.mrf.mxu0
      %v4392 = vadd.f32 0.0, %v4391
      %v4393 = vpop.f32.mrf.mxu0
      %v4394 = vadd.f32 0.0, %v4393
      %4395 = vmatmul.bf16.gmra.mxu0 %v4299
      %v4396 = vpop.f32.mrf.mxu0
      %v4397 = vadd.f32 0.0, %v4396
      %v4398 = vpop.f32.mrf.mxu0
      %v4399 = vadd.f32 0.0, %v4398
      %4400 = vmatmul.bf16.gmra.mxu0 %v4300
      %v4401 = vpop.f32.mrf.mxu0
      %v4402 = vadd.f32 0.0, %v4401
      %v4403 = vpop.f32.mrf.mxu0
      %v4404 = vadd.f32 0.0, %v4403
      %4405 = vmatmul.bf16.gmra.mxu0 %v4301
      %v4406 = vpop.f32.mrf.mxu0
      %v4407 = vadd.f32 0.0, %v4406
      %v4408 = vpop.f32.mrf.mxu0
      %v4409 = vadd.f32 0.0, %v4408
      %4410 = vmatmul.bf16.gmra.mxu0 %v4302
      %v4411 = vpop.f32.mrf.mxu0
      %v4412 = vadd.f32 0.0, %v4411
      %v4413 = vpop.f32.mrf.mxu0
      %v4414 = vadd.f32 0.0, %v4413
      %4415 = vmatmul.bf16.gmra.mxu0 %v4303
      %v4416 = vpop.f32.mrf.mxu0
      %v4417 = vadd.f32 0.0, %v4416
      %v4418 = vpop.f32.mrf.mxu0
      %v4419 = vadd.f32 0.0, %v4418
      %4420 = vmatmul.bf16.gmra.mxu0 %v4304
      %v4421 = vpop.f32.mrf.mxu0
      %v4422 = vadd.f32 0.0, %v4421
      %v4423 = vpop.f32.mrf.mxu0
      %v4424 = vadd.f32 0.0, %v4423
      %4425 = vmatmul.bf16.gmra.mxu0 %v4305
      %v4426 = vpop.f32.mrf.mxu0
      %v4427 = vadd.f32 0.0, %v4426
      %v4428 = vpop.f32.mrf.mxu0
      %v4429 = vadd.f32 0.0, %v4428
      %4430 = vmatmul.bf16.gmra.mxu0 %v4306
      %v4431 = vpop.f32.mrf.mxu0
      %v4432 = vadd.f32 0.0, %v4431
      %v4433 = vpop.f32.mrf.mxu0
      %v4434 = vadd.f32 0.0, %v4433
      %4435 = vmatmul.bf16.gmra.mxu0 %v4307
      %v4436 = vpop.f32.mrf.mxu0
      %v4437 = vadd.f32 0.0, %v4436
      %v4438 = vpop.f32.mrf.mxu0
      %v4439 = vadd.f32 0.0, %v4438
      %4440 = vmatmul.bf16.gmra.mxu0 %v4308
      %v4441 = vpop.f32.mrf.mxu0
      %v4442 = vadd.f32 0.0, %v4441
      %v4443 = vpop.f32.mrf.mxu0
      %v4444 = vadd.f32 0.0, %v4443
      %4445 = vmatmul.bf16.gmra.mxu0 %v4309
      %v4446 = vpop.f32.mrf.mxu0
      %v4447 = vadd.f32 0.0, %v4446
      %v4448 = vpop.f32.mrf.mxu0
      %v4449 = vadd.f32 0.0, %v4448
      %4450 = vmatmul.bf16.gmra.mxu0 %v4310
      %v4451 = vpop.f32.mrf.mxu0
      %v4452 = vadd.f32 0.0, %v4451
      %v4453 = vpop.f32.mrf.mxu0
      %v4454 = vadd.f32 0.0, %v4453
      %4455 = vmatmul.bf16.gmra.mxu0 %v4311
      %v4456 = vpop.f32.mrf.mxu0
      %v4457 = vadd.f32 0.0, %v4456
      %v4458 = vpop.f32.mrf.mxu0
      %v4459 = vadd.f32 0.0, %v4458
      %4460 = vmatmul.bf16.gmra.mxu0 %v4312
      %v4461 = vpop.f32.mrf.mxu0
      %v4462 = vadd.f32 0.0, %v4461
      %v4463 = vpop.f32.mrf.mxu0
      %v4464 = vadd.f32 0.0, %v4463
      %4465 = vdwg.mxu0
      %v4466 = vadd.f32 %v4040, %v4387
      %v4467 = vadd.f32 %v4041, %v4389
      %v4468 = vadd.f32 %v4042, %v4392
      %v4469 = vadd.f32 %v4043, %v4394
      %v4470 = vadd.f32 %v4044, %v4397
      %v4471 = vadd.f32 %v4045, %v4399
      %v4472 = vadd.f32 %v4046, %v4402
      %v4473 = vadd.f32 %v4047, %v4404
      %v4474 = vadd.f32 %v4048, %v4407
      %v4475 = vadd.f32 %v4049, %v4409
      %v4476 = vadd.f32 %v4050, %v4412
      %v4477 = vadd.f32 %v4051, %v4414
      %v4478 = vadd.f32 %v4052, %v4417
      %v4479 = vadd.f32 %v4053, %v4419
      %v4480 = vadd.f32 %v4054, %v4422
      %v4481 = vadd.f32 %v4055, %v4424
      %v4482 = vadd.f32 %v4056, %v4427
      %v4483 = vadd.f32 %v4057, %v4429
      %v4484 = vadd.f32 %v4058, %v4432
      %v4485 = vadd.f32 %v4059, %v4434
      %v4486 = vadd.f32 %v4060, %v4437
      %v4487 = vadd.f32 %v4061, %v4439
      %v4488 = vadd.f32 %v4062, %v4442
      %v4489 = vadd.f32 %v4063, %v4444
      %v4490 = vadd.f32 %v4064, %v4447
      %v4491 = vadd.f32 %v4065, %v4449
      %v4492 = vadd.f32 %v4066, %v4452
      %v4493 = vadd.f32 %v4067, %v4454
      %v4494 = vadd.f32 %v4068, %v4457
      %v4495 = vadd.f32 %v4069, %v4459
      %v4496 = vadd.f32 %v4070, %v4462
      %v4497 = vadd.f32 %v4071, %v4464
      %s4498 = scalar_lea.vmem [#allocation2], 256
      %v4499 = vld [vmem:[%s4498] sm:$0xff]
      %v4500 = vld [vmem:[%s4498 + $0x8] sm:$0xff]
      %v4501 = vld [vmem:[%s4498 + $0x10] sm:$0xff]
      %v4502 = vld [vmem:[%s4498 + $0x18] sm:$0xff]
      %v4503 = vld [vmem:[%s4498 + $0x20] sm:$0xff]
      %v4504 = vld [vmem:[%s4498 + $0x28] sm:$0xff]
      %v4505 = vld [vmem:[%s4498 + $0x30] sm:$0xff]
      %v4506 = vld [vmem:[%s4498 + $0x38] sm:$0xff]
      %v4507 = vld [vmem:[%s4498 + $0x40] sm:$0xff]
      %v4508 = vld [vmem:[%s4498 + $0x48] sm:$0xff]
      %v4509 = vld [vmem:[%s4498 + $0x50] sm:$0xff]
      %v4510 = vld [vmem:[%s4498 + $0x58] sm:$0xff]
      %v4511 = vld [vmem:[%s4498 + $0x60] sm:$0xff]
      %v4512 = vld [vmem:[%s4498 + $0x68] sm:$0xff]
      %v4513 = vld [vmem:[%s4498 + $0x70] sm:$0xff]
      %v4514 = vld [vmem:[%s4498 + $0x78] sm:$0xff]
      %v4515 = vld [vmem:[%s4498 + $0x80] sm:$0xff]
      %v4516 = vld [vmem:[%s4498 + $0x88] sm:$0xff]
      %v4517 = vld [vmem:[%s4498 + $0x90] sm:$0xff]
      %v4518 = vld [vmem:[%s4498 + $0x98] sm:$0xff]
      %v4519 = vld [vmem:[%s4498 + $0xa0] sm:$0xff]
      %v4520 = vld [vmem:[%s4498 + $0xa8] sm:$0xff]
      %v4521 = vld [vmem:[%s4498 + $0xb0] sm:$0xff]
      %v4522 = vld [vmem:[%s4498 + $0xb8] sm:$0xff]
      %v4523 = vld [vmem:[%s4498 + $0xc0] sm:$0xff]
      %v4524 = vld [vmem:[%s4498 + $0xc8] sm:$0xff]
      %v4525 = vld [vmem:[%s4498 + $0xd0] sm:$0xff]
      %v4526 = vld [vmem:[%s4498 + $0xd8] sm:$0xff]
      %v4527 = vld [vmem:[%s4498 + $0xe0] sm:$0xff]
      %v4528 = vld [vmem:[%s4498 + $0xe8] sm:$0xff]
      %v4529 = vld [vmem:[%s4498 + $0xf0] sm:$0xff]
      %v4530 = vld [vmem:[%s4498 + $0xf8] sm:$0xff]
      %v4531 = vadd.f32 %v4499, %v4466
      %v4532 = vadd.f32 %v4500, %v4467
      %v4533 = vadd.f32 %v4501, %v4468
      %v4534 = vadd.f32 %v4502, %v4469
      %v4535 = vadd.f32 %v4503, %v4470
      %v4536 = vadd.f32 %v4504, %v4471
      %v4537 = vadd.f32 %v4505, %v4472
      %v4538 = vadd.f32 %v4506, %v4473
      %v4539 = vadd.f32 %v4507, %v4474
      %v4540 = vadd.f32 %v4508, %v4475
      %v4541 = vadd.f32 %v4509, %v4476
      %v4542 = vadd.f32 %v4510, %v4477
      %v4543 = vadd.f32 %v4511, %v4478
      %v4544 = vadd.f32 %v4512, %v4479
      %v4545 = vadd.f32 %v4513, %v4480
      %v4546 = vadd.f32 %v4514, %v4481
      %v4547 = vadd.f32 %v4515, %v4482
      %v4548 = vadd.f32 %v4516, %v4483
      %v4549 = vadd.f32 %v4517, %v4484
      %v4550 = vadd.f32 %v4518, %v4485
      %v4551 = vadd.f32 %v4519, %v4486
      %v4552 = vadd.f32 %v4520, %v4487
      %v4553 = vadd.f32 %v4521, %v4488
      %v4554 = vadd.f32 %v4522, %v4489
      %v4555 = vadd.f32 %v4523, %v4490
      %v4556 = vadd.f32 %v4524, %v4491
      %v4557 = vadd.f32 %v4525, %v4492
      %v4558 = vadd.f32 %v4526, %v4493
      %v4559 = vadd.f32 %v4527, %v4494
      %v4560 = vadd.f32 %v4528, %v4495
      %v4561 = vadd.f32 %v4529, %v4496
      %v4562 = vadd.f32 %v4530, %v4497
      %4563 = vst [vmem:[%s4498] sm:$0xff] %v4531
      %4564 = vst [vmem:[%s4498 + $0x8] sm:$0xff] %v4532
      %4565 = vst [vmem:[%s4498 + $0x10] sm:$0xff] %v4533
      %4566 = vst [vmem:[%s4498 + $0x18] sm:$0xff] %v4534
      %4567 = vst [vmem:[%s4498 + $0x20] sm:$0xff] %v4535
      %4568 = vst [vmem:[%s4498 + $0x28] sm:$0xff] %v4536
      %4569 = vst [vmem:[%s4498 + $0x30] sm:$0xff] %v4537
      %4570 = vst [vmem:[%s4498 + $0x38] sm:$0xff] %v4538
      %4571 = vst [vmem:[%s4498 + $0x40] sm:$0xff] %v4539
      %4572 = vst [vmem:[%s4498 + $0x48] sm:$0xff] %v4540
      %4573 = vst [vmem:[%s4498 + $0x50] sm:$0xff] %v4541
      %4574 = vst [vmem:[%s4498 + $0x58] sm:$0xff] %v4542
      %4575 = vst [vmem:[%s4498 + $0x60] sm:$0xff] %v4543
      %4576 = vst [vmem:[%s4498 + $0x68] sm:$0xff] %v4544
      %4577 = vst [vmem:[%s4498 + $0x70] sm:$0xff] %v4545
      %4578 = vst [vmem:[%s4498 + $0x78] sm:$0xff] %v4546
      %4579 = vst [vmem:[%s4498 + $0x80] sm:$0xff] %v4547
      %4580 = vst [vmem:[%s4498 + $0x88] sm:$0xff] %v4548
      %4581 = vst [vmem:[%s4498 + $0x90] sm:$0xff] %v4549
      %4582 = vst [vmem:[%s4498 + $0x98] sm:$0xff] %v4550
      %4583 = vst [vmem:[%s4498 + $0xa0] sm:$0xff] %v4551
      %4584 = vst [vmem:[%s4498 + $0xa8] sm:$0xff] %v4552
      %4585 = vst [vmem:[%s4498 + $0xb0] sm:$0xff] %v4553
      %4586 = vst [vmem:[%s4498 + $0xb8] sm:$0xff] %v4554
      %4587 = vst [vmem:[%s4498 + $0xc0] sm:$0xff] %v4555
      %4588 = vst [vmem:[%s4498 + $0xc8] sm:$0xff] %v4556
      %4589 = vst [vmem:[%s4498 + $0xd0] sm:$0xff] %v4557
      %4590 = vst [vmem:[%s4498 + $0xd8] sm:$0xff] %v4558
      %4591 = vst [vmem:[%s4498 + $0xe0] sm:$0xff] %v4559
      %4592 = vst [vmem:[%s4498 + $0xe8] sm:$0xff] %v4560
      %4593 = vst [vmem:[%s4498 + $0xf0] sm:$0xff] %v4561
      %4594 = vst [vmem:[%s4498 + $0xf8] sm:$0xff] %v4562
      %v4595 = vld [vmem:[%s1250] sm:$0xf]
      %v4596 = vld [vmem:[%s1250 + $0x4] sm:$0xf]
      %v4597 = vld [vmem:[%s1250 + $0xc] sm:$0xf]
      %v4598 = vld [vmem:[%s1250 + $0x10] sm:$0xf]
      %v4599 = vld [vmem:[%s1250 + $0x18] sm:$0xf]
      %v4600 = vld [vmem:[%s1250 + $0x1c] sm:$0xf]
      %v4601 = vld [vmem:[%s1250 + $0x24] sm:$0xf]
      %v4602 = vld [vmem:[%s1250 + $0x28] sm:$0xf]
      %v4603 = vld [vmem:[%s1250 + $0x30] sm:$0xf]
      %v4604 = vld [vmem:[%s1250 + $0x34] sm:$0xf]
      %v4605 = vld [vmem:[%s1250 + $0x3c] sm:$0xf]
      %v4606 = vld [vmem:[%s1250 + $0x40] sm:$0xf]
      %v4607 = vld [vmem:[%s1250 + $0x48] sm:$0xf]
      %v4608 = vld [vmem:[%s1250 + $0x4c] sm:$0xf]
      %v4609 = vld [vmem:[%s1250 + $0x54] sm:$0xf]
      %v4610 = vld [vmem:[%s1250 + $0x58] sm:$0xf]
      %v4611 = vld [vmem:[%s1250 + $0x60] sm:$0xf]
      %v4612 = vld [vmem:[%s1250 + $0x64] sm:$0xf]
      %v4613 = vld [vmem:[%s1250 + $0x6c] sm:$0xf]
      %v4614 = vld [vmem:[%s1250 + $0x70] sm:$0xf]
      %v4615 = vld [vmem:[%s1250 + $0x78] sm:$0xf]
      %v4616 = vld [vmem:[%s1250 + $0x7c] sm:$0xf]
      %v4617 = vld [vmem:[%s1250 + $0x84] sm:$0xf]
      %v4618 = vld [vmem:[%s1250 + $0x88] sm:$0xf]
      %v4619 = vld [vmem:[%s1250 + $0x90] sm:$0xf]
      %v4620 = vld [vmem:[%s1250 + $0x94] sm:$0xf]
      %v4621 = vld [vmem:[%s1250 + $0x9c] sm:$0xf]
      %v4622 = vld [vmem:[%s1250 + $0xa0] sm:$0xf]
      %v4623 = vld [vmem:[%s1250 + $0xa8] sm:$0xf]
      %v4624 = vld [vmem:[%s1250 + $0xac] sm:$0xf]
      %v4625 = vld [vmem:[%s1250 + $0xb4] sm:$0xf]
      %v4626 = vld [vmem:[%s1250 + $0xb8] sm:$0xf]
      %s4627 = scalar_lea.vmem %s209, 512
      %v4628 = vld [vmem:[%s4627] sm:$0xf]
      %v4629 = vld [vmem:[%s4627 + $0x4] sm:$0xf]
      %v4630 = vld [vmem:[%s4627 + $0x8] sm:$0xf]
      %v4631 = vld [vmem:[%s4627 + $0xc] sm:$0xf]
      %v4632 = vld [vmem:[%s4627 + $0x10] sm:$0xf]
      %v4633 = vld [vmem:[%s4627 + $0x14] sm:$0xf]
      %v4634 = vld [vmem:[%s4627 + $0x18] sm:$0xf]
      %v4635 = vld [vmem:[%s4627 + $0x1c] sm:$0xf]
      %v4636 = vld [vmem:[%s4627 + $0x20] sm:$0xf]
      %v4637 = vld [vmem:[%s4627 + $0x24] sm:$0xf]
      %v4638 = vld [vmem:[%s4627 + $0x28] sm:$0xf]
      %v4639 = vld [vmem:[%s4627 + $0x2c] sm:$0xf]
      %v4640 = vld [vmem:[%s4627 + $0x30] sm:$0xf]
      %v4641 = vld [vmem:[%s4627 + $0x34] sm:$0xf]
      %v4642 = vld [vmem:[%s4627 + $0x38] sm:$0xf]
      %v4643 = vld [vmem:[%s4627 + $0x3c] sm:$0xf]
      %v4644 = vld [vmem:[%s1250 + $0x8] sm:$0x1]
      %v4645 = vld [vmem:[%s1250 + $0x14] sm:$0x1]
      %v4646 = vld [vmem:[%s1250 + $0x20] sm:$0x1]
      %v4647 = vld [vmem:[%s1250 + $0x2c] sm:$0x1]
      %v4648 = vld [vmem:[%s1250 + $0x38] sm:$0x1]
      %v4649 = vld [vmem:[%s1250 + $0x44] sm:$0x1]
      %v4650 = vld [vmem:[%s1250 + $0x50] sm:$0x1]
      %v4651 = vld [vmem:[%s1250 + $0x5c] sm:$0x1]
      %v4652 = vld [vmem:[%s1250 + $0x68] sm:$0x1]
      %v4653 = vld [vmem:[%s1250 + $0x74] sm:$0x1]
      %v4654 = vld [vmem:[%s1250 + $0x80] sm:$0x1]
      %v4655 = vld [vmem:[%s1250 + $0x8c] sm:$0x1]
      %v4656 = vld [vmem:[%s1250 + $0x98] sm:$0x1]
      %v4657 = vld [vmem:[%s1250 + $0xa4] sm:$0x1]
      %v4658 = vld [vmem:[%s1250 + $0xb0] sm:$0x1]
      %v4659 = vld [vmem:[%s1250 + $0xbc] sm:$0x1]
      %v4661 = vshrl.u32 %v4595, 16
      %v4663 = vrot.slane %v4661, 4
      %v4664 = vshll.u32 %v4595, 16
      %v4666 = vrot.slane %v4664, 5
      %v4667 = vor.u32 %v4663, %v4666
      %v4668 = vrot.slane %v4667, 4
      %v4670 = vshll.u32 %v4596, 16
      %v4672 = vrot.slane %v4670, 5
      %v4673 = vsel %vm414, %v4668, %v4672
      %v4674 = vshrl.u32 %v4596, 16
      %v4676 = vrot.slane %v4674, 4
      %v4677 = vor.u32 %v4676, %v4672
      %v4678 = vrot.slane %v4677, 4
      %v4680 = vshll.u32 %v4644, 16
      %v4682 = vrot.slane %v4680, 5
      %v4683 = vsel %vm414, %v4678, %v4682
      %v4685 = vshrl.u32 %v4597, 16
      %v4687 = vrot.slane %v4685, 4
      %v4688 = vshll.u32 %v4597, 16
      %v4690 = vrot.slane %v4688, 5
      %v4691 = vor.u32 %v4687, %v4690
      %v4692 = vrot.slane %v4691, 4
      %v4694 = vshll.u32 %v4598, 16
      %v4696 = vrot.slane %v4694, 5
      %v4697 = vsel %vm414, %v4692, %v4696
      %v4698 = vshrl.u32 %v4598, 16
      %v4700 = vrot.slane %v4698, 4
      %v4701 = vor.u32 %v4700, %v4696
      %v4702 = vrot.slane %v4701, 4
      %v4704 = vshll.u32 %v4645, 16
      %v4706 = vrot.slane %v4704, 5
      %v4707 = vsel %vm414, %v4702, %v4706
      %v4709 = vshrl.u32 %v4599, 16
      %v4711 = vrot.slane %v4709, 4
      %v4712 = vshll.u32 %v4599, 16
      %v4714 = vrot.slane %v4712, 5
      %v4715 = vor.u32 %v4711, %v4714
      %v4716 = vrot.slane %v4715, 4
      %v4718 = vshll.u32 %v4600, 16
      %v4720 = vrot.slane %v4718, 5
      %v4721 = vsel %vm414, %v4716, %v4720
      %v4722 = vshrl.u32 %v4600, 16
      %v4724 = vrot.slane %v4722, 4
      %v4725 = vor.u32 %v4724, %v4720
      %v4726 = vrot.slane %v4725, 4
      %v4728 = vshll.u32 %v4646, 16
      %v4730 = vrot.slane %v4728, 5
      %v4731 = vsel %vm414, %v4726, %v4730
      %v4733 = vshrl.u32 %v4601, 16
      %v4735 = vrot.slane %v4733, 4
      %v4736 = vshll.u32 %v4601, 16
      %v4738 = vrot.slane %v4736, 5
      %v4739 = vor.u32 %v4735, %v4738
      %v4740 = vrot.slane %v4739, 4
      %v4742 = vshll.u32 %v4602, 16
      %v4744 = vrot.slane %v4742, 5
      %v4745 = vsel %vm414, %v4740, %v4744
      %v4746 = vshrl.u32 %v4602, 16
      %v4748 = vrot.slane %v4746, 4
      %v4749 = vor.u32 %v4748, %v4744
      %v4750 = vrot.slane %v4749, 4
      %v4752 = vshll.u32 %v4647, 16
      %v4754 = vrot.slane %v4752, 5
      %v4755 = vsel %vm414, %v4750, %v4754
      %v4757 = vshrl.u32 %v4603, 16
      %v4759 = vrot.slane %v4757, 4
      %v4760 = vshll.u32 %v4603, 16
      %v4762 = vrot.slane %v4760, 5
      %v4763 = vor.u32 %v4759, %v4762
      %v4764 = vrot.slane %v4763, 4
      %v4766 = vshll.u32 %v4604, 16
      %v4768 = vrot.slane %v4766, 5
      %v4769 = vsel %vm414, %v4764, %v4768
      %v4770 = vshrl.u32 %v4604, 16
      %v4772 = vrot.slane %v4770, 4
      %v4773 = vor.u32 %v4772, %v4768
      %v4774 = vrot.slane %v4773, 4
      %v4776 = vshll.u32 %v4648, 16
      %v4778 = vrot.slane %v4776, 5
      %v4779 = vsel %vm414, %v4774, %v4778
      %v4781 = vshrl.u32 %v4605, 16
      %v4783 = vrot.slane %v4781, 4
      %v4784 = vshll.u32 %v4605, 16
      %v4786 = vrot.slane %v4784, 5
      %v4787 = vor.u32 %v4783, %v4786
      %v4788 = vrot.slane %v4787, 4
      %v4790 = vshll.u32 %v4606, 16
      %v4792 = vrot.slane %v4790, 5
      %v4793 = vsel %vm414, %v4788, %v4792
      %v4794 = vshrl.u32 %v4606, 16
      %v4796 = vrot.slane %v4794, 4
      %v4797 = vor.u32 %v4796, %v4792
      %v4798 = vrot.slane %v4797, 4
      %v4800 = vshll.u32 %v4649, 16
      %v4802 = vrot.slane %v4800, 5
      %v4803 = vsel %vm414, %v4798, %v4802
      %v4805 = vshrl.u32 %v4607, 16
      %v4807 = vrot.slane %v4805, 4
      %v4808 = vshll.u32 %v4607, 16
      %v4810 = vrot.slane %v4808, 5
      %v4811 = vor.u32 %v4807, %v4810
      %v4812 = vrot.slane %v4811, 4
      %v4814 = vshll.u32 %v4608, 16
      %v4816 = vrot.slane %v4814, 5
      %v4817 = vsel %vm414, %v4812, %v4816
      %v4818 = vshrl.u32 %v4608, 16
      %v4820 = vrot.slane %v4818, 4
      %v4821 = vor.u32 %v4820, %v4816
      %v4822 = vrot.slane %v4821, 4
      %v4824 = vshll.u32 %v4650, 16
      %v4826 = vrot.slane %v4824, 5
      %v4827 = vsel %vm414, %v4822, %v4826
      %v4829 = vshrl.u32 %v4609, 16
      %v4831 = vrot.slane %v4829, 4
      %v4832 = vshll.u32 %v4609, 16
      %v4834 = vrot.slane %v4832, 5
      %v4835 = vor.u32 %v4831, %v4834
      %v4836 = vrot.slane %v4835, 4
      %v4838 = vshll.u32 %v4610, 16
      %v4840 = vrot.slane %v4838, 5
      %v4841 = vsel %vm414, %v4836, %v4840
      %v4842 = vshrl.u32 %v4610, 16
      %v4844 = vrot.slane %v4842, 4
      %v4845 = vor.u32 %v4844, %v4840
      %v4846 = vrot.slane %v4845, 4
      %v4848 = vshll.u32 %v4651, 16
      %v4850 = vrot.slane %v4848, 5
      %v4851 = vsel %vm414, %v4846, %v4850
      %v4853 = vshrl.u32 %v4611, 16
      %v4855 = vrot.slane %v4853, 4
      %v4856 = vshll.u32 %v4611, 16
      %v4858 = vrot.slane %v4856, 5
      %v4859 = vor.u32 %v4855, %v4858
      %v4860 = vrot.slane %v4859, 4
      %v4862 = vshll.u32 %v4612, 16
      %v4864 = vrot.slane %v4862, 5
      %v4865 = vsel %vm414, %v4860, %v4864
      %v4866 = vshrl.u32 %v4612, 16
      %v4868 = vrot.slane %v4866, 4
      %v4869 = vor.u32 %v4868, %v4864
      %v4870 = vrot.slane %v4869, 4
      %v4872 = vshll.u32 %v4652, 16
      %v4874 = vrot.slane %v4872, 5
      %v4875 = vsel %vm414, %v4870, %v4874
      %v4877 = vshrl.u32 %v4613, 16
      %v4879 = vrot.slane %v4877, 4
      %v4880 = vshll.u32 %v4613, 16
      %v4882 = vrot.slane %v4880, 5
      %v4883 = vor.u32 %v4879, %v4882
      %v4884 = vrot.slane %v4883, 4
      %v4886 = vshll.u32 %v4614, 16
      %v4888 = vrot.slane %v4886, 5
      %v4889 = vsel %vm414, %v4884, %v4888
      %v4890 = vshrl.u32 %v4614, 16
      %v4892 = vrot.slane %v4890, 4
      %v4893 = vor.u32 %v4892, %v4888
      %v4894 = vrot.slane %v4893, 4
      %v4896 = vshll.u32 %v4653, 16
      %v4898 = vrot.slane %v4896, 5
      %v4899 = vsel %vm414, %v4894, %v4898
      %v4901 = vshrl.u32 %v4615, 16
      %v4903 = vrot.slane %v4901, 4
      %v4904 = vshll.u32 %v4615, 16
      %v4906 = vrot.slane %v4904, 5
      %v4907 = vor.u32 %v4903, %v4906
      %v4908 = vrot.slane %v4907, 4
      %v4910 = vshll.u32 %v4616, 16
      %v4912 = vrot.slane %v4910, 5
      %v4913 = vsel %vm414, %v4908, %v4912
      %v4914 = vshrl.u32 %v4616, 16
      %v4916 = vrot.slane %v4914, 4
      %v4917 = vor.u32 %v4916, %v4912
      %v4918 = vrot.slane %v4917, 4
      %v4920 = vshll.u32 %v4654, 16
      %v4922 = vrot.slane %v4920, 5
      %v4923 = vsel %vm414, %v4918, %v4922
      %v4925 = vshrl.u32 %v4617, 16
      %v4927 = vrot.slane %v4925, 4
      %v4928 = vshll.u32 %v4617, 16
      %v4930 = vrot.slane %v4928, 5
      %v4931 = vor.u32 %v4927, %v4930
      %v4932 = vrot.slane %v4931, 4
      %v4934 = vshll.u32 %v4618, 16
      %v4936 = vrot.slane %v4934, 5
      %v4937 = vsel %vm414, %v4932, %v4936
      %v4938 = vshrl.u32 %v4618, 16
      %v4940 = vrot.slane %v4938, 4
      %v4941 = vor.u32 %v4940, %v4936
      %v4942 = vrot.slane %v4941, 4
      %v4944 = vshll.u32 %v4655, 16
      %v4946 = vrot.slane %v4944, 5
      %v4947 = vsel %vm414, %v4942, %v4946
      %v4949 = vshrl.u32 %v4619, 16
      %v4951 = vrot.slane %v4949, 4
      %v4952 = vshll.u32 %v4619, 16
      %v4954 = vrot.slane %v4952, 5
      %v4955 = vor.u32 %v4951, %v4954
      %v4956 = vrot.slane %v4955, 4
      %v4958 = vshll.u32 %v4620, 16
      %v4960 = vrot.slane %v4958, 5
      %v4961 = vsel %vm414, %v4956, %v4960
      %v4962 = vshrl.u32 %v4620, 16
      %v4964 = vrot.slane %v4962, 4
      %v4965 = vor.u32 %v4964, %v4960
      %v4966 = vrot.slane %v4965, 4
      %v4968 = vshll.u32 %v4656, 16
      %v4970 = vrot.slane %v4968, 5
      %v4971 = vsel %vm414, %v4966, %v4970
      %v4973 = vshrl.u32 %v4621, 16
      %v4975 = vrot.slane %v4973, 4
      %v4976 = vshll.u32 %v4621, 16
      %v4978 = vrot.slane %v4976, 5
      %v4979 = vor.u32 %v4975, %v4978
      %v4980 = vrot.slane %v4979, 4
      %v4982 = vshll.u32 %v4622, 16
      %v4984 = vrot.slane %v4982, 5
      %v4985 = vsel %vm414, %v4980, %v4984
      %v4986 = vshrl.u32 %v4622, 16
      %v4988 = vrot.slane %v4986, 4
      %v4989 = vor.u32 %v4988, %v4984
      %v4990 = vrot.slane %v4989, 4
      %v4992 = vshll.u32 %v4657, 16
      %v4994 = vrot.slane %v4992, 5
      %v4995 = vsel %vm414, %v4990, %v4994
      %v4997 = vshrl.u32 %v4623, 16
      %v4999 = vrot.slane %v4997, 4
      %v5000 = vshll.u32 %v4623, 16
      %v5002 = vrot.slane %v5000, 5
      %v5003 = vor.u32 %v4999, %v5002
      %v5004 = vrot.slane %v5003, 4
      %v5006 = vshll.u32 %v4624, 16
      %v5008 = vrot.slane %v5006, 5
      %v5009 = vsel %vm414, %v5004, %v5008
      %v5010 = vshrl.u32 %v4624, 16
      %v5012 = vrot.slane %v5010, 4
      %v5013 = vor.u32 %v5012, %v5008
      %v5014 = vrot.slane %v5013, 4
      %v5016 = vshll.u32 %v4658, 16
      %v5018 = vrot.slane %v5016, 5
      %v5019 = vsel %vm414, %v5014, %v5018
      %v5021 = vshrl.u32 %v4625, 16
      %v5023 = vrot.slane %v5021, 4
      %v5024 = vshll.u32 %v4625, 16
      %v5026 = vrot.slane %v5024, 5
      %v5027 = vor.u32 %v5023, %v5026
      %v5028 = vrot.slane %v5027, 4
      %v5030 = vshll.u32 %v4626, 16
      %v5032 = vrot.slane %v5030, 5
      %v5033 = vsel %vm414, %v5028, %v5032
      %v5034 = vshrl.u32 %v4626, 16
      %v5036 = vrot.slane %v5034, 4
      %v5037 = vor.u32 %v5036, %v5032
      %v5038 = vrot.slane %v5037, 4
      %v5040 = vshll.u32 %v4659, 16
      %v5042 = vrot.slane %v5040, 5
      %v5043 = vsel %vm414, %v5038, %v5042
      %s5044 = scalar_lea.vmem %s209, 576
      %v5045 = vld [vmem:[%s5044] sm:$0xf]
      %v5046 = vld [vmem:[%s5044 + $0x4] sm:$0xf]
      %v5047 = vld [vmem:[%s5044 + $0x8] sm:$0xf]
      %v5048 = vld [vmem:[%s5044 + $0xc] sm:$0xf]
      %v5049 = vld [vmem:[%s5044 + $0x10] sm:$0xf]
      %v5050 = vld [vmem:[%s5044 + $0x14] sm:$0xf]
      %v5051 = vld [vmem:[%s5044 + $0x18] sm:$0xf]
      %v5052 = vld [vmem:[%s5044 + $0x1c] sm:$0xf]
      %v5053 = vld [vmem:[%s5044 + $0x20] sm:$0xf]
      %v5054 = vld [vmem:[%s5044 + $0x24] sm:$0xf]
      %v5055 = vld [vmem:[%s5044 + $0x28] sm:$0xf]
      %v5056 = vld [vmem:[%s5044 + $0x2c] sm:$0xf]
      %v5057 = vld [vmem:[%s5044 + $0x30] sm:$0xf]
      %v5058 = vld [vmem:[%s5044 + $0x34] sm:$0xf]
      %v5059 = vld [vmem:[%s5044 + $0x38] sm:$0xf]
      %v5060 = vld [vmem:[%s5044 + $0x3c] sm:$0xf]
      %v5061 = vunpack.c.l.b16 %v4673
      %v5062 = vunpack.c.l.b16 %v4683
      %v5063 = vunpack.c.l.b16 %v4697
      %v5064 = vunpack.c.l.b16 %v4707
      %v5065 = vunpack.c.l.b16 %v4721
      %v5066 = vunpack.c.l.b16 %v4731
      %v5067 = vunpack.c.l.b16 %v4745
      %v5068 = vunpack.c.l.b16 %v4755
      %v5069 = vunpack.c.l.b16 %v4769
      %v5070 = vunpack.c.l.b16 %v4779
      %v5071 = vunpack.c.l.b16 %v4793
      %v5072 = vunpack.c.l.b16 %v4803
      %v5073 = vunpack.c.l.b16 %v4817
      %v5074 = vunpack.c.l.b16 %v4827
      %v5075 = vunpack.c.l.b16 %v4841
      %v5076 = vunpack.c.l.b16 %v4851
      %v5077 = vunpack.c.l.b16 %v4865
      %v5078 = vunpack.c.l.b16 %v4875
      %v5079 = vunpack.c.l.b16 %v4889
      %v5080 = vunpack.c.l.b16 %v4899
      %v5081 = vunpack.c.l.b16 %v4913
      %v5082 = vunpack.c.l.b16 %v4923
      %v5083 = vunpack.c.l.b16 %v4937
      %v5084 = vunpack.c.l.b16 %v4947
      %v5085 = vunpack.c.l.b16 %v4961
      %v5086 = vunpack.c.l.b16 %v4971
      %v5087 = vunpack.c.l.b16 %v4985
      %v5088 = vunpack.c.l.b16 %v4995
      %v5089 = vunpack.c.l.b16 %v5009
      %v5090 = vunpack.c.l.b16 %v5019
      %v5091 = vunpack.c.l.b16 %v5033
      %v5092 = vunpack.c.l.b16 %v5043
      %v5093 = vpack.c.b16 %v5062, %v5061
      %v5094 = vpack.c.b16 %v5064, %v5063
      %v5095 = vpack.c.b16 %v5066, %v5065
      %v5096 = vpack.c.b16 %v5068, %v5067
      %v5097 = vpack.c.b16 %v5070, %v5069
      %v5098 = vpack.c.b16 %v5072, %v5071
      %v5099 = vpack.c.b16 %v5074, %v5073
      %v5100 = vpack.c.b16 %v5076, %v5075
      %v5101 = vpack.c.b16 %v5078, %v5077
      %v5102 = vpack.c.b16 %v5080, %v5079
      %v5103 = vpack.c.b16 %v5082, %v5081
      %v5104 = vpack.c.b16 %v5084, %v5083
      %v5105 = vpack.c.b16 %v5086, %v5085
      %v5106 = vpack.c.b16 %v5088, %v5087
      %v5107 = vpack.c.b16 %v5090, %v5089
      %v5108 = vpack.c.b16 %v5092, %v5091
      %v5141 = vunpack.c.l.b16 %v5045
      %v5142 = vunpack.c.l.b16 %v5046
      %v5143 = vunpack.c.l.b16 %v5047
      %v5144 = vunpack.c.l.b16 %v5048
      %v5145 = vunpack.c.l.b16 %v5049
      %v5146 = vunpack.c.l.b16 %v5050
      %v5147 = vunpack.c.l.b16 %v5051
      %v5148 = vunpack.c.l.b16 %v5052
      %v5149 = vunpack.c.l.b16 %v5053
      %v5150 = vunpack.c.l.b16 %v5054
      %v5151 = vunpack.c.l.b16 %v5055
      %v5152 = vunpack.c.l.b16 %v5056
      %v5153 = vunpack.c.l.b16 %v5057
      %v5154 = vunpack.c.l.b16 %v5058
      %v5155 = vunpack.c.l.b16 %v5059
      %v5156 = vunpack.c.l.b16 %v5060
      %v5157 = vpack.c.b16 %v5142, %v5141
      %v5158 = vpack.c.b16 %v5144, %v5143
      %v5159 = vpack.c.b16 %v5146, %v5145
      %v5160 = vpack.c.b16 %v5148, %v5147
      %v5161 = vpack.c.b16 %v5150, %v5149
      %v5162 = vpack.c.b16 %v5152, %v5151
      %v5163 = vpack.c.b16 %v5154, %v5153
      %v5164 = vpack.c.b16 %v5156, %v5155
      %5173 = vmatpush.bf16.msra.mxu0 %v5164
      %5174 = vmatpush.bf16.msra.mxu0 %v5163
      %5175 = vmatpush.bf16.msra.mxu0 %v5162
      %5176 = vmatpush.bf16.msra.mxu0 %v5161
      %5177 = vmatpush.bf16.msra.mxu0 %v5160
      %5178 = vmatpush.bf16.msra.mxu0 %v5159
      %5179 = vmatpush.bf16.msra.mxu0 %v5158
      %5180 = vmatpush.bf16.msra.mxu0 %v5157
      %5181 = vmatmul.bf16.gmra.mxu0 %v5093
      %v5182 = vpop.f32.mrf.mxu0
      %v5183 = vadd.f32 0.0, %v5182
      %v5184 = vpop.f32.mrf.mxu0
      %v5185 = vadd.f32 0.0, %v5184
      %5186 = vmatmul.bf16.gmra.mxu0 %v5094
      %v5187 = vpop.f32.mrf.mxu0
      %v5188 = vadd.f32 0.0, %v5187
      %v5189 = vpop.f32.mrf.mxu0
      %v5190 = vadd.f32 0.0, %v5189
      %5191 = vmatmul.bf16.gmra.mxu0 %v5095
      %v5192 = vpop.f32.mrf.mxu0
      %v5193 = vadd.f32 0.0, %v5192
      %v5194 = vpop.f32.mrf.mxu0
      %v5195 = vadd.f32 0.0, %v5194
      %5196 = vmatmul.bf16.gmra.mxu0 %v5096
      %v5197 = vpop.f32.mrf.mxu0
      %v5198 = vadd.f32 0.0, %v5197
      %v5199 = vpop.f32.mrf.mxu0
      %v5200 = vadd.f32 0.0, %v5199
      %5201 = vmatmul.bf16.gmra.mxu0 %v5097
      %v5202 = vpop.f32.mrf.mxu0
      %v5203 = vadd.f32 0.0, %v5202
      %v5204 = vpop.f32.mrf.mxu0
      %v5205 = vadd.f32 0.0, %v5204
      %5206 = vmatmul.bf16.gmra.mxu0 %v5098
      %v5207 = vpop.f32.mrf.mxu0
      %v5208 = vadd.f32 0.0, %v5207
      %v5209 = vpop.f32.mrf.mxu0
      %v5210 = vadd.f32 0.0, %v5209
      %5211 = vmatmul.bf16.gmra.mxu0 %v5099
      %v5212 = vpop.f32.mrf.mxu0
      %v5213 = vadd.f32 0.0, %v5212
      %v5214 = vpop.f32.mrf.mxu0
      %v5215 = vadd.f32 0.0, %v5214
      %5216 = vmatmul.bf16.gmra.mxu0 %v5100
      %v5217 = vpop.f32.mrf.mxu0
      %v5218 = vadd.f32 0.0, %v5217
      %v5219 = vpop.f32.mrf.mxu0
      %v5220 = vadd.f32 0.0, %v5219
      %5221 = vmatmul.bf16.gmra.mxu0 %v5101
      %v5222 = vpop.f32.mrf.mxu0
      %v5223 = vadd.f32 0.0, %v5222
      %v5224 = vpop.f32.mrf.mxu0
      %v5225 = vadd.f32 0.0, %v5224
      %5226 = vmatmul.bf16.gmra.mxu0 %v5102
      %v5227 = vpop.f32.mrf.mxu0
      %v5228 = vadd.f32 0.0, %v5227
      %v5229 = vpop.f32.mrf.mxu0
      %v5230 = vadd.f32 0.0, %v5229
      %5231 = vmatmul.bf16.gmra.mxu0 %v5103
      %v5232 = vpop.f32.mrf.mxu0
      %v5233 = vadd.f32 0.0, %v5232
      %v5234 = vpop.f32.mrf.mxu0
      %v5235 = vadd.f32 0.0, %v5234
      %5236 = vmatmul.bf16.gmra.mxu0 %v5104
      %v5237 = vpop.f32.mrf.mxu0
      %v5238 = vadd.f32 0.0, %v5237
      %v5239 = vpop.f32.mrf.mxu0
      %v5240 = vadd.f32 0.0, %v5239
      %5241 = vmatmul.bf16.gmra.mxu0 %v5105
      %v5242 = vpop.f32.mrf.mxu0
      %v5243 = vadd.f32 0.0, %v5242
      %v5244 = vpop.f32.mrf.mxu0
      %v5245 = vadd.f32 0.0, %v5244
      %5246 = vmatmul.bf16.gmra.mxu0 %v5106
      %v5247 = vpop.f32.mrf.mxu0
      %v5248 = vadd.f32 0.0, %v5247
      %v5249 = vpop.f32.mrf.mxu0
      %v5250 = vadd.f32 0.0, %v5249
      %5251 = vmatmul.bf16.gmra.mxu0 %v5107
      %v5252 = vpop.f32.mrf.mxu0
      %v5253 = vadd.f32 0.0, %v5252
      %v5254 = vpop.f32.mrf.mxu0
      %v5255 = vadd.f32 0.0, %v5254
      %5256 = vmatmul.bf16.gmra.mxu0 %v5108
      %v5257 = vpop.f32.mrf.mxu0
      %v5258 = vadd.f32 0.0, %v5257
      %v5259 = vpop.f32.mrf.mxu0
      %v5260 = vadd.f32 0.0, %v5259
      %5261 = vdwg.mxu0
      %v5294 = vunpack.c.l.b16 %v4595
      %v5295 = vunpack.c.l.b16 %v4596
      %v5296 = vunpack.c.l.b16 %v4597
      %v5297 = vunpack.c.l.b16 %v4598
      %v5298 = vunpack.c.l.b16 %v4599
      %v5299 = vunpack.c.l.b16 %v4600
      %v5300 = vunpack.c.l.b16 %v4601
      %v5301 = vunpack.c.l.b16 %v4602
      %v5302 = vunpack.c.l.b16 %v4603
      %v5303 = vunpack.c.l.b16 %v4604
      %v5304 = vunpack.c.l.b16 %v4605
      %v5305 = vunpack.c.l.b16 %v4606
      %v5306 = vunpack.c.l.b16 %v4607
      %v5307 = vunpack.c.l.b16 %v4608
      %v5308 = vunpack.c.l.b16 %v4609
      %v5309 = vunpack.c.l.b16 %v4610
      %v5310 = vunpack.c.l.b16 %v4611
      %v5311 = vunpack.c.l.b16 %v4612
      %v5312 = vunpack.c.l.b16 %v4613
      %v5313 = vunpack.c.l.b16 %v4614
      %v5314 = vunpack.c.l.b16 %v4615
      %v5315 = vunpack.c.l.b16 %v4616
      %v5316 = vunpack.c.l.b16 %v4617
      %v5317 = vunpack.c.l.b16 %v4618
      %v5318 = vunpack.c.l.b16 %v4619
      %v5319 = vunpack.c.l.b16 %v4620
      %v5320 = vunpack.c.l.b16 %v4621
      %v5321 = vunpack.c.l.b16 %v4622
      %v5322 = vunpack.c.l.b16 %v4623
      %v5323 = vunpack.c.l.b16 %v4624
      %v5324 = vunpack.c.l.b16 %v4625
      %v5325 = vunpack.c.l.b16 %v4626
      %v5326 = vpack.c.b16 %v5295, %v5294
      %v5327 = vpack.c.b16 %v5297, %v5296
      %v5328 = vpack.c.b16 %v5299, %v5298
      %v5329 = vpack.c.b16 %v5301, %v5300
      %v5330 = vpack.c.b16 %v5303, %v5302
      %v5331 = vpack.c.b16 %v5305, %v5304
      %v5332 = vpack.c.b16 %v5307, %v5306
      %v5333 = vpack.c.b16 %v5309, %v5308
      %v5334 = vpack.c.b16 %v5311, %v5310
      %v5335 = vpack.c.b16 %v5313, %v5312
      %v5336 = vpack.c.b16 %v5315, %v5314
      %v5337 = vpack.c.b16 %v5317, %v5316
      %v5338 = vpack.c.b16 %v5319, %v5318
      %v5339 = vpack.c.b16 %v5321, %v5320
      %v5340 = vpack.c.b16 %v5323, %v5322
      %v5341 = vpack.c.b16 %v5325, %v5324
      %v5374 = vunpack.c.l.b16 %v4628
      %v5375 = vunpack.c.l.b16 %v4629
      %v5376 = vunpack.c.l.b16 %v4630
      %v5377 = vunpack.c.l.b16 %v4631
      %v5378 = vunpack.c.l.b16 %v4632
      %v5379 = vunpack.c.l.b16 %v4633
      %v5380 = vunpack.c.l.b16 %v4634
      %v5381 = vunpack.c.l.b16 %v4635
      %v5382 = vunpack.c.l.b16 %v4636
      %v5383 = vunpack.c.l.b16 %v4637
      %v5384 = vunpack.c.l.b16 %v4638
      %v5385 = vunpack.c.l.b16 %v4639
      %v5386 = vunpack.c.l.b16 %v4640
      %v5387 = vunpack.c.l.b16 %v4641
      %v5388 = vunpack.c.l.b16 %v4642
      %v5389 = vunpack.c.l.b16 %v4643
      %v5390 = vpack.c.b16 %v5375, %v5374
      %v5391 = vpack.c.b16 %v5377, %v5376
      %v5392 = vpack.c.b16 %v5379, %v5378
      %v5393 = vpack.c.b16 %v5381, %v5380
      %v5394 = vpack.c.b16 %v5383, %v5382
      %v5395 = vpack.c.b16 %v5385, %v5384
      %v5396 = vpack.c.b16 %v5387, %v5386
      %v5397 = vpack.c.b16 %v5389, %v5388
      %5406 = vmatpush.bf16.msra.mxu0 %v5397
      %5407 = vmatpush.bf16.msra.mxu0 %v5396
      %5408 = vmatpush.bf16.msra.mxu0 %v5395
      %5409 = vmatpush.bf16.msra.mxu0 %v5394
      %5410 = vmatpush.bf16.msra.mxu0 %v5393
      %5411 = vmatpush.bf16.msra.mxu0 %v5392
      %5412 = vmatpush.bf16.msra.mxu0 %v5391
      %5413 = vmatpush.bf16.msra.mxu0 %v5390
      %5414 = vmatmul.bf16.gmra.mxu0 %v5326
      %v5415 = vpop.f32.mrf.mxu0
      %v5416 = vadd.f32 %v5183, %v5415
      %v5417 = vpop.f32.mrf.mxu0
      %v5418 = vadd.f32 %v5185, %v5417
      %5419 = vmatmul.bf16.gmra.mxu0 %v5327
      %v5420 = vpop.f32.mrf.mxu0
      %v5421 = vadd.f32 %v5188, %v5420
      %v5422 = vpop.f32.mrf.mxu0
      %v5423 = vadd.f32 %v5190, %v5422
      %5424 = vmatmul.bf16.gmra.mxu0 %v5328
      %v5425 = vpop.f32.mrf.mxu0
      %v5426 = vadd.f32 %v5193, %v5425
      %v5427 = vpop.f32.mrf.mxu0
      %v5428 = vadd.f32 %v5195, %v5427
      %5429 = vmatmul.bf16.gmra.mxu0 %v5329
      %v5430 = vpop.f32.mrf.mxu0
      %v5431 = vadd.f32 %v5198, %v5430
      %v5432 = vpop.f32.mrf.mxu0
      %v5433 = vadd.f32 %v5200, %v5432
      %5434 = vmatmul.bf16.gmra.mxu0 %v5330
      %v5435 = vpop.f32.mrf.mxu0
      %v5436 = vadd.f32 %v5203, %v5435
      %v5437 = vpop.f32.mrf.mxu0
      %v5438 = vadd.f32 %v5205, %v5437
      %5439 = vmatmul.bf16.gmra.mxu0 %v5331
      %v5440 = vpop.f32.mrf.mxu0
      %v5441 = vadd.f32 %v5208, %v5440
      %v5442 = vpop.f32.mrf.mxu0
      %v5443 = vadd.f32 %v5210, %v5442
      %5444 = vmatmul.bf16.gmra.mxu0 %v5332
      %v5445 = vpop.f32.mrf.mxu0
      %v5446 = vadd.f32 %v5213, %v5445
      %v5447 = vpop.f32.mrf.mxu0
      %v5448 = vadd.f32 %v5215, %v5447
      %5449 = vmatmul.bf16.gmra.mxu0 %v5333
      %v5450 = vpop.f32.mrf.mxu0
      %v5451 = vadd.f32 %v5218, %v5450
      %v5452 = vpop.f32.mrf.mxu0
      %v5453 = vadd.f32 %v5220, %v5452
      %5454 = vmatmul.bf16.gmra.mxu0 %v5334
      %v5455 = vpop.f32.mrf.mxu0
      %v5456 = vadd.f32 %v5223, %v5455
      %v5457 = vpop.f32.mrf.mxu0
      %v5458 = vadd.f32 %v5225, %v5457
      %5459 = vmatmul.bf16.gmra.mxu0 %v5335
      %v5460 = vpop.f32.mrf.mxu0
      %v5461 = vadd.f32 %v5228, %v5460
      %v5462 = vpop.f32.mrf.mxu0
      %v5463 = vadd.f32 %v5230, %v5462
      %5464 = vmatmul.bf16.gmra.mxu0 %v5336
      %v5465 = vpop.f32.mrf.mxu0
      %v5466 = vadd.f32 %v5233, %v5465
      %v5467 = vpop.f32.mrf.mxu0
      %v5468 = vadd.f32 %v5235, %v5467
      %5469 = vmatmul.bf16.gmra.mxu0 %v5337
      %v5470 = vpop.f32.mrf.mxu0
      %v5471 = vadd.f32 %v5238, %v5470
      %v5472 = vpop.f32.mrf.mxu0
      %v5473 = vadd.f32 %v5240, %v5472
      %5474 = vmatmul.bf16.gmra.mxu0 %v5338
      %v5475 = vpop.f32.mrf.mxu0
      %v5476 = vadd.f32 %v5243, %v5475
      %v5477 = vpop.f32.mrf.mxu0
      %v5478 = vadd.f32 %v5245, %v5477
      %5479 = vmatmul.bf16.gmra.mxu0 %v5339
      %v5480 = vpop.f32.mrf.mxu0
      %v5481 = vadd.f32 %v5248, %v5480
      %v5482 = vpop.f32.mrf.mxu0
      %v5483 = vadd.f32 %v5250, %v5482
      %5484 = vmatmul.bf16.gmra.mxu0 %v5340
      %v5485 = vpop.f32.mrf.mxu0
      %v5486 = vadd.f32 %v5253, %v5485
      %v5487 = vpop.f32.mrf.mxu0
      %v5488 = vadd.f32 %v5255, %v5487
      %5489 = vmatmul.bf16.gmra.mxu0 %v5341
      %v5490 = vpop.f32.mrf.mxu0
      %v5491 = vadd.f32 %v5258, %v5490
      %v5492 = vpop.f32.mrf.mxu0
      %v5493 = vadd.f32 %v5260, %v5492
      %5494 = vdwg.mxu0
      %s5495 = scalar_lea.vmem %s204, 24
      %v5496 = vld [vmem:[%s5495] sm:$0xf]
      %v5497 = vld [vmem:[%s5495 + $0x4] sm:$0xf]
      %v5498 = vld [vmem:[%s5495 + $0xc] sm:$0xf]
      %v5499 = vld [vmem:[%s5495 + $0x10] sm:$0xf]
      %v5500 = vld [vmem:[%s5495 + $0x18] sm:$0xf]
      %v5501 = vld [vmem:[%s5495 + $0x1c] sm:$0xf]
      %v5502 = vld [vmem:[%s5495 + $0x24] sm:$0xf]
      %v5503 = vld [vmem:[%s5495 + $0x28] sm:$0xf]
      %v5504 = vld [vmem:[%s5495 + $0x30] sm:$0xf]
      %v5505 = vld [vmem:[%s5495 + $0x34] sm:$0xf]
      %v5506 = vld [vmem:[%s5495 + $0x3c] sm:$0xf]
      %v5507 = vld [vmem:[%s5495 + $0x40] sm:$0xf]
      %v5508 = vld [vmem:[%s5495 + $0x48] sm:$0xf]
      %v5509 = vld [vmem:[%s5495 + $0x4c] sm:$0xf]
      %v5510 = vld [vmem:[%s5495 + $0x54] sm:$0xf]
      %v5511 = vld [vmem:[%s5495 + $0x58] sm:$0xf]
      %v5512 = vld [vmem:[%s5495 + $0x60] sm:$0xf]
      %v5513 = vld [vmem:[%s5495 + $0x64] sm:$0xf]
      %v5514 = vld [vmem:[%s5495 + $0x6c] sm:$0xf]
      %v5515 = vld [vmem:[%s5495 + $0x70] sm:$0xf]
      %v5516 = vld [vmem:[%s5495 + $0x78] sm:$0xf]
      %v5517 = vld [vmem:[%s5495 + $0x7c] sm:$0xf]
      %v5518 = vld [vmem:[%s5495 + $0x84] sm:$0xf]
      %v5519 = vld [vmem:[%s5495 + $0x88] sm:$0xf]
      %v5520 = vld [vmem:[%s5495 + $0x90] sm:$0xf]
      %v5521 = vld [vmem:[%s5495 + $0x94] sm:$0xf]
      %v5522 = vld [vmem:[%s5495 + $0x9c] sm:$0xf]
      %v5523 = vld [vmem:[%s5495 + $0xa0] sm:$0xf]
      %v5524 = vld [vmem:[%s5495 + $0xa8] sm:$0xf]
      %v5525 = vld [vmem:[%s5495 + $0xac] sm:$0xf]
      %v5526 = vld [vmem:[%s5495 + $0xb4] sm:$0xf]
      %v5527 = vld [vmem:[%s5495 + $0xb8] sm:$0xf]
      %s5528 = scalar_lea.vmem %s209, 640
      %v5529 = vld [vmem:[%s5528] sm:$0xf]
      %v5530 = vld [vmem:[%s5528 + $0x4] sm:$0xf]
      %v5531 = vld [vmem:[%s5528 + $0x8] sm:$0xf]
      %v5532 = vld [vmem:[%s5528 + $0xc] sm:$0xf]
      %v5533 = vld [vmem:[%s5528 + $0x10] sm:$0xf]
      %v5534 = vld [vmem:[%s5528 + $0x14] sm:$0xf]
      %v5535 = vld [vmem:[%s5528 + $0x18] sm:$0xf]
      %v5536 = vld [vmem:[%s5528 + $0x1c] sm:$0xf]
      %v5537 = vld [vmem:[%s5528 + $0x20] sm:$0xf]
      %v5538 = vld [vmem:[%s5528 + $0x24] sm:$0xf]
      %v5539 = vld [vmem:[%s5528 + $0x28] sm:$0xf]
      %v5540 = vld [vmem:[%s5528 + $0x2c] sm:$0xf]
      %v5541 = vld [vmem:[%s5528 + $0x30] sm:$0xf]
      %v5542 = vld [vmem:[%s5528 + $0x34] sm:$0xf]
      %v5543 = vld [vmem:[%s5528 + $0x38] sm:$0xf]
      %v5544 = vld [vmem:[%s5528 + $0x3c] sm:$0xf]
      %v5577 = vunpack.c.l.b16 %v5496
      %v5578 = vunpack.c.l.b16 %v5497
      %v5579 = vunpack.c.l.b16 %v5498
      %v5580 = vunpack.c.l.b16 %v5499
      %v5581 = vunpack.c.l.b16 %v5500
      %v5582 = vunpack.c.l.b16 %v5501
      %v5583 = vunpack.c.l.b16 %v5502
      %v5584 = vunpack.c.l.b16 %v5503
      %v5585 = vunpack.c.l.b16 %v5504
      %v5586 = vunpack.c.l.b16 %v5505
      %v5587 = vunpack.c.l.b16 %v5506
      %v5588 = vunpack.c.l.b16 %v5507
      %v5589 = vunpack.c.l.b16 %v5508
      %v5590 = vunpack.c.l.b16 %v5509
      %v5591 = vunpack.c.l.b16 %v5510
      %v5592 = vunpack.c.l.b16 %v5511
      %v5593 = vunpack.c.l.b16 %v5512
      %v5594 = vunpack.c.l.b16 %v5513
      %v5595 = vunpack.c.l.b16 %v5514
      %v5596 = vunpack.c.l.b16 %v5515
      %v5597 = vunpack.c.l.b16 %v5516
      %v5598 = vunpack.c.l.b16 %v5517
      %v5599 = vunpack.c.l.b16 %v5518
      %v5600 = vunpack.c.l.b16 %v5519
      %v5601 = vunpack.c.l.b16 %v5520
      %v5602 = vunpack.c.l.b16 %v5521
      %v5603 = vunpack.c.l.b16 %v5522
      %v5604 = vunpack.c.l.b16 %v5523
      %v5605 = vunpack.c.l.b16 %v5524
      %v5606 = vunpack.c.l.b16 %v5525
      %v5607 = vunpack.c.l.b16 %v5526
      %v5608 = vunpack.c.l.b16 %v5527
      %v5609 = vpack.c.b16 %v5578, %v5577
      %v5610 = vpack.c.b16 %v5580, %v5579
      %v5611 = vpack.c.b16 %v5582, %v5581
      %v5612 = vpack.c.b16 %v5584, %v5583
      %v5613 = vpack.c.b16 %v5586, %v5585
      %v5614 = vpack.c.b16 %v5588, %v5587
      %v5615 = vpack.c.b16 %v5590, %v5589
      %v5616 = vpack.c.b16 %v5592, %v5591
      %v5617 = vpack.c.b16 %v5594, %v5593
      %v5618 = vpack.c.b16 %v5596, %v5595
      %v5619 = vpack.c.b16 %v5598, %v5597
      %v5620 = vpack.c.b16 %v5600, %v5599
      %v5621 = vpack.c.b16 %v5602, %v5601
      %v5622 = vpack.c.b16 %v5604, %v5603
      %v5623 = vpack.c.b16 %v5606, %v5605
      %v5624 = vpack.c.b16 %v5608, %v5607
      %v5657 = vunpack.c.l.b16 %v5529
      %v5658 = vunpack.c.l.b16 %v5530
      %v5659 = vunpack.c.l.b16 %v5531
      %v5660 = vunpack.c.l.b16 %v5532
      %v5661 = vunpack.c.l.b16 %v5533
      %v5662 = vunpack.c.l.b16 %v5534
      %v5663 = vunpack.c.l.b16 %v5535
      %v5664 = vunpack.c.l.b16 %v5536
      %v5665 = vunpack.c.l.b16 %v5537
      %v5666 = vunpack.c.l.b16 %v5538
      %v5667 = vunpack.c.l.b16 %v5539
      %v5668 = vunpack.c.l.b16 %v5540
      %v5669 = vunpack.c.l.b16 %v5541
      %v5670 = vunpack.c.l.b16 %v5542
      %v5671 = vunpack.c.l.b16 %v5543
      %v5672 = vunpack.c.l.b16 %v5544
      %v5673 = vpack.c.b16 %v5658, %v5657
      %v5674 = vpack.c.b16 %v5660, %v5659
      %v5675 = vpack.c.b16 %v5662, %v5661
      %v5676 = vpack.c.b16 %v5664, %v5663
      %v5677 = vpack.c.b16 %v5666, %v5665
      %v5678 = vpack.c.b16 %v5668, %v5667
      %v5679 = vpack.c.b16 %v5670, %v5669
      %v5680 = vpack.c.b16 %v5672, %v5671
      %5689 = vmatpush.bf16.msra.mxu0 %v5680
      %5690 = vmatpush.bf16.msra.mxu0 %v5679
      %5691 = vmatpush.bf16.msra.mxu0 %v5678
      %5692 = vmatpush.bf16.msra.mxu0 %v5677
      %5693 = vmatpush.bf16.msra.mxu0 %v5676
      %5694 = vmatpush.bf16.msra.mxu0 %v5675
      %5695 = vmatpush.bf16.msra.mxu0 %v5674
      %5696 = vmatpush.bf16.msra.mxu0 %v5673
      %5697 = vmatmul.bf16.gmra.mxu0 %v5609
      %v5698 = vpop.f32.mrf.mxu0
      %v5699 = vadd.f32 0.0, %v5698
      %v5700 = vpop.f32.mrf.mxu0
      %v5701 = vadd.f32 0.0, %v5700
      %5702 = vmatmul.bf16.gmra.mxu0 %v5610
      %v5703 = vpop.f32.mrf.mxu0
      %v5704 = vadd.f32 0.0, %v5703
      %v5705 = vpop.f32.mrf.mxu0
      %v5706 = vadd.f32 0.0, %v5705
      %5707 = vmatmul.bf16.gmra.mxu0 %v5611
      %v5708 = vpop.f32.mrf.mxu0
      %v5709 = vadd.f32 0.0, %v5708
      %v5710 = vpop.f32.mrf.mxu0
      %v5711 = vadd.f32 0.0, %v5710
      %5712 = vmatmul.bf16.gmra.mxu0 %v5612
      %v5713 = vpop.f32.mrf.mxu0
      %v5714 = vadd.f32 0.0, %v5713
      %v5715 = vpop.f32.mrf.mxu0
      %v5716 = vadd.f32 0.0, %v5715
      %5717 = vmatmul.bf16.gmra.mxu0 %v5613
      %v5718 = vpop.f32.mrf.mxu0
      %v5719 = vadd.f32 0.0, %v5718
      %v5720 = vpop.f32.mrf.mxu0
      %v5721 = vadd.f32 0.0, %v5720
      %5722 = vmatmul.bf16.gmra.mxu0 %v5614
      %v5723 = vpop.f32.mrf.mxu0
      %v5724 = vadd.f32 0.0, %v5723
      %v5725 = vpop.f32.mrf.mxu0
      %v5726 = vadd.f32 0.0, %v5725
      %5727 = vmatmul.bf16.gmra.mxu0 %v5615
      %v5728 = vpop.f32.mrf.mxu0
      %v5729 = vadd.f32 0.0, %v5728
      %v5730 = vpop.f32.mrf.mxu0
      %v5731 = vadd.f32 0.0, %v5730
      %5732 = vmatmul.bf16.gmra.mxu0 %v5616
      %v5733 = vpop.f32.mrf.mxu0
      %v5734 = vadd.f32 0.0, %v5733
      %v5735 = vpop.f32.mrf.mxu0
      %v5736 = vadd.f32 0.0, %v5735
      %5737 = vmatmul.bf16.gmra.mxu0 %v5617
      %v5738 = vpop.f32.mrf.mxu0
      %v5739 = vadd.f32 0.0, %v5738
      %v5740 = vpop.f32.mrf.mxu0
      %v5741 = vadd.f32 0.0, %v5740
      %5742 = vmatmul.bf16.gmra.mxu0 %v5618
      %v5743 = vpop.f32.mrf.mxu0
      %v5744 = vadd.f32 0.0, %v5743
      %v5745 = vpop.f32.mrf.mxu0
      %v5746 = vadd.f32 0.0, %v5745
      %5747 = vmatmul.bf16.gmra.mxu0 %v5619
      %v5748 = vpop.f32.mrf.mxu0
      %v5749 = vadd.f32 0.0, %v5748
      %v5750 = vpop.f32.mrf.mxu0
      %v5751 = vadd.f32 0.0, %v5750
      %5752 = vmatmul.bf16.gmra.mxu0 %v5620
      %v5753 = vpop.f32.mrf.mxu0
      %v5754 = vadd.f32 0.0, %v5753
      %v5755 = vpop.f32.mrf.mxu0
      %v5756 = vadd.f32 0.0, %v5755
      %5757 = vmatmul.bf16.gmra.mxu0 %v5621
      %v5758 = vpop.f32.mrf.mxu0
      %v5759 = vadd.f32 0.0, %v5758
      %v5760 = vpop.f32.mrf.mxu0
      %v5761 = vadd.f32 0.0, %v5760
      %5762 = vmatmul.bf16.gmra.mxu0 %v5622
      %v5763 = vpop.f32.mrf.mxu0
      %v5764 = vadd.f32 0.0, %v5763
      %v5765 = vpop.f32.mrf.mxu0
      %v5766 = vadd.f32 0.0, %v5765
      %5767 = vmatmul.bf16.gmra.mxu0 %v5623
      %v5768 = vpop.f32.mrf.mxu0
      %v5769 = vadd.f32 0.0, %v5768
      %v5770 = vpop.f32.mrf.mxu0
      %v5771 = vadd.f32 0.0, %v5770
      %5772 = vmatmul.bf16.gmra.mxu0 %v5624
      %v5773 = vpop.f32.mrf.mxu0
      %v5774 = vadd.f32 0.0, %v5773
      %v5775 = vpop.f32.mrf.mxu0
      %v5776 = vadd.f32 0.0, %v5775
      %5777 = vdwg.mxu0
      %v5778 = vadd.f32 %v5416, %v5699
      %v5779 = vadd.f32 %v5418, %v5701
      %v5780 = vadd.f32 %v5421, %v5704
      %v5781 = vadd.f32 %v5423, %v5706
      %v5782 = vadd.f32 %v5426, %v5709
      %v5783 = vadd.f32 %v5428, %v5711
      %v5784 = vadd.f32 %v5431, %v5714
      %v5785 = vadd.f32 %v5433, %v5716
      %v5786 = vadd.f32 %v5436, %v5719
      %v5787 = vadd.f32 %v5438, %v5721
      %v5788 = vadd.f32 %v5441, %v5724
      %v5789 = vadd.f32 %v5443, %v5726
      %v5790 = vadd.f32 %v5446, %v5729
      %v5791 = vadd.f32 %v5448, %v5731
      %v5792 = vadd.f32 %v5451, %v5734
      %v5793 = vadd.f32 %v5453, %v5736
      %v5794 = vadd.f32 %v5456, %v5739
      %v5795 = vadd.f32 %v5458, %v5741
      %v5796 = vadd.f32 %v5461, %v5744
      %v5797 = vadd.f32 %v5463, %v5746
      %v5798 = vadd.f32 %v5466, %v5749
      %v5799 = vadd.f32 %v5468, %v5751
      %v5800 = vadd.f32 %v5471, %v5754
      %v5801 = vadd.f32 %v5473, %v5756
      %v5802 = vadd.f32 %v5476, %v5759
      %v5803 = vadd.f32 %v5478, %v5761
      %v5804 = vadd.f32 %v5481, %v5764
      %v5805 = vadd.f32 %v5483, %v5766
      %v5806 = vadd.f32 %v5486, %v5769
      %v5807 = vadd.f32 %v5488, %v5771
      %v5808 = vadd.f32 %v5491, %v5774
      %v5809 = vadd.f32 %v5493, %v5776
      %v5810 = vld [vmem:[%s5495] sm:$0xf]
      %v5811 = vld [vmem:[%s5495 + $0x4] sm:$0xf]
      %v5812 = vld [vmem:[%s5495 + $0x8] sm:$0x1]
      %v5813 = vld [vmem:[%s5495 + $0xc] sm:$0xf]
      %v5814 = vld [vmem:[%s5495 + $0x10] sm:$0xf]
      %v5815 = vld [vmem:[%s5495 + $0x14] sm:$0x1]
      %v5816 = vld [vmem:[%s5495 + $0x18] sm:$0xf]
      %v5817 = vld [vmem:[%s5495 + $0x1c] sm:$0xf]
      %v5818 = vld [vmem:[%s5495 + $0x20] sm:$0x1]
      %v5819 = vld [vmem:[%s5495 + $0x24] sm:$0xf]
      %v5820 = vld [vmem:[%s5495 + $0x28] sm:$0xf]
      %v5821 = vld [vmem:[%s5495 + $0x2c] sm:$0x1]
      %v5822 = vld [vmem:[%s5495 + $0x30] sm:$0xf]
      %v5823 = vld [vmem:[%s5495 + $0x34] sm:$0xf]
      %v5824 = vld [vmem:[%s5495 + $0x38] sm:$0x1]
      %v5825 = vld [vmem:[%s5495 + $0x3c] sm:$0xf]
      %v5826 = vld [vmem:[%s5495 + $0x40] sm:$0xf]
      %v5827 = vld [vmem:[%s5495 + $0x44] sm:$0x1]
      %v5828 = vld [vmem:[%s5495 + $0x48] sm:$0xf]
      %v5829 = vld [vmem:[%s5495 + $0x4c] sm:$0xf]
      %v5830 = vld [vmem:[%s5495 + $0x50] sm:$0x1]
      %v5831 = vld [vmem:[%s5495 + $0x54] sm:$0xf]
      %v5832 = vld [vmem:[%s5495 + $0x58] sm:$0xf]
      %v5833 = vld [vmem:[%s5495 + $0x5c] sm:$0x1]
      %v5834 = vld [vmem:[%s5495 + $0x60] sm:$0xf]
      %v5835 = vld [vmem:[%s5495 + $0x64] sm:$0xf]
      %v5836 = vld [vmem:[%s5495 + $0x68] sm:$0x1]
      %v5837 = vld [vmem:[%s5495 + $0x6c] sm:$0xf]
      %v5838 = vld [vmem:[%s5495 + $0x70] sm:$0xf]
      %v5839 = vld [vmem:[%s5495 + $0x74] sm:$0x1]
      %v5840 = vld [vmem:[%s5495 + $0x78] sm:$0xf]
      %v5841 = vld [vmem:[%s5495 + $0x7c] sm:$0xf]
      %v5842 = vld [vmem:[%s5495 + $0x80] sm:$0x1]
      %v5843 = vld [vmem:[%s5495 + $0x84] sm:$0xf]
      %v5844 = vld [vmem:[%s5495 + $0x88] sm:$0xf]
      %v5845 = vld [vmem:[%s5495 + $0x8c] sm:$0x1]
      %v5846 = vld [vmem:[%s5495 + $0x90] sm:$0xf]
      %v5847 = vld [vmem:[%s5495 + $0x94] sm:$0xf]
      %v5848 = vld [vmem:[%s5495 + $0x98] sm:$0x1]
      %v5849 = vld [vmem:[%s5495 + $0x9c] sm:$0xf]
      %v5850 = vld [vmem:[%s5495 + $0xa0] sm:$0xf]
      %v5851 = vld [vmem:[%s5495 + $0xa4] sm:$0x1]
      %v5852 = vld [vmem:[%s5495 + $0xa8] sm:$0xf]
      %v5853 = vld [vmem:[%s5495 + $0xac] sm:$0xf]
      %v5854 = vld [vmem:[%s5495 + $0xb0] sm:$0x1]
      %v5855 = vld [vmem:[%s5495 + $0xb4] sm:$0xf]
      %v5856 = vld [vmem:[%s5495 + $0xb8] sm:$0xf]
      %v5857 = vld [vmem:[%s5495 + $0xbc] sm:$0x1]
      %v5859 = vshrl.u32 %v5810, 16
      %v5861 = vrot.slane %v5859, 4
      %v5862 = vshll.u32 %v5810, 16
      %v5864 = vrot.slane %v5862, 5
      %v5865 = vor.u32 %v5861, %v5864
      %v5866 = vrot.slane %v5865, 4
      %v5868 = vshll.u32 %v5811, 16
      %v5870 = vrot.slane %v5868, 5
      %v5871 = vsel %vm414, %v5866, %v5870
      %v5872 = vshrl.u32 %v5811, 16
      %v5874 = vrot.slane %v5872, 4
      %v5875 = vor.u32 %v5874, %v5870
      %v5876 = vrot.slane %v5875, 4
      %v5878 = vshll.u32 %v5812, 16
      %v5880 = vrot.slane %v5878, 5
      %v5881 = vsel %vm414, %v5876, %v5880
      %v5883 = vshrl.u32 %v5813, 16
      %v5885 = vrot.slane %v5883, 4
      %v5886 = vshll.u32 %v5813, 16
      %v5888 = vrot.slane %v5886, 5
      %v5889 = vor.u32 %v5885, %v5888
      %v5890 = vrot.slane %v5889, 4
      %v5892 = vshll.u32 %v5814, 16
      %v5894 = vrot.slane %v5892, 5
      %v5895 = vsel %vm414, %v5890, %v5894
      %v5896 = vshrl.u32 %v5814, 16
      %v5898 = vrot.slane %v5896, 4
      %v5899 = vor.u32 %v5898, %v5894
      %v5900 = vrot.slane %v5899, 4
      %v5902 = vshll.u32 %v5815, 16
      %v5904 = vrot.slane %v5902, 5
      %v5905 = vsel %vm414, %v5900, %v5904
      %v5907 = vshrl.u32 %v5816, 16
      %v5909 = vrot.slane %v5907, 4
      %v5910 = vshll.u32 %v5816, 16
      %v5912 = vrot.slane %v5910, 5
      %v5913 = vor.u32 %v5909, %v5912
      %v5914 = vrot.slane %v5913, 4
      %v5916 = vshll.u32 %v5817, 16
      %v5918 = vrot.slane %v5916, 5
      %v5919 = vsel %vm414, %v5914, %v5918
      %v5920 = vshrl.u32 %v5817, 16
      %v5922 = vrot.slane %v5920, 4
      %v5923 = vor.u32 %v5922, %v5918
      %v5924 = vrot.slane %v5923, 4
      %v5926 = vshll.u32 %v5818, 16
      %v5928 = vrot.slane %v5926, 5
      %v5929 = vsel %vm414, %v5924, %v5928
      %v5931 = vshrl.u32 %v5819, 16
      %v5933 = vrot.slane %v5931, 4
      %v5934 = vshll.u32 %v5819, 16
      %v5936 = vrot.slane %v5934, 5
      %v5937 = vor.u32 %v5933, %v5936
      %v5938 = vrot.slane %v5937, 4
      %v5940 = vshll.u32 %v5820, 16
      %v5942 = vrot.slane %v5940, 5
      %v5943 = vsel %vm414, %v5938, %v5942
      %v5944 = vshrl.u32 %v5820, 16
      %v5946 = vrot.slane %v5944, 4
      %v5947 = vor.u32 %v5946, %v5942
      %v5948 = vrot.slane %v5947, 4
      %v5950 = vshll.u32 %v5821, 16
      %v5952 = vrot.slane %v5950, 5
      %v5953 = vsel %vm414, %v5948, %v5952
      %v5955 = vshrl.u32 %v5822, 16
      %v5957 = vrot.slane %v5955, 4
      %v5958 = vshll.u32 %v5822, 16
      %v5960 = vrot.slane %v5958, 5
      %v5961 = vor.u32 %v5957, %v5960
      %v5962 = vrot.slane %v5961, 4
      %v5964 = vshll.u32 %v5823, 16
      %v5966 = vrot.slane %v5964, 5
      %v5967 = vsel %vm414, %v5962, %v5966
      %v5968 = vshrl.u32 %v5823, 16
      %v5970 = vrot.slane %v5968, 4
      %v5971 = vor.u32 %v5970, %v5966
      %v5972 = vrot.slane %v5971, 4
      %v5974 = vshll.u32 %v5824, 16
      %v5976 = vrot.slane %v5974, 5
      %v5977 = vsel %vm414, %v5972, %v5976
      %v5979 = vshrl.u32 %v5825, 16
      %v5981 = vrot.slane %v5979, 4
      %v5982 = vshll.u32 %v5825, 16
      %v5984 = vrot.slane %v5982, 5
      %v5985 = vor.u32 %v5981, %v5984
      %v5986 = vrot.slane %v5985, 4
      %v5988 = vshll.u32 %v5826, 16
      %v5990 = vrot.slane %v5988, 5
      %v5991 = vsel %vm414, %v5986, %v5990
      %v5992 = vshrl.u32 %v5826, 16
      %v5994 = vrot.slane %v5992, 4
      %v5995 = vor.u32 %v5994, %v5990
      %v5996 = vrot.slane %v5995, 4
      %v5998 = vshll.u32 %v5827, 16
      %v6000 = vrot.slane %v5998, 5
      %v6001 = vsel %vm414, %v5996, %v6000
      %v6003 = vshrl.u32 %v5828, 16
      %v6005 = vrot.slane %v6003, 4
      %v6006 = vshll.u32 %v5828, 16
      %v6008 = vrot.slane %v6006, 5
      %v6009 = vor.u32 %v6005, %v6008
      %v6010 = vrot.slane %v6009, 4
      %v6012 = vshll.u32 %v5829, 16
      %v6014 = vrot.slane %v6012, 5
      %v6015 = vsel %vm414, %v6010, %v6014
      %v6016 = vshrl.u32 %v5829, 16
      %v6018 = vrot.slane %v6016, 4
      %v6019 = vor.u32 %v6018, %v6014
      %v6020 = vrot.slane %v6019, 4
      %v6022 = vshll.u32 %v5830, 16
      %v6024 = vrot.slane %v6022, 5
      %v6025 = vsel %vm414, %v6020, %v6024
      %v6027 = vshrl.u32 %v5831, 16
      %v6029 = vrot.slane %v6027, 4
      %v6030 = vshll.u32 %v5831, 16
      %v6032 = vrot.slane %v6030, 5
      %v6033 = vor.u32 %v6029, %v6032
      %v6034 = vrot.slane %v6033, 4
      %v6036 = vshll.u32 %v5832, 16
      %v6038 = vrot.slane %v6036, 5
      %v6039 = vsel %vm414, %v6034, %v6038
      %v6040 = vshrl.u32 %v5832, 16
      %v6042 = vrot.slane %v6040, 4
      %v6043 = vor.u32 %v6042, %v6038
      %v6044 = vrot.slane %v6043, 4
      %v6046 = vshll.u32 %v5833, 16
      %v6048 = vrot.slane %v6046, 5
      %v6049 = vsel %vm414, %v6044, %v6048
      %v6051 = vshrl.u32 %v5834, 16
      %v6053 = vrot.slane %v6051, 4
      %v6054 = vshll.u32 %v5834, 16
      %v6056 = vrot.slane %v6054, 5
      %v6057 = vor.u32 %v6053, %v6056
      %v6058 = vrot.slane %v6057, 4
      %v6060 = vshll.u32 %v5835, 16
      %v6062 = vrot.slane %v6060, 5
      %v6063 = vsel %vm414, %v6058, %v6062
      %v6064 = vshrl.u32 %v5835, 16
      %v6066 = vrot.slane %v6064, 4
      %v6067 = vor.u32 %v6066, %v6062
      %v6068 = vrot.slane %v6067, 4
      %v6070 = vshll.u32 %v5836, 16
      %v6072 = vrot.slane %v6070, 5
      %v6073 = vsel %vm414, %v6068, %v6072
      %v6075 = vshrl.u32 %v5837, 16
      %v6077 = vrot.slane %v6075, 4
      %v6078 = vshll.u32 %v5837, 16
      %v6080 = vrot.slane %v6078, 5
      %v6081 = vor.u32 %v6077, %v6080
      %v6082 = vrot.slane %v6081, 4
      %v6084 = vshll.u32 %v5838, 16
      %v6086 = vrot.slane %v6084, 5
      %v6087 = vsel %vm414, %v6082, %v6086
      %v6088 = vshrl.u32 %v5838, 16
      %v6090 = vrot.slane %v6088, 4
      %v6091 = vor.u32 %v6090, %v6086
      %v6092 = vrot.slane %v6091, 4
      %v6094 = vshll.u32 %v5839, 16
      %v6096 = vrot.slane %v6094, 5
      %v6097 = vsel %vm414, %v6092, %v6096
      %v6099 = vshrl.u32 %v5840, 16
      %v6101 = vrot.slane %v6099, 4
      %v6102 = vshll.u32 %v5840, 16
      %v6104 = vrot.slane %v6102, 5
      %v6105 = vor.u32 %v6101, %v6104
      %v6106 = vrot.slane %v6105, 4
      %v6108 = vshll.u32 %v5841, 16
      %v6110 = vrot.slane %v6108, 5
      %v6111 = vsel %vm414, %v6106, %v6110
      %v6112 = vshrl.u32 %v5841, 16
      %v6114 = vrot.slane %v6112, 4
      %v6115 = vor.u32 %v6114, %v6110
      %v6116 = vrot.slane %v6115, 4
      %v6118 = vshll.u32 %v5842, 16
      %v6120 = vrot.slane %v6118, 5
      %v6121 = vsel %vm414, %v6116, %v6120
      %v6123 = vshrl.u32 %v5843, 16
      %v6125 = vrot.slane %v6123, 4
      %v6126 = vshll.u32 %v5843, 16
      %v6128 = vrot.slane %v6126, 5
      %v6129 = vor.u32 %v6125, %v6128
      %v6130 = vrot.slane %v6129, 4
      %v6132 = vshll.u32 %v5844, 16
      %v6134 = vrot.slane %v6132, 5
      %v6135 = vsel %vm414, %v6130, %v6134
      %v6136 = vshrl.u32 %v5844, 16
      %v6138 = vrot.slane %v6136, 4
      %v6139 = vor.u32 %v6138, %v6134
      %v6140 = vrot.slane %v6139, 4
      %v6142 = vshll.u32 %v5845, 16
      %v6144 = vrot.slane %v6142, 5
      %v6145 = vsel %vm414, %v6140, %v6144
      %v6147 = vshrl.u32 %v5846, 16
      %v6149 = vrot.slane %v6147, 4
      %v6150 = vshll.u32 %v5846, 16
      %v6152 = vrot.slane %v6150, 5
      %v6153 = vor.u32 %v6149, %v6152
      %v6154 = vrot.slane %v6153, 4
      %v6156 = vshll.u32 %v5847, 16
      %v6158 = vrot.slane %v6156, 5
      %v6159 = vsel %vm414, %v6154, %v6158
      %v6160 = vshrl.u32 %v5847, 16
      %v6162 = vrot.slane %v6160, 4
      %v6163 = vor.u32 %v6162, %v6158
      %v6164 = vrot.slane %v6163, 4
      %v6166 = vshll.u32 %v5848, 16
      %v6168 = vrot.slane %v6166, 5
      %v6169 = vsel %vm414, %v6164, %v6168
      %v6171 = vshrl.u32 %v5849, 16
      %v6173 = vrot.slane %v6171, 4
      %v6174 = vshll.u32 %v5849, 16
      %v6176 = vrot.slane %v6174, 5
      %v6177 = vor.u32 %v6173, %v6176
      %v6178 = vrot.slane %v6177, 4
      %v6180 = vshll.u32 %v5850, 16
      %v6182 = vrot.slane %v6180, 5
      %v6183 = vsel %vm414, %v6178, %v6182
      %v6184 = vshrl.u32 %v5850, 16
      %v6186 = vrot.slane %v6184, 4
      %v6187 = vor.u32 %v6186, %v6182
      %v6188 = vrot.slane %v6187, 4
      %v6190 = vshll.u32 %v5851, 16
      %v6192 = vrot.slane %v6190, 5
      %v6193 = vsel %vm414, %v6188, %v6192
      %v6195 = vshrl.u32 %v5852, 16
      %v6197 = vrot.slane %v6195, 4
      %v6198 = vshll.u32 %v5852, 16
      %v6200 = vrot.slane %v6198, 5
      %v6201 = vor.u32 %v6197, %v6200
      %v6202 = vrot.slane %v6201, 4
      %v6204 = vshll.u32 %v5853, 16
      %v6206 = vrot.slane %v6204, 5
      %v6207 = vsel %vm414, %v6202, %v6206
      %v6208 = vshrl.u32 %v5853, 16
      %v6210 = vrot.slane %v6208, 4
      %v6211 = vor.u32 %v6210, %v6206
      %v6212 = vrot.slane %v6211, 4
      %v6214 = vshll.u32 %v5854, 16
      %v6216 = vrot.slane %v6214, 5
      %v6217 = vsel %vm414, %v6212, %v6216
      %v6219 = vshrl.u32 %v5855, 16
      %v6221 = vrot.slane %v6219, 4
      %v6222 = vshll.u32 %v5855, 16
      %v6224 = vrot.slane %v6222, 5
      %v6225 = vor.u32 %v6221, %v6224
      %v6226 = vrot.slane %v6225, 4
      %v6228 = vshll.u32 %v5856, 16
      %v6230 = vrot.slane %v6228, 5
      %v6231 = vsel %vm414, %v6226, %v6230
      %v6232 = vshrl.u32 %v5856, 16
      %v6234 = vrot.slane %v6232, 4
      %v6235 = vor.u32 %v6234, %v6230
      %v6236 = vrot.slane %v6235, 4
      %v6238 = vshll.u32 %v5857, 16
      %v6240 = vrot.slane %v6238, 5
      %v6241 = vsel %vm414, %v6236, %v6240
      %s6242 = scalar_lea.vmem %s209, 704
      %v6243 = vld [vmem:[%s6242] sm:$0xf]
      %v6244 = vld [vmem:[%s6242 + $0x4] sm:$0xf]
      %v6245 = vld [vmem:[%s6242 + $0x8] sm:$0xf]
      %v6246 = vld [vmem:[%s6242 + $0xc] sm:$0xf]
      %v6247 = vld [vmem:[%s6242 + $0x10] sm:$0xf]
      %v6248 = vld [vmem:[%s6242 + $0x14] sm:$0xf]
      %v6249 = vld [vmem:[%s6242 + $0x18] sm:$0xf]
      %v6250 = vld [vmem:[%s6242 + $0x1c] sm:$0xf]
      %v6251 = vld [vmem:[%s6242 + $0x20] sm:$0xf]
      %v6252 = vld [vmem:[%s6242 + $0x24] sm:$0xf]
      %v6253 = vld [vmem:[%s6242 + $0x28] sm:$0xf]
      %v6254 = vld [vmem:[%s6242 + $0x2c] sm:$0xf]
      %v6255 = vld [vmem:[%s6242 + $0x30] sm:$0xf]
      %v6256 = vld [vmem:[%s6242 + $0x34] sm:$0xf]
      %v6257 = vld [vmem:[%s6242 + $0x38] sm:$0xf]
      %v6258 = vld [vmem:[%s6242 + $0x3c] sm:$0xf]
      %v6259 = vunpack.c.l.b16 %v5871
      %v6260 = vunpack.c.l.b16 %v5881
      %v6261 = vunpack.c.l.b16 %v5895
      %v6262 = vunpack.c.l.b16 %v5905
      %v6263 = vunpack.c.l.b16 %v5919
      %v6264 = vunpack.c.l.b16 %v5929
      %v6265 = vunpack.c.l.b16 %v5943
      %v6266 = vunpack.c.l.b16 %v5953
      %v6267 = vunpack.c.l.b16 %v5967
      %v6268 = vunpack.c.l.b16 %v5977
      %v6269 = vunpack.c.l.b16 %v5991
      %v6270 = vunpack.c.l.b16 %v6001
      %v6271 = vunpack.c.l.b16 %v6015
      %v6272 = vunpack.c.l.b16 %v6025
      %v6273 = vunpack.c.l.b16 %v6039
      %v6274 = vunpack.c.l.b16 %v6049
      %v6275 = vunpack.c.l.b16 %v6063
      %v6276 = vunpack.c.l.b16 %v6073
      %v6277 = vunpack.c.l.b16 %v6087
      %v6278 = vunpack.c.l.b16 %v6097
      %v6279 = vunpack.c.l.b16 %v6111
      %v6280 = vunpack.c.l.b16 %v6121
      %v6281 = vunpack.c.l.b16 %v6135
      %v6282 = vunpack.c.l.b16 %v6145
      %v6283 = vunpack.c.l.b16 %v6159
      %v6284 = vunpack.c.l.b16 %v6169
      %v6285 = vunpack.c.l.b16 %v6183
      %v6286 = vunpack.c.l.b16 %v6193
      %v6287 = vunpack.c.l.b16 %v6207
      %v6288 = vunpack.c.l.b16 %v6217
      %v6289 = vunpack.c.l.b16 %v6231
      %v6290 = vunpack.c.l.b16 %v6241
      %v6291 = vpack.c.b16 %v6260, %v6259
      %v6292 = vpack.c.b16 %v6262, %v6261
      %v6293 = vpack.c.b16 %v6264, %v6263
      %v6294 = vpack.c.b16 %v6266, %v6265
      %v6295 = vpack.c.b16 %v6268, %v6267
      %v6296 = vpack.c.b16 %v6270, %v6269
      %v6297 = vpack.c.b16 %v6272, %v6271
      %v6298 = vpack.c.b16 %v6274, %v6273
      %v6299 = vpack.c.b16 %v6276, %v6275
      %v6300 = vpack.c.b16 %v6278, %v6277
      %v6301 = vpack.c.b16 %v6280, %v6279
      %v6302 = vpack.c.b16 %v6282, %v6281
      %v6303 = vpack.c.b16 %v6284, %v6283
      %v6304 = vpack.c.b16 %v6286, %v6285
      %v6305 = vpack.c.b16 %v6288, %v6287
      %v6306 = vpack.c.b16 %v6290, %v6289
      %v6339 = vunpack.c.l.b16 %v6243
      %v6340 = vunpack.c.l.b16 %v6244
      %v6341 = vunpack.c.l.b16 %v6245
      %v6342 = vunpack.c.l.b16 %v6246
      %v6343 = vunpack.c.l.b16 %v6247
      %v6344 = vunpack.c.l.b16 %v6248
      %v6345 = vunpack.c.l.b16 %v6249
      %v6346 = vunpack.c.l.b16 %v6250
      %v6347 = vunpack.c.l.b16 %v6251
      %v6348 = vunpack.c.l.b16 %v6252
      %v6349 = vunpack.c.l.b16 %v6253
      %v6350 = vunpack.c.l.b16 %v6254
      %v6351 = vunpack.c.l.b16 %v6255
      %v6352 = vunpack.c.l.b16 %v6256
      %v6353 = vunpack.c.l.b16 %v6257
      %v6354 = vunpack.c.l.b16 %v6258
      %v6355 = vpack.c.b16 %v6340, %v6339
      %v6356 = vpack.c.b16 %v6342, %v6341
      %v6357 = vpack.c.b16 %v6344, %v6343
      %v6358 = vpack.c.b16 %v6346, %v6345
      %v6359 = vpack.c.b16 %v6348, %v6347
      %v6360 = vpack.c.b16 %v6350, %v6349
      %v6361 = vpack.c.b16 %v6352, %v6351
      %v6362 = vpack.c.b16 %v6354, %v6353
      %6371 = vmatpush.bf16.msra.mxu0 %v6362
      %6372 = vmatpush.bf16.msra.mxu0 %v6361
      %6373 = vmatpush.bf16.msra.mxu0 %v6360
      %6374 = vmatpush.bf16.msra.mxu0 %v6359
      %6375 = vmatpush.bf16.msra.mxu0 %v6358
      %6376 = vmatpush.bf16.msra.mxu0 %v6357
      %6377 = vmatpush.bf16.msra.mxu0 %v6356
      %6378 = vmatpush.bf16.msra.mxu0 %v6355
      %6379 = vmatmul.bf16.gmra.mxu0 %v6291
      %v6380 = vpop.f32.mrf.mxu0
      %v6381 = vadd.f32 0.0, %v6380
      %v6382 = vpop.f32.mrf.mxu0
      %v6383 = vadd.f32 0.0, %v6382
      %6384 = vmatmul.bf16.gmra.mxu0 %v6292
      %v6385 = vpop.f32.mrf.mxu0
      %v6386 = vadd.f32 0.0, %v6385
      %v6387 = vpop.f32.mrf.mxu0
      %v6388 = vadd.f32 0.0, %v6387
      %6389 = vmatmul.bf16.gmra.mxu0 %v6293
      %v6390 = vpop.f32.mrf.mxu0
      %v6391 = vadd.f32 0.0, %v6390
      %v6392 = vpop.f32.mrf.mxu0
      %v6393 = vadd.f32 0.0, %v6392
      %6394 = vmatmul.bf16.gmra.mxu0 %v6294
      %v6395 = vpop.f32.mrf.mxu0
      %v6396 = vadd.f32 0.0, %v6395
      %v6397 = vpop.f32.mrf.mxu0
      %v6398 = vadd.f32 0.0, %v6397
      %6399 = vmatmul.bf16.gmra.mxu0 %v6295
      %v6400 = vpop.f32.mrf.mxu0
      %v6401 = vadd.f32 0.0, %v6400
      %v6402 = vpop.f32.mrf.mxu0
      %v6403 = vadd.f32 0.0, %v6402
      %6404 = vmatmul.bf16.gmra.mxu0 %v6296
      %v6405 = vpop.f32.mrf.mxu0
      %v6406 = vadd.f32 0.0, %v6405
      %v6407 = vpop.f32.mrf.mxu0
      %v6408 = vadd.f32 0.0, %v6407
      %6409 = vmatmul.bf16.gmra.mxu0 %v6297
      %v6410 = vpop.f32.mrf.mxu0
      %v6411 = vadd.f32 0.0, %v6410
      %v6412 = vpop.f32.mrf.mxu0
      %v6413 = vadd.f32 0.0, %v6412
      %6414 = vmatmul.bf16.gmra.mxu0 %v6298
      %v6415 = vpop.f32.mrf.mxu0
      %v6416 = vadd.f32 0.0, %v6415
      %v6417 = vpop.f32.mrf.mxu0
      %v6418 = vadd.f32 0.0, %v6417
      %6419 = vmatmul.bf16.gmra.mxu0 %v6299
      %v6420 = vpop.f32.mrf.mxu0
      %v6421 = vadd.f32 0.0, %v6420
      %v6422 = vpop.f32.mrf.mxu0
      %v6423 = vadd.f32 0.0, %v6422
      %6424 = vmatmul.bf16.gmra.mxu0 %v6300
      %v6425 = vpop.f32.mrf.mxu0
      %v6426 = vadd.f32 0.0, %v6425
      %v6427 = vpop.f32.mrf.mxu0
      %v6428 = vadd.f32 0.0, %v6427
      %6429 = vmatmul.bf16.gmra.mxu0 %v6301
      %v6430 = vpop.f32.mrf.mxu0
      %v6431 = vadd.f32 0.0, %v6430
      %v6432 = vpop.f32.mrf.mxu0
      %v6433 = vadd.f32 0.0, %v6432
      %6434 = vmatmul.bf16.gmra.mxu0 %v6302
      %v6435 = vpop.f32.mrf.mxu0
      %v6436 = vadd.f32 0.0, %v6435
      %v6437 = vpop.f32.mrf.mxu0
      %v6438 = vadd.f32 0.0, %v6437
      %6439 = vmatmul.bf16.gmra.mxu0 %v6303
      %v6440 = vpop.f32.mrf.mxu0
      %v6441 = vadd.f32 0.0, %v6440
      %v6442 = vpop.f32.mrf.mxu0
      %v6443 = vadd.f32 0.0, %v6442
      %6444 = vmatmul.bf16.gmra.mxu0 %v6304
      %v6445 = vpop.f32.mrf.mxu0
      %v6446 = vadd.f32 0.0, %v6445
      %v6447 = vpop.f32.mrf.mxu0
      %v6448 = vadd.f32 0.0, %v6447
      %6449 = vmatmul.bf16.gmra.mxu0 %v6305
      %v6450 = vpop.f32.mrf.mxu0
      %v6451 = vadd.f32 0.0, %v6450
      %v6452 = vpop.f32.mrf.mxu0
      %v6453 = vadd.f32 0.0, %v6452
      %6454 = vmatmul.bf16.gmra.mxu0 %v6306
      %v6455 = vpop.f32.mrf.mxu0
      %v6456 = vadd.f32 0.0, %v6455
      %v6457 = vpop.f32.mrf.mxu0
      %v6458 = vadd.f32 0.0, %v6457
      %6459 = vdwg.mxu0
      %v6460 = vadd.f32 %v5778, %v6381
      %v6461 = vadd.f32 %v5779, %v6383
      %v6462 = vadd.f32 %v5780, %v6386
      %v6463 = vadd.f32 %v5781, %v6388
      %v6464 = vadd.f32 %v5782, %v6391
      %v6465 = vadd.f32 %v5783, %v6393
      %v6466 = vadd.f32 %v5784, %v6396
      %v6467 = vadd.f32 %v5785, %v6398
      %v6468 = vadd.f32 %v5786, %v6401
      %v6469 = vadd.f32 %v5787, %v6403
      %v6470 = vadd.f32 %v5788, %v6406
      %v6471 = vadd.f32 %v5789, %v6408
      %v6472 = vadd.f32 %v5790, %v6411
      %v6473 = vadd.f32 %v5791, %v6413
      %v6474 = vadd.f32 %v5792, %v6416
      %v6475 = vadd.f32 %v5793, %v6418
      %v6476 = vadd.f32 %v5794, %v6421
      %v6477 = vadd.f32 %v5795, %v6423
      %v6478 = vadd.f32 %v5796, %v6426
      %v6479 = vadd.f32 %v5797, %v6428
      %v6480 = vadd.f32 %v5798, %v6431
      %v6481 = vadd.f32 %v5799, %v6433
      %v6482 = vadd.f32 %v5800, %v6436
      %v6483 = vadd.f32 %v5801, %v6438
      %v6484 = vadd.f32 %v5802, %v6441
      %v6485 = vadd.f32 %v5803, %v6443
      %v6486 = vadd.f32 %v5804, %v6446
      %v6487 = vadd.f32 %v5805, %v6448
      %v6488 = vadd.f32 %v5806, %v6451
      %v6489 = vadd.f32 %v5807, %v6453
      %v6490 = vadd.f32 %v5808, %v6456
      %v6491 = vadd.f32 %v5809, %v6458
      %s6492 = scalar_lea.vmem [#allocation2], 512
      %v6493 = vld [vmem:[%s6492] sm:$0xff]
      %v6494 = vld [vmem:[%s6492 + $0x8] sm:$0xff]
      %v6495 = vld [vmem:[%s6492 + $0x10] sm:$0xff]
      %v6496 = vld [vmem:[%s6492 + $0x18] sm:$0xff]
      %v6497 = vld [vmem:[%s6492 + $0x20] sm:$0xff]
      %v6498 = vld [vmem:[%s6492 + $0x28] sm:$0xff]
      %v6499 = vld [vmem:[%s6492 + $0x30] sm:$0xff]
      %v6500 = vld [vmem:[%s6492 + $0x38] sm:$0xff]
      %v6501 = vld [vmem:[%s6492 + $0x40] sm:$0xff]
      %v6502 = vld [vmem:[%s6492 + $0x48] sm:$0xff]
      %v6503 = vld [vmem:[%s6492 + $0x50] sm:$0xff]
      %v6504 = vld [vmem:[%s6492 + $0x58] sm:$0xff]
      %v6505 = vld [vmem:[%s6492 + $0x60] sm:$0xff]
      %v6506 = vld [vmem:[%s6492 + $0x68] sm:$0xff]
      %v6507 = vld [vmem:[%s6492 + $0x70] sm:$0xff]
      %v6508 = vld [vmem:[%s6492 + $0x78] sm:$0xff]
      %v6509 = vld [vmem:[%s6492 + $0x80] sm:$0xff]
      %v6510 = vld [vmem:[%s6492 + $0x88] sm:$0xff]
      %v6511 = vld [vmem:[%s6492 + $0x90] sm:$0xff]
      %v6512 = vld [vmem:[%s6492 + $0x98] sm:$0xff]
      %v6513 = vld [vmem:[%s6492 + $0xa0] sm:$0xff]
      %v6514 = vld [vmem:[%s6492 + $0xa8] sm:$0xff]
      %v6515 = vld [vmem:[%s6492 + $0xb0] sm:$0xff]
      %v6516 = vld [vmem:[%s6492 + $0xb8] sm:$0xff]
      %v6517 = vld [vmem:[%s6492 + $0xc0] sm:$0xff]
      %v6518 = vld [vmem:[%s6492 + $0xc8] sm:$0xff]
      %v6519 = vld [vmem:[%s6492 + $0xd0] sm:$0xff]
      %v6520 = vld [vmem:[%s6492 + $0xd8] sm:$0xff]
      %v6521 = vld [vmem:[%s6492 + $0xe0] sm:$0xff]
      %v6522 = vld [vmem:[%s6492 + $0xe8] sm:$0xff]
      %v6523 = vld [vmem:[%s6492 + $0xf0] sm:$0xff]
      %v6524 = vld [vmem:[%s6492 + $0xf8] sm:$0xff]
      %v6525 = vadd.f32 %v6493, %v6460
      %v6526 = vadd.f32 %v6494, %v6461
      %v6527 = vadd.f32 %v6495, %v6462
      %v6528 = vadd.f32 %v6496, %v6463
      %v6529 = vadd.f32 %v6497, %v6464
      %v6530 = vadd.f32 %v6498, %v6465
      %v6531 = vadd.f32 %v6499, %v6466
      %v6532 = vadd.f32 %v6500, %v6467
      %v6533 = vadd.f32 %v6501, %v6468
      %v6534 = vadd.f32 %v6502, %v6469
      %v6535 = vadd.f32 %v6503, %v6470
      %v6536 = vadd.f32 %v6504, %v6471
      %v6537 = vadd.f32 %v6505, %v6472
      %v6538 = vadd.f32 %v6506, %v6473
      %v6539 = vadd.f32 %v6507, %v6474
      %v6540 = vadd.f32 %v6508, %v6475
      %v6541 = vadd.f32 %v6509, %v6476
      %v6542 = vadd.f32 %v6510, %v6477
      %v6543 = vadd.f32 %v6511, %v6478
      %v6544 = vadd.f32 %v6512, %v6479
      %v6545 = vadd.f32 %v6513, %v6480
      %v6546 = vadd.f32 %v6514, %v6481
      %v6547 = vadd.f32 %v6515, %v6482
      %v6548 = vadd.f32 %v6516, %v6483
      %v6549 = vadd.f32 %v6517, %v6484
      %v6550 = vadd.f32 %v6518, %v6485
      %v6551 = vadd.f32 %v6519, %v6486
      %v6552 = vadd.f32 %v6520, %v6487
      %v6553 = vadd.f32 %v6521, %v6488
      %v6554 = vadd.f32 %v6522, %v6489
      %v6555 = vadd.f32 %v6523, %v6490
      %v6556 = vadd.f32 %v6524, %v6491
      %6557 = vst [vmem:[%s6492] sm:$0xff] %v6525
      %6558 = vst [vmem:[%s6492 + $0x8] sm:$0xff] %v6526
      %6559 = vst [vmem:[%s6492 + $0x10] sm:$0xff] %v6527
      %6560 = vst [vmem:[%s6492 + $0x18] sm:$0xff] %v6528
      %6561 = vst [vmem:[%s6492 + $0x20] sm:$0xff] %v6529
      %6562 = vst [vmem:[%s6492 + $0x28] sm:$0xff] %v6530
      %6563 = vst [vmem:[%s6492 + $0x30] sm:$0xff] %v6531
      %6564 = vst [vmem:[%s6492 + $0x38] sm:$0xff] %v6532
      %6565 = vst [vmem:[%s6492 + $0x40] sm:$0xff] %v6533
      %6566 = vst [vmem:[%s6492 + $0x48] sm:$0xff] %v6534
      %6567 = vst [vmem:[%s6492 + $0x50] sm:$0xff] %v6535
      %6568 = vst [vmem:[%s6492 + $0x58] sm:$0xff] %v6536
      %6569 = vst [vmem:[%s6492 + $0x60] sm:$0xff] %v6537
      %6570 = vst [vmem:[%s6492 + $0x68] sm:$0xff] %v6538
      %6571 = vst [vmem:[%s6492 + $0x70] sm:$0xff] %v6539
      %6572 = vst [vmem:[%s6492 + $0x78] sm:$0xff] %v6540
      %6573 = vst [vmem:[%s6492 + $0x80] sm:$0xff] %v6541
      %6574 = vst [vmem:[%s6492 + $0x88] sm:$0xff] %v6542
      %6575 = vst [vmem:[%s6492 + $0x90] sm:$0xff] %v6543
      %6576 = vst [vmem:[%s6492 + $0x98] sm:$0xff] %v6544
      %6577 = vst [vmem:[%s6492 + $0xa0] sm:$0xff] %v6545
      %6578 = vst [vmem:[%s6492 + $0xa8] sm:$0xff] %v6546
      %6579 = vst [vmem:[%s6492 + $0xb0] sm:$0xff] %v6547
      %6580 = vst [vmem:[%s6492 + $0xb8] sm:$0xff] %v6548
      %6581 = vst [vmem:[%s6492 + $0xc0] sm:$0xff] %v6549
      %6582 = vst [vmem:[%s6492 + $0xc8] sm:$0xff] %v6550
      %6583 = vst [vmem:[%s6492 + $0xd0] sm:$0xff] %v6551
      %6584 = vst [vmem:[%s6492 + $0xd8] sm:$0xff] %v6552
      %6585 = vst [vmem:[%s6492 + $0xe0] sm:$0xff] %v6553
      %6586 = vst [vmem:[%s6492 + $0xe8] sm:$0xff] %v6554
      %6587 = vst [vmem:[%s6492 + $0xf0] sm:$0xff] %v6555
      %6588 = vst [vmem:[%s6492 + $0xf8] sm:$0xff] %v6556
      %v6589 = vld [vmem:[%s1250] sm:$0xf]
      %v6590 = vld [vmem:[%s1250 + $0x4] sm:$0xf]
      %v6591 = vld [vmem:[%s1250 + $0x8] sm:$0x1]
      %v6592 = vld [vmem:[%s1250 + $0xc] sm:$0xf]
      %v6593 = vld [vmem:[%s1250 + $0x10] sm:$0xf]
      %v6594 = vld [vmem:[%s1250 + $0x14] sm:$0x1]
      %v6595 = vld [vmem:[%s1250 + $0x18] sm:$0xf]
      %v6596 = vld [vmem:[%s1250 + $0x1c] sm:$0xf]
      %v6597 = vld [vmem:[%s1250 + $0x20] sm:$0x1]
      %v6598 = vld [vmem:[%s1250 + $0x24] sm:$0xf]
      %v6599 = vld [vmem:[%s1250 + $0x28] sm:$0xf]
      %v6600 = vld [vmem:[%s1250 + $0x2c] sm:$0x1]
      %v6601 = vld [vmem:[%s1250 + $0x30] sm:$0xf]
      %v6602 = vld [vmem:[%s1250 + $0x34] sm:$0xf]
      %v6603 = vld [vmem:[%s1250 + $0x38] sm:$0x1]
      %v6604 = vld [vmem:[%s1250 + $0x3c] sm:$0xf]
      %v6605 = vld [vmem:[%s1250 + $0x40] sm:$0xf]
      %v6606 = vld [vmem:[%s1250 + $0x44] sm:$0x1]
      %v6607 = vld [vmem:[%s1250 + $0x48] sm:$0xf]
      %v6608 = vld [vmem:[%s1250 + $0x4c] sm:$0xf]
      %v6609 = vld [vmem:[%s1250 + $0x50] sm:$0x1]
      %v6610 = vld [vmem:[%s1250 + $0x54] sm:$0xf]
      %v6611 = vld [vmem:[%s1250 + $0x58] sm:$0xf]
      %v6612 = vld [vmem:[%s1250 + $0x5c] sm:$0x1]
      %v6613 = vld [vmem:[%s1250 + $0x60] sm:$0xf]
      %v6614 = vld [vmem:[%s1250 + $0x64] sm:$0xf]
      %v6615 = vld [vmem:[%s1250 + $0x68] sm:$0x1]
      %v6616 = vld [vmem:[%s1250 + $0x6c] sm:$0xf]
      %v6617 = vld [vmem:[%s1250 + $0x70] sm:$0xf]
      %v6618 = vld [vmem:[%s1250 + $0x74] sm:$0x1]
      %v6619 = vld [vmem:[%s1250 + $0x78] sm:$0xf]
      %v6620 = vld [vmem:[%s1250 + $0x7c] sm:$0xf]
      %v6621 = vld [vmem:[%s1250 + $0x80] sm:$0x1]
      %v6622 = vld [vmem:[%s1250 + $0x84] sm:$0xf]
      %v6623 = vld [vmem:[%s1250 + $0x88] sm:$0xf]
      %v6624 = vld [vmem:[%s1250 + $0x8c] sm:$0x1]
      %v6625 = vld [vmem:[%s1250 + $0x90] sm:$0xf]
      %v6626 = vld [vmem:[%s1250 + $0x94] sm:$0xf]
      %v6627 = vld [vmem:[%s1250 + $0x98] sm:$0x1]
      %v6628 = vld [vmem:[%s1250 + $0x9c] sm:$0xf]
      %v6629 = vld [vmem:[%s1250 + $0xa0] sm:$0xf]
      %v6630 = vld [vmem:[%s1250 + $0xa4] sm:$0x1]
      %v6631 = vld [vmem:[%s1250 + $0xa8] sm:$0xf]
      %v6632 = vld [vmem:[%s1250 + $0xac] sm:$0xf]
      %v6633 = vld [vmem:[%s1250 + $0xb0] sm:$0x1]
      %v6634 = vld [vmem:[%s1250 + $0xb4] sm:$0xf]
      %v6635 = vld [vmem:[%s1250 + $0xb8] sm:$0xf]
      %v6636 = vld [vmem:[%s1250 + $0xbc] sm:$0x1]
      %v6638 = vshrl.u32 %v6589, 16
      %v6640 = vrot.slane %v6638, 4
      %v6641 = vshll.u32 %v6589, 16
      %v6643 = vrot.slane %v6641, 5
      %v6644 = vor.u32 %v6640, %v6643
      %v6645 = vrot.slane %v6644, 4
      %v6647 = vshll.u32 %v6590, 16
      %v6649 = vrot.slane %v6647, 5
      %v6650 = vsel %vm414, %v6645, %v6649
      %v6651 = vshrl.u32 %v6590, 16
      %v6653 = vrot.slane %v6651, 4
      %v6654 = vor.u32 %v6653, %v6649
      %v6655 = vrot.slane %v6654, 4
      %v6657 = vshll.u32 %v6591, 16
      %v6659 = vrot.slane %v6657, 5
      %v6660 = vsel %vm414, %v6655, %v6659
      %v6662 = vshrl.u32 %v6592, 16
      %v6664 = vrot.slane %v6662, 4
      %v6665 = vshll.u32 %v6592, 16
      %v6667 = vrot.slane %v6665, 5
      %v6668 = vor.u32 %v6664, %v6667
      %v6669 = vrot.slane %v6668, 4
      %v6671 = vshll.u32 %v6593, 16
      %v6673 = vrot.slane %v6671, 5
      %v6674 = vsel %vm414, %v6669, %v6673
      %v6675 = vshrl.u32 %v6593, 16
      %v6677 = vrot.slane %v6675, 4
      %v6678 = vor.u32 %v6677, %v6673
      %v6679 = vrot.slane %v6678, 4
      %v6681 = vshll.u32 %v6594, 16
      %v6683 = vrot.slane %v6681, 5
      %v6684 = vsel %vm414, %v6679, %v6683
      %v6686 = vshrl.u32 %v6595, 16
      %v6688 = vrot.slane %v6686, 4
      %v6689 = vshll.u32 %v6595, 16
      %v6691 = vrot.slane %v6689, 5
      %v6692 = vor.u32 %v6688, %v6691
      %v6693 = vrot.slane %v6692, 4
      %v6695 = vshll.u32 %v6596, 16
      %v6697 = vrot.slane %v6695, 5
      %v6698 = vsel %vm414, %v6693, %v6697
      %v6699 = vshrl.u32 %v6596, 16
      %v6701 = vrot.slane %v6699, 4
      %v6702 = vor.u32 %v6701, %v6697
      %v6703 = vrot.slane %v6702, 4
      %v6705 = vshll.u32 %v6597, 16
      %v6707 = vrot.slane %v6705, 5
      %v6708 = vsel %vm414, %v6703, %v6707
      %v6710 = vshrl.u32 %v6598, 16
      %v6712 = vrot.slane %v6710, 4
      %v6713 = vshll.u32 %v6598, 16
      %v6715 = vrot.slane %v6713, 5
      %v6716 = vor.u32 %v6712, %v6715
      %v6717 = vrot.slane %v6716, 4
      %v6719 = vshll.u32 %v6599, 16
      %v6721 = vrot.slane %v6719, 5
      %v6722 = vsel %vm414, %v6717, %v6721
      %v6723 = vshrl.u32 %v6599, 16
      %v6725 = vrot.slane %v6723, 4
      %v6726 = vor.u32 %v6725, %v6721
      %v6727 = vrot.slane %v6726, 4
      %v6729 = vshll.u32 %v6600, 16
      %v6731 = vrot.slane %v6729, 5
      %v6732 = vsel %vm414, %v6727, %v6731
      %v6734 = vshrl.u32 %v6601, 16
      %v6736 = vrot.slane %v6734, 4
      %v6737 = vshll.u32 %v6601, 16
      %v6739 = vrot.slane %v6737, 5
      %v6740 = vor.u32 %v6736, %v6739
      %v6741 = vrot.slane %v6740, 4
      %v6743 = vshll.u32 %v6602, 16
      %v6745 = vrot.slane %v6743, 5
      %v6746 = vsel %vm414, %v6741, %v6745
      %v6747 = vshrl.u32 %v6602, 16
      %v6749 = vrot.slane %v6747, 4
      %v6750 = vor.u32 %v6749, %v6745
      %v6751 = vrot.slane %v6750, 4
      %v6753 = vshll.u32 %v6603, 16
      %v6755 = vrot.slane %v6753, 5
      %v6756 = vsel %vm414, %v6751, %v6755
      %v6758 = vshrl.u32 %v6604, 16
      %v6760 = vrot.slane %v6758, 4
      %v6761 = vshll.u32 %v6604, 16
      %v6763 = vrot.slane %v6761, 5
      %v6764 = vor.u32 %v6760, %v6763
      %v6765 = vrot.slane %v6764, 4
      %v6767 = vshll.u32 %v6605, 16
      %v6769 = vrot.slane %v6767, 5
      %v6770 = vsel %vm414, %v6765, %v6769
      %v6771 = vshrl.u32 %v6605, 16
      %v6773 = vrot.slane %v6771, 4
      %v6774 = vor.u32 %v6773, %v6769
      %v6775 = vrot.slane %v6774, 4
      %v6777 = vshll.u32 %v6606, 16
      %v6779 = vrot.slane %v6777, 5
      %v6780 = vsel %vm414, %v6775, %v6779
      %v6782 = vshrl.u32 %v6607, 16
      %v6784 = vrot.slane %v6782, 4
      %v6785 = vshll.u32 %v6607, 16
      %v6787 = vrot.slane %v6785, 5
      %v6788 = vor.u32 %v6784, %v6787
      %v6789 = vrot.slane %v6788, 4
      %v6791 = vshll.u32 %v6608, 16
      %v6793 = vrot.slane %v6791, 5
      %v6794 = vsel %vm414, %v6789, %v6793
      %v6795 = vshrl.u32 %v6608, 16
      %v6797 = vrot.slane %v6795, 4
      %v6798 = vor.u32 %v6797, %v6793
      %v6799 = vrot.slane %v6798, 4
      %v6801 = vshll.u32 %v6609, 16
      %v6803 = vrot.slane %v6801, 5
      %v6804 = vsel %vm414, %v6799, %v6803
      %v6806 = vshrl.u32 %v6610, 16
      %v6808 = vrot.slane %v6806, 4
      %v6809 = vshll.u32 %v6610, 16
      %v6811 = vrot.slane %v6809, 5
      %v6812 = vor.u32 %v6808, %v6811
      %v6813 = vrot.slane %v6812, 4
      %v6815 = vshll.u32 %v6611, 16
      %v6817 = vrot.slane %v6815, 5
      %v6818 = vsel %vm414, %v6813, %v6817
      %v6819 = vshrl.u32 %v6611, 16
      %v6821 = vrot.slane %v6819, 4
      %v6822 = vor.u32 %v6821, %v6817
      %v6823 = vrot.slane %v6822, 4
      %v6825 = vshll.u32 %v6612, 16
      %v6827 = vrot.slane %v6825, 5
      %v6828 = vsel %vm414, %v6823, %v6827
      %v6830 = vshrl.u32 %v6613, 16
      %v6832 = vrot.slane %v6830, 4
      %v6833 = vshll.u32 %v6613, 16
      %v6835 = vrot.slane %v6833, 5
      %v6836 = vor.u32 %v6832, %v6835
      %v6837 = vrot.slane %v6836, 4
      %v6839 = vshll.u32 %v6614, 16
      %v6841 = vrot.slane %v6839, 5
      %v6842 = vsel %vm414, %v6837, %v6841
      %v6843 = vshrl.u32 %v6614, 16
      %v6845 = vrot.slane %v6843, 4
      %v6846 = vor.u32 %v6845, %v6841
      %v6847 = vrot.slane %v6846, 4
      %v6849 = vshll.u32 %v6615, 16
      %v6851 = vrot.slane %v6849, 5
      %v6852 = vsel %vm414, %v6847, %v6851
      %v6854 = vshrl.u32 %v6616, 16
      %v6856 = vrot.slane %v6854, 4
      %v6857 = vshll.u32 %v6616, 16
      %v6859 = vrot.slane %v6857, 5
      %v6860 = vor.u32 %v6856, %v6859
      %v6861 = vrot.slane %v6860, 4
      %v6863 = vshll.u32 %v6617, 16
      %v6865 = vrot.slane %v6863, 5
      %v6866 = vsel %vm414, %v6861, %v6865
      %v6867 = vshrl.u32 %v6617, 16
      %v6869 = vrot.slane %v6867, 4
      %v6870 = vor.u32 %v6869, %v6865
      %v6871 = vrot.slane %v6870, 4
      %v6873 = vshll.u32 %v6618, 16
      %v6875 = vrot.slane %v6873, 5
      %v6876 = vsel %vm414, %v6871, %v6875
      %v6878 = vshrl.u32 %v6619, 16
      %v6880 = vrot.slane %v6878, 4
      %v6881 = vshll.u32 %v6619, 16
      %v6883 = vrot.slane %v6881, 5
      %v6884 = vor.u32 %v6880, %v6883
      %v6885 = vrot.slane %v6884, 4
      %v6887 = vshll.u32 %v6620, 16
      %v6889 = vrot.slane %v6887, 5
      %v6890 = vsel %vm414, %v6885, %v6889
      %v6891 = vshrl.u32 %v6620, 16
      %v6893 = vrot.slane %v6891, 4
      %v6894 = vor.u32 %v6893, %v6889
      %v6895 = vrot.slane %v6894, 4
      %v6897 = vshll.u32 %v6621, 16
      %v6899 = vrot.slane %v6897, 5
      %v6900 = vsel %vm414, %v6895, %v6899
      %v6902 = vshrl.u32 %v6622, 16
      %v6904 = vrot.slane %v6902, 4
      %v6905 = vshll.u32 %v6622, 16
      %v6907 = vrot.slane %v6905, 5
      %v6908 = vor.u32 %v6904, %v6907
      %v6909 = vrot.slane %v6908, 4
      %v6911 = vshll.u32 %v6623, 16
      %v6913 = vrot.slane %v6911, 5
      %v6914 = vsel %vm414, %v6909, %v6913
      %v6915 = vshrl.u32 %v6623, 16
      %v6917 = vrot.slane %v6915, 4
      %v6918 = vor.u32 %v6917, %v6913
      %v6919 = vrot.slane %v6918, 4
      %v6921 = vshll.u32 %v6624, 16
      %v6923 = vrot.slane %v6921, 5
      %v6924 = vsel %vm414, %v6919, %v6923
      %v6926 = vshrl.u32 %v6625, 16
      %v6928 = vrot.slane %v6926, 4
      %v6929 = vshll.u32 %v6625, 16
      %v6931 = vrot.slane %v6929, 5
      %v6932 = vor.u32 %v6928, %v6931
      %v6933 = vrot.slane %v6932, 4
      %v6935 = vshll.u32 %v6626, 16
      %v6937 = vrot.slane %v6935, 5
      %v6938 = vsel %vm414, %v6933, %v6937
      %v6939 = vshrl.u32 %v6626, 16
      %v6941 = vrot.slane %v6939, 4
      %v6942 = vor.u32 %v6941, %v6937
      %v6943 = vrot.slane %v6942, 4
      %v6945 = vshll.u32 %v6627, 16
      %v6947 = vrot.slane %v6945, 5
      %v6948 = vsel %vm414, %v6943, %v6947
      %v6950 = vshrl.u32 %v6628, 16
      %v6952 = vrot.slane %v6950, 4
      %v6953 = vshll.u32 %v6628, 16
      %v6955 = vrot.slane %v6953, 5
      %v6956 = vor.u32 %v6952, %v6955
      %v6957 = vrot.slane %v6956, 4
      %v6959 = vshll.u32 %v6629, 16
      %v6961 = vrot.slane %v6959, 5
      %v6962 = vsel %vm414, %v6957, %v6961
      %v6963 = vshrl.u32 %v6629, 16
      %v6965 = vrot.slane %v6963, 4
      %v6966 = vor.u32 %v6965, %v6961
      %v6967 = vrot.slane %v6966, 4
      %v6969 = vshll.u32 %v6630, 16
      %v6971 = vrot.slane %v6969, 5
      %v6972 = vsel %vm414, %v6967, %v6971
      %v6974 = vshrl.u32 %v6631, 16
      %v6976 = vrot.slane %v6974, 4
      %v6977 = vshll.u32 %v6631, 16
      %v6979 = vrot.slane %v6977, 5
      %v6980 = vor.u32 %v6976, %v6979
      %v6981 = vrot.slane %v6980, 4
      %v6983 = vshll.u32 %v6632, 16
      %v6985 = vrot.slane %v6983, 5
      %v6986 = vsel %vm414, %v6981, %v6985
      %v6987 = vshrl.u32 %v6632, 16
      %v6989 = vrot.slane %v6987, 4
      %v6990 = vor.u32 %v6989, %v6985
      %v6991 = vrot.slane %v6990, 4
      %v6993 = vshll.u32 %v6633, 16
      %v6995 = vrot.slane %v6993, 5
      %v6996 = vsel %vm414, %v6991, %v6995
      %v6998 = vshrl.u32 %v6634, 16
      %v7000 = vrot.slane %v6998, 4
      %v7001 = vshll.u32 %v6634, 16
      %v7003 = vrot.slane %v7001, 5
      %v7004 = vor.u32 %v7000, %v7003
      %v7005 = vrot.slane %v7004, 4
      %v7007 = vshll.u32 %v6635, 16
      %v7009 = vrot.slane %v7007, 5
      %v7010 = vsel %vm414, %v7005, %v7009
      %v7011 = vshrl.u32 %v6635, 16
      %v7013 = vrot.slane %v7011, 4
      %v7014 = vor.u32 %v7013, %v7009
      %v7015 = vrot.slane %v7014, 4
      %v7017 = vshll.u32 %v6636, 16
      %v7019 = vrot.slane %v7017, 5
      %v7020 = vsel %vm414, %v7015, %v7019
      %s7021 = scalar_lea.vmem %s209, 768
      %v7022 = vld [vmem:[%s7021] sm:$0xf]
      %v7023 = vld [vmem:[%s7021 + $0x4] sm:$0xf]
      %v7024 = vld [vmem:[%s7021 + $0x8] sm:$0xf]
      %v7025 = vld [vmem:[%s7021 + $0xc] sm:$0xf]
      %v7026 = vld [vmem:[%s7021 + $0x10] sm:$0xf]
      %v7027 = vld [vmem:[%s7021 + $0x14] sm:$0xf]
      %v7028 = vld [vmem:[%s7021 + $0x18] sm:$0xf]
      %v7029 = vld [vmem:[%s7021 + $0x1c] sm:$0xf]
      %v7030 = vld [vmem:[%s7021 + $0x20] sm:$0xf]
      %v7031 = vld [vmem:[%s7021 + $0x24] sm:$0xf]
      %v7032 = vld [vmem:[%s7021 + $0x28] sm:$0xf]
      %v7033 = vld [vmem:[%s7021 + $0x2c] sm:$0xf]
      %v7034 = vld [vmem:[%s7021 + $0x30] sm:$0xf]
      %v7035 = vld [vmem:[%s7021 + $0x34] sm:$0xf]
      %v7036 = vld [vmem:[%s7021 + $0x38] sm:$0xf]
      %v7037 = vld [vmem:[%s7021 + $0x3c] sm:$0xf]
      %v7038 = vld [vmem:[%s1250] sm:$0xe]
      %v7039 = vld [vmem:[%s1250 + $0xc] sm:$0xe]
      %v7040 = vld [vmem:[%s1250 + $0x18] sm:$0xe]
      %v7041 = vld [vmem:[%s1250 + $0x24] sm:$0xe]
      %v7042 = vld [vmem:[%s1250 + $0x30] sm:$0xe]
      %v7043 = vld [vmem:[%s1250 + $0x3c] sm:$0xe]
      %v7044 = vld [vmem:[%s1250 + $0x48] sm:$0xe]
      %v7045 = vld [vmem:[%s1250 + $0x54] sm:$0xe]
      %v7046 = vld [vmem:[%s1250 + $0x60] sm:$0xe]
      %v7047 = vld [vmem:[%s1250 + $0x6c] sm:$0xe]
      %v7048 = vld [vmem:[%s1250 + $0x78] sm:$0xe]
      %v7049 = vld [vmem:[%s1250 + $0x84] sm:$0xe]
      %v7050 = vld [vmem:[%s1250 + $0x90] sm:$0xe]
      %v7051 = vld [vmem:[%s1250 + $0x9c] sm:$0xe]
      %v7052 = vld [vmem:[%s1250 + $0xa8] sm:$0xe]
      %v7053 = vld [vmem:[%s1250 + $0xb4] sm:$0xe]
      %v7102 = vrot.slane %v7038, 5
      %v7103 = vrot.slane %v7102, 4
      %v7104 = vrot.slane %v6590, 5
      %v7105 = vsel %vm2858, %v7103, %v7104
      %v7106 = vrot.slane %v7104, 4
      %v7107 = vrot.slane %v6591, 5
      %v7108 = vsel %vm2858, %v7106, %v7107
      %v7109 = vrot.slane %v7039, 5
      %v7110 = vrot.slane %v7109, 4
      %v7111 = vrot.slane %v6593, 5
      %v7112 = vsel %vm2858, %v7110, %v7111
      %v7113 = vrot.slane %v7111, 4
      %v7114 = vrot.slane %v6594, 5
      %v7115 = vsel %vm2858, %v7113, %v7114
      %v7116 = vrot.slane %v7040, 5
      %v7117 = vrot.slane %v7116, 4
      %v7118 = vrot.slane %v6596, 5
      %v7119 = vsel %vm2858, %v7117, %v7118
      %v7120 = vrot.slane %v7118, 4
      %v7121 = vrot.slane %v6597, 5
      %v7122 = vsel %vm2858, %v7120, %v7121
      %v7123 = vrot.slane %v7041, 5
      %v7124 = vrot.slane %v7123, 4
      %v7125 = vrot.slane %v6599, 5
      %v7126 = vsel %vm2858, %v7124, %v7125
      %v7127 = vrot.slane %v7125, 4
      %v7128 = vrot.slane %v6600, 5
      %v7129 = vsel %vm2858, %v7127, %v7128
      %v7130 = vrot.slane %v7042, 5
      %v7131 = vrot.slane %v7130, 4
      %v7132 = vrot.slane %v6602, 5
      %v7133 = vsel %vm2858, %v7131, %v7132
      %v7134 = vrot.slane %v7132, 4
      %v7135 = vrot.slane %v6603, 5
      %v7136 = vsel %vm2858, %v7134, %v7135
      %v7137 = vrot.slane %v7043, 5
      %v7138 = vrot.slane %v7137, 4
      %v7139 = vrot.slane %v6605, 5
      %v7140 = vsel %vm2858, %v7138, %v7139
      %v7141 = vrot.slane %v7139, 4
      %v7142 = vrot.slane %v6606, 5
      %v7143 = vsel %vm2858, %v7141, %v7142
      %v7144 = vrot.slane %v7044, 5
      %v7145 = vrot.slane %v7144, 4
      %v7146 = vrot.slane %v6608, 5
      %v7147 = vsel %vm2858, %v7145, %v7146
      %v7148 = vrot.slane %v7146, 4
      %v7149 = vrot.slane %v6609, 5
      %v7150 = vsel %vm2858, %v7148, %v7149
      %v7151 = vrot.slane %v7045, 5
      %v7152 = vrot.slane %v7151, 4
      %v7153 = vrot.slane %v6611, 5
      %v7154 = vsel %vm2858, %v7152, %v7153
      %v7155 = vrot.slane %v7153, 4
      %v7156 = vrot.slane %v6612, 5
      %v7157 = vsel %vm2858, %v7155, %v7156
      %v7158 = vrot.slane %v7046, 5
      %v7159 = vrot.slane %v7158, 4
      %v7160 = vrot.slane %v6614, 5
      %v7161 = vsel %vm2858, %v7159, %v7160
      %v7162 = vrot.slane %v7160, 4
      %v7163 = vrot.slane %v6615, 5
      %v7164 = vsel %vm2858, %v7162, %v7163
      %v7165 = vrot.slane %v7047, 5
      %v7166 = vrot.slane %v7165, 4
      %v7167 = vrot.slane %v6617, 5
      %v7168 = vsel %vm2858, %v7166, %v7167
      %v7169 = vrot.slane %v7167, 4
      %v7170 = vrot.slane %v6618, 5
      %v7171 = vsel %vm2858, %v7169, %v7170
      %v7172 = vrot.slane %v7048, 5
      %v7173 = vrot.slane %v7172, 4
      %v7174 = vrot.slane %v6620, 5
      %v7175 = vsel %vm2858, %v7173, %v7174
      %v7176 = vrot.slane %v7174, 4
      %v7177 = vrot.slane %v6621, 5
      %v7178 = vsel %vm2858, %v7176, %v7177
      %v7179 = vrot.slane %v7049, 5
      %v7180 = vrot.slane %v7179, 4
      %v7181 = vrot.slane %v6623, 5
      %v7182 = vsel %vm2858, %v7180, %v7181
      %v7183 = vrot.slane %v7181, 4
      %v7184 = vrot.slane %v6624, 5
      %v7185 = vsel %vm2858, %v7183, %v7184
      %v7186 = vrot.slane %v7050, 5
      %v7187 = vrot.slane %v7186, 4
      %v7188 = vrot.slane %v6626, 5
      %v7189 = vsel %vm2858, %v7187, %v7188
      %v7190 = vrot.slane %v7188, 4
      %v7191 = vrot.slane %v6627, 5
      %v7192 = vsel %vm2858, %v7190, %v7191
      %v7193 = vrot.slane %v7051, 5
      %v7194 = vrot.slane %v7193, 4
      %v7195 = vrot.slane %v6629, 5
      %v7196 = vsel %vm2858, %v7194, %v7195
      %v7197 = vrot.slane %v7195, 4
      %v7198 = vrot.slane %v6630, 5
      %v7199 = vsel %vm2858, %v7197, %v7198
      %v7200 = vrot.slane %v7052, 5
      %v7201 = vrot.slane %v7200, 4
      %v7202 = vrot.slane %v6632, 5
      %v7203 = vsel %vm2858, %v7201, %v7202
      %v7204 = vrot.slane %v7202, 4
      %v7205 = vrot.slane %v6633, 5
      %v7206 = vsel %vm2858, %v7204, %v7205
      %v7207 = vrot.slane %v7053, 5
      %v7208 = vrot.slane %v7207, 4
      %v7209 = vrot.slane %v6635, 5
      %v7210 = vsel %vm2858, %v7208, %v7209
      %v7211 = vrot.slane %v7209, 4
      %v7212 = vrot.slane %v6636, 5
      %v7213 = vsel %vm2858, %v7211, %v7212
      %s7214 = scalar_lea.vmem %s209, 832
      %v7215 = vld [vmem:[%s7214] sm:$0xf]
      %v7216 = vld [vmem:[%s7214 + $0x4] sm:$0xf]
      %v7217 = vld [vmem:[%s7214 + $0x8] sm:$0xf]
      %v7218 = vld [vmem:[%s7214 + $0xc] sm:$0xf]
      %v7219 = vld [vmem:[%s7214 + $0x10] sm:$0xf]
      %v7220 = vld [vmem:[%s7214 + $0x14] sm:$0xf]
      %v7221 = vld [vmem:[%s7214 + $0x18] sm:$0xf]
      %v7222 = vld [vmem:[%s7214 + $0x1c] sm:$0xf]
      %v7223 = vld [vmem:[%s7214 + $0x20] sm:$0xf]
      %v7224 = vld [vmem:[%s7214 + $0x24] sm:$0xf]
      %v7225 = vld [vmem:[%s7214 + $0x28] sm:$0xf]
      %v7226 = vld [vmem:[%s7214 + $0x2c] sm:$0xf]
      %v7227 = vld [vmem:[%s7214 + $0x30] sm:$0xf]
      %v7228 = vld [vmem:[%s7214 + $0x34] sm:$0xf]
      %v7229 = vld [vmem:[%s7214 + $0x38] sm:$0xf]
      %v7230 = vld [vmem:[%s7214 + $0x3c] sm:$0xf]
      %v7231 = vunpack.c.l.b16 %v7105
      %v7232 = vunpack.c.l.b16 %v7108
      %v7233 = vunpack.c.l.b16 %v7112
      %v7234 = vunpack.c.l.b16 %v7115
      %v7235 = vunpack.c.l.b16 %v7119
      %v7236 = vunpack.c.l.b16 %v7122
      %v7237 = vunpack.c.l.b16 %v7126
      %v7238 = vunpack.c.l.b16 %v7129
      %v7239 = vunpack.c.l.b16 %v7133
      %v7240 = vunpack.c.l.b16 %v7136
      %v7241 = vunpack.c.l.b16 %v7140
      %v7242 = vunpack.c.l.b16 %v7143
      %v7243 = vunpack.c.l.b16 %v7147
      %v7244 = vunpack.c.l.b16 %v7150
      %v7245 = vunpack.c.l.b16 %v7154
      %v7246 = vunpack.c.l.b16 %v7157
      %v7247 = vunpack.c.l.b16 %v7161
      %v7248 = vunpack.c.l.b16 %v7164
      %v7249 = vunpack.c.l.b16 %v7168
      %v7250 = vunpack.c.l.b16 %v7171
      %v7251 = vunpack.c.l.b16 %v7175
      %v7252 = vunpack.c.l.b16 %v7178
      %v7253 = vunpack.c.l.b16 %v7182
      %v7254 = vunpack.c.l.b16 %v7185
      %v7255 = vunpack.c.l.b16 %v7189
      %v7256 = vunpack.c.l.b16 %v7192
      %v7257 = vunpack.c.l.b16 %v7196
      %v7258 = vunpack.c.l.b16 %v7199
      %v7259 = vunpack.c.l.b16 %v7203
      %v7260 = vunpack.c.l.b16 %v7206
      %v7261 = vunpack.c.l.b16 %v7210
      %v7262 = vunpack.c.l.b16 %v7213
      %v7263 = vpack.c.b16 %v7232, %v7231
      %v7264 = vpack.c.b16 %v7234, %v7233
      %v7265 = vpack.c.b16 %v7236, %v7235
      %v7266 = vpack.c.b16 %v7238, %v7237
      %v7267 = vpack.c.b16 %v7240, %v7239
      %v7268 = vpack.c.b16 %v7242, %v7241
      %v7269 = vpack.c.b16 %v7244, %v7243
      %v7270 = vpack.c.b16 %v7246, %v7245
      %v7271 = vpack.c.b16 %v7248, %v7247
      %v7272 = vpack.c.b16 %v7250, %v7249
      %v7273 = vpack.c.b16 %v7252, %v7251
      %v7274 = vpack.c.b16 %v7254, %v7253
      %v7275 = vpack.c.b16 %v7256, %v7255
      %v7276 = vpack.c.b16 %v7258, %v7257
      %v7277 = vpack.c.b16 %v7260, %v7259
      %v7278 = vpack.c.b16 %v7262, %v7261
      %v7311 = vunpack.c.l.b16 %v7215
      %v7312 = vunpack.c.l.b16 %v7216
      %v7313 = vunpack.c.l.b16 %v7217
      %v7314 = vunpack.c.l.b16 %v7218
      %v7315 = vunpack.c.l.b16 %v7219
      %v7316 = vunpack.c.l.b16 %v7220
      %v7317 = vunpack.c.l.b16 %v7221
      %v7318 = vunpack.c.l.b16 %v7222
      %v7319 = vunpack.c.l.b16 %v7223
      %v7320 = vunpack.c.l.b16 %v7224
      %v7321 = vunpack.c.l.b16 %v7225
      %v7322 = vunpack.c.l.b16 %v7226
      %v7323 = vunpack.c.l.b16 %v7227
      %v7324 = vunpack.c.l.b16 %v7228
      %v7325 = vunpack.c.l.b16 %v7229
      %v7326 = vunpack.c.l.b16 %v7230
      %v7327 = vpack.c.b16 %v7312, %v7311
      %v7328 = vpack.c.b16 %v7314, %v7313
      %v7329 = vpack.c.b16 %v7316, %v7315
      %v7330 = vpack.c.b16 %v7318, %v7317
      %v7331 = vpack.c.b16 %v7320, %v7319
      %v7332 = vpack.c.b16 %v7322, %v7321
      %v7333 = vpack.c.b16 %v7324, %v7323
      %v7334 = vpack.c.b16 %v7326, %v7325
      %7343 = vmatpush.bf16.msra.mxu0 %v7334
      %7344 = vmatpush.bf16.msra.mxu0 %v7333
      %7345 = vmatpush.bf16.msra.mxu0 %v7332
      %7346 = vmatpush.bf16.msra.mxu0 %v7331
      %7347 = vmatpush.bf16.msra.mxu0 %v7330
      %7348 = vmatpush.bf16.msra.mxu0 %v7329
      %7349 = vmatpush.bf16.msra.mxu0 %v7328
      %7350 = vmatpush.bf16.msra.mxu0 %v7327
      %7351 = vmatmul.bf16.gmra.mxu0 %v7263
      %v7352 = vpop.f32.mrf.mxu0
      %v7353 = vadd.f32 0.0, %v7352
      %v7354 = vpop.f32.mrf.mxu0
      %v7355 = vadd.f32 0.0, %v7354
      %7356 = vmatmul.bf16.gmra.mxu0 %v7264
      %v7357 = vpop.f32.mrf.mxu0
      %v7358 = vadd.f32 0.0, %v7357
      %v7359 = vpop.f32.mrf.mxu0
      %v7360 = vadd.f32 0.0, %v7359
      %7361 = vmatmul.bf16.gmra.mxu0 %v7265
      %v7362 = vpop.f32.mrf.mxu0
      %v7363 = vadd.f32 0.0, %v7362
      %v7364 = vpop.f32.mrf.mxu0
      %v7365 = vadd.f32 0.0, %v7364
      %7366 = vmatmul.bf16.gmra.mxu0 %v7266
      %v7367 = vpop.f32.mrf.mxu0
      %v7368 = vadd.f32 0.0, %v7367
      %v7369 = vpop.f32.mrf.mxu0
      %v7370 = vadd.f32 0.0, %v7369
      %7371 = vmatmul.bf16.gmra.mxu0 %v7267
      %v7372 = vpop.f32.mrf.mxu0
      %v7373 = vadd.f32 0.0, %v7372
      %v7374 = vpop.f32.mrf.mxu0
      %v7375 = vadd.f32 0.0, %v7374
      %7376 = vmatmul.bf16.gmra.mxu0 %v7268
      %v7377 = vpop.f32.mrf.mxu0
      %v7378 = vadd.f32 0.0, %v7377
      %v7379 = vpop.f32.mrf.mxu0
      %v7380 = vadd.f32 0.0, %v7379
      %7381 = vmatmul.bf16.gmra.mxu0 %v7269
      %v7382 = vpop.f32.mrf.mxu0
      %v7383 = vadd.f32 0.0, %v7382
      %v7384 = vpop.f32.mrf.mxu0
      %v7385 = vadd.f32 0.0, %v7384
      %7386 = vmatmul.bf16.gmra.mxu0 %v7270
      %v7387 = vpop.f32.mrf.mxu0
      %v7388 = vadd.f32 0.0, %v7387
      %v7389 = vpop.f32.mrf.mxu0
      %v7390 = vadd.f32 0.0, %v7389
      %7391 = vmatmul.bf16.gmra.mxu0 %v7271
      %v7392 = vpop.f32.mrf.mxu0
      %v7393 = vadd.f32 0.0, %v7392
      %v7394 = vpop.f32.mrf.mxu0
      %v7395 = vadd.f32 0.0, %v7394
      %7396 = vmatmul.bf16.gmra.mxu0 %v7272
      %v7397 = vpop.f32.mrf.mxu0
      %v7398 = vadd.f32 0.0, %v7397
      %v7399 = vpop.f32.mrf.mxu0
      %v7400 = vadd.f32 0.0, %v7399
      %7401 = vmatmul.bf16.gmra.mxu0 %v7273
      %v7402 = vpop.f32.mrf.mxu0
      %v7403 = vadd.f32 0.0, %v7402
      %v7404 = vpop.f32.mrf.mxu0
      %v7405 = vadd.f32 0.0, %v7404
      %7406 = vmatmul.bf16.gmra.mxu0 %v7274
      %v7407 = vpop.f32.mrf.mxu0
      %v7408 = vadd.f32 0.0, %v7407
      %v7409 = vpop.f32.mrf.mxu0
      %v7410 = vadd.f32 0.0, %v7409
      %7411 = vmatmul.bf16.gmra.mxu0 %v7275
      %v7412 = vpop.f32.mrf.mxu0
      %v7413 = vadd.f32 0.0, %v7412
      %v7414 = vpop.f32.mrf.mxu0
      %v7415 = vadd.f32 0.0, %v7414
      %7416 = vmatmul.bf16.gmra.mxu0 %v7276
      %v7417 = vpop.f32.mrf.mxu0
      %v7418 = vadd.f32 0.0, %v7417
      %v7419 = vpop.f32.mrf.mxu0
      %v7420 = vadd.f32 0.0, %v7419
      %7421 = vmatmul.bf16.gmra.mxu0 %v7277
      %v7422 = vpop.f32.mrf.mxu0
      %v7423 = vadd.f32 0.0, %v7422
      %v7424 = vpop.f32.mrf.mxu0
      %v7425 = vadd.f32 0.0, %v7424
      %7426 = vmatmul.bf16.gmra.mxu0 %v7278
      %v7427 = vpop.f32.mrf.mxu0
      %v7428 = vadd.f32 0.0, %v7427
      %v7429 = vpop.f32.mrf.mxu0
      %v7430 = vadd.f32 0.0, %v7429
      %7431 = vdwg.mxu0
      %v7432 = vunpack.c.l.b16 %v6650
      %v7433 = vunpack.c.l.b16 %v6660
      %v7434 = vunpack.c.l.b16 %v6674
      %v7435 = vunpack.c.l.b16 %v6684
      %v7436 = vunpack.c.l.b16 %v6698
      %v7437 = vunpack.c.l.b16 %v6708
      %v7438 = vunpack.c.l.b16 %v6722
      %v7439 = vunpack.c.l.b16 %v6732
      %v7440 = vunpack.c.l.b16 %v6746
      %v7441 = vunpack.c.l.b16 %v6756
      %v7442 = vunpack.c.l.b16 %v6770
      %v7443 = vunpack.c.l.b16 %v6780
      %v7444 = vunpack.c.l.b16 %v6794
      %v7445 = vunpack.c.l.b16 %v6804
      %v7446 = vunpack.c.l.b16 %v6818
      %v7447 = vunpack.c.l.b16 %v6828
      %v7448 = vunpack.c.l.b16 %v6842
      %v7449 = vunpack.c.l.b16 %v6852
      %v7450 = vunpack.c.l.b16 %v6866
      %v7451 = vunpack.c.l.b16 %v6876
      %v7452 = vunpack.c.l.b16 %v6890
      %v7453 = vunpack.c.l.b16 %v6900
      %v7454 = vunpack.c.l.b16 %v6914
      %v7455 = vunpack.c.l.b16 %v6924
      %v7456 = vunpack.c.l.b16 %v6938
      %v7457 = vunpack.c.l.b16 %v6948
      %v7458 = vunpack.c.l.b16 %v6962
      %v7459 = vunpack.c.l.b16 %v6972
      %v7460 = vunpack.c.l.b16 %v6986
      %v7461 = vunpack.c.l.b16 %v6996
      %v7462 = vunpack.c.l.b16 %v7010
      %v7463 = vunpack.c.l.b16 %v7020
      %v7464 = vpack.c.b16 %v7433, %v7432
      %v7465 = vpack.c.b16 %v7435, %v7434
      %v7466 = vpack.c.b16 %v7437, %v7436
      %v7467 = vpack.c.b16 %v7439, %v7438
      %v7468 = vpack.c.b16 %v7441, %v7440
      %v7469 = vpack.c.b16 %v7443, %v7442
      %v7470 = vpack.c.b16 %v7445, %v7444
      %v7471 = vpack.c.b16 %v7447, %v7446
      %v7472 = vpack.c.b16 %v7449, %v7448
      %v7473 = vpack.c.b16 %v7451, %v7450
      %v7474 = vpack.c.b16 %v7453, %v7452
      %v7475 = vpack.c.b16 %v7455, %v7454
      %v7476 = vpack.c.b16 %v7457, %v7456
      %v7477 = vpack.c.b16 %v7459, %v7458
      %v7478 = vpack.c.b16 %v7461, %v7460
      %v7479 = vpack.c.b16 %v7463, %v7462
      %v7512 = vunpack.c.l.b16 %v7022
      %v7513 = vunpack.c.l.b16 %v7023
      %v7514 = vunpack.c.l.b16 %v7024
      %v7515 = vunpack.c.l.b16 %v7025
      %v7516 = vunpack.c.l.b16 %v7026
      %v7517 = vunpack.c.l.b16 %v7027
      %v7518 = vunpack.c.l.b16 %v7028
      %v7519 = vunpack.c.l.b16 %v7029
      %v7520 = vunpack.c.l.b16 %v7030
      %v7521 = vunpack.c.l.b16 %v7031
      %v7522 = vunpack.c.l.b16 %v7032
      %v7523 = vunpack.c.l.b16 %v7033
      %v7524 = vunpack.c.l.b16 %v7034
      %v7525 = vunpack.c.l.b16 %v7035
      %v7526 = vunpack.c.l.b16 %v7036
      %v7527 = vunpack.c.l.b16 %v7037
      %v7528 = vpack.c.b16 %v7513, %v7512
      %v7529 = vpack.c.b16 %v7515, %v7514
      %v7530 = vpack.c.b16 %v7517, %v7516
      %v7531 = vpack.c.b16 %v7519, %v7518
      %v7532 = vpack.c.b16 %v7521, %v7520
      %v7533 = vpack.c.b16 %v7523, %v7522
      %v7534 = vpack.c.b16 %v7525, %v7524
      %v7535 = vpack.c.b16 %v7527, %v7526
      %7544 = vmatpush.bf16.msra.mxu0 %v7535
      %7545 = vmatpush.bf16.msra.mxu0 %v7534
      %7546 = vmatpush.bf16.msra.mxu0 %v7533
      %7547 = vmatpush.bf16.msra.mxu0 %v7532
      %7548 = vmatpush.bf16.msra.mxu0 %v7531
      %7549 = vmatpush.bf16.msra.mxu0 %v7530
      %7550 = vmatpush.bf16.msra.mxu0 %v7529
      %7551 = vmatpush.bf16.msra.mxu0 %v7528
      %7552 = vmatmul.bf16.gmra.mxu0 %v7464
      %v7553 = vpop.f32.mrf.mxu0
      %v7554 = vadd.f32 %v7353, %v7553
      %v7555 = vpop.f32.mrf.mxu0
      %v7556 = vadd.f32 %v7355, %v7555
      %7557 = vmatmul.bf16.gmra.mxu0 %v7465
      %v7558 = vpop.f32.mrf.mxu0
      %v7559 = vadd.f32 %v7358, %v7558
      %v7560 = vpop.f32.mrf.mxu0
      %v7561 = vadd.f32 %v7360, %v7560
      %7562 = vmatmul.bf16.gmra.mxu0 %v7466
      %v7563 = vpop.f32.mrf.mxu0
      %v7564 = vadd.f32 %v7363, %v7563
      %v7565 = vpop.f32.mrf.mxu0
      %v7566 = vadd.f32 %v7365, %v7565
      %7567 = vmatmul.bf16.gmra.mxu0 %v7467
      %v7568 = vpop.f32.mrf.mxu0
      %v7569 = vadd.f32 %v7368, %v7568
      %v7570 = vpop.f32.mrf.mxu0
      %v7571 = vadd.f32 %v7370, %v7570
      %7572 = vmatmul.bf16.gmra.mxu0 %v7468
      %v7573 = vpop.f32.mrf.mxu0
      %v7574 = vadd.f32 %v7373, %v7573
      %v7575 = vpop.f32.mrf.mxu0
      %v7576 = vadd.f32 %v7375, %v7575
      %7577 = vmatmul.bf16.gmra.mxu0 %v7469
      %v7578 = vpop.f32.mrf.mxu0
      %v7579 = vadd.f32 %v7378, %v7578
      %v7580 = vpop.f32.mrf.mxu0
      %v7581 = vadd.f32 %v7380, %v7580
      %7582 = vmatmul.bf16.gmra.mxu0 %v7470
      %v7583 = vpop.f32.mrf.mxu0
      %v7584 = vadd.f32 %v7383, %v7583
      %v7585 = vpop.f32.mrf.mxu0
      %v7586 = vadd.f32 %v7385, %v7585
      %7587 = vmatmul.bf16.gmra.mxu0 %v7471
      %v7588 = vpop.f32.mrf.mxu0
      %v7589 = vadd.f32 %v7388, %v7588
      %v7590 = vpop.f32.mrf.mxu0
      %v7591 = vadd.f32 %v7390, %v7590
      %7592 = vmatmul.bf16.gmra.mxu0 %v7472
      %v7593 = vpop.f32.mrf.mxu0
      %v7594 = vadd.f32 %v7393, %v7593
      %v7595 = vpop.f32.mrf.mxu0
      %v7596 = vadd.f32 %v7395, %v7595
      %7597 = vmatmul.bf16.gmra.mxu0 %v7473
      %v7598 = vpop.f32.mrf.mxu0
      %v7599 = vadd.f32 %v7398, %v7598
      %v7600 = vpop.f32.mrf.mxu0
      %v7601 = vadd.f32 %v7400, %v7600
      %7602 = vmatmul.bf16.gmra.mxu0 %v7474
      %v7603 = vpop.f32.mrf.mxu0
      %v7604 = vadd.f32 %v7403, %v7603
      %v7605 = vpop.f32.mrf.mxu0
      %v7606 = vadd.f32 %v7405, %v7605
      %7607 = vmatmul.bf16.gmra.mxu0 %v7475
      %v7608 = vpop.f32.mrf.mxu0
      %v7609 = vadd.f32 %v7408, %v7608
      %v7610 = vpop.f32.mrf.mxu0
      %v7611 = vadd.f32 %v7410, %v7610
      %7612 = vmatmul.bf16.gmra.mxu0 %v7476
      %v7613 = vpop.f32.mrf.mxu0
      %v7614 = vadd.f32 %v7413, %v7613
      %v7615 = vpop.f32.mrf.mxu0
      %v7616 = vadd.f32 %v7415, %v7615
      %7617 = vmatmul.bf16.gmra.mxu0 %v7477
      %v7618 = vpop.f32.mrf.mxu0
      %v7619 = vadd.f32 %v7418, %v7618
      %v7620 = vpop.f32.mrf.mxu0
      %v7621 = vadd.f32 %v7420, %v7620
      %7622 = vmatmul.bf16.gmra.mxu0 %v7478
      %v7623 = vpop.f32.mrf.mxu0
      %v7624 = vadd.f32 %v7423, %v7623
      %v7625 = vpop.f32.mrf.mxu0
      %v7626 = vadd.f32 %v7425, %v7625
      %7627 = vmatmul.bf16.gmra.mxu0 %v7479
      %v7628 = vpop.f32.mrf.mxu0
      %v7629 = vadd.f32 %v7428, %v7628
      %v7630 = vpop.f32.mrf.mxu0
      %v7631 = vadd.f32 %v7430, %v7630
      %7632 = vdwg.mxu0
      %v7633 = vld [vmem:[%s5495] sm:$0xf]
      %v7634 = vld [vmem:[%s5495 + $0x4] sm:$0xf]
      %v7635 = vld [vmem:[%s5495 + $0x8] sm:$0x1]
      %v7636 = vld [vmem:[%s5495 + $0xc] sm:$0xf]
      %v7637 = vld [vmem:[%s5495 + $0x10] sm:$0xf]
      %v7638 = vld [vmem:[%s5495 + $0x14] sm:$0x1]
      %v7639 = vld [vmem:[%s5495 + $0x18] sm:$0xf]
      %v7640 = vld [vmem:[%s5495 + $0x1c] sm:$0xf]
      %v7641 = vld [vmem:[%s5495 + $0x20] sm:$0x1]
      %v7642 = vld [vmem:[%s5495 + $0x24] sm:$0xf]
      %v7643 = vld [vmem:[%s5495 + $0x28] sm:$0xf]
      %v7644 = vld [vmem:[%s5495 + $0x2c] sm:$0x1]
      %v7645 = vld [vmem:[%s5495 + $0x30] sm:$0xf]
      %v7646 = vld [vmem:[%s5495 + $0x34] sm:$0xf]
      %v7647 = vld [vmem:[%s5495 + $0x38] sm:$0x1]
      %v7648 = vld [vmem:[%s5495 + $0x3c] sm:$0xf]
      %v7649 = vld [vmem:[%s5495 + $0x40] sm:$0xf]
      %v7650 = vld [vmem:[%s5495 + $0x44] sm:$0x1]
      %v7651 = vld [vmem:[%s5495 + $0x48] sm:$0xf]
      %v7652 = vld [vmem:[%s5495 + $0x4c] sm:$0xf]
      %v7653 = vld [vmem:[%s5495 + $0x50] sm:$0x1]
      %v7654 = vld [vmem:[%s5495 + $0x54] sm:$0xf]
      %v7655 = vld [vmem:[%s5495 + $0x58] sm:$0xf]
      %v7656 = vld [vmem:[%s5495 + $0x5c] sm:$0x1]
      %v7657 = vld [vmem:[%s5495 + $0x60] sm:$0xf]
      %v7658 = vld [vmem:[%s5495 + $0x64] sm:$0xf]
      %v7659 = vld [vmem:[%s5495 + $0x68] sm:$0x1]
      %v7660 = vld [vmem:[%s5495 + $0x6c] sm:$0xf]
      %v7661 = vld [vmem:[%s5495 + $0x70] sm:$0xf]
      %v7662 = vld [vmem:[%s5495 + $0x74] sm:$0x1]
      %v7663 = vld [vmem:[%s5495 + $0x78] sm:$0xf]
      %v7664 = vld [vmem:[%s5495 + $0x7c] sm:$0xf]
      %v7665 = vld [vmem:[%s5495 + $0x80] sm:$0x1]
      %v7666 = vld [vmem:[%s5495 + $0x84] sm:$0xf]
      %v7667 = vld [vmem:[%s5495 + $0x88] sm:$0xf]
      %v7668 = vld [vmem:[%s5495 + $0x8c] sm:$0x1]
      %v7669 = vld [vmem:[%s5495 + $0x90] sm:$0xf]
      %v7670 = vld [vmem:[%s5495 + $0x94] sm:$0xf]
      %v7671 = vld [vmem:[%s5495 + $0x98] sm:$0x1]
      %v7672 = vld [vmem:[%s5495 + $0x9c] sm:$0xf]
      %v7673 = vld [vmem:[%s5495 + $0xa0] sm:$0xf]
      %v7674 = vld [vmem:[%s5495 + $0xa4] sm:$0x1]
      %v7675 = vld [vmem:[%s5495 + $0xa8] sm:$0xf]
      %v7676 = vld [vmem:[%s5495 + $0xac] sm:$0xf]
      %v7677 = vld [vmem:[%s5495 + $0xb0] sm:$0x1]
      %v7678 = vld [vmem:[%s5495 + $0xb4] sm:$0xf]
      %v7679 = vld [vmem:[%s5495 + $0xb8] sm:$0xf]
      %v7680 = vld [vmem:[%s5495 + $0xbc] sm:$0x1]
      %v7682 = vshrl.u32 %v7633, 16
      %v7684 = vrot.slane %v7682, 4
      %v7685 = vshll.u32 %v7633, 16
      %v7687 = vrot.slane %v7685, 5
      %v7688 = vor.u32 %v7684, %v7687
      %v7689 = vrot.slane %v7688, 4
      %v7691 = vshll.u32 %v7634, 16
      %v7693 = vrot.slane %v7691, 5
      %v7694 = vsel %vm414, %v7689, %v7693
      %v7695 = vshrl.u32 %v7634, 16
      %v7697 = vrot.slane %v7695, 4
      %v7698 = vor.u32 %v7697, %v7693
      %v7699 = vrot.slane %v7698, 4
      %v7701 = vshll.u32 %v7635, 16
      %v7703 = vrot.slane %v7701, 5
      %v7704 = vsel %vm414, %v7699, %v7703
      %v7706 = vshrl.u32 %v7636, 16
      %v7708 = vrot.slane %v7706, 4
      %v7709 = vshll.u32 %v7636, 16
      %v7711 = vrot.slane %v7709, 5
      %v7712 = vor.u32 %v7708, %v7711
      %v7713 = vrot.slane %v7712, 4
      %v7715 = vshll.u32 %v7637, 16
      %v7717 = vrot.slane %v7715, 5
      %v7718 = vsel %vm414, %v7713, %v7717
      %v7719 = vshrl.u32 %v7637, 16
      %v7721 = vrot.slane %v7719, 4
      %v7722 = vor.u32 %v7721, %v7717
      %v7723 = vrot.slane %v7722, 4
      %v7725 = vshll.u32 %v7638, 16
      %v7727 = vrot.slane %v7725, 5
      %v7728 = vsel %vm414, %v7723, %v7727
      %v7730 = vshrl.u32 %v7639, 16
      %v7732 = vrot.slane %v7730, 4
      %v7733 = vshll.u32 %v7639, 16
      %v7735 = vrot.slane %v7733, 5
      %v7736 = vor.u32 %v7732, %v7735
      %v7737 = vrot.slane %v7736, 4
      %v7739 = vshll.u32 %v7640, 16
      %v7741 = vrot.slane %v7739, 5
      %v7742 = vsel %vm414, %v7737, %v7741
      %v7743 = vshrl.u32 %v7640, 16
      %v7745 = vrot.slane %v7743, 4
      %v7746 = vor.u32 %v7745, %v7741
      %v7747 = vrot.slane %v7746, 4
      %v7749 = vshll.u32 %v7641, 16
      %v7751 = vrot.slane %v7749, 5
      %v7752 = vsel %vm414, %v7747, %v7751
      %v7754 = vshrl.u32 %v7642, 16
      %v7756 = vrot.slane %v7754, 4
      %v7757 = vshll.u32 %v7642, 16
      %v7759 = vrot.slane %v7757, 5
      %v7760 = vor.u32 %v7756, %v7759
      %v7761 = vrot.slane %v7760, 4
      %v7763 = vshll.u32 %v7643, 16
      %v7765 = vrot.slane %v7763, 5
      %v7766 = vsel %vm414, %v7761, %v7765
      %v7767 = vshrl.u32 %v7643, 16
      %v7769 = vrot.slane %v7767, 4
      %v7770 = vor.u32 %v7769, %v7765
      %v7771 = vrot.slane %v7770, 4
      %v7773 = vshll.u32 %v7644, 16
      %v7775 = vrot.slane %v7773, 5
      %v7776 = vsel %vm414, %v7771, %v7775
      %v7778 = vshrl.u32 %v7645, 16
      %v7780 = vrot.slane %v7778, 4
      %v7781 = vshll.u32 %v7645, 16
      %v7783 = vrot.slane %v7781, 5
      %v7784 = vor.u32 %v7780, %v7783
      %v7785 = vrot.slane %v7784, 4
      %v7787 = vshll.u32 %v7646, 16
      %v7789 = vrot.slane %v7787, 5
      %v7790 = vsel %vm414, %v7785, %v7789
      %v7791 = vshrl.u32 %v7646, 16
      %v7793 = vrot.slane %v7791, 4
      %v7794 = vor.u32 %v7793, %v7789
      %v7795 = vrot.slane %v7794, 4
      %v7797 = vshll.u32 %v7647, 16
      %v7799 = vrot.slane %v7797, 5
      %v7800 = vsel %vm414, %v7795, %v7799
      %v7802 = vshrl.u32 %v7648, 16
      %v7804 = vrot.slane %v7802, 4
      %v7805 = vshll.u32 %v7648, 16
      %v7807 = vrot.slane %v7805, 5
      %v7808 = vor.u32 %v7804, %v7807
      %v7809 = vrot.slane %v7808, 4
      %v7811 = vshll.u32 %v7649, 16
      %v7813 = vrot.slane %v7811, 5
      %v7814 = vsel %vm414, %v7809, %v7813
      %v7815 = vshrl.u32 %v7649, 16
      %v7817 = vrot.slane %v7815, 4
      %v7818 = vor.u32 %v7817, %v7813
      %v7819 = vrot.slane %v7818, 4
      %v7821 = vshll.u32 %v7650, 16
      %v7823 = vrot.slane %v7821, 5
      %v7824 = vsel %vm414, %v7819, %v7823
      %v7826 = vshrl.u32 %v7651, 16
      %v7828 = vrot.slane %v7826, 4
      %v7829 = vshll.u32 %v7651, 16
      %v7831 = vrot.slane %v7829, 5
      %v7832 = vor.u32 %v7828, %v7831
      %v7833 = vrot.slane %v7832, 4
      %v7835 = vshll.u32 %v7652, 16
      %v7837 = vrot.slane %v7835, 5
      %v7838 = vsel %vm414, %v7833, %v7837
      %v7839 = vshrl.u32 %v7652, 16
      %v7841 = vrot.slane %v7839, 4
      %v7842 = vor.u32 %v7841, %v7837
      %v7843 = vrot.slane %v7842, 4
      %v7845 = vshll.u32 %v7653, 16
      %v7847 = vrot.slane %v7845, 5
      %v7848 = vsel %vm414, %v7843, %v7847
      %v7850 = vshrl.u32 %v7654, 16
      %v7852 = vrot.slane %v7850, 4
      %v7853 = vshll.u32 %v7654, 16
      %v7855 = vrot.slane %v7853, 5
      %v7856 = vor.u32 %v7852, %v7855
      %v7857 = vrot.slane %v7856, 4
      %v7859 = vshll.u32 %v7655, 16
      %v7861 = vrot.slane %v7859, 5
      %v7862 = vsel %vm414, %v7857, %v7861
      %v7863 = vshrl.u32 %v7655, 16
      %v7865 = vrot.slane %v7863, 4
      %v7866 = vor.u32 %v7865, %v7861
      %v7867 = vrot.slane %v7866, 4
      %v7869 = vshll.u32 %v7656, 16
      %v7871 = vrot.slane %v7869, 5
      %v7872 = vsel %vm414, %v7867, %v7871
      %v7874 = vshrl.u32 %v7657, 16
      %v7876 = vrot.slane %v7874, 4
      %v7877 = vshll.u32 %v7657, 16
      %v7879 = vrot.slane %v7877, 5
      %v7880 = vor.u32 %v7876, %v7879
      %v7881 = vrot.slane %v7880, 4
      %v7883 = vshll.u32 %v7658, 16
      %v7885 = vrot.slane %v7883, 5
      %v7886 = vsel %vm414, %v7881, %v7885
      %v7887 = vshrl.u32 %v7658, 16
      %v7889 = vrot.slane %v7887, 4
      %v7890 = vor.u32 %v7889, %v7885
      %v7891 = vrot.slane %v7890, 4
      %v7893 = vshll.u32 %v7659, 16
      %v7895 = vrot.slane %v7893, 5
      %v7896 = vsel %vm414, %v7891, %v7895
      %v7898 = vshrl.u32 %v7660, 16
      %v7900 = vrot.slane %v7898, 4
      %v7901 = vshll.u32 %v7660, 16
      %v7903 = vrot.slane %v7901, 5
      %v7904 = vor.u32 %v7900, %v7903
      %v7905 = vrot.slane %v7904, 4
      %v7907 = vshll.u32 %v7661, 16
      %v7909 = vrot.slane %v7907, 5
      %v7910 = vsel %vm414, %v7905, %v7909
      %v7911 = vshrl.u32 %v7661, 16
      %v7913 = vrot.slane %v7911, 4
      %v7914 = vor.u32 %v7913, %v7909
      %v7915 = vrot.slane %v7914, 4
      %v7917 = vshll.u32 %v7662, 16
      %v7919 = vrot.slane %v7917, 5
      %v7920 = vsel %vm414, %v7915, %v7919
      %v7922 = vshrl.u32 %v7663, 16
      %v7924 = vrot.slane %v7922, 4
      %v7925 = vshll.u32 %v7663, 16
      %v7927 = vrot.slane %v7925, 5
      %v7928 = vor.u32 %v7924, %v7927
      %v7929 = vrot.slane %v7928, 4
      %v7931 = vshll.u32 %v7664, 16
      %v7933 = vrot.slane %v7931, 5
      %v7934 = vsel %vm414, %v7929, %v7933
      %v7935 = vshrl.u32 %v7664, 16
      %v7937 = vrot.slane %v7935, 4
      %v7938 = vor.u32 %v7937, %v7933
      %v7939 = vrot.slane %v7938, 4
      %v7941 = vshll.u32 %v7665, 16
      %v7943 = vrot.slane %v7941, 5
      %v7944 = vsel %vm414, %v7939, %v7943
      %v7946 = vshrl.u32 %v7666, 16
      %v7948 = vrot.slane %v7946, 4
      %v7949 = vshll.u32 %v7666, 16
      %v7951 = vrot.slane %v7949, 5
      %v7952 = vor.u32 %v7948, %v7951
      %v7953 = vrot.slane %v7952, 4
      %v7955 = vshll.u32 %v7667, 16
      %v7957 = vrot.slane %v7955, 5
      %v7958 = vsel %vm414, %v7953, %v7957
      %v7959 = vshrl.u32 %v7667, 16
      %v7961 = vrot.slane %v7959, 4
      %v7962 = vor.u32 %v7961, %v7957
      %v7963 = vrot.slane %v7962, 4
      %v7965 = vshll.u32 %v7668, 16
      %v7967 = vrot.slane %v7965, 5
      %v7968 = vsel %vm414, %v7963, %v7967
      %v7970 = vshrl.u32 %v7669, 16
      %v7972 = vrot.slane %v7970, 4
      %v7973 = vshll.u32 %v7669, 16
      %v7975 = vrot.slane %v7973, 5
      %v7976 = vor.u32 %v7972, %v7975
      %v7977 = vrot.slane %v7976, 4
      %v7979 = vshll.u32 %v7670, 16
      %v7981 = vrot.slane %v7979, 5
      %v7982 = vsel %vm414, %v7977, %v7981
      %v7983 = vshrl.u32 %v7670, 16
      %v7985 = vrot.slane %v7983, 4
      %v7986 = vor.u32 %v7985, %v7981
      %v7987 = vrot.slane %v7986, 4
      %v7989 = vshll.u32 %v7671, 16
      %v7991 = vrot.slane %v7989, 5
      %v7992 = vsel %vm414, %v7987, %v7991
      %v7994 = vshrl.u32 %v7672, 16
      %v7996 = vrot.slane %v7994, 4
      %v7997 = vshll.u32 %v7672, 16
      %v7999 = vrot.slane %v7997, 5
      %v8000 = vor.u32 %v7996, %v7999
      %v8001 = vrot.slane %v8000, 4
      %v8003 = vshll.u32 %v7673, 16
      %v8005 = vrot.slane %v8003, 5
      %v8006 = vsel %vm414, %v8001, %v8005
      %v8007 = vshrl.u32 %v7673, 16
      %v8009 = vrot.slane %v8007, 4
      %v8010 = vor.u32 %v8009, %v8005
      %v8011 = vrot.slane %v8010, 4
      %v8013 = vshll.u32 %v7674, 16
      %v8015 = vrot.slane %v8013, 5
      %v8016 = vsel %vm414, %v8011, %v8015
      %v8018 = vshrl.u32 %v7675, 16
      %v8020 = vrot.slane %v8018, 4
      %v8021 = vshll.u32 %v7675, 16
      %v8023 = vrot.slane %v8021, 5
      %v8024 = vor.u32 %v8020, %v8023
      %v8025 = vrot.slane %v8024, 4
      %v8027 = vshll.u32 %v7676, 16
      %v8029 = vrot.slane %v8027, 5
      %v8030 = vsel %vm414, %v8025, %v8029
      %v8031 = vshrl.u32 %v7676, 16
      %v8033 = vrot.slane %v8031, 4
      %v8034 = vor.u32 %v8033, %v8029
      %v8035 = vrot.slane %v8034, 4
      %v8037 = vshll.u32 %v7677, 16
      %v8039 = vrot.slane %v8037, 5
      %v8040 = vsel %vm414, %v8035, %v8039
      %v8042 = vshrl.u32 %v7678, 16
      %v8044 = vrot.slane %v8042, 4
      %v8045 = vshll.u32 %v7678, 16
      %v8047 = vrot.slane %v8045, 5
      %v8048 = vor.u32 %v8044, %v8047
      %v8049 = vrot.slane %v8048, 4
      %v8051 = vshll.u32 %v7679, 16
      %v8053 = vrot.slane %v8051, 5
      %v8054 = vsel %vm414, %v8049, %v8053
      %v8055 = vshrl.u32 %v7679, 16
      %v8057 = vrot.slane %v8055, 4
      %v8058 = vor.u32 %v8057, %v8053
      %v8059 = vrot.slane %v8058, 4
      %v8061 = vshll.u32 %v7680, 16
      %v8063 = vrot.slane %v8061, 5
      %v8064 = vsel %vm414, %v8059, %v8063
      %s8065 = scalar_lea.vmem %s209, 896
      %v8066 = vld [vmem:[%s8065] sm:$0xf]
      %v8067 = vld [vmem:[%s8065 + $0x4] sm:$0xf]
      %v8068 = vld [vmem:[%s8065 + $0x8] sm:$0xf]
      %v8069 = vld [vmem:[%s8065 + $0xc] sm:$0xf]
      %v8070 = vld [vmem:[%s8065 + $0x10] sm:$0xf]
      %v8071 = vld [vmem:[%s8065 + $0x14] sm:$0xf]
      %v8072 = vld [vmem:[%s8065 + $0x18] sm:$0xf]
      %v8073 = vld [vmem:[%s8065 + $0x1c] sm:$0xf]
      %v8074 = vld [vmem:[%s8065 + $0x20] sm:$0xf]
      %v8075 = vld [vmem:[%s8065 + $0x24] sm:$0xf]
      %v8076 = vld [vmem:[%s8065 + $0x28] sm:$0xf]
      %v8077 = vld [vmem:[%s8065 + $0x2c] sm:$0xf]
      %v8078 = vld [vmem:[%s8065 + $0x30] sm:$0xf]
      %v8079 = vld [vmem:[%s8065 + $0x34] sm:$0xf]
      %v8080 = vld [vmem:[%s8065 + $0x38] sm:$0xf]
      %v8081 = vld [vmem:[%s8065 + $0x3c] sm:$0xf]
      %v8082 = vunpack.c.l.b16 %v7694
      %v8083 = vunpack.c.l.b16 %v7704
      %v8084 = vunpack.c.l.b16 %v7718
      %v8085 = vunpack.c.l.b16 %v7728
      %v8086 = vunpack.c.l.b16 %v7742
      %v8087 = vunpack.c.l.b16 %v7752
      %v8088 = vunpack.c.l.b16 %v7766
      %v8089 = vunpack.c.l.b16 %v7776
      %v8090 = vunpack.c.l.b16 %v7790
      %v8091 = vunpack.c.l.b16 %v7800
      %v8092 = vunpack.c.l.b16 %v7814
      %v8093 = vunpack.c.l.b16 %v7824
      %v8094 = vunpack.c.l.b16 %v7838
      %v8095 = vunpack.c.l.b16 %v7848
      %v8096 = vunpack.c.l.b16 %v7862
      %v8097 = vunpack.c.l.b16 %v7872
      %v8098 = vunpack.c.l.b16 %v7886
      %v8099 = vunpack.c.l.b16 %v7896
      %v8100 = vunpack.c.l.b16 %v7910
      %v8101 = vunpack.c.l.b16 %v7920
      %v8102 = vunpack.c.l.b16 %v7934
      %v8103 = vunpack.c.l.b16 %v7944
      %v8104 = vunpack.c.l.b16 %v7958
      %v8105 = vunpack.c.l.b16 %v7968
      %v8106 = vunpack.c.l.b16 %v7982
      %v8107 = vunpack.c.l.b16 %v7992
      %v8108 = vunpack.c.l.b16 %v8006
      %v8109 = vunpack.c.l.b16 %v8016
      %v8110 = vunpack.c.l.b16 %v8030
      %v8111 = vunpack.c.l.b16 %v8040
      %v8112 = vunpack.c.l.b16 %v8054
      %v8113 = vunpack.c.l.b16 %v8064
      %v8114 = vpack.c.b16 %v8083, %v8082
      %v8115 = vpack.c.b16 %v8085, %v8084
      %v8116 = vpack.c.b16 %v8087, %v8086
      %v8117 = vpack.c.b16 %v8089, %v8088
      %v8118 = vpack.c.b16 %v8091, %v8090
      %v8119 = vpack.c.b16 %v8093, %v8092
      %v8120 = vpack.c.b16 %v8095, %v8094
      %v8121 = vpack.c.b16 %v8097, %v8096
      %v8122 = vpack.c.b16 %v8099, %v8098
      %v8123 = vpack.c.b16 %v8101, %v8100
      %v8124 = vpack.c.b16 %v8103, %v8102
      %v8125 = vpack.c.b16 %v8105, %v8104
      %v8126 = vpack.c.b16 %v8107, %v8106
      %v8127 = vpack.c.b16 %v8109, %v8108
      %v8128 = vpack.c.b16 %v8111, %v8110
      %v8129 = vpack.c.b16 %v8113, %v8112
      %v8162 = vunpack.c.l.b16 %v8066
      %v8163 = vunpack.c.l.b16 %v8067
      %v8164 = vunpack.c.l.b16 %v8068
      %v8165 = vunpack.c.l.b16 %v8069
      %v8166 = vunpack.c.l.b16 %v8070
      %v8167 = vunpack.c.l.b16 %v8071
      %v8168 = vunpack.c.l.b16 %v8072
      %v8169 = vunpack.c.l.b16 %v8073
      %v8170 = vunpack.c.l.b16 %v8074
      %v8171 = vunpack.c.l.b16 %v8075
      %v8172 = vunpack.c.l.b16 %v8076
      %v8173 = vunpack.c.l.b16 %v8077
      %v8174 = vunpack.c.l.b16 %v8078
      %v8175 = vunpack.c.l.b16 %v8079
      %v8176 = vunpack.c.l.b16 %v8080
      %v8177 = vunpack.c.l.b16 %v8081
      %v8178 = vpack.c.b16 %v8163, %v8162
      %v8179 = vpack.c.b16 %v8165, %v8164
      %v8180 = vpack.c.b16 %v8167, %v8166
      %v8181 = vpack.c.b16 %v8169, %v8168
      %v8182 = vpack.c.b16 %v8171, %v8170
      %v8183 = vpack.c.b16 %v8173, %v8172
      %v8184 = vpack.c.b16 %v8175, %v8174
      %v8185 = vpack.c.b16 %v8177, %v8176
      %8194 = vmatpush.bf16.msra.mxu0 %v8185
      %8195 = vmatpush.bf16.msra.mxu0 %v8184
      %8196 = vmatpush.bf16.msra.mxu0 %v8183
      %8197 = vmatpush.bf16.msra.mxu0 %v8182
      %8198 = vmatpush.bf16.msra.mxu0 %v8181
      %8199 = vmatpush.bf16.msra.mxu0 %v8180
      %8200 = vmatpush.bf16.msra.mxu0 %v8179
      %8201 = vmatpush.bf16.msra.mxu0 %v8178
      %8202 = vmatmul.bf16.gmra.mxu0 %v8114
      %v8203 = vpop.f32.mrf.mxu0
      %v8204 = vadd.f32 0.0, %v8203
      %v8205 = vpop.f32.mrf.mxu0
      %v8206 = vadd.f32 0.0, %v8205
      %8207 = vmatmul.bf16.gmra.mxu0 %v8115
      %v8208 = vpop.f32.mrf.mxu0
      %v8209 = vadd.f32 0.0, %v8208
      %v8210 = vpop.f32.mrf.mxu0
      %v8211 = vadd.f32 0.0, %v8210
      %8212 = vmatmul.bf16.gmra.mxu0 %v8116
      %v8213 = vpop.f32.mrf.mxu0
      %v8214 = vadd.f32 0.0, %v8213
      %v8215 = vpop.f32.mrf.mxu0
      %v8216 = vadd.f32 0.0, %v8215
      %8217 = vmatmul.bf16.gmra.mxu0 %v8117
      %v8218 = vpop.f32.mrf.mxu0
      %v8219 = vadd.f32 0.0, %v8218
      %v8220 = vpop.f32.mrf.mxu0
      %v8221 = vadd.f32 0.0, %v8220
      %8222 = vmatmul.bf16.gmra.mxu0 %v8118
      %v8223 = vpop.f32.mrf.mxu0
      %v8224 = vadd.f32 0.0, %v8223
      %v8225 = vpop.f32.mrf.mxu0
      %v8226 = vadd.f32 0.0, %v8225
      %8227 = vmatmul.bf16.gmra.mxu0 %v8119
      %v8228 = vpop.f32.mrf.mxu0
      %v8229 = vadd.f32 0.0, %v8228
      %v8230 = vpop.f32.mrf.mxu0
      %v8231 = vadd.f32 0.0, %v8230
      %8232 = vmatmul.bf16.gmra.mxu0 %v8120
      %v8233 = vpop.f32.mrf.mxu0
      %v8234 = vadd.f32 0.0, %v8233
      %v8235 = vpop.f32.mrf.mxu0
      %v8236 = vadd.f32 0.0, %v8235
      %8237 = vmatmul.bf16.gmra.mxu0 %v8121
      %v8238 = vpop.f32.mrf.mxu0
      %v8239 = vadd.f32 0.0, %v8238
      %v8240 = vpop.f32.mrf.mxu0
      %v8241 = vadd.f32 0.0, %v8240
      %8242 = vmatmul.bf16.gmra.mxu0 %v8122
      %v8243 = vpop.f32.mrf.mxu0
      %v8244 = vadd.f32 0.0, %v8243
      %v8245 = vpop.f32.mrf.mxu0
      %v8246 = vadd.f32 0.0, %v8245
      %8247 = vmatmul.bf16.gmra.mxu0 %v8123
      %v8248 = vpop.f32.mrf.mxu0
      %v8249 = vadd.f32 0.0, %v8248
      %v8250 = vpop.f32.mrf.mxu0
      %v8251 = vadd.f32 0.0, %v8250
      %8252 = vmatmul.bf16.gmra.mxu0 %v8124
      %v8253 = vpop.f32.mrf.mxu0
      %v8254 = vadd.f32 0.0, %v8253
      %v8255 = vpop.f32.mrf.mxu0
      %v8256 = vadd.f32 0.0, %v8255
      %8257 = vmatmul.bf16.gmra.mxu0 %v8125
      %v8258 = vpop.f32.mrf.mxu0
      %v8259 = vadd.f32 0.0, %v8258
      %v8260 = vpop.f32.mrf.mxu0
      %v8261 = vadd.f32 0.0, %v8260
      %8262 = vmatmul.bf16.gmra.mxu0 %v8126
      %v8263 = vpop.f32.mrf.mxu0
      %v8264 = vadd.f32 0.0, %v8263
      %v8265 = vpop.f32.mrf.mxu0
      %v8266 = vadd.f32 0.0, %v8265
      %8267 = vmatmul.bf16.gmra.mxu0 %v8127
      %v8268 = vpop.f32.mrf.mxu0
      %v8269 = vadd.f32 0.0, %v8268
      %v8270 = vpop.f32.mrf.mxu0
      %v8271 = vadd.f32 0.0, %v8270
      %8272 = vmatmul.bf16.gmra.mxu0 %v8128
      %v8273 = vpop.f32.mrf.mxu0
      %v8274 = vadd.f32 0.0, %v8273
      %v8275 = vpop.f32.mrf.mxu0
      %v8276 = vadd.f32 0.0, %v8275
      %8277 = vmatmul.bf16.gmra.mxu0 %v8129
      %v8278 = vpop.f32.mrf.mxu0
      %v8279 = vadd.f32 0.0, %v8278
      %v8280 = vpop.f32.mrf.mxu0
      %v8281 = vadd.f32 0.0, %v8280
      %8282 = vdwg.mxu0
      %v8283 = vadd.f32 %v7554, %v8204
      %v8284 = vadd.f32 %v7556, %v8206
      %v8285 = vadd.f32 %v7559, %v8209
      %v8286 = vadd.f32 %v7561, %v8211
      %v8287 = vadd.f32 %v7564, %v8214
      %v8288 = vadd.f32 %v7566, %v8216
      %v8289 = vadd.f32 %v7569, %v8219
      %v8290 = vadd.f32 %v7571, %v8221
      %v8291 = vadd.f32 %v7574, %v8224
      %v8292 = vadd.f32 %v7576, %v8226
      %v8293 = vadd.f32 %v7579, %v8229
      %v8294 = vadd.f32 %v7581, %v8231
      %v8295 = vadd.f32 %v7584, %v8234
      %v8296 = vadd.f32 %v7586, %v8236
      %v8297 = vadd.f32 %v7589, %v8239
      %v8298 = vadd.f32 %v7591, %v8241
      %v8299 = vadd.f32 %v7594, %v8244
      %v8300 = vadd.f32 %v7596, %v8246
      %v8301 = vadd.f32 %v7599, %v8249
      %v8302 = vadd.f32 %v7601, %v8251
      %v8303 = vadd.f32 %v7604, %v8254
      %v8304 = vadd.f32 %v7606, %v8256
      %v8305 = vadd.f32 %v7609, %v8259
      %v8306 = vadd.f32 %v7611, %v8261
      %v8307 = vadd.f32 %v7614, %v8264
      %v8308 = vadd.f32 %v7616, %v8266
      %v8309 = vadd.f32 %v7619, %v8269
      %v8310 = vadd.f32 %v7621, %v8271
      %v8311 = vadd.f32 %v7624, %v8274
      %v8312 = vadd.f32 %v7626, %v8276
      %v8313 = vadd.f32 %v7629, %v8279
      %v8314 = vadd.f32 %v7631, %v8281
      %v8315 = vld [vmem:[%s5495] sm:$0xe]
      %v8316 = vld [vmem:[%s5495 + $0xc] sm:$0xe]
      %v8317 = vld [vmem:[%s5495 + $0x18] sm:$0xe]
      %v8318 = vld [vmem:[%s5495 + $0x24] sm:$0xe]
      %v8319 = vld [vmem:[%s5495 + $0x30] sm:$0xe]
      %v8320 = vld [vmem:[%s5495 + $0x3c] sm:$0xe]
      %v8321 = vld [vmem:[%s5495 + $0x48] sm:$0xe]
      %v8322 = vld [vmem:[%s5495 + $0x54] sm:$0xe]
      %v8323 = vld [vmem:[%s5495 + $0x60] sm:$0xe]
      %v8324 = vld [vmem:[%s5495 + $0x6c] sm:$0xe]
      %v8325 = vld [vmem:[%s5495 + $0x78] sm:$0xe]
      %v8326 = vld [vmem:[%s5495 + $0x84] sm:$0xe]
      %v8327 = vld [vmem:[%s5495 + $0x90] sm:$0xe]
      %v8328 = vld [vmem:[%s5495 + $0x9c] sm:$0xe]
      %v8329 = vld [vmem:[%s5495 + $0xa8] sm:$0xe]
      %v8330 = vld [vmem:[%s5495 + $0xb4] sm:$0xe]
      %v8379 = vrot.slane %v8315, 5
      %v8380 = vrot.slane %v8379, 4
      %v8381 = vrot.slane %v7634, 5
      %v8382 = vsel %vm2858, %v8380, %v8381
      %v8383 = vrot.slane %v8381, 4
      %v8384 = vrot.slane %v7635, 5
      %v8385 = vsel %vm2858, %v8383, %v8384
      %v8386 = vrot.slane %v8316, 5
      %v8387 = vrot.slane %v8386, 4
      %v8388 = vrot.slane %v7637, 5
      %v8389 = vsel %vm2858, %v8387, %v8388
      %v8390 = vrot.slane %v8388, 4
      %v8391 = vrot.slane %v7638, 5
      %v8392 = vsel %vm2858, %v8390, %v8391
      %v8393 = vrot.slane %v8317, 5
      %v8394 = vrot.slane %v8393, 4
      %v8395 = vrot.slane %v7640, 5
      %v8396 = vsel %vm2858, %v8394, %v8395
      %v8397 = vrot.slane %v8395, 4
      %v8398 = vrot.slane %v7641, 5
      %v8399 = vsel %vm2858, %v8397, %v8398
      %v8400 = vrot.slane %v8318, 5
      %v8401 = vrot.slane %v8400, 4
      %v8402 = vrot.slane %v7643, 5
      %v8403 = vsel %vm2858, %v8401, %v8402
      %v8404 = vrot.slane %v8402, 4
      %v8405 = vrot.slane %v7644, 5
      %v8406 = vsel %vm2858, %v8404, %v8405
      %v8407 = vrot.slane %v8319, 5
      %v8408 = vrot.slane %v8407, 4
      %v8409 = vrot.slane %v7646, 5
      %v8410 = vsel %vm2858, %v8408, %v8409
      %v8411 = vrot.slane %v8409, 4
      %v8412 = vrot.slane %v7647, 5
      %v8413 = vsel %vm2858, %v8411, %v8412
      %v8414 = vrot.slane %v8320, 5
      %v8415 = vrot.slane %v8414, 4
      %v8416 = vrot.slane %v7649, 5
      %v8417 = vsel %vm2858, %v8415, %v8416
      %v8418 = vrot.slane %v8416, 4
      %v8419 = vrot.slane %v7650, 5
      %v8420 = vsel %vm2858, %v8418, %v8419
      %v8421 = vrot.slane %v8321, 5
      %v8422 = vrot.slane %v8421, 4
      %v8423 = vrot.slane %v7652, 5
      %v8424 = vsel %vm2858, %v8422, %v8423
      %v8425 = vrot.slane %v8423, 4
      %v8426 = vrot.slane %v7653, 5
      %v8427 = vsel %vm2858, %v8425, %v8426
      %v8428 = vrot.slane %v8322, 5
      %v8429 = vrot.slane %v8428, 4
      %v8430 = vrot.slane %v7655, 5
      %v8431 = vsel %vm2858, %v8429, %v8430
      %v8432 = vrot.slane %v8430, 4
      %v8433 = vrot.slane %v7656, 5
      %v8434 = vsel %vm2858, %v8432, %v8433
      %v8435 = vrot.slane %v8323, 5
      %v8436 = vrot.slane %v8435, 4
      %v8437 = vrot.slane %v7658, 5
      %v8438 = vsel %vm2858, %v8436, %v8437
      %v8439 = vrot.slane %v8437, 4
      %v8440 = vrot.slane %v7659, 5
      %v8441 = vsel %vm2858, %v8439, %v8440
      %v8442 = vrot.slane %v8324, 5
      %v8443 = vrot.slane %v8442, 4
      %v8444 = vrot.slane %v7661, 5
      %v8445 = vsel %vm2858, %v8443, %v8444
      %v8446 = vrot.slane %v8444, 4
      %v8447 = vrot.slane %v7662, 5
      %v8448 = vsel %vm2858, %v8446, %v8447
      %v8449 = vrot.slane %v8325, 5
      %v8450 = vrot.slane %v8449, 4
      %v8451 = vrot.slane %v7664, 5
      %v8452 = vsel %vm2858, %v8450, %v8451
      %v8453 = vrot.slane %v8451, 4
      %v8454 = vrot.slane %v7665, 5
      %v8455 = vsel %vm2858, %v8453, %v8454
      %v8456 = vrot.slane %v8326, 5
      %v8457 = vrot.slane %v8456, 4
      %v8458 = vrot.slane %v7667, 5
      %v8459 = vsel %vm2858, %v8457, %v8458
      %v8460 = vrot.slane %v8458, 4
      %v8461 = vrot.slane %v7668, 5
      %v8462 = vsel %vm2858, %v8460, %v8461
      %v8463 = vrot.slane %v8327, 5
      %v8464 = vrot.slane %v8463, 4
      %v8465 = vrot.slane %v7670, 5
      %v8466 = vsel %vm2858, %v8464, %v8465
      %v8467 = vrot.slane %v8465, 4
      %v8468 = vrot.slane %v7671, 5
      %v8469 = vsel %vm2858, %v8467, %v8468
      %v8470 = vrot.slane %v8328, 5
      %v8471 = vrot.slane %v8470, 4
      %v8472 = vrot.slane %v7673, 5
      %v8473 = vsel %vm2858, %v8471, %v8472
      %v8474 = vrot.slane %v8472, 4
      %v8475 = vrot.slane %v7674, 5
      %v8476 = vsel %vm2858, %v8474, %v8475
      %v8477 = vrot.slane %v8329, 5
      %v8478 = vrot.slane %v8477, 4
      %v8479 = vrot.slane %v7676, 5
      %v8480 = vsel %vm2858, %v8478, %v8479
      %v8481 = vrot.slane %v8479, 4
      %v8482 = vrot.slane %v7677, 5
      %v8483 = vsel %vm2858, %v8481, %v8482
      %v8484 = vrot.slane %v8330, 5
      %v8485 = vrot.slane %v8484, 4
      %v8486 = vrot.slane %v7679, 5
      %v8487 = vsel %vm2858, %v8485, %v8486
      %v8488 = vrot.slane %v8486, 4
      %v8489 = vrot.slane %v7680, 5
      %v8490 = vsel %vm2858, %v8488, %v8489
      %s8491 = scalar_lea.vmem %s209, 960
      %v8492 = vld [vmem:[%s8491] sm:$0xf]
      %v8493 = vld [vmem:[%s8491 + $0x4] sm:$0xf]
      %v8494 = vld [vmem:[%s8491 + $0x8] sm:$0xf]
      %v8495 = vld [vmem:[%s8491 + $0xc] sm:$0xf]
      %v8496 = vld [vmem:[%s8491 + $0x10] sm:$0xf]
      %v8497 = vld [vmem:[%s8491 + $0x14] sm:$0xf]
      %v8498 = vld [vmem:[%s8491 + $0x18] sm:$0xf]
      %v8499 = vld [vmem:[%s8491 + $0x1c] sm:$0xf]
      %v8500 = vld [vmem:[%s8491 + $0x20] sm:$0xf]
      %v8501 = vld [vmem:[%s8491 + $0x24] sm:$0xf]
      %v8502 = vld [vmem:[%s8491 + $0x28] sm:$0xf]
      %v8503 = vld [vmem:[%s8491 + $0x2c] sm:$0xf]
      %v8504 = vld [vmem:[%s8491 + $0x30] sm:$0xf]
      %v8505 = vld [vmem:[%s8491 + $0x34] sm:$0xf]
      %v8506 = vld [vmem:[%s8491 + $0x38] sm:$0xf]
      %v8507 = vld [vmem:[%s8491 + $0x3c] sm:$0xf]
      %v8508 = vunpack.c.l.b16 %v8382
      %v8509 = vunpack.c.l.b16 %v8385
      %v8510 = vunpack.c.l.b16 %v8389
      %v8511 = vunpack.c.l.b16 %v8392
      %v8512 = vunpack.c.l.b16 %v8396
      %v8513 = vunpack.c.l.b16 %v8399
      %v8514 = vunpack.c.l.b16 %v8403
      %v8515 = vunpack.c.l.b16 %v8406
      %v8516 = vunpack.c.l.b16 %v8410
      %v8517 = vunpack.c.l.b16 %v8413
      %v8518 = vunpack.c.l.b16 %v8417
      %v8519 = vunpack.c.l.b16 %v8420
      %v8520 = vunpack.c.l.b16 %v8424
      %v8521 = vunpack.c.l.b16 %v8427
      %v8522 = vunpack.c.l.b16 %v8431
      %v8523 = vunpack.c.l.b16 %v8434
      %v8524 = vunpack.c.l.b16 %v8438
      %v8525 = vunpack.c.l.b16 %v8441
      %v8526 = vunpack.c.l.b16 %v8445
      %v8527 = vunpack.c.l.b16 %v8448
      %v8528 = vunpack.c.l.b16 %v8452
      %v8529 = vunpack.c.l.b16 %v8455
      %v8530 = vunpack.c.l.b16 %v8459
      %v8531 = vunpack.c.l.b16 %v8462
      %v8532 = vunpack.c.l.b16 %v8466
      %v8533 = vunpack.c.l.b16 %v8469
      %v8534 = vunpack.c.l.b16 %v8473
      %v8535 = vunpack.c.l.b16 %v8476
      %v8536 = vunpack.c.l.b16 %v8480
      %v8537 = vunpack.c.l.b16 %v8483
      %v8538 = vunpack.c.l.b16 %v8487
      %v8539 = vunpack.c.l.b16 %v8490
      %v8540 = vpack.c.b16 %v8509, %v8508
      %v8541 = vpack.c.b16 %v8511, %v8510
      %v8542 = vpack.c.b16 %v8513, %v8512
      %v8543 = vpack.c.b16 %v8515, %v8514
      %v8544 = vpack.c.b16 %v8517, %v8516
      %v8545 = vpack.c.b16 %v8519, %v8518
      %v8546 = vpack.c.b16 %v8521, %v8520
      %v8547 = vpack.c.b16 %v8523, %v8522
      %v8548 = vpack.c.b16 %v8525, %v8524
      %v8549 = vpack.c.b16 %v8527, %v8526
      %v8550 = vpack.c.b16 %v8529, %v8528
      %v8551 = vpack.c.b16 %v8531, %v8530
      %v8552 = vpack.c.b16 %v8533, %v8532
      %v8553 = vpack.c.b16 %v8535, %v8534
      %v8554 = vpack.c.b16 %v8537, %v8536
      %v8555 = vpack.c.b16 %v8539, %v8538
      %v8588 = vunpack.c.l.b16 %v8492
      %v8589 = vunpack.c.l.b16 %v8493
      %v8590 = vunpack.c.l.b16 %v8494
      %v8591 = vunpack.c.l.b16 %v8495
      %v8592 = vunpack.c.l.b16 %v8496
      %v8593 = vunpack.c.l.b16 %v8497
      %v8594 = vunpack.c.l.b16 %v8498
      %v8595 = vunpack.c.l.b16 %v8499
      %v8596 = vunpack.c.l.b16 %v8500
      %v8597 = vunpack.c.l.b16 %v8501
      %v8598 = vunpack.c.l.b16 %v8502
      %v8599 = vunpack.c.l.b16 %v8503
      %v8600 = vunpack.c.l.b16 %v8504
      %v8601 = vunpack.c.l.b16 %v8505
      %v8602 = vunpack.c.l.b16 %v8506
      %v8603 = vunpack.c.l.b16 %v8507
      %v8604 = vpack.c.b16 %v8589, %v8588
      %v8605 = vpack.c.b16 %v8591, %v8590
      %v8606 = vpack.c.b16 %v8593, %v8592
      %v8607 = vpack.c.b16 %v8595, %v8594
      %v8608 = vpack.c.b16 %v8597, %v8596
      %v8609 = vpack.c.b16 %v8599, %v8598
      %v8610 = vpack.c.b16 %v8601, %v8600
      %v8611 = vpack.c.b16 %v8603, %v8602
      %8620 = vmatpush.bf16.msra.mxu0 %v8611
      %8621 = vmatpush.bf16.msra.mxu0 %v8610
      %8622 = vmatpush.bf16.msra.mxu0 %v8609
      %8623 = vmatpush.bf16.msra.mxu0 %v8608
      %8624 = vmatpush.bf16.msra.mxu0 %v8607
      %8625 = vmatpush.bf16.msra.mxu0 %v8606
      %8626 = vmatpush.bf16.msra.mxu0 %v8605
      %8627 = vmatpush.bf16.msra.mxu0 %v8604
      %8628 = vmatmul.bf16.gmra.mxu0 %v8540
      %v8629 = vpop.f32.mrf.mxu0
      %v8630 = vadd.f32 0.0, %v8629
      %v8631 = vpop.f32.mrf.mxu0
      %v8632 = vadd.f32 0.0, %v8631
      %8633 = vmatmul.bf16.gmra.mxu0 %v8541
      %v8634 = vpop.f32.mrf.mxu0
      %v8635 = vadd.f32 0.0, %v8634
      %v8636 = vpop.f32.mrf.mxu0
      %v8637 = vadd.f32 0.0, %v8636
      %8638 = vmatmul.bf16.gmra.mxu0 %v8542
      %v8639 = vpop.f32.mrf.mxu0
      %v8640 = vadd.f32 0.0, %v8639
      %v8641 = vpop.f32.mrf.mxu0
      %v8642 = vadd.f32 0.0, %v8641
      %8643 = vmatmul.bf16.gmra.mxu0 %v8543
      %v8644 = vpop.f32.mrf.mxu0
      %v8645 = vadd.f32 0.0, %v8644
      %v8646 = vpop.f32.mrf.mxu0
      %v8647 = vadd.f32 0.0, %v8646
      %8648 = vmatmul.bf16.gmra.mxu0 %v8544
      %v8649 = vpop.f32.mrf.mxu0
      %v8650 = vadd.f32 0.0, %v8649
      %v8651 = vpop.f32.mrf.mxu0
      %v8652 = vadd.f32 0.0, %v8651
      %8653 = vmatmul.bf16.gmra.mxu0 %v8545
      %v8654 = vpop.f32.mrf.mxu0
      %v8655 = vadd.f32 0.0, %v8654
      %v8656 = vpop.f32.mrf.mxu0
      %v8657 = vadd.f32 0.0, %v8656
      %8658 = vmatmul.bf16.gmra.mxu0 %v8546
      %v8659 = vpop.f32.mrf.mxu0
      %v8660 = vadd.f32 0.0, %v8659
      %v8661 = vpop.f32.mrf.mxu0
      %v8662 = vadd.f32 0.0, %v8661
      %8663 = vmatmul.bf16.gmra.mxu0 %v8547
      %v8664 = vpop.f32.mrf.mxu0
      %v8665 = vadd.f32 0.0, %v8664
      %v8666 = vpop.f32.mrf.mxu0
      %v8667 = vadd.f32 0.0, %v8666
      %8668 = vmatmul.bf16.gmra.mxu0 %v8548
      %v8669 = vpop.f32.mrf.mxu0
      %v8670 = vadd.f32 0.0, %v8669
      %v8671 = vpop.f32.mrf.mxu0
      %v8672 = vadd.f32 0.0, %v8671
      %8673 = vmatmul.bf16.gmra.mxu0 %v8549
      %v8674 = vpop.f32.mrf.mxu0
      %v8675 = vadd.f32 0.0, %v8674
      %v8676 = vpop.f32.mrf.mxu0
      %v8677 = vadd.f32 0.0, %v8676
      %8678 = vmatmul.bf16.gmra.mxu0 %v8550
      %v8679 = vpop.f32.mrf.mxu0
      %v8680 = vadd.f32 0.0, %v8679
      %v8681 = vpop.f32.mrf.mxu0
      %v8682 = vadd.f32 0.0, %v8681
      %8683 = vmatmul.bf16.gmra.mxu0 %v8551
      %v8684 = vpop.f32.mrf.mxu0
      %v8685 = vadd.f32 0.0, %v8684
      %v8686 = vpop.f32.mrf.mxu0
      %v8687 = vadd.f32 0.0, %v8686
      %8688 = vmatmul.bf16.gmra.mxu0 %v8552
      %v8689 = vpop.f32.mrf.mxu0
      %v8690 = vadd.f32 0.0, %v8689
      %v8691 = vpop.f32.mrf.mxu0
      %v8692 = vadd.f32 0.0, %v8691
      %8693 = vmatmul.bf16.gmra.mxu0 %v8553
      %v8694 = vpop.f32.mrf.mxu0
      %v8695 = vadd.f32 0.0, %v8694
      %v8696 = vpop.f32.mrf.mxu0
      %v8697 = vadd.f32 0.0, %v8696
      %8698 = vmatmul.bf16.gmra.mxu0 %v8554
      %v8699 = vpop.f32.mrf.mxu0
      %v8700 = vadd.f32 0.0, %v8699
      %v8701 = vpop.f32.mrf.mxu0
      %v8702 = vadd.f32 0.0, %v8701
      %8703 = vmatmul.bf16.gmra.mxu0 %v8555
      %v8704 = vpop.f32.mrf.mxu0
      %v8705 = vadd.f32 0.0, %v8704
      %v8706 = vpop.f32.mrf.mxu0
      %v8707 = vadd.f32 0.0, %v8706
      %8708 = vdwg.mxu0
      %v8709 = vadd.f32 %v8283, %v8630
      %v8710 = vadd.f32 %v8284, %v8632
      %v8711 = vadd.f32 %v8285, %v8635
      %v8712 = vadd.f32 %v8286, %v8637
      %v8713 = vadd.f32 %v8287, %v8640
      %v8714 = vadd.f32 %v8288, %v8642
      %v8715 = vadd.f32 %v8289, %v8645
      %v8716 = vadd.f32 %v8290, %v8647
      %v8717 = vadd.f32 %v8291, %v8650
      %v8718 = vadd.f32 %v8292, %v8652
      %v8719 = vadd.f32 %v8293, %v8655
      %v8720 = vadd.f32 %v8294, %v8657
      %v8721 = vadd.f32 %v8295, %v8660
      %v8722 = vadd.f32 %v8296, %v8662
      %v8723 = vadd.f32 %v8297, %v8665
      %v8724 = vadd.f32 %v8298, %v8667
      %v8725 = vadd.f32 %v8299, %v8670
      %v8726 = vadd.f32 %v8300, %v8672
      %v8727 = vadd.f32 %v8301, %v8675
      %v8728 = vadd.f32 %v8302, %v8677
      %v8729 = vadd.f32 %v8303, %v8680
      %v8730 = vadd.f32 %v8304, %v8682
      %v8731 = vadd.f32 %v8305, %v8685
      %v8732 = vadd.f32 %v8306, %v8687
      %v8733 = vadd.f32 %v8307, %v8690
      %v8734 = vadd.f32 %v8308, %v8692
      %v8735 = vadd.f32 %v8309, %v8695
      %v8736 = vadd.f32 %v8310, %v8697
      %v8737 = vadd.f32 %v8311, %v8700
      %v8738 = vadd.f32 %v8312, %v8702
      %v8739 = vadd.f32 %v8313, %v8705
      %v8740 = vadd.f32 %v8314, %v8707
      %s8741 = scalar_lea.vmem [#allocation2], 768
      %v8742 = vld [vmem:[%s8741] sm:$0xff]
      %v8743 = vld [vmem:[%s8741 + $0x8] sm:$0xff]
      %v8744 = vld [vmem:[%s8741 + $0x10] sm:$0xff]
      %v8745 = vld [vmem:[%s8741 + $0x18] sm:$0xff]
      %v8746 = vld [vmem:[%s8741 + $0x20] sm:$0xff]
      %v8747 = vld [vmem:[%s8741 + $0x28] sm:$0xff]
      %v8748 = vld [vmem:[%s8741 + $0x30] sm:$0xff]
      %v8749 = vld [vmem:[%s8741 + $0x38] sm:$0xff]
      %v8750 = vld [vmem:[%s8741 + $0x40] sm:$0xff]
      %v8751 = vld [vmem:[%s8741 + $0x48] sm:$0xff]
      %v8752 = vld [vmem:[%s8741 + $0x50] sm:$0xff]
      %v8753 = vld [vmem:[%s8741 + $0x58] sm:$0xff]
      %v8754 = vld [vmem:[%s8741 + $0x60] sm:$0xff]
      %v8755 = vld [vmem:[%s8741 + $0x68] sm:$0xff]
      %v8756 = vld [vmem:[%s8741 + $0x70] sm:$0xff]
      %v8757 = vld [vmem:[%s8741 + $0x78] sm:$0xff]
      %v8758 = vld [vmem:[%s8741 + $0x80] sm:$0xff]
      %v8759 = vld [vmem:[%s8741 + $0x88] sm:$0xff]
      %v8760 = vld [vmem:[%s8741 + $0x90] sm:$0xff]
      %v8761 = vld [vmem:[%s8741 + $0x98] sm:$0xff]
      %v8762 = vld [vmem:[%s8741 + $0xa0] sm:$0xff]
      %v8763 = vld [vmem:[%s8741 + $0xa8] sm:$0xff]
      %v8764 = vld [vmem:[%s8741 + $0xb0] sm:$0xff]
      %v8765 = vld [vmem:[%s8741 + $0xb8] sm:$0xff]
      %v8766 = vld [vmem:[%s8741 + $0xc0] sm:$0xff]
      %v8767 = vld [vmem:[%s8741 + $0xc8] sm:$0xff]
      %v8768 = vld [vmem:[%s8741 + $0xd0] sm:$0xff]
      %v8769 = vld [vmem:[%s8741 + $0xd8] sm:$0xff]
      %v8770 = vld [vmem:[%s8741 + $0xe0] sm:$0xff]
      %v8771 = vld [vmem:[%s8741 + $0xe8] sm:$0xff]
      %v8772 = vld [vmem:[%s8741 + $0xf0] sm:$0xff]
      %v8773 = vld [vmem:[%s8741 + $0xf8] sm:$0xff]
      %v8774 = vadd.f32 %v8742, %v8709
      %v8775 = vadd.f32 %v8743, %v8710
      %v8776 = vadd.f32 %v8744, %v8711
      %v8777 = vadd.f32 %v8745, %v8712
      %v8778 = vadd.f32 %v8746, %v8713
      %v8779 = vadd.f32 %v8747, %v8714
      %v8780 = vadd.f32 %v8748, %v8715
      %v8781 = vadd.f32 %v8749, %v8716
      %v8782 = vadd.f32 %v8750, %v8717
      %v8783 = vadd.f32 %v8751, %v8718
      %v8784 = vadd.f32 %v8752, %v8719
      %v8785 = vadd.f32 %v8753, %v8720
      %v8786 = vadd.f32 %v8754, %v8721
      %v8787 = vadd.f32 %v8755, %v8722
      %v8788 = vadd.f32 %v8756, %v8723
      %v8789 = vadd.f32 %v8757, %v8724
      %v8790 = vadd.f32 %v8758, %v8725
      %v8791 = vadd.f32 %v8759, %v8726
      %v8792 = vadd.f32 %v8760, %v8727
      %v8793 = vadd.f32 %v8761, %v8728
      %v8794 = vadd.f32 %v8762, %v8729
      %v8795 = vadd.f32 %v8763, %v8730
      %v8796 = vadd.f32 %v8764, %v8731
      %v8797 = vadd.f32 %v8765, %v8732
      %v8798 = vadd.f32 %v8766, %v8733
      %v8799 = vadd.f32 %v8767, %v8734
      %v8800 = vadd.f32 %v8768, %v8735
      %v8801 = vadd.f32 %v8769, %v8736
      %v8802 = vadd.f32 %v8770, %v8737
      %v8803 = vadd.f32 %v8771, %v8738
      %v8804 = vadd.f32 %v8772, %v8739
      %v8805 = vadd.f32 %v8773, %v8740
      %8806 = vst [vmem:[%s8741] sm:$0xff] %v8774
      %8807 = vst [vmem:[%s8741 + $0x8] sm:$0xff] %v8775
      %8808 = vst [vmem:[%s8741 + $0x10] sm:$0xff] %v8776
      %8809 = vst [vmem:[%s8741 + $0x18] sm:$0xff] %v8777
      %8810 = vst [vmem:[%s8741 + $0x20] sm:$0xff] %v8778
      %8811 = vst [vmem:[%s8741 + $0x28] sm:$0xff] %v8779
      %8812 = vst [vmem:[%s8741 + $0x30] sm:$0xff] %v8780
      %8813 = vst [vmem:[%s8741 + $0x38] sm:$0xff] %v8781
      %8814 = vst [vmem:[%s8741 + $0x40] sm:$0xff] %v8782
      %8815 = vst [vmem:[%s8741 + $0x48] sm:$0xff] %v8783
      %8816 = vst [vmem:[%s8741 + $0x50] sm:$0xff] %v8784
      %8817 = vst [vmem:[%s8741 + $0x58] sm:$0xff] %v8785
      %8818 = vst [vmem:[%s8741 + $0x60] sm:$0xff] %v8786
      %8819 = vst [vmem:[%s8741 + $0x68] sm:$0xff] %v8787
      %8820 = vst [vmem:[%s8741 + $0x70] sm:$0xff] %v8788
      %8821 = vst [vmem:[%s8741 + $0x78] sm:$0xff] %v8789
      %8822 = vst [vmem:[%s8741 + $0x80] sm:$0xff] %v8790
      %8823 = vst [vmem:[%s8741 + $0x88] sm:$0xff] %v8791
      %8824 = vst [vmem:[%s8741 + $0x90] sm:$0xff] %v8792
      %8825 = vst [vmem:[%s8741 + $0x98] sm:$0xff] %v8793
      %8826 = vst [vmem:[%s8741 + $0xa0] sm:$0xff] %v8794
      %8827 = vst [vmem:[%s8741 + $0xa8] sm:$0xff] %v8795
      %8828 = vst [vmem:[%s8741 + $0xb0] sm:$0xff] %v8796
      %8829 = vst [vmem:[%s8741 + $0xb8] sm:$0xff] %v8797
      %8830 = vst [vmem:[%s8741 + $0xc0] sm:$0xff] %v8798
      %8831 = vst [vmem:[%s8741 + $0xc8] sm:$0xff] %v8799
      %8832 = vst [vmem:[%s8741 + $0xd0] sm:$0xff] %v8800
      %8833 = vst [vmem:[%s8741 + $0xd8] sm:$0xff] %v8801
      %8834 = vst [vmem:[%s8741 + $0xe0] sm:$0xff] %v8802
      %8835 = vst [vmem:[%s8741 + $0xe8] sm:$0xff] %v8803
      %8836 = vst [vmem:[%s8741 + $0xf0] sm:$0xff] %v8804
      %8837 = vst [vmem:[%s8741 + $0xf8] sm:$0xff] %v8805
      // Predicated region
      $region37: #{prediction_head.3} parent=31 // pred_check
        %p8838 = pneg %p216
      $region38: #{prediction_head.3} parent=31 // pred_check_branch
        %8840 = sbr.rel (%p8838) target = $region40
      $region39: #{prediction_head.3} parent=31 // pred_region
        %v8841 = vld [vmem:[%s2] sm:$0x1]
        %v8842 = vld [vmem:[#allocation2] sm:$0xff]
        %v8843 = vld [vmem:[#allocation2 + $0x8] sm:$0xff]
        %v8844 = vld [vmem:[#allocation2 + $0x10] sm:$0xff]
        %v8845 = vld [vmem:[#allocation2 + $0x18] sm:$0xff]
        %v8846 = vld [vmem:[#allocation2 + $0x20] sm:$0xff]
        %v8847 = vld [vmem:[#allocation2 + $0x28] sm:$0xff]
        %v8848 = vld [vmem:[#allocation2 + $0x30] sm:$0xff]
        %v8849 = vld [vmem:[#allocation2 + $0x38] sm:$0xff]
        %v8850 = vld [vmem:[#allocation2 + $0x40] sm:$0xff]
        %v8851 = vld [vmem:[#allocation2 + $0x48] sm:$0xff]
        %v8852 = vld [vmem:[#allocation2 + $0x50] sm:$0xff]
        %v8853 = vld [vmem:[#allocation2 + $0x58] sm:$0xff]
        %v8854 = vld [vmem:[#allocation2 + $0x60] sm:$0xff]
        %v8855 = vld [vmem:[#allocation2 + $0x68] sm:$0xff]
        %v8856 = vld [vmem:[#allocation2 + $0x70] sm:$0xff]
        %v8857 = vld [vmem:[#allocation2 + $0x78] sm:$0xff]
        %v8858 = vld [vmem:[#allocation2 + $0x80] sm:$0xff]
        %v8859 = vld [vmem:[#allocation2 + $0x88] sm:$0xff]
        %v8860 = vld [vmem:[#allocation2 + $0x90] sm:$0xff]
        %v8861 = vld [vmem:[#allocation2 + $0x98] sm:$0xff]
        %v8862 = vld [vmem:[#allocation2 + $0xa0] sm:$0xff]
        %v8863 = vld [vmem:[#allocation2 + $0xa8] sm:$0xff]
        %v8864 = vld [vmem:[#allocation2 + $0xb0] sm:$0xff]
        %v8865 = vld [vmem:[#allocation2 + $0xb8] sm:$0xff]
        %v8866 = vld [vmem:[#allocation2 + $0xc0] sm:$0xff]
        %v8867 = vld [vmem:[#allocation2 + $0xc8] sm:$0xff]
        %v8868 = vld [vmem:[#allocation2 + $0xd0] sm:$0xff]
        %v8869 = vld [vmem:[#allocation2 + $0xd8] sm:$0xff]
        %v8870 = vld [vmem:[#allocation2 + $0xe0] sm:$0xff]
        %v8871 = vld [vmem:[#allocation2 + $0xe8] sm:$0xff]
        %v8872 = vld [vmem:[#allocation2 + $0xf0] sm:$0xff]
        %v8873 = vld [vmem:[#allocation2 + $0xf8] sm:$0xff]
        %v8875 = vperm.slane %v8841, 0
        %v8877 = vadd.f32 %v8842, %v8875
        %v8878 = vadd.f32 %v8843, %v8875
        %v8879 = vadd.f32 %v8844, %v8875
        %v8880 = vadd.f32 %v8845, %v8875
        %v8881 = vadd.f32 %v8846, %v8875
        %v8882 = vadd.f32 %v8847, %v8875
        %v8883 = vadd.f32 %v8848, %v8875
        %v8884 = vadd.f32 %v8849, %v8875
        %v8885 = vadd.f32 %v8850, %v8875
        %v8886 = vadd.f32 %v8851, %v8875
        %v8887 = vadd.f32 %v8852, %v8875
        %v8888 = vadd.f32 %v8853, %v8875
        %v8889 = vadd.f32 %v8854, %v8875
        %v8890 = vadd.f32 %v8855, %v8875
        %v8891 = vadd.f32 %v8856, %v8875
        %v8892 = vadd.f32 %v8857, %v8875
        %v8893 = vadd.f32 %v8858, %v8875
        %v8894 = vadd.f32 %v8859, %v8875
        %v8895 = vadd.f32 %v8860, %v8875
        %v8896 = vadd.f32 %v8861, %v8875
        %v8897 = vadd.f32 %v8862, %v8875
        %v8898 = vadd.f32 %v8863, %v8875
        %v8899 = vadd.f32 %v8864, %v8875
        %v8900 = vadd.f32 %v8865, %v8875
        %v8901 = vadd.f32 %v8866, %v8875
        %v8902 = vadd.f32 %v8867, %v8875
        %v8903 = vadd.f32 %v8868, %v8875
        %v8904 = vadd.f32 %v8869, %v8875
        %v8905 = vadd.f32 %v8870, %v8875
        %v8906 = vadd.f32 %v8871, %v8875
        %v8907 = vadd.f32 %v8872, %v8875
        %v8908 = vadd.f32 %v8873, %v8875
        %8909 = vst [vmem:[%s215] sm:$0xff] %v8877
        %8910 = vst [vmem:[%s215 + $0x10] sm:$0xff] %v8878
        %8911 = vst [vmem:[%s215 + $0x40] sm:$0xff] %v8879
        %8912 = vst [vmem:[%s215 + $0x50] sm:$0xff] %v8880
        %8913 = vst [vmem:[%s215 + $0x80] sm:$0xff] %v8881
        %8914 = vst [vmem:[%s215 + $0x90] sm:$0xff] %v8882
        %8915 = vst [vmem:[%s215 + $0xc0] sm:$0xff] %v8883
        %8916 = vst [vmem:[%s215 + $0xd0] sm:$0xff] %v8884
        %8917 = vst [vmem:[%s215 + $0x100] sm:$0xff] %v8885
        %8918 = vst [vmem:[%s215 + $0x110] sm:$0xff] %v8886
        %8919 = vst [vmem:[%s215 + $0x140] sm:$0xff] %v8887
        %8920 = vst [vmem:[%s215 + $0x150] sm:$0xff] %v8888
        %8921 = vst [vmem:[%s215 + $0x180] sm:$0xff] %v8889
        %8922 = vst [vmem:[%s215 + $0x190] sm:$0xff] %v8890
        %8923 = vst [vmem:[%s215 + $0x1c0] sm:$0xff] %v8891
        %8924 = vst [vmem:[%s215 + $0x1d0] sm:$0xff] %v8892
        %8925 = vst [vmem:[%s215 + $0x200] sm:$0xff] %v8893
        %8926 = vst [vmem:[%s215 + $0x210] sm:$0xff] %v8894
        %8927 = vst [vmem:[%s215 + $0x240] sm:$0xff] %v8895
        %8928 = vst [vmem:[%s215 + $0x250] sm:$0xff] %v8896
        %8929 = vst [vmem:[%s215 + $0x280] sm:$0xff] %v8897
        %8930 = vst [vmem:[%s215 + $0x290] sm:$0xff] %v8898
        %8931 = vst [vmem:[%s215 + $0x2c0] sm:$0xff] %v8899
        %8932 = vst [vmem:[%s215 + $0x2d0] sm:$0xff] %v8900
        %8933 = vst [vmem:[%s215 + $0x300] sm:$0xff] %v8901
        %8934 = vst [vmem:[%s215 + $0x310] sm:$0xff] %v8902
        %8935 = vst [vmem:[%s215 + $0x340] sm:$0xff] %v8903
        %8936 = vst [vmem:[%s215 + $0x350] sm:$0xff] %v8904
        %8937 = vst [vmem:[%s215 + $0x380] sm:$0xff] %v8905
        %8938 = vst [vmem:[%s215 + $0x390] sm:$0xff] %v8906
        %8939 = vst [vmem:[%s215 + $0x3c0] sm:$0xff] %v8907
        %8940 = vst [vmem:[%s215 + $0x3d0] sm:$0xff] %v8908
        %v8941 = vld [vmem:[%s4498] sm:$0xff]
        %v8942 = vld [vmem:[%s4498 + $0x8] sm:$0xff]
        %v8943 = vld [vmem:[%s4498 + $0x10] sm:$0xff]
        %v8944 = vld [vmem:[%s4498 + $0x18] sm:$0xff]
        %v8945 = vld [vmem:[%s4498 + $0x20] sm:$0xff]
        %v8946 = vld [vmem:[%s4498 + $0x28] sm:$0xff]
        %v8947 = vld [vmem:[%s4498 + $0x30] sm:$0xff]
        %v8948 = vld [vmem:[%s4498 + $0x38] sm:$0xff]
        %v8949 = vld [vmem:[%s4498 + $0x40] sm:$0xff]
        %v8950 = vld [vmem:[%s4498 + $0x48] sm:$0xff]
        %v8951 = vld [vmem:[%s4498 + $0x50] sm:$0xff]
        %v8952 = vld [vmem:[%s4498 + $0x58] sm:$0xff]
        %v8953 = vld [vmem:[%s4498 + $0x60] sm:$0xff]
        %v8954 = vld [vmem:[%s4498 + $0x68] sm:$0xff]
        %v8955 = vld [vmem:[%s4498 + $0x70] sm:$0xff]
        %v8956 = vld [vmem:[%s4498 + $0x78] sm:$0xff]
        %v8957 = vld [vmem:[%s4498 + $0x80] sm:$0xff]
        %v8958 = vld [vmem:[%s4498 + $0x88] sm:$0xff]
        %v8959 = vld [vmem:[%s4498 + $0x90] sm:$0xff]
        %v8960 = vld [vmem:[%s4498 + $0x98] sm:$0xff]
        %v8961 = vld [vmem:[%s4498 + $0xa0] sm:$0xff]
        %v8962 = vld [vmem:[%s4498 + $0xa8] sm:$0xff]
        %v8963 = vld [vmem:[%s4498 + $0xb0] sm:$0xff]
        %v8964 = vld [vmem:[%s4498 + $0xb8] sm:$0xff]
        %v8965 = vld [vmem:[%s4498 + $0xc0] sm:$0xff]
        %v8966 = vld [vmem:[%s4498 + $0xc8] sm:$0xff]
        %v8967 = vld [vmem:[%s4498 + $0xd0] sm:$0xff]
        %v8968 = vld [vmem:[%s4498 + $0xd8] sm:$0xff]
        %v8969 = vld [vmem:[%s4498 + $0xe0] sm:$0xff]
        %v8970 = vld [vmem:[%s4498 + $0xe8] sm:$0xff]
        %v8971 = vld [vmem:[%s4498 + $0xf0] sm:$0xff]
        %v8972 = vld [vmem:[%s4498 + $0xf8] sm:$0xff]
        %v8973 = vadd.f32 %v8941, %v8875
        %v8974 = vadd.f32 %v8942, %v8875
        %v8975 = vadd.f32 %v8943, %v8875
        %v8976 = vadd.f32 %v8944, %v8875
        %v8977 = vadd.f32 %v8945, %v8875
        %v8978 = vadd.f32 %v8946, %v8875
        %v8979 = vadd.f32 %v8947, %v8875
        %v8980 = vadd.f32 %v8948, %v8875
        %v8981 = vadd.f32 %v8949, %v8875
        %v8982 = vadd.f32 %v8950, %v8875
        %v8983 = vadd.f32 %v8951, %v8875
        %v8984 = vadd.f32 %v8952, %v8875
        %v8985 = vadd.f32 %v8953, %v8875
        %v8986 = vadd.f32 %v8954, %v8875
        %v8987 = vadd.f32 %v8955, %v8875
        %v8988 = vadd.f32 %v8956, %v8875
        %v8989 = vadd.f32 %v8957, %v8875
        %v8990 = vadd.f32 %v8958, %v8875
        %v8991 = vadd.f32 %v8959, %v8875
        %v8992 = vadd.f32 %v8960, %v8875
        %v8993 = vadd.f32 %v8961, %v8875
        %v8994 = vadd.f32 %v8962, %v8875
        %v8995 = vadd.f32 %v8963, %v8875
        %v8996 = vadd.f32 %v8964, %v8875
        %v8997 = vadd.f32 %v8965, %v8875
        %v8998 = vadd.f32 %v8966, %v8875
        %v8999 = vadd.f32 %v8967, %v8875
        %v9000 = vadd.f32 %v8968, %v8875
        %v9001 = vadd.f32 %v8969, %v8875
        %v9002 = vadd.f32 %v8970, %v8875
        %v9003 = vadd.f32 %v8971, %v8875
        %v9004 = vadd.f32 %v8972, %v8875
        %9005 = vst [vmem:[%s215 + $0x8] sm:$0xff] %v8973
        %9006 = vst [vmem:[%s215 + $0x18] sm:$0xff] %v8974
        %9007 = vst [vmem:[%s215 + $0x48] sm:$0xff] %v8975
        %9008 = vst [vmem:[%s215 + $0x58] sm:$0xff] %v8976
        %9009 = vst [vmem:[%s215 + $0x88] sm:$0xff] %v8977
        %9010 = vst [vmem:[%s215 + $0x98] sm:$0xff] %v8978
        %9011 = vst [vmem:[%s215 + $0xc8] sm:$0xff] %v8979
        %9012 = vst [vmem:[%s215 + $0xd8] sm:$0xff] %v8980
        %9013 = vst [vmem:[%s215 + $0x108] sm:$0xff] %v8981
        %9014 = vst [vmem:[%s215 + $0x118] sm:$0xff] %v8982
        %9015 = vst [vmem:[%s215 + $0x148] sm:$0xff] %v8983
        %9016 = vst [vmem:[%s215 + $0x158] sm:$0xff] %v8984
        %9017 = vst [vmem:[%s215 + $0x188] sm:$0xff] %v8985
        %9018 = vst [vmem:[%s215 + $0x198] sm:$0xff] %v8986
        %9019 = vst [vmem:[%s215 + $0x1c8] sm:$0xff] %v8987
        %9020 = vst [vmem:[%s215 + $0x1d8] sm:$0xff] %v8988
        %9021 = vst [vmem:[%s215 + $0x208] sm:$0xff] %v8989
        %9022 = vst [vmem:[%s215 + $0x218] sm:$0xff] %v8990
        %9023 = vst [vmem:[%s215 + $0x248] sm:$0xff] %v8991
        %9024 = vst [vmem:[%s215 + $0x258] sm:$0xff] %v8992
        %9025 = vst [vmem:[%s215 + $0x288] sm:$0xff] %v8993
        %9026 = vst [vmem:[%s215 + $0x298] sm:$0xff] %v8994
        %9027 = vst [vmem:[%s215 + $0x2c8] sm:$0xff] %v8995
        %9028 = vst [vmem:[%s215 + $0x2d8] sm:$0xff] %v8996
        %9029 = vst [vmem:[%s215 + $0x308] sm:$0xff] %v8997
        %9030 = vst [vmem:[%s215 + $0x318] sm:$0xff] %v8998
        %9031 = vst [vmem:[%s215 + $0x348] sm:$0xff] %v8999
        %9032 = vst [vmem:[%s215 + $0x358] sm:$0xff] %v9000
        %9033 = vst [vmem:[%s215 + $0x388] sm:$0xff] %v9001
        %9034 = vst [vmem:[%s215 + $0x398] sm:$0xff] %v9002
        %9035 = vst [vmem:[%s215 + $0x3c8] sm:$0xff] %v9003
        %9036 = vst [vmem:[%s215 + $0x3d8] sm:$0xff] %v9004
        %v9037 = vld [vmem:[%s6492] sm:$0xff]
        %v9038 = vld [vmem:[%s6492 + $0x8] sm:$0xff]
        %v9039 = vld [vmem:[%s6492 + $0x10] sm:$0xff]
        %v9040 = vld [vmem:[%s6492 + $0x18] sm:$0xff]
        %v9041 = vld [vmem:[%s6492 + $0x20] sm:$0xff]
        %v9042 = vld [vmem:[%s6492 + $0x28] sm:$0xff]
        %v9043 = vld [vmem:[%s6492 + $0x30] sm:$0xff]
        %v9044 = vld [vmem:[%s6492 + $0x38] sm:$0xff]
        %v9045 = vld [vmem:[%s6492 + $0x40] sm:$0xff]
        %v9046 = vld [vmem:[%s6492 + $0x48] sm:$0xff]
        %v9047 = vld [vmem:[%s6492 + $0x50] sm:$0xff]
        %v9048 = vld [vmem:[%s6492 + $0x58] sm:$0xff]
        %v9049 = vld [vmem:[%s6492 + $0x60] sm:$0xff]
        %v9050 = vld [vmem:[%s6492 + $0x68] sm:$0xff]
        %v9051 = vld [vmem:[%s6492 + $0x70] sm:$0xff]
        %v9052 = vld [vmem:[%s6492 + $0x78] sm:$0xff]
        %v9053 = vld [vmem:[%s6492 + $0x80] sm:$0xff]
        %v9054 = vld [vmem:[%s6492 + $0x88] sm:$0xff]
        %v9055 = vld [vmem:[%s6492 + $0x90] sm:$0xff]
        %v9056 = vld [vmem:[%s6492 + $0x98] sm:$0xff]
        %v9057 = vld [vmem:[%s6492 + $0xa0] sm:$0xff]
        %v9058 = vld [vmem:[%s6492 + $0xa8] sm:$0xff]
        %v9059 = vld [vmem:[%s6492 + $0xb0] sm:$0xff]
        %v9060 = vld [vmem:[%s6492 + $0xb8] sm:$0xff]
        %v9061 = vld [vmem:[%s6492 + $0xc0] sm:$0xff]
        %v9062 = vld [vmem:[%s6492 + $0xc8] sm:$0xff]
        %v9063 = vld [vmem:[%s6492 + $0xd0] sm:$0xff]
        %v9064 = vld [vmem:[%s6492 + $0xd8] sm:$0xff]
        %v9065 = vld [vmem:[%s6492 + $0xe0] sm:$0xff]
        %v9066 = vld [vmem:[%s6492 + $0xe8] sm:$0xff]
        %v9067 = vld [vmem:[%s6492 + $0xf0] sm:$0xff]
        %v9068 = vld [vmem:[%s6492 + $0xf8] sm:$0xff]
        %v9069 = vadd.f32 %v9037, %v8875
        %v9070 = vadd.f32 %v9038, %v8875
        %v9071 = vadd.f32 %v9039, %v8875
        %v9072 = vadd.f32 %v9040, %v8875
        %v9073 = vadd.f32 %v9041, %v8875
        %v9074 = vadd.f32 %v9042, %v8875
        %v9075 = vadd.f32 %v9043, %v8875
        %v9076 = vadd.f32 %v9044, %v8875
        %v9077 = vadd.f32 %v9045, %v8875
        %v9078 = vadd.f32 %v9046, %v8875
        %v9079 = vadd.f32 %v9047, %v8875
        %v9080 = vadd.f32 %v9048, %v8875
        %v9081 = vadd.f32 %v9049, %v8875
        %v9082 = vadd.f32 %v9050, %v8875
        %v9083 = vadd.f32 %v9051, %v8875
        %v9084 = vadd.f32 %v9052, %v8875
        %v9085 = vadd.f32 %v9053, %v8875
        %v9086 = vadd.f32 %v9054, %v8875
        %v9087 = vadd.f32 %v9055, %v8875
        %v9088 = vadd.f32 %v9056, %v8875
        %v9089 = vadd.f32 %v9057, %v8875
        %v9090 = vadd.f32 %v9058, %v8875
        %v9091 = vadd.f32 %v9059, %v8875
        %v9092 = vadd.f32 %v9060, %v8875
        %v9093 = vadd.f32 %v9061, %v8875
        %v9094 = vadd.f32 %v9062, %v8875
        %v9095 = vadd.f32 %v9063, %v8875
        %v9096 = vadd.f32 %v9064, %v8875
        %v9097 = vadd.f32 %v9065, %v8875
        %v9098 = vadd.f32 %v9066, %v8875
        %v9099 = vadd.f32 %v9067, %v8875
        %v9100 = vadd.f32 %v9068, %v8875
        %s9101 = scalar_lea.vmem %s215, 32
        %9102 = vst [vmem:[%s9101] sm:$0xff] %v9069
        %9103 = vst [vmem:[%s9101 + $0x10] sm:$0xff] %v9070
        %9104 = vst [vmem:[%s9101 + $0x40] sm:$0xff] %v9071
        %9105 = vst [vmem:[%s9101 + $0x50] sm:$0xff] %v9072
        %9106 = vst [vmem:[%s9101 + $0x80] sm:$0xff] %v9073
        %9107 = vst [vmem:[%s9101 + $0x90] sm:$0xff] %v9074
        %9108 = vst [vmem:[%s9101 + $0xc0] sm:$0xff] %v9075
        %9109 = vst [vmem:[%s9101 + $0xd0] sm:$0xff] %v9076
        %9110 = vst [vmem:[%s9101 + $0x100] sm:$0xff] %v9077
        %9111 = vst [vmem:[%s9101 + $0x110] sm:$0xff] %v9078
        %9112 = vst [vmem:[%s9101 + $0x140] sm:$0xff] %v9079
        %9113 = vst [vmem:[%s9101 + $0x150] sm:$0xff] %v9080
        %9114 = vst [vmem:[%s9101 + $0x180] sm:$0xff] %v9081
        %9115 = vst [vmem:[%s9101 + $0x190] sm:$0xff] %v9082
        %9116 = vst [vmem:[%s9101 + $0x1c0] sm:$0xff] %v9083
        %9117 = vst [vmem:[%s9101 + $0x1d0] sm:$0xff] %v9084
        %9118 = vst [vmem:[%s9101 + $0x200] sm:$0xff] %v9085
        %9119 = vst [vmem:[%s9101 + $0x210] sm:$0xff] %v9086
        %9120 = vst [vmem:[%s9101 + $0x240] sm:$0xff] %v9087
        %9121 = vst [vmem:[%s9101 + $0x250] sm:$0xff] %v9088
        %9122 = vst [vmem:[%s9101 + $0x280] sm:$0xff] %v9089
        %9123 = vst [vmem:[%s9101 + $0x290] sm:$0xff] %v9090
        %9124 = vst [vmem:[%s9101 + $0x2c0] sm:$0xff] %v9091
        %9125 = vst [vmem:[%s9101 + $0x2d0] sm:$0xff] %v9092
        %9126 = vst [vmem:[%s9101 + $0x300] sm:$0xff] %v9093
        %9127 = vst [vmem:[%s9101 + $0x310] sm:$0xff] %v9094
        %9128 = vst [vmem:[%s9101 + $0x340] sm:$0xff] %v9095
        %9129 = vst [vmem:[%s9101 + $0x350] sm:$0xff] %v9096
        %9130 = vst [vmem:[%s9101 + $0x380] sm:$0xff] %v9097
        %9131 = vst [vmem:[%s9101 + $0x390] sm:$0xff] %v9098
        %9132 = vst [vmem:[%s9101 + $0x3c0] sm:$0xff] %v9099
        %9133 = vst [vmem:[%s9101 + $0x3d0] sm:$0xff] %v9100
        %v9134 = vld [vmem:[%s8741] sm:$0xff]
        %v9135 = vld [vmem:[%s8741 + $0x8] sm:$0xff]
        %v9136 = vld [vmem:[%s8741 + $0x10] sm:$0xff]
        %v9137 = vld [vmem:[%s8741 + $0x18] sm:$0xff]
        %v9138 = vld [vmem:[%s8741 + $0x20] sm:$0xff]
        %v9139 = vld [vmem:[%s8741 + $0x28] sm:$0xff]
        %v9140 = vld [vmem:[%s8741 + $0x30] sm:$0xff]
        %v9141 = vld [vmem:[%s8741 + $0x38] sm:$0xff]
        %v9142 = vld [vmem:[%s8741 + $0x40] sm:$0xff]
        %v9143 = vld [vmem:[%s8741 + $0x48] sm:$0xff]
        %v9144 = vld [vmem:[%s8741 + $0x50] sm:$0xff]
        %v9145 = vld [vmem:[%s8741 + $0x58] sm:$0xff]
        %v9146 = vld [vmem:[%s8741 + $0x60] sm:$0xff]
        %v9147 = vld [vmem:[%s8741 + $0x68] sm:$0xff]
        %v9148 = vld [vmem:[%s8741 + $0x70] sm:$0xff]
        %v9149 = vld [vmem:[%s8741 + $0x78] sm:$0xff]
        %v9150 = vld [vmem:[%s8741 + $0x80] sm:$0xff]
        %v9151 = vld [vmem:[%s8741 + $0x88] sm:$0xff]
        %v9152 = vld [vmem:[%s8741 + $0x90] sm:$0xff]
        %v9153 = vld [vmem:[%s8741 + $0x98] sm:$0xff]
        %v9154 = vld [vmem:[%s8741 + $0xa0] sm:$0xff]
        %v9155 = vld [vmem:[%s8741 + $0xa8] sm:$0xff]
        %v9156 = vld [vmem:[%s8741 + $0xb0] sm:$0xff]
        %v9157 = vld [vmem:[%s8741 + $0xb8] sm:$0xff]
        %v9158 = vld [vmem:[%s8741 + $0xc0] sm:$0xff]
        %v9159 = vld [vmem:[%s8741 + $0xc8] sm:$0xff]
        %v9160 = vld [vmem:[%s8741 + $0xd0] sm:$0xff]
        %v9161 = vld [vmem:[%s8741 + $0xd8] sm:$0xff]
        %v9162 = vld [vmem:[%s8741 + $0xe0] sm:$0xff]
        %v9163 = vld [vmem:[%s8741 + $0xe8] sm:$0xff]
        %v9164 = vld [vmem:[%s8741 + $0xf0] sm:$0xff]
        %v9165 = vld [vmem:[%s8741 + $0xf8] sm:$0xff]
        %v9166 = vadd.f32 %v9134, %v8875
        %v9167 = vadd.f32 %v9135, %v8875
        %v9168 = vadd.f32 %v9136, %v8875
        %v9169 = vadd.f32 %v9137, %v8875
        %v9170 = vadd.f32 %v9138, %v8875
        %v9171 = vadd.f32 %v9139, %v8875
        %v9172 = vadd.f32 %v9140, %v8875
        %v9173 = vadd.f32 %v9141, %v8875
        %v9174 = vadd.f32 %v9142, %v8875
        %v9175 = vadd.f32 %v9143, %v8875
        %v9176 = vadd.f32 %v9144, %v8875
        %v9177 = vadd.f32 %v9145, %v8875
        %v9178 = vadd.f32 %v9146, %v8875
        %v9179 = vadd.f32 %v9147, %v8875
        %v9180 = vadd.f32 %v9148, %v8875
        %v9181 = vadd.f32 %v9149, %v8875
        %v9182 = vadd.f32 %v9150, %v8875
        %v9183 = vadd.f32 %v9151, %v8875
        %v9184 = vadd.f32 %v9152, %v8875
        %v9185 = vadd.f32 %v9153, %v8875
        %v9186 = vadd.f32 %v9154, %v8875
        %v9187 = vadd.f32 %v9155, %v8875
        %v9188 = vadd.f32 %v9156, %v8875
        %v9189 = vadd.f32 %v9157, %v8875
        %v9190 = vadd.f32 %v9158, %v8875
        %v9191 = vadd.f32 %v9159, %v8875
        %v9192 = vadd.f32 %v9160, %v8875
        %v9193 = vadd.f32 %v9161, %v8875
        %v9194 = vadd.f32 %v9162, %v8875
        %v9195 = vadd.f32 %v9163, %v8875
        %v9196 = vadd.f32 %v9164, %v8875
        %v9197 = vadd.f32 %v9165, %v8875
        %9198 = vst [vmem:[%s9101 + $0x8] sm:$0xff] %v9166
        %9199 = vst [vmem:[%s9101 + $0x18] sm:$0xff] %v9167
        %9200 = vst [vmem:[%s9101 + $0x48] sm:$0xff] %v9168
        %9201 = vst [vmem:[%s9101 + $0x58] sm:$0xff] %v9169
        %9202 = vst [vmem:[%s9101 + $0x88] sm:$0xff] %v9170
        %9203 = vst [vmem:[%s9101 + $0x98] sm:$0xff] %v9171
        %9204 = vst [vmem:[%s9101 + $0xc8] sm:$0xff] %v9172
        %9205 = vst [vmem:[%s9101 + $0xd8] sm:$0xff] %v9173
        %9206 = vst [vmem:[%s9101 + $0x108] sm:$0xff] %v9174
        %9207 = vst [vmem:[%s9101 + $0x118] sm:$0xff] %v9175
        %9208 = vst [vmem:[%s9101 + $0x148] sm:$0xff] %v9176
        %9209 = vst [vmem:[%s9101 + $0x158] sm:$0xff] %v9177
        %9210 = vst [vmem:[%s9101 + $0x188] sm:$0xff] %v9178
        %9211 = vst [vmem:[%s9101 + $0x198] sm:$0xff] %v9179
        %9212 = vst [vmem:[%s9101 + $0x1c8] sm:$0xff] %v9180
        %9213 = vst [vmem:[%s9101 + $0x1d8] sm:$0xff] %v9181
        %9214 = vst [vmem:[%s9101 + $0x208] sm:$0xff] %v9182
        %9215 = vst [vmem:[%s9101 + $0x218] sm:$0xff] %v9183
        %9216 = vst [vmem:[%s9101 + $0x248] sm:$0xff] %v9184
        %9217 = vst [vmem:[%s9101 + $0x258] sm:$0xff] %v9185
        %9218 = vst [vmem:[%s9101 + $0x288] sm:$0xff] %v9186
        %9219 = vst [vmem:[%s9101 + $0x298] sm:$0xff] %v9187
        %9220 = vst [vmem:[%s9101 + $0x2c8] sm:$0xff] %v9188
        %9221 = vst [vmem:[%s9101 + $0x2d8] sm:$0xff] %v9189
        %9222 = vst [vmem:[%s9101 + $0x308] sm:$0xff] %v9190
        %9223 = vst [vmem:[%s9101 + $0x318] sm:$0xff] %v9191
        %9224 = vst [vmem:[%s9101 + $0x348] sm:$0xff] %v9192
        %9225 = vst [vmem:[%s9101 + $0x358] sm:$0xff] %v9193
        %9226 = vst [vmem:[%s9101 + $0x388] sm:$0xff] %v9194
        %9227 = vst [vmem:[%s9101 + $0x398] sm:$0xff] %v9195
        %9228 = vst [vmem:[%s9101 + $0x3c8] sm:$0xff] %v9196
        %9229 = vst [vmem:[%s9101 + $0x3d8] sm:$0xff] %v9197
      $region40: #{prediction_head.3} parent=31 // pred_fallthru
        _
      %p9230 = scmp.lt.s32.totalorder %s18, 1
      %s9231 = scalar_select %p9230, %s18, 1
      %s9232 = smul.addr %s9231, 128
      %s9233 = smul.addr %s9232, 8
      %s9234 = scalar_lea.vmem %s3, %s9233
      // Predicated region
      $region41: #{prediction_head.3} parent=31 // pred_check
        %p9235 = pneg %p119
      $region42: #{prediction_head.3} parent=31 // pred_check_branch
        %9237 = sbr.rel (%p9235) target = $region44
      $region43: #{prediction_head.3} parent=31 // pred_region
        _
      $region44: #{prediction_head.3} parent=31 // pred_fallthru
        _
    $region32: #{prediction_head.3} parent=5 // pred_fallthru
      _
    %p9238 = scmp.le.s32.totalorder 2, %s9
    // Predicated region
    $region45: #{prediction_head.3} parent=5 // pred_check
      %p9239 = pneg %p9238
    $region46: #{prediction_head.3} parent=5 // pred_check_branch
      %9241 = sbr.rel (%p9239) target = $region48
    $region47: #{prediction_head.3} parent=5 // pred_region
      %s9242 = ssub.s32 %s9, 2
      // Predicated region
      $region49: #{prediction_head.3} parent=47 // pred_check
        %p9243 = pneg %p125
      $region50: #{prediction_head.3} parent=47 // pred_check_branch
        %9245 = sbr.rel (%p9243) target = $region52
      $region51: #{prediction_head.3} parent=47 // pred_region
        %p9246 = scmp.lt.s32.totalorder %s20, 1
        %s9247 = scalar_select %p9246, %s20, 1
        %s9248 = smul.addr %s9247, 128
        %s9249 = smul.addr %s9248, 8
        %s9250 = scalar_lea.vmem %s3, %s9249
      $region52: #{prediction_head.3} parent=47 // pred_fallthru
        _
    $region48: #{prediction_head.3} parent=5 // pred_fallthru
      _
  $region6: #{prediction_head.3} parent=0 // loop_footer
    %s13 = sadd.s32 1, %s9
  $region7: #{prediction_head.3} parent=0 // loop_footer_branch
    %8 = sbr.rel target = $region3
  $region8: #{prediction_head.3} parent=0 // loop_exit
    _

</llo_original>
